<compile_context>
chip_gen: v7x
topology: tpu7x:2x2x1
jax: 0.10.0
libtpu: 0.0.40
codegen_flags: <defaults>
</compile_context>

<pallas_src>
import functools

import jax
import jax.numpy as jnp
from jax.experimental import pallas as pl
from jax.experimental.pallas import tpu as pltpu


# ---------------------------------------------------------------------------
# Fused kernel: one grid step == one image.  Everything stays in VMEM.
# ---------------------------------------------------------------------------
def _fused_block_kernel(x_ref, b1m_ref, mask1_ref, poolm_ref, w1_ref, s1_ref,
                        b2_ref, alpha_ref, w2_ref, b3_ref, sew1_ref, sew2_ref,
                        *rest, WC, M1, M2, inv_count, has_sc_conv):
    if has_sc_conv:
        wsc_ref, bsc_ref, o_ref = rest
    else:
        (o_ref,) = rest

    D = o_ref.shape[2]
    LEADX = 4 * WC                     # flat row of canvas position (0, 0)

    xflat = x_ref[0]                   # (PX, Cin) raw zero-padded input, bf16

    # BN1: scale + interior-masked bias (the conv's zero-padding ring must
    # stay exactly zero, matching "BatchNorm -> Conv(pad=1)" in the module).
    xb16 = (xflat.astype(jnp.float32) * s1_ref[...] + b1m_ref[...]
            ).astype(jnp.bfloat16)

    # Conv1 (3x3, stride 1, pad 1): 9 contiguous row-offset slices of the
    # flattened padded canvas -> 9 MXU matmuls, f32 accumulation.
    acc1 = jnp.zeros((M1, D), jnp.float32)
    for t in range(9):
        dh, dw = t // 3, t % 3
        start = (dh + 1) * WC + (dw - 1)
        acc1 = acc1 + jnp.dot(xb16[start:start + M1, :], w1_ref[t],
                              preferred_element_type=jnp.float32)

    # BN2 bias (scale pre-folded into w1) + PReLU, then zero the halo/garbage
    # rows so `y1` is exactly conv2's zero-padded input canvas.
    z = acc1 + b2_ref[...]
    z = jnp.where(z > 0, z, alpha_ref[...] * z)
    y1 = (z * mask1_ref[...]).astype(jnp.bfloat16)           # (M1, D)

    # Conv2 (3x3, stride s, pad 1): output on a W-dense canvas with row pitch
    # s*WC so every tap (for any stride) is again a contiguous flat slice.
    acc2 = jnp.zeros((M2, D), jnp.float32)
    for t in range(9):
        dh, dw = t // 3, t % 3
        start = (dh + 2) * WC + dw
        acc2 = acc2 + jnp.dot(y1[start:start + M2, :], w2_ref[t],
                              preferred_element_type=jnp.float32)
    y3 = acc2 + b3_ref[...]                                  # BN3 bias

    # SE: masked global average pool -> fc1 -> ReLU -> fc2 -> sigmoid.
    pooled = jnp.sum(y3 * poolm_ref[...], axis=0, keepdims=True) * inv_count
    h = jnp.maximum(jnp.dot(pooled, sew1_ref[...],
                            preferred_element_type=jnp.float32), 0.0)
    gate = jax.nn.sigmoid(jnp.dot(h, sew2_ref[...],
                                  preferred_element_type=jnp.float32))

    # Shortcut, read straight from the raw padded input canvas (no extra HBM
    # round trip in the wrapper).
    xsc = xflat[LEADX + WC + 1:LEADX + WC + 1 + M2, :]
    if has_sc_conv:          # Conv1x1(stride) + BN (scale folded into w_sc)
        sc = jnp.dot(xsc, wsc_ref[...],
                     preferred_element_type=jnp.float32) + bsc_ref[...]
    else:                    # MaxPool2d(kernel_size=1, stride) == subsample
        sc = xsc.astype(jnp.float32)

    # TODO(synk): for D < 128 this store is lane-masked; a lane-dense
    # (rows, pitch*D) output layout would further speed the store path.
    o_ref[0] = (y3 * gate + sc).astype(o_ref.dtype)


# ---------------------------------------------------------------------------
# Trace-time parameter preparation (BN-scale folding, bf16 weights).
# ---------------------------------------------------------------------------
def _prepare_params(p, in_channel, depth):
    prep = {
        "s1": p["bn1_s"],
        "b2": p["bn2_b"],
        "alpha": p["prelu_a"],
        "b3": p["bn3_b"],
        "se_w1": p["se_w1"],
        "se_w2": p["se_w2"],
        # BN2 / BN3 scales folded into the conv weights (exact), per-tap
        # layout (9, Cin, D), cast to bf16 for the MXU.
        "w1f": (p["w1"] * p["bn2_s"][0]).reshape(9, in_channel, depth
                                                 ).astype(jnp.bfloat16),
        "w2f": (p["w2"] * p["bn3_s"][0]).reshape(9, depth, depth
                                                 ).astype(jnp.bfloat16),
    }
    if in_channel != depth:
        prep["w_scf"] = (p["w_sc"] * p["bn_sc_s"][0]).astype(jnp.bfloat16)
        prep["b_sc"] = p["bn_sc_b"]
    return prep


# ---------------------------------------------------------------------------
# Wrapper
# ---------------------------------------------------------------------------
def bottleneck_ir_se_forward(x_nchw, params, stride):
    assert stride in (1, 2)
    x = jnp.transpose(x_nchw, (0, 2, 3, 1))                  # NCHW -> NHWC
    N, H, W, Cin = x.shape
    D = params["w1"].shape[-1]

    WC = W + 2                       # padded canvas width
    Ho = (H - 1) // stride + 1
    Wo = (W - 1) // stride + 1
    PITCH = stride * WC              # W-dense output row pitch
    M1 = (H + 6) * WC                # conv1 rows (canvas + 2 guard rows/side)
    M2 = Ho * PITCH                  # conv2 / output rows (W-dense)
    PX = (H + 10) * WC               # flattened padded + guarded input rows
    LEADX = 4 * WC

    # Static bound checks for the flat-slice offsets used inside the kernel.
    assert 3 * WC + 1 + M1 <= PX                 # conv1 taps stay in x canvas
    assert 4 * WC + 2 + M2 <= M1                 # conv2 taps stay in y1 canvas
    assert LEADX + WC + 1 + M2 <= PX             # shortcut slice stays in x

    prep = _prepare_params(params, Cin, D)

    # Raw input, cast to bf16 and zero-padded once (1 conv-pad ring + 4 guard
    # rows top/bottom so every flat tap slice stays in bounds), flattened.
    xpad = jnp.pad(x.astype(jnp.bfloat16), ((0, 0), (5, 5), (1, 1), (0, 0)))
    xflat = xpad.reshape(N, PX, Cin)

    # Tiny constant helper arrays (shape-only, resident in VMEM across steps).
    ones_hw = jnp.ones((H, W, 1), jnp.float32)
    b1m = jnp.pad(ones_hw, ((5, 5), (1, 1), (0, 0))).reshape(PX, 1) \
        * params["bn1_b"]                                    # (PX, Cin)
    mask1 = jnp.pad(ones_hw, ((3, 3), (1, 1), (0, 0))).reshape(M1, 1)
    col = jnp.arange(M2, dtype=jnp.int32) % PITCH
    poolmask = ((col % stride == 0) & (col <= stride * (Wo - 1))
                ).astype(jnp.float32).reshape(M2, 1)

    has_sc_conv = Cin != D
    kernel = functools.partial(
        _fused_block_kernel, WC=WC, M1=M1, M2=M2,
        inv_count=1.0 / float(Ho * Wo), has_sc_conv=has_sc_conv)

    c2 = lambda n: (0, 0)
    c3 = lambda n: (0, 0, 0)
    in_specs = [
        pl.BlockSpec((1, PX, Cin), lambda n: (n, 0, 0)),     # x (padded, flat)
        pl.BlockSpec((PX, Cin), c2),                         # masked BN1 bias
        pl.BlockSpec((M1, 1), c2),                           # y1 canvas mask
        pl.BlockSpec((M2, 1), c2),                           # SE pool mask
        pl.BlockSpec((9, Cin, D), c3),                       # w1 (BN2 folded)
        pl.BlockSpec((1, Cin), c2),                          # BN1 scale
        pl.BlockSpec((1, D), c2),                            # BN2 bias
        pl.BlockSpec((1, D), c2),                            # PReLU alpha
        pl.BlockSpec((9, D, D), c3),                         # w2 (BN3 folded)
        pl.BlockSpec((1, D), c2),                            # BN3 bias
        pl.BlockSpec((D, D // 16), c2),                      # SE fc1
        pl.BlockSpec((D // 16, D), c2),                      # SE fc2
    ]
    args = [xflat, b1m, mask1, poolmask, prep["w1f"], prep["s1"], prep["b2"],
            prep["alpha"], prep["w2f"], prep["b3"], prep["se_w1"],
            prep["se_w2"]]
    if has_sc_conv:
        in_specs += [pl.BlockSpec((Cin, D), c2), pl.BlockSpec((1, D), c2)]
        args += [prep["w_scf"], prep["b_sc"]]

    # TODO(synk): for large feature maps (e.g. 112x112 IRSE stages) also tile
    # the grid spatially and set vmem_limit_bytes per generation (v7x: 64 MiB).
    out_dense = pl.pallas_call(
        kernel,
        out_shape=jax.ShapeDtypeStruct((N, M2, D), jnp.float32),
        grid=(N,),
        in_specs=in_specs,
        out_specs=pl.BlockSpec((1, M2, D), lambda n: (n, 0, 0)),
        compiler_params=pltpu.CompilerParams(
            dimension_semantics=("parallel",)),
    )(*args)

    # Decode the W-dense canvas: keep every `stride`-th column, drop pad/guard
    # columns; XLA fuses this with the (required) NHWC -> NCHW transpose.
    out = out_dense.reshape(N, Ho, PITCH, D)
    out = out[:, :, 0:stride * (Wo - 1) + 1:stride, :]
    return jnp.transpose(out, (0, 3, 1, 2))


# ---------------------------------------------------------------------------
# Deterministic synthetic parameters (shapes follow the module's __init__).
# ---------------------------------------------------------------------------
def init_params(key, in_channel, depth, reduction=16, eps=1e-5):
    keys = list(jax.random.split(key, 24))
    it = iter(keys)

    def bn(c):
        gamma = 1.0 + 0.1 * jax.random.normal(next(it), (c,), jnp.float32)
        beta = 0.1 * jax.random.normal(next(it), (c,), jnp.float32)
        mean = 0.1 * jax.random.normal(next(it), (c,), jnp.float32)
        var = jnp.abs(jax.random.normal(next(it), (c,), jnp.float32)) + 0.5
        s = gamma / jnp.sqrt(var + eps)
        b = beta - mean * s
        return s.reshape(1, c), b.reshape(1, c)

    p = {}
    p["bn1_s"], p["bn1_b"] = bn(in_channel)
    p["w1"] = 0.1 * jax.random.normal(next(it), (3, 3, in_channel, depth),
                                      jnp.float32)          # HWIO
    p["bn2_s"], p["bn2_b"] = bn(depth)
    p["prelu_a"] = jnp.full((1, depth), 0.25, jnp.float32)   # PReLU default
    p["w2"] = 0.1 * jax.random.normal(next(it), (3, 3, depth, depth),
                                      jnp.float32)
    p["bn3_s"], p["bn3_b"] = bn(depth)
    p["se_w1"] = 0.2 * jax.random.normal(next(it), (depth, depth // reduction),
                                         jnp.float32)
    p["se_w2"] = 0.2 * jax.random.normal(next(it), (depth // reduction, depth),
                                         jnp.float32)
    if in_channel != depth:
        p["w_sc"] = 0.1 * jax.random.normal(next(it), (in_channel, depth),
                                            jnp.float32)
        p["bn_sc_s"], p["bn_sc_b"] = bn(depth)
    return p


# ---------------------------------------------------------------------------
# Pure-JAX reference.  match_kernel_bf16=False -> the f32 spec;
# match_kernel_bf16=True -> same math with the kernel's bf16 rounding points.
# ---------------------------------------------------------------------------
def reference_forward(x_nchw, p, stride, *, match_kernel_bf16=False):
    x = jnp.transpose(x_nchw, (0, 2, 3, 1))
    dn = ("NHWC", "HWIO", "NHWC")
    Cin, D = x.shape[-1], p["w1"].shape[-1]
    conv = functools.partial(jax.lax.conv_general_dilated,
                             dimension_numbers=dn,
                             preferred_element_type=jnp.float32)

    if match_kernel_bf16:
        cast = lambda a: a.astype(jnp.bfloat16)
        x = cast(x).astype(jnp.float32)
        w1 = cast(p["w1"] * p["bn2_s"][0])
        w2 = cast(p["w2"] * p["bn3_s"][0])
        s2 = s3 = None
    else:
        cast = lambda a: a
        w1, w2 = p["w1"], p["w2"]
        s2, s3 = p["bn2_s"][0], p["bn3_s"][0]

    y = x * p["bn1_s"][0] + p["bn1_b"][0]
    y = conv(cast(y), w1, (1, 1), ((1, 1), (1, 1)))
    if s2 is not None:
        y = y * s2
    y = y + p["bn2_b"][0]
    y = jnp.where(y > 0, y, p["prelu_a"][0] * y)
    y = conv(cast(y), w2, (stride, stride), ((1, 1), (1, 1)))
    if s3 is not None:
        y = y * s3
    y = y + p["bn3_b"][0]

    pooled = jnp.mean(y, axis=(1, 2), keepdims=True)
    h = jnp.maximum(jnp.einsum("nhwc,cd->nhwd", pooled, p["se_w1"]), 0.0)
    g = jax.nn.sigmoid(jnp.einsum("nhwc,cd->nhwd", h, p["se_w2"]))
    res = y * g

    if Cin == D:
        sc = x[:, ::stride, ::stride, :]
    else:
        if match_kernel_bf16:
            wsc = cast(p["w_sc"] * p["bn_sc_s"][0])[None, None]
            sc = conv(cast(x), wsc, (stride, stride), ((0, 0), (0, 0)))
            sc = sc + p["bn_sc_b"][0]
        else:
            sc = conv(x, p["w_sc"][None, None], (stride, stride),
                      ((0, 0), (0, 0)))
            sc = sc * p["bn_sc_s"][0] + p["bn_sc_b"][0]

    return jnp.transpose(res + sc, (0, 3, 1, 2))


if __name__ == "__main__":
    key = jax.random.PRNGKey(0)
    configs = [
        # (N, in_channel, depth, H, W, stride)
        (2, 16, 32, 16, 16, 2),   # projection shortcut (Conv1x1 + BN), stride 2
        (2, 32, 32, 16, 16, 1),   # identity (MaxPool(1,1)) shortcut, stride 1
    ]
    for (N, cin, depth, H, W, stride) in configs:
        key, kx, kp = jax.random.split(key, 3)
        x_nchw = jax.random.normal(kx, (N, cin, H, W), jnp.float32)
        params = init_params(kp, cin, depth)

        fwd = jax.jit(functools.partial(bottleneck_ir_se_forward,
                                        stride=stride))
        out = jax.block_until_ready(fwd(x_nchw, params))

        Ho = (H - 1) // stride + 1
        Wo = (W - 1) // stride + 1
        assert out.shape == (N, depth, Ho, Wo), out.shape

        # Tight check vs a reference that uses the kernel's bf16 rounding
        # points (validates indexing / fusion exactly).
        ref_m = reference_forward(x_nchw, params, stride,
                                  match_kernel_bf16=True)
        err_m = float(jnp.max(jnp.abs(out - ref_m)))
        assert err_m < 1e-2, f"matched-ref max abs err {err_m}"

        # Loose fidelity check vs the pure-f32 spec (bf16 MXU compute).
        ref_f = reference_forward(x_nchw, params, stride)
        err_f = float(jnp.max(jnp.abs(out - ref_f)))
        assert err_f < 0.35, f"f32-ref max abs err {err_f}"

    print("KERNEL_OK")
</pallas_src>

<mosaic_0001>
module attributes {stable_mosaic.version = 11 : i64} {
  func.func @_fused_block_kernel(%arg0: i32, %arg1: memref<1x468x16xbf16, #tpu.memory_space<vmem>>, %arg2: memref<468x16xf32, #tpu.memory_space<vmem>>, %arg3: memref<396x1xf32, #tpu.memory_space<vmem>>, %arg4: memref<288x1xf32, #tpu.memory_space<vmem>>, %arg5: memref<9x16x32xbf16, #tpu.memory_space<vmem>>, %arg6: memref<1x16xf32, #tpu.memory_space<vmem>>, %arg7: memref<1x32xf32, #tpu.memory_space<vmem>>, %arg8: memref<1x32xf32, #tpu.memory_space<vmem>>, %arg9: memref<9x32x32xbf16, #tpu.memory_space<vmem>>, %arg10: memref<1x32xf32, #tpu.memory_space<vmem>>, %arg11: memref<32x2xf32, #tpu.memory_space<vmem>>, %arg12: memref<2x32xf32, #tpu.memory_space<vmem>>, %arg13: memref<16x32xbf16, #tpu.memory_space<vmem>>, %arg14: memref<1x32xf32, #tpu.memory_space<vmem>>, %arg15: memref<1x288x32xf32, #tpu.memory_space<vmem>>) attributes {dimension_semantics = [#tpu.dimension_semantics<parallel>], iteration_bounds = array<i64: 2>, scalar_prefetch = 0 : i64, scratch_operands = 0 : i64, tpu.core_type = #tpu.core_type<tc>, window_params = [{transform_indices = @transform_0, window_bounds = array<i64: 1, 468, 16>}, {pipeline_mode = #tpu.pipeline_mode<synchronous>, transform_indices = @transform_1, window_bounds = array<i64: 468, 16>}, {pipeline_mode = #tpu.pipeline_mode<synchronous>, transform_indices = @transform_2, window_bounds = array<i64: 396, 1>}, {pipeline_mode = #tpu.pipeline_mode<synchronous>, transform_indices = @transform_3, window_bounds = array<i64: 288, 1>}, {pipeline_mode = #tpu.pipeline_mode<synchronous>, transform_indices = @transform_4, window_bounds = array<i64: 9, 16, 32>}, {pipeline_mode = #tpu.pipeline_mode<synchronous>, transform_indices = @transform_5, window_bounds = array<i64: 1, 16>}, {pipeline_mode = #tpu.pipeline_mode<synchronous>, transform_indices = @transform_6, window_bounds = array<i64: 1, 32>}, {pipeline_mode = #tpu.pipeline_mode<synchronous>, transform_indices = @transform_7, window_bounds = array<i64: 1, 32>}, {pipeline_mode = #tpu.pipeline_mode<synchronous>, transform_indices = @transform_8, window_bounds = array<i64: 9, 32, 32>}, {pipeline_mode = #tpu.pipeline_mode<synchronous>, transform_indices = @transform_9, window_bounds = array<i64: 1, 32>}, {pipeline_mode = #tpu.pipeline_mode<synchronous>, transform_indices = @transform_10, window_bounds = array<i64: 32, 2>}, {pipeline_mode = #tpu.pipeline_mode<synchronous>, transform_indices = @transform_11, window_bounds = array<i64: 2, 32>}, {pipeline_mode = #tpu.pipeline_mode<synchronous>, transform_indices = @transform_12, window_bounds = array<i64: 16, 32>}, {pipeline_mode = #tpu.pipeline_mode<synchronous>, transform_indices = @transform_13, window_bounds = array<i64: 1, 32>}, {transform_indices = @transform_14, window_bounds = array<i64: 1, 288, 32>}]} {
    %c0 = arith.constant 0 : index
    %c0_0 = arith.constant 0 : index
    %c0_1 = arith.constant 0 : index
    %0 = vector.load %arg1[%c0, %c0_0, %c0_1] : memref<1x468x16xbf16, #tpu.memory_space<vmem>>, vector<1x468x16xbf16>
    %1 = vector.shape_cast %0 : vector<1x468x16xbf16> to vector<468x16xbf16>
    %2 = arith.extf %1 : vector<468x16xbf16> to vector<468x16xf32>
    %c0_2 = arith.constant 0 : index
    %c0_3 = arith.constant 0 : index
    %3 = vector.load %arg6[%c0_2, %c0_3] : memref<1x16xf32, #tpu.memory_space<vmem>>, vector<1x16xf32>
    %4 = vector.broadcast %3 : vector<1x16xf32> to vector<468x16xf32>
    %5 = arith.mulf %2, %4 : vector<468x16xf32>
    %c0_4 = arith.constant 0 : index
    %c0_5 = arith.constant 0 : index
    %6 = vector.load %arg2[%c0_4, %c0_5] : memref<468x16xf32, #tpu.memory_space<vmem>>, vector<468x16xf32>
    %7 = arith.addf %5, %6 : vector<468x16xf32>
    %8 = arith.truncf %7 : vector<468x16xf32> to vector<468x16xbf16>
    %cst = arith.constant 0.000000e+00 : f32
    %9 = vector.broadcast %cst : f32 to vector<396x32xf32>
    %10 = vector.extract_strided_slice %8 {offsets = [17, 0], sizes = [396, 16], strides = [1, 1]} : vector<468x16xbf16> to vector<396x16xbf16>
    %c0_6 = arith.constant 0 : index
    %c0_7 = arith.constant 0 : index
    %c0_8 = arith.constant 0 : index
    %11 = vector.load %arg5[%c0_6, %c0_7, %c0_8] : memref<9x16x32xbf16, #tpu.memory_space<vmem>>, vector<1x16x32xbf16>
    %12 = vector.shape_cast %11 : vector<1x16x32xbf16> to vector<16x32xbf16>
    %cst_9 = arith.constant dense<0.000000e+00> : vector<396x32xf32>
    %13 = tpu.matmul %10, %12, %cst_9 {dimension_numbers = #tpu.dot_dimension_numbers<[1], [0], [0], [1], [0, 0, 1, 1], [], []>} : vector<396x16xbf16>, vector<16x32xbf16>, vector<396x32xf32> -> vector<396x32xf32>
    %14 = arith.addf %9, %13 : vector<396x32xf32>
    %15 = vector.extract_strided_slice %8 {offsets = [18, 0], sizes = [396, 16], strides = [1, 1]} : vector<468x16xbf16> to vector<396x16xbf16>
    %c1 = arith.constant 1 : index
    %c0_10 = arith.constant 0 : index
    %c0_11 = arith.constant 0 : index
    %16 = vector.load %arg5[%c1, %c0_10, %c0_11] : memref<9x16x32xbf16, #tpu.memory_space<vmem>>, vector<1x16x32xbf16>
    %17 = vector.shape_cast %16 : vector<1x16x32xbf16> to vector<16x32xbf16>
    %cst_12 = arith.constant dense<0.000000e+00> : vector<396x32xf32>
    %18 = tpu.matmul %15, %17, %cst_12 {dimension_numbers = #tpu.dot_dimension_numbers<[1], [0], [0], [1], [0, 0, 1, 1], [], []>} : vector<396x16xbf16>, vector<16x32xbf16>, vector<396x32xf32> -> vector<396x32xf32>
    %19 = arith.addf %14, %18 : vector<396x32xf32>
    %20 = vector.extract_strided_slice %8 {offsets = [19, 0], sizes = [396, 16], strides = [1, 1]} : vector<468x16xbf16> to vector<396x16xbf16>
    %c2 = arith.constant 2 : index
    %c0_13 = arith.constant 0 : index
    %c0_14 = arith.constant 0 : index
    %21 = vector.load %arg5[%c2, %c0_13, %c0_14] : memref<9x16x32xbf16, #tpu.memory_space<vmem>>, vector<1x16x32xbf16>
    %22 = vector.shape_cast %21 : vector<1x16x32xbf16> to vector<16x32xbf16>
    %cst_15 = arith.constant dense<0.000000e+00> : vector<396x32xf32>
    %23 = tpu.matmul %20, %22, %cst_15 {dimension_numbers = #tpu.dot_dimension_numbers<[1], [0], [0], [1], [0, 0, 1, 1], [], []>} : vector<396x16xbf16>, vector<16x32xbf16>, vector<396x32xf32> -> vector<396x32xf32>
    %24 = arith.addf %19, %23 : vector<396x32xf32>
    %25 = vector.extract_strided_slice %8 {offsets = [35, 0], sizes = [396, 16], strides = [1, 1]} : vector<468x16xbf16> to vector<396x16xbf16>
    %c3 = arith.constant 3 : index
    %c0_16 = arith.constant 0 : index
    %c0_17 = arith.constant 0 : index
    %26 = vector.load %arg5[%c3, %c0_16, %c0_17] : memref<9x16x32xbf16, #tpu.memory_space<vmem>>, vector<1x16x32xbf16>
    %27 = vector.shape_cast %26 : vector<1x16x32xbf16> to vector<16x32xbf16>
    %cst_18 = arith.constant dense<0.000000e+00> : vector<396x32xf32>
    %28 = tpu.matmul %25, %27, %cst_18 {dimension_numbers = #tpu.dot_dimension_numbers<[1], [0], [0], [1], [0, 0, 1, 1], [], []>} : vector<396x16xbf16>, vector<16x32xbf16>, vector<396x32xf32> -> vector<396x32xf32>
    %29 = arith.addf %24, %28 : vector<396x32xf32>
    %30 = vector.extract_strided_slice %8 {offsets = [36, 0], sizes = [396, 16], strides = [1, 1]} : vector<468x16xbf16> to vector<396x16xbf16>
    %c4 = arith.constant 4 : index
    %c0_19 = arith.constant 0 : index
    %c0_20 = arith.constant 0 : index
    %31 = vector.load %arg5[%c4, %c0_19, %c0_20] : memref<9x16x32xbf16, #tpu.memory_space<vmem>>, vector<1x16x32xbf16>
    %32 = vector.shape_cast %31 : vector<1x16x32xbf16> to vector<16x32xbf16>
    %cst_21 = arith.constant dense<0.000000e+00> : vector<396x32xf32>
    %33 = tpu.matmul %30, %32, %cst_21 {dimension_numbers = #tpu.dot_dimension_numbers<[1], [0], [0], [1], [0, 0, 1, 1], [], []>} : vector<396x16xbf16>, vector<16x32xbf16>, vector<396x32xf32> -> vector<396x32xf32>
    %34 = arith.addf %29, %33 : vector<396x32xf32>
    %35 = vector.extract_strided_slice %8 {offsets = [37, 0], sizes = [396, 16], strides = [1, 1]} : vector<468x16xbf16> to vector<396x16xbf16>
    %c5 = arith.constant 5 : index
    %c0_22 = arith.constant 0 : index
    %c0_23 = arith.constant 0 : index
    %36 = vector.load %arg5[%c5, %c0_22, %c0_23] : memref<9x16x32xbf16, #tpu.memory_space<vmem>>, vector<1x16x32xbf16>
    %37 = vector.shape_cast %36 : vector<1x16x32xbf16> to vector<16x32xbf16>
    %cst_24 = arith.constant dense<0.000000e+00> : vector<396x32xf32>
    %38 = tpu.matmul %35, %37, %cst_24 {dimension_numbers = #tpu.dot_dimension_numbers<[1], [0], [0], [1], [0, 0, 1, 1], [], []>} : vector<396x16xbf16>, vector<16x32xbf16>, vector<396x32xf32> -> vector<396x32xf32>
    %39 = arith.addf %34, %38 : vector<396x32xf32>
    %40 = vector.extract_strided_slice %8 {offsets = [53, 0], sizes = [396, 16], strides = [1, 1]} : vector<468x16xbf16> to vector<396x16xbf16>
    %c6 = arith.constant 6 : index
    %c0_25 = arith.constant 0 : index
    %c0_26 = arith.constant 0 : index
    %41 = vector.load %arg5[%c6, %c0_25, %c0_26] : memref<9x16x32xbf16, #tpu.memory_space<vmem>>, vector<1x16x32xbf16>
    %42 = vector.shape_cast %41 : vector<1x16x32xbf16> to vector<16x32xbf16>
    %cst_27 = arith.constant dense<0.000000e+00> : vector<396x32xf32>
    %43 = tpu.matmul %40, %42, %cst_27 {dimension_numbers = #tpu.dot_dimension_numbers<[1], [0], [0], [1], [0, 0, 1, 1], [], []>} : vector<396x16xbf16>, vector<16x32xbf16>, vector<396x32xf32> -> vector<396x32xf32>
    %44 = arith.addf %39, %43 : vector<396x32xf32>
    %45 = vector.extract_strided_slice %8 {offsets = [54, 0], sizes = [396, 16], strides = [1, 1]} : vector<468x16xbf16> to vector<396x16xbf16>
    %c7 = arith.constant 7 : index
    %c0_28 = arith.constant 0 : index
    %c0_29 = arith.constant 0 : index
    %46 = vector.load %arg5[%c7, %c0_28, %c0_29] : memref<9x16x32xbf16, #tpu.memory_space<vmem>>, vector<1x16x32xbf16>
    %47 = vector.shape_cast %46 : vector<1x16x32xbf16> to vector<16x32xbf16>
    %cst_30 = arith.constant dense<0.000000e+00> : vector<396x32xf32>
    %48 = tpu.matmul %45, %47, %cst_30 {dimension_numbers = #tpu.dot_dimension_numbers<[1], [0], [0], [1], [0, 0, 1, 1], [], []>} : vector<396x16xbf16>, vector<16x32xbf16>, vector<396x32xf32> -> vector<396x32xf32>
    %49 = arith.addf %44, %48 : vector<396x32xf32>
    %50 = vector.extract_strided_slice %8 {offsets = [55, 0], sizes = [396, 16], strides = [1, 1]} : vector<468x16xbf16> to vector<396x16xbf16>
    %c8 = arith.constant 8 : index
    %c0_31 = arith.constant 0 : index
    %c0_32 = arith.constant 0 : index
    %51 = vector.load %arg5[%c8, %c0_31, %c0_32] : memref<9x16x32xbf16, #tpu.memory_space<vmem>>, vector<1x16x32xbf16>
    %52 = vector.shape_cast %51 : vector<1x16x32xbf16> to vector<16x32xbf16>
    %cst_33 = arith.constant dense<0.000000e+00> : vector<396x32xf32>
    %53 = tpu.matmul %50, %52, %cst_33 {dimension_numbers = #tpu.dot_dimension_numbers<[1], [0], [0], [1], [0, 0, 1, 1], [], []>} : vector<396x16xbf16>, vector<16x32xbf16>, vector<396x32xf32> -> vector<396x32xf32>
    %54 = arith.addf %49, %53 : vector<396x32xf32>
    %c0_34 = arith.constant 0 : index
    %c0_35 = arith.constant 0 : index
    %55 = vector.load %arg7[%c0_34, %c0_35] : memref<1x32xf32, #tpu.memory_space<vmem>>, vector<1x32xf32>
    %56 = vector.broadcast %55 : vector<1x32xf32> to vector<396x32xf32>
    %57 = arith.addf %54, %56 : vector<396x32xf32>
    %cst_36 = arith.constant 0.000000e+00 : f32
    %58 = vector.broadcast %cst_36 : f32 to vector<396x32xf32>
    %59 = arith.cmpf ogt, %57, %58 : vector<396x32xf32>
    %c0_37 = arith.constant 0 : index
    %c0_38 = arith.constant 0 : index
    %60 = vector.load %arg8[%c0_37, %c0_38] : memref<1x32xf32, #tpu.memory_space<vmem>>, vector<1x32xf32>
    %61 = vector.broadcast %60 : vector<1x32xf32> to vector<396x32xf32>
    %62 = arith.mulf %61, %57 : vector<396x32xf32>
    %63 = arith.select %59, %57, %62 : vector<396x32xi1>, vector<396x32xf32>
    %c0_39 = arith.constant 0 : index
    %c0_40 = arith.constant 0 : index
    %64 = vector.load %arg3[%c0_39, %c0_40] : memref<396x1xf32, #tpu.memory_space<vmem>>, vector<396x1xf32>
    %65 = vector.broadcast %64 : vector<396x1xf32> to vector<396x32xf32>
    %66 = arith.mulf %63, %65 : vector<396x32xf32>
    %67 = arith.truncf %66 : vector<396x32xf32> to vector<396x32xbf16>
    %cst_41 = arith.constant 0.000000e+00 : f32
    %68 = vector.broadcast %cst_41 : f32 to vector<288x32xf32>
    %69 = vector.extract_strided_slice %67 {offsets = [36, 0], sizes = [288, 32], strides = [1, 1]} : vector<396x32xbf16> to vector<288x32xbf16>
    %c0_42 = arith.constant 0 : index
    %c0_43 = arith.constant 0 : index
    %c0_44 = arith.constant 0 : index
    %70 = vector.load %arg9[%c0_42, %c0_43, %c0_44] : memref<9x32x32xbf16, #tpu.memory_space<vmem>>, vector<1x32x32xbf16>
    %71 = vector.shape_cast %70 : vector<1x32x32xbf16> to vector<32x32xbf16>
    %cst_45 = arith.constant dense<0.000000e+00> : vector<288x32xf32>
    %72 = tpu.matmul %69, %71, %cst_45 {dimension_numbers = #tpu.dot_dimension_numbers<[1], [0], [0], [1], [0, 0, 1, 1], [], []>} : vector<288x32xbf16>, vector<32x32xbf16>, vector<288x32xf32> -> vector<288x32xf32>
    %73 = arith.addf %68, %72 : vector<288x32xf32>
    %74 = vector.extract_strided_slice %67 {offsets = [37, 0], sizes = [288, 32], strides = [1, 1]} : vector<396x32xbf16> to vector<288x32xbf16>
    %c1_46 = arith.constant 1 : index
    %c0_47 = arith.constant 0 : index
    %c0_48 = arith.constant 0 : index
    %75 = vector.load %arg9[%c1_46, %c0_47, %c0_48] : memref<9x32x32xbf16, #tpu.memory_space<vmem>>, vector<1x32x32xbf16>
    %76 = vector.shape_cast %75 : vector<1x32x32xbf16> to vector<32x32xbf16>
    %cst_49 = arith.constant dense<0.000000e+00> : vector<288x32xf32>
    %77 = tpu.matmul %74, %76, %cst_49 {dimension_numbers = #tpu.dot_dimension_numbers<[1], [0], [0], [1], [0, 0, 1, 1], [], []>} : vector<288x32xbf16>, vector<32x32xbf16>, vector<288x32xf32> -> vector<288x32xf32>
    %78 = arith.addf %73, %77 : vector<288x32xf32>
    %79 = vector.extract_strided_slice %67 {offsets = [38, 0], sizes = [288, 32], strides = [1, 1]} : vector<396x32xbf16> to vector<288x32xbf16>
    %c2_50 = arith.constant 2 : index
    %c0_51 = arith.constant 0 : index
    %c0_52 = arith.constant 0 : index
    %80 = vector.load %arg9[%c2_50, %c0_51, %c0_52] : memref<9x32x32xbf16, #tpu.memory_space<vmem>>, vector<1x32x32xbf16>
    %81 = vector.shape_cast %80 : vector<1x32x32xbf16> to vector<32x32xbf16>
    %cst_53 = arith.constant dense<0.000000e+00> : vector<288x32xf32>
    %82 = tpu.matmul %79, %81, %cst_53 {dimension_numbers = #tpu.dot_dimension_numbers<[1], [0], [0], [1], [0, 0, 1, 1], [], []>} : vector<288x32xbf16>, vector<32x32xbf16>, vector<288x32xf32> -> vector<288x32xf32>
    %83 = arith.addf %78, %82 : vector<288x32xf32>
    %84 = vector.extract_strided_slice %67 {offsets = [54, 0], sizes = [288, 32], strides = [1, 1]} : vector<396x32xbf16> to vector<288x32xbf16>
    %c3_54 = arith.constant 3 : index
    %c0_55 = arith.constant 0 : index
    %c0_56 = arith.constant 0 : index
    %85 = vector.load %arg9[%c3_54, %c0_55, %c0_56] : memref<9x32x32xbf16, #tpu.memory_space<vmem>>, vector<1x32x32xbf16>
    %86 = vector.shape_cast %85 : vector<1x32x32xbf16> to vector<32x32xbf16>
    %cst_57 = arith.constant dense<0.000000e+00> : vector<288x32xf32>
    %87 = tpu.matmul %84, %86, %cst_57 {dimension_numbers = #tpu.dot_dimension_numbers<[1], [0], [0], [1], [0, 0, 1, 1], [], []>} : vector<288x32xbf16>, vector<32x32xbf16>, vector<288x32xf32> -> vector<288x32xf32>
    %88 = arith.addf %83, %87 : vector<288x32xf32>
    %89 = vector.extract_strided_slice %67 {offsets = [55, 0], sizes = [288, 32], strides = [1, 1]} : vector<396x32xbf16> to vector<288x32xbf16>
    %c4_58 = arith.constant 4 : index
    %c0_59 = arith.constant 0 : index
    %c0_60 = arith.constant 0 : index
    %90 = vector.load %arg9[%c4_58, %c0_59, %c0_60] : memref<9x32x32xbf16, #tpu.memory_space<vmem>>, vector<1x32x32xbf16>
    %91 = vector.shape_cast %90 : vector<1x32x32xbf16> to vector<32x32xbf16>
    %cst_61 = arith.constant dense<0.000000e+00> : vector<288x32xf32>
    %92 = tpu.matmul %89, %91, %cst_61 {dimension_numbers = #tpu.dot_dimension_numbers<[1], [0], [0], [1], [0, 0, 1, 1], [], []>} : vector<288x32xbf16>, vector<32x32xbf16>, vector<288x32xf32> -> vector<288x32xf32>
    %93 = arith.addf %88, %92 : vector<288x32xf32>
    %94 = vector.extract_strided_slice %67 {offsets = [56, 0], sizes = [288, 32], strides = [1, 1]} : vector<396x32xbf16> to vector<288x32xbf16>
    %c5_62 = arith.constant 5 : index
    %c0_63 = arith.constant 0 : index
    %c0_64 = arith.constant 0 : index
    %95 = vector.load %arg9[%c5_62, %c0_63, %c0_64] : memref<9x32x32xbf16, #tpu.memory_space<vmem>>, vector<1x32x32xbf16>
    %96 = vector.shape_cast %95 : vector<1x32x32xbf16> to vector<32x32xbf16>
    %cst_65 = arith.constant dense<0.000000e+00> : vector<288x32xf32>
    %97 = tpu.matmul %94, %96, %cst_65 {dimension_numbers = #tpu.dot_dimension_numbers<[1], [0], [0], [1], [0, 0, 1, 1], [], []>} : vector<288x32xbf16>, vector<32x32xbf16>, vector<288x32xf32> -> vector<288x32xf32>
    %98 = arith.addf %93, %97 : vector<288x32xf32>
    %99 = vector.extract_strided_slice %67 {offsets = [72, 0], sizes = [288, 32], strides = [1, 1]} : vector<396x32xbf16> to vector<288x32xbf16>
    %c6_66 = arith.constant 6 : index
    %c0_67 = arith.constant 0 : index
    %c0_68 = arith.constant 0 : index
    %100 = vector.load %arg9[%c6_66, %c0_67, %c0_68] : memref<9x32x32xbf16, #tpu.memory_space<vmem>>, vector<1x32x32xbf16>
    %101 = vector.shape_cast %100 : vector<1x32x32xbf16> to vector<32x32xbf16>
    %cst_69 = arith.constant dense<0.000000e+00> : vector<288x32xf32>
    %102 = tpu.matmul %99, %101, %cst_69 {dimension_numbers = #tpu.dot_dimension_numbers<[1], [0], [0], [1], [0, 0, 1, 1], [], []>} : vector<288x32xbf16>, vector<32x32xbf16>, vector<288x32xf32> -> vector<288x32xf32>
    %103 = arith.addf %98, %102 : vector<288x32xf32>
    %104 = vector.extract_strided_slice %67 {offsets = [73, 0], sizes = [288, 32], strides = [1, 1]} : vector<396x32xbf16> to vector<288x32xbf16>
    %c7_70 = arith.constant 7 : index
    %c0_71 = arith.constant 0 : index
    %c0_72 = arith.constant 0 : index
    %105 = vector.load %arg9[%c7_70, %c0_71, %c0_72] : memref<9x32x32xbf16, #tpu.memory_space<vmem>>, vector<1x32x32xbf16>
    %106 = vector.shape_cast %105 : vector<1x32x32xbf16> to vector<32x32xbf16>
    %cst_73 = arith.constant dense<0.000000e+00> : vector<288x32xf32>
    %107 = tpu.matmul %104, %106, %cst_73 {dimension_numbers = #tpu.dot_dimension_numbers<[1], [0], [0], [1], [0, 0, 1, 1], [], []>} : vector<288x32xbf16>, vector<32x32xbf16>, vector<288x32xf32> -> vector<288x32xf32>
    %108 = arith.addf %103, %107 : vector<288x32xf32>
    %109 = vector.extract_strided_slice %67 {offsets = [74, 0], sizes = [288, 32], strides = [1, 1]} : vector<396x32xbf16> to vector<288x32xbf16>
    %c8_74 = arith.constant 8 : index
    %c0_75 = arith.constant 0 : index
    %c0_76 = arith.constant 0 : index
    %110 = vector.load %arg9[%c8_74, %c0_75, %c0_76] : memref<9x32x32xbf16, #tpu.memory_space<vmem>>, vector<1x32x32xbf16>
    %111 = vector.shape_cast %110 : vector<1x32x32xbf16> to vector<32x32xbf16>
    %cst_77 = arith.constant dense<0.000000e+00> : vector<288x32xf32>
    %112 = tpu.matmul %109, %111, %cst_77 {dimension_numbers = #tpu.dot_dimension_numbers<[1], [0], [0], [1], [0, 0, 1, 1], [], []>} : vector<288x32xbf16>, vector<32x32xbf16>, vector<288x32xf32> -> vector<288x32xf32>
    %113 = arith.addf %108, %112 : vector<288x32xf32>
    %c0_78 = arith.constant 0 : index
    %c0_79 = arith.constant 0 : index
    %114 = vector.load %arg10[%c0_78, %c0_79] : memref<1x32xf32, #tpu.memory_space<vmem>>, vector<1x32xf32>
    %115 = vector.broadcast %114 : vector<1x32xf32> to vector<288x32xf32>
    %116 = arith.addf %113, %115 : vector<288x32xf32>
    %c0_80 = arith.constant 0 : index
    %c0_81 = arith.constant 0 : index
    %117 = vector.load %arg4[%c0_80, %c0_81] : memref<288x1xf32, #tpu.memory_space<vmem>>, vector<288x1xf32>
    %118 = vector.broadcast %117 : vector<288x1xf32> to vector<288x32xf32>
    %119 = arith.mulf %116, %118 : vector<288x32xf32>
    %cst_82 = arith.constant dense<0.000000e+00> : vector<32xf32>
    %120 = vector.multi_reduction <add>, %119, %cst_82 [0] : vector<288x32xf32> to vector<32xf32>
    %121 = vector.shape_cast %120 : vector<32xf32> to vector<1x32xf32>
    %cst_83 = arith.constant 1.562500e-02 : f32
    %122 = vector.broadcast %cst_83 : f32 to vector<1x32xf32>
    %123 = arith.mulf %121, %122 : vector<1x32xf32>
    %c0_84 = arith.constant 0 : index
    %c0_85 = arith.constant 0 : index
    %124 = vector.load %arg11[%c0_84, %c0_85] : memref<32x2xf32, #tpu.memory_space<vmem>>, vector<32x2xf32>
    %cst_86 = arith.constant dense<0.000000e+00> : vector<1x2xf32>
    %125 = tpu.matmul %123, %124, %cst_86 {dimension_numbers = #tpu.dot_dimension_numbers<[1], [0], [0], [1], [0, 0, 1, 1], [], []>} : vector<1x32xf32>, vector<32x2xf32>, vector<1x2xf32> -> vector<1x2xf32>
    %cst_87 = arith.constant 0.000000e+00 : f32
    %126 = vector.broadcast %cst_87 : f32 to vector<1x2xf32>
    %127 = arith.maximumf %125, %126 : vector<1x2xf32>
    %c0_88 = arith.constant 0 : index
    %c0_89 = arith.constant 0 : index
    %128 = vector.load %arg12[%c0_88, %c0_89] : memref<2x32xf32, #tpu.memory_space<vmem>>, vector<2x32xf32>
    %cst_90 = arith.constant dense<0.000000e+00> : vector<1x32xf32>
    %129 = tpu.matmul %127, %128, %cst_90 {dimension_numbers = #tpu.dot_dimension_numbers<[1], [0], [0], [1], [0, 0, 1, 1], [], []>} : vector<1x2xf32>, vector<2x32xf32>, vector<1x32xf32> -> vector<1x32xf32>
    %130 = arith.negf %129 : vector<1x32xf32>
    %131 = math.exp %130 : vector<1x32xf32>
    %cst_91 = arith.constant 1.000000e+00 : f32
    %132 = vector.broadcast %cst_91 : f32 to vector<1x32xf32>
    %133 = arith.addf %132, %131 : vector<1x32xf32>
    %134 = arith.divf %132, %133 : vector<1x32xf32>
    %135 = vector.extract_strided_slice %1 {offsets = [91, 0], sizes = [288, 16], strides = [1, 1]} : vector<468x16xbf16> to vector<288x16xbf16>
    %c0_92 = arith.constant 0 : index
    %c0_93 = arith.constant 0 : index
    %136 = vector.load %arg13[%c0_92, %c0_93] : memref<16x32xbf16, #tpu.memory_space<vmem>>, vector<16x32xbf16>
    %cst_94 = arith.constant dense<0.000000e+00> : vector<288x32xf32>
    %137 = tpu.matmul %135, %136, %cst_94 {dimension_numbers = #tpu.dot_dimension_numbers<[1], [0], [0], [1], [0, 0, 1, 1], [], []>} : vector<288x16xbf16>, vector<16x32xbf16>, vector<288x32xf32> -> vector<288x32xf32>
    %c0_95 = arith.constant 0 : index
    %c0_96 = arith.constant 0 : index
    %138 = vector.load %arg14[%c0_95, %c0_96] : memref<1x32xf32, #tpu.memory_space<vmem>>, vector<1x32xf32>
    %139 = vector.broadcast %138 : vector<1x32xf32> to vector<288x32xf32>
    %140 = arith.addf %137, %139 : vector<288x32xf32>
    %141 = vector.broadcast %134 : vector<1x32xf32> to vector<288x32xf32>
    %142 = arith.mulf %116, %141 : vector<288x32xf32>
    %143 = arith.addf %142, %140 : vector<288x32xf32>
    %c0_97 = arith.constant 0 : index
    %c0_98 = arith.constant 0 : index
    %c0_99 = arith.constant 0 : index
    %144 = vector.load %arg15[%c0_97, %c0_98, %c0_99] : memref<1x288x32xf32, #tpu.memory_space<vmem>>, vector<1x288x32xf32>
    %145 = vector.shape_cast %144 : vector<1x288x32xf32> to vector<288x32xf32>
    %146 = vector.shape_cast %143 : vector<288x32xf32> to vector<1x288x32xf32>
    tpu.vector_store %arg15[%c0_97, %c0_98, %c0_99], %146 {strides = array<i32>} : memref<1x288x32xf32, #tpu.memory_space<vmem>>, vector<1x288x32xf32>,
    return
  }
  func.func @transform_0(%arg0: i32) -> (i32, i32, i32) {
    %c0_i32 = arith.constant 0 : i32
    %c0_i32_0 = arith.constant 0 : i32
    %c0_i32_1 = arith.constant 0 : i32
    return %arg0, %c0_i32, %c0_i32_0 : i32, i32, i32
  }
  func.func @transform_1(%arg0: i32) -> (i32, i32) {
    %c0_i32 = arith.constant 0 : i32
    %c0_i32_0 = arith.constant 0 : i32
    %c0_i32_1 = arith.constant 0 : i32
    return %c0_i32, %c0_i32_0 : i32, i32
  }
  func.func @transform_2(%arg0: i32) -> (i32, i32) {
    %c0_i32 = arith.constant 0 : i32
    %c0_i32_0 = arith.constant 0 : i32
    %c0_i32_1 = arith.constant 0 : i32
    return %c0_i32, %c0_i32_0 : i32, i32
  }
  func.func @transform_3(%arg0: i32) -> (i32, i32) {
    %c0_i32 = arith.constant 0 : i32
    %c0_i32_0 = arith.constant 0 : i32
    %c0_i32_1 = arith.constant 0 : i32
    return %c0_i32, %c0_i32_0 : i32, i32
  }
  func.func @transform_4(%arg0: i32) -> (i32, i32, i32) {
    %c0_i32 = arith.constant 0 : i32
    %c0_i32_0 = arith.constant 0 : i32
    %c0_i32_1 = arith.constant 0 : i32
    %c0_i32_2 = arith.constant 0 : i32
    return %c0_i32, %c0_i32_0, %c0_i32_1 : i32, i32, i32
  }
  func.func @transform_5(%arg0: i32) -> (i32, i32) {
    %c0_i32 = arith.constant 0 : i32
    %c0_i32_0 = arith.constant 0 : i32
    %c0_i32_1 = arith.constant 0 : i32
    return %c0_i32, %c0_i32_0 : i32, i32
  }
  func.func @transform_6(%arg0: i32) -> (i32, i32) {
    %c0_i32 = arith.constant 0 : i32
    %c0_i32_0 = arith.constant 0 : i32
    %c0_i32_1 = arith.constant 0 : i32
    return %c0_i32, %c0_i32_0 : i32, i32
  }
  func.func @transform_7(%arg0: i32) -> (i32, i32) {
    %c0_i32 = arith.constant 0 : i32
    %c0_i32_0 = arith.constant 0 : i32
    %c0_i32_1 = arith.constant 0 : i32
    return %c0_i32, %c0_i32_0 : i32, i32
  }
  func.func @transform_8(%arg0: i32) -> (i32, i32, i32) {
    %c0_i32 = arith.constant 0 : i32
    %c0_i32_0 = arith.constant 0 : i32
    %c0_i32_1 = arith.constant 0 : i32
    %c0_i32_2 = arith.constant 0 : i32
    return %c0_i32, %c0_i32_0, %c0_i32_1 : i32, i32, i32
  }
  func.func @transform_9(%arg0: i32) -> (i32, i32) {
    %c0_i32 = arith.constant 0 : i32
    %c0_i32_0 = arith.constant 0 : i32
    %c0_i32_1 = arith.constant 0 : i32
    return %c0_i32, %c0_i32_0 : i32, i32
  }
  func.func @transform_10(%arg0: i32) -> (i32, i32) {
    %c0_i32 = arith.constant 0 : i32
    %c0_i32_0 = arith.constant 0 : i32
    %c0_i32_1 = arith.constant 0 : i32
    return %c0_i32, %c0_i32_0 : i32, i32
  }
  func.func @transform_11(%arg0: i32) -> (i32, i32) {
    %c0_i32 = arith.constant 0 : i32
    %c0_i32_0 = arith.constant 0 : i32
    %c0_i32_1 = arith.constant 0 : i32
    return %c0_i32, %c0_i32_0 : i32, i32
  }
  func.func @transform_12(%arg0: i32) -> (i32, i32) {
    %c0_i32 = arith.constant 0 : i32
    %c0_i32_0 = arith.constant 0 : i32
    %c0_i32_1 = arith.constant 0 : i32
    return %c0_i32, %c0_i32_0 : i32, i32
  }
  func.func @transform_13(%arg0: i32) -> (i32, i32) {
    %c0_i32 = arith.constant 0 : i32
    %c0_i32_0 = arith.constant 0 : i32
    %c0_i32_1 = arith.constant 0 : i32
    return %c0_i32, %c0_i32_0 : i32, i32
  }
  func.func @transform_14(%arg0: i32) -> (i32, i32, i32) {
    %c0_i32 = arith.constant 0 : i32
    %c0_i32_0 = arith.constant 0 : i32
    %c0_i32_1 = arith.constant 0 : i32
    return %arg0, %c0_i32, %c0_i32_0 : i32, i32, i32
  }
}

</mosaic_0001>

<llo_original>
// kernel: mul.32
$region0: #{mul.32}
  %s0 = inlined_call_operand.vmem [shape: f32[26,18,1], index: 0, kind: input, shape index: {}]
  %s1 = inlined_call_operand.vmem [shape: f32[468], index: 1, kind: output, shape index: {}]
  $region1: #{mul.32} parent=0
    #allocation0 [shape = 'u8[4096]{0}', space=vmem, size = 0x1000, scoped, tag = 'scoped mem for output reshape']
    %v2 = vld [vmem:[%s0] sm:$0x1]
    %vm3 = vcmask 146432
    %4 = vst.msk [vmem:[#allocation0] sm:$0x1] %vm3, %v2
    %s5 = scalar_lea.vmem %s0, 7
    %v6 = vld [vmem:[%s5] sm:$0x1]
    %s7 = scalar_lea.vmem %s0, 7
    %v8 = vld [vmem:[%s7] sm:$0x1]
    %vm9 = vcmask 15360
    %v10 = vsel %vm9, %v8, %v6
    %11 = vrot.lane.b32.xlu0 %v10, 126
    %v12 = vpop.permute.xlu0 %11
    %vm13 = vcmask 130048
    %s14 = scalar_lea.vmem [#allocation0], 1
    %15 = vst.msk [vmem:[%s14] sm:$0x1] %vm13, %v12
    %vm16 = vcmask 1048560
    %17 = vst.msk [vmem:[#allocation0] sm:$0x1] %vm16, %v12
    %s18 = scalar_lea.vmem %s0, 14
    %v19 = vld [vmem:[%s18] sm:$0x1]
    %s20 = scalar_lea.vmem %s0, 14
    %v21 = vld [vmem:[%s20] sm:$0x1]
    %vm22 = vcmask 31744
    %v23 = vsel %vm22, %v21, %v19
    %24 = vrot.lane.b32.xlu0 %v23, 124
    %v25 = vpop.permute.xlu0 %24
    %vm26 = vcmask 113664
    %s27 = scalar_lea.vmem [#allocation0], 2
    %28 = vst.msk [vmem:[%s27] sm:$0x1] %vm26, %v25
    %vm29 = vcmask 1048544
    %s30 = scalar_lea.vmem [#allocation0], 1
    %31 = vst.msk [vmem:[%s30] sm:$0x1] %vm29, %v25
    %s32 = scalar_lea.vmem %s0, 21
    %v33 = vld [vmem:[%s32] sm:$0x1]
    %s34 = scalar_lea.vmem %s0, 21
    %v35 = vld [vmem:[%s34] sm:$0x1]
    %vm36 = vcmask 48128
    %v37 = vsel %vm36, %v35, %v33
    %38 = vrot.lane.b32.xlu0 %v37, 122
    %v39 = vpop.permute.xlu0 %38
    %vm40 = vcmask 97280
    %s41 = scalar_lea.vmem [#allocation0], 3
    %42 = vst.msk [vmem:[%s41] sm:$0x1] %vm40, %v39
    %vm43 = vcmask 1048528
    %s44 = scalar_lea.vmem [#allocation0], 2
    %45 = vst.msk [vmem:[%s44] sm:$0x1] %vm43, %v39
    %s46 = scalar_lea.vmem %s0, 6
    %v47 = vld [vmem:[%s46] sm:$0x1]
    %48 = vrot.lane.b32.xlu0 %v47, 108
    %v49 = vpop.permute.xlu0 %48
    %vm50 = vcmask 1032032
    %51 = vst.msk [vmem:[#allocation0] sm:$0x1] %vm50, %v49
    %s52 = scalar_lea.vmem %s0, 13
    %v53 = vld [vmem:[%s52] sm:$0x1]
    %54 = vrot.lane.b32.xlu0 %v53, 106
    %v55 = vpop.permute.xlu0 %54
    %vm56 = vcmask 1015632
    %s57 = scalar_lea.vmem [#allocation0], 1
    %58 = vst.msk [vmem:[%s57] sm:$0x1] %vm56, %v55
    %s59 = scalar_lea.vmem %s0, 20
    %v60 = vld [vmem:[%s59] sm:$0x1]
    %61 = vrot.lane.b32.xlu0 %v60, 104
    %v62 = vpop.permute.xlu0 %61
    %vm63 = vcmask 999232
    %s64 = scalar_lea.vmem [#allocation0], 2
    %65 = vst.msk [vmem:[%s64] sm:$0x1] %vm63, %v62
    %s66 = scalar_lea.vmem %s0, 5
    %v67 = vld [vmem:[%s66] sm:$0x1]
    %68 = vrot.lane.b32.xlu0 %v67, 90
    %v69 = vpop.permute.xlu0 %68
    %vm70 = vcmask 884432
    %71 = vst.msk [vmem:[#allocation0] sm:$0x1] %vm70, %v69
    %s72 = scalar_lea.vmem %s0, 12
    %v73 = vld [vmem:[%s72] sm:$0x1]
    %74 = vrot.lane.b32.xlu0 %v73, 88
    %v75 = vpop.permute.xlu0 %74
    %vm76 = vcmask 868032
    %s77 = scalar_lea.vmem [#allocation0], 1
    %78 = vst.msk [vmem:[%s77] sm:$0x1] %vm76, %v75
    %s79 = scalar_lea.vmem %s0, 19
    %v80 = vld [vmem:[%s79] sm:$0x1]
    %81 = vrot.lane.b32.xlu0 %v80, 86
    %v82 = vpop.permute.xlu0 %81
    %vm83 = vcmask 851632
    %s84 = scalar_lea.vmem [#allocation0], 2
    %85 = vst.msk [vmem:[%s84] sm:$0x1] %vm83, %v82
    %s86 = scalar_lea.vmem %s0, 4
    %v87 = vld [vmem:[%s86] sm:$0x1]
    %88 = vrot.lane.b32.xlu0 %v87, 72
    %v89 = vpop.permute.xlu0 %88
    %vm90 = vcmask 736832
    %91 = vst.msk [vmem:[#allocation0] sm:$0x1] %vm90, %v89
    %s92 = scalar_lea.vmem %s0, 11
    %v93 = vld [vmem:[%s92] sm:$0x1]
    %94 = vrot.lane.b32.xlu0 %v93, 70
    %v95 = vpop.permute.xlu0 %94
    %vm96 = vcmask 720432
    %s97 = scalar_lea.vmem [#allocation0], 1
    %98 = vst.msk [vmem:[%s97] sm:$0x1] %vm96, %v95
    %s99 = scalar_lea.vmem %s0, 18
    %v100 = vld [vmem:[%s99] sm:$0x1]
    %101 = vrot.lane.b32.xlu0 %v100, 68
    %v102 = vpop.permute.xlu0 %101
    %vm103 = vcmask 704032
    %s104 = scalar_lea.vmem [#allocation0], 2
    %105 = vst.msk [vmem:[%s104] sm:$0x1] %vm103, %v102
    %s106 = scalar_lea.vmem %s0, 25
    %v107 = vld [vmem:[%s106] sm:$0x1]
    %108 = vrot.lane.b32.xlu0 %v107, 66
    %v109 = vpop.permute.xlu0 %108
    %vm110 = vcmask 687632
    %s111 = scalar_lea.vmem [#allocation0], 3
    %112 = vst.msk [vmem:[%s111] sm:$0x1] %vm110, %v109
    %s113 = scalar_lea.vmem %s0, 3
    %v114 = vld [vmem:[%s113] sm:$0x1]
    %115 = vrot.lane.b32.xlu0 %v114, 54
    %v116 = vpop.permute.xlu0 %115
    %vm117 = vcmask 589232
    %118 = vst.msk [vmem:[#allocation0] sm:$0x1] %vm117, %v116
    %s119 = scalar_lea.vmem %s0, 10
    %v120 = vld [vmem:[%s119] sm:$0x1]
    %121 = vrot.lane.b32.xlu0 %v120, 52
    %v122 = vpop.permute.xlu0 %121
    %vm123 = vcmask 572832
    %s124 = scalar_lea.vmem [#allocation0], 1
    %125 = vst.msk [vmem:[%s124] sm:$0x1] %vm123, %v122
    %s126 = scalar_lea.vmem %s0, 17
    %v127 = vld [vmem:[%s126] sm:$0x1]
    %128 = vrot.lane.b32.xlu0 %v127, 50
    %v129 = vpop.permute.xlu0 %128
    %vm130 = vcmask 556432
    %s131 = scalar_lea.vmem [#allocation0], 2
    %132 = vst.msk [vmem:[%s131] sm:$0x1] %vm130, %v129
    %s133 = scalar_lea.vmem %s0, 24
    %v134 = vld [vmem:[%s133] sm:$0x1]
    %135 = vrot.lane.b32.xlu0 %v134, 48
    %v136 = vpop.permute.xlu0 %135
    %vm137 = vcmask 540032
    %s138 = scalar_lea.vmem [#allocation0], 3
    %139 = vst.msk [vmem:[%s138] sm:$0x1] %vm137, %v136
    %s140 = scalar_lea.vmem %s0, 2
    %v141 = vld [vmem:[%s140] sm:$0x1]
    %142 = vrot.lane.b32.xlu0 %v141, 36
    %v143 = vpop.permute.xlu0 %142
    %vm144 = vcmask 441632
    %145 = vst.msk [vmem:[#allocation0] sm:$0x1] %vm144, %v143
    %s146 = scalar_lea.vmem %s0, 9
    %v147 = vld [vmem:[%s146] sm:$0x1]
    %148 = vrot.lane.b32.xlu0 %v147, 34
    %v149 = vpop.permute.xlu0 %148
    %vm150 = vcmask 425232
    %s151 = scalar_lea.vmem [#allocation0], 1
    %152 = vst.msk [vmem:[%s151] sm:$0x1] %vm150, %v149
    %s153 = scalar_lea.vmem %s0, 16
    %v154 = vld [vmem:[%s153] sm:$0x1]
    %155 = vrot.lane.b32.xlu0 %v154, 32
    %v156 = vpop.permute.xlu0 %155
    %vm157 = vcmask 408832
    %s158 = scalar_lea.vmem [#allocation0], 2
    %159 = vst.msk [vmem:[%s158] sm:$0x1] %vm157, %v156
    %s160 = scalar_lea.vmem %s0, 23
    %v161 = vld [vmem:[%s160] sm:$0x1]
    %162 = vrot.lane.b32.xlu0 %v161, 30
    %v163 = vpop.permute.xlu0 %162
    %vm164 = vcmask 392432
    %s165 = scalar_lea.vmem [#allocation0], 3
    %166 = vst.msk [vmem:[%s165] sm:$0x1] %vm164, %v163
    %s167 = scalar_lea.vmem %s0, 1
    %v168 = vld [vmem:[%s167] sm:$0x1]
    %169 = vrot.lane.b32.xlu0 %v168, 18
    %v170 = vpop.permute.xlu0 %169
    %vm171 = vcmask 294032
    %172 = vst.msk [vmem:[#allocation0] sm:$0x1] %vm171, %v170
    %s173 = scalar_lea.vmem %s0, 8
    %v174 = vld [vmem:[%s173] sm:$0x1]
    %175 = vrot.lane.b32.xlu0 %v174, 16
    %v176 = vpop.permute.xlu0 %175
    %vm177 = vcmask 277632
    %s178 = scalar_lea.vmem [#allocation0], 1
    %179 = vst.msk [vmem:[%s178] sm:$0x1] %vm177, %v176
    %s180 = scalar_lea.vmem %s0, 15
    %v181 = vld [vmem:[%s180] sm:$0x1]
    %182 = vrot.lane.b32.xlu0 %v181, 14
    %v183 = vpop.permute.xlu0 %182
    %vm184 = vcmask 261232
    %s185 = scalar_lea.vmem [#allocation0], 2
    %186 = vst.msk [vmem:[%s185] sm:$0x1] %vm184, %v183
    %s187 = scalar_lea.vmem %s0, 22
    %v188 = vld [vmem:[%s187] sm:$0x1]
    %189 = vrot.lane.b32.xlu0 %v188, 12
    %v190 = vpop.permute.xlu0 %189
    %vm191 = vcmask 244832
    %s192 = scalar_lea.vmem [#allocation0], 3
    %193 = vst.msk [vmem:[%s192] sm:$0x1] %vm191, %v190
    %s195 = sshllo.u32 0, 4
    %v197 = vld [vmem:[#allocation0] sm:%s195]
    %s198 = sshllo.u32 0, 4
    %199 = vst [vmem:[%s1] sm:%s198] %v197

// kernel: bottleneck_ir_se_forward.1
$region0: #{bottleneck_ir_se_forward.1}
  #allocation0 [shape = 'u32[]', space=smem, size = 0x4, offset = 0x4, fixed_abs, tag = 'smem constant byte address 0x4 - core index']
  #allocation1 [shape = 'u32[144,128]{1,0:T(1,128)}', space=vmem, size = 0x12000, scoped, tag = 'internal scratch']
  %s0 = inlined_call_operand.vmem [shape: bf16[2,468,16], index: 0, kind: input, shape index: {}]
  %s1 = inlined_call_operand.vmem [shape: f32[468,16], index: 1, kind: input, shape index: {}]
  %s2 = inlined_call_operand.vmem [shape: f32[396,1], index: 2, kind: input, shape index: {}]
  %s3 = inlined_call_operand.vmem [shape: f32[288,1], index: 3, kind: input, shape index: {}]
  %s4 = inlined_call_operand.vmem [shape: bf16[9,16,32], index: 4, kind: input, shape index: {}]
  %s5 = inlined_call_operand.vmem [shape: f32[1,16], index: 5, kind: input, shape index: {}]
  %s6 = inlined_call_operand.vmem [shape: f32[1,32], index: 6, kind: input, shape index: {}]
  %s7 = inlined_call_operand.vmem [shape: f32[1,32], index: 7, kind: input, shape index: {}]
  %s8 = inlined_call_operand.vmem [shape: bf16[9,32,32], index: 8, kind: input, shape index: {}]
  %s9 = inlined_call_operand.vmem [shape: f32[1,32], index: 9, kind: input, shape index: {}]
  %s10 = inlined_call_operand.vmem [shape: f32[32,2], index: 10, kind: input, shape index: {}]
  %s11 = inlined_call_operand.vmem [shape: f32[2,32], index: 11, kind: input, shape index: {}]
  %s12 = inlined_call_operand.vmem [shape: bf16[16,32], index: 12, kind: input, shape index: {}]
  %s13 = inlined_call_operand.vmem [shape: f32[1,32], index: 13, kind: input, shape index: {}]
  %s14 = inlined_call_operand.vmem [shape: f32[2,288,32], index: 14, kind: output, shape index: {}]
  %s15 = sld [smem:[#allocation0]]
  $region89: #{bottleneck_ir_se_forward.1} parent=0
    _
  %s17 = ssub.s32 1, %s15
  %s18 = scalar_select 0, %s17, %s15
  loop: start=0, step=1, limit=4
  $region2: #{bottleneck_ir_se_forward.1} parent=0 // loop_pre_header
    _
  $region3: #{bottleneck_ir_se_forward.1} parent=0 // loop_header
    %s20 = sphi 0, %s24
    %p21 = scmp.ge.s32.totalorder %s20, 4
    %s30 = sphi 0, %s32
    %s33 = sphi 0, %s30
    %s34 = sphi 0, %s33
    %s50 = sphi 0, %s34
    %s54 = sphi 0, %s54
    %s56 = sphi 0, %s54
    %s57 = sphi 0, %s56
    %s71 = sphi 0, %s57
    %s75 = sphi 0, %s75
    %s77 = sphi 0, %s75
    %s78 = sphi 0, %s77
    %s92 = sphi 0, %s78
    %s96 = sphi 0, %s96
    %s98 = sphi 0, %s96
    %s99 = sphi 0, %s98
    %s113 = sphi 0, %s99
    %s117 = sphi 0, %s117
    %s119 = sphi 0, %s117
    %s120 = sphi 0, %s119
    %s134 = sphi 0, %s120
    %s138 = sphi 0, %s138
    %s140 = sphi 0, %s138
    %s141 = sphi 0, %s140
    %s155 = sphi 0, %s141
    %s159 = sphi 0, %s159
    %s161 = sphi 0, %s159
    %s162 = sphi 0, %s161
    %s176 = sphi 0, %s162
    %s180 = sphi 0, %s180
    %s182 = sphi 0, %s180
    %s183 = sphi 0, %s182
    %s197 = sphi 0, %s183
    %s201 = sphi 0, %s201
    %s203 = sphi 0, %s201
    %s204 = sphi 0, %s203
    %s218 = sphi 0, %s204
    %s222 = sphi 0, %s222
    %s224 = sphi 0, %s222
    %s225 = sphi 0, %s224
    %s239 = sphi 0, %s225
    %s243 = sphi 0, %s243
    %s245 = sphi 0, %s243
    %s246 = sphi 0, %s245
    %s260 = sphi 0, %s246
    %s264 = sphi 0, %s264
    %s266 = sphi 0, %s264
    %s267 = sphi 0, %s266
    %s281 = sphi 0, %s267
    %s285 = sphi 0, %s285
    %s287 = sphi 0, %s285
    %s288 = sphi 0, %s287
    %s302 = sphi 0, %s288
    %s306 = sphi 0, %s306
    %s308 = sphi 0, %s306
    %s309 = sphi 0, %s308
    %s323 = sphi 0, %s309
    %s329 = sphi 0, %s331
    %s332 = sphi 0, %s329
    %s333 = sphi 0, %s332
    %s349 = sphi 0, %s333
  $region4: #{bottleneck_ir_se_forward.1} parent=0 // loop_header_branch
    %23 = sbr.rel (%p21) target = $region8
  $region5: #{bottleneck_ir_se_forward.1} parent=0 // loop_body
    %s25 = ssub.s32 %s20, 1
    %s26 = ssub.s32 %s20, 2
    %s27 = sadd.s32 %s20, 1
    %s28 = ssub.s32 %s20, %s27
    %p29 = scmp.eq.s32.totalorder %s28, 0
    %s31 = sadd.s32 %s30, 1
    %s32 = scalar_select %p29, %s30, %s31
    %p35 = pneg %p29
    %p36 = scmp.eq.s32.totalorder %s20, 1
    %p37 = por %p35, %p36
    %p38 = scmp.ne.s32.totalorder %s30, %s33
    %p39 = scmp.eq.s32.totalorder %s20, 0
    %p40 = por %p38, %p39
    %p41 = scmp.ne.s32.totalorder %s30, %s33
    %p42 = scmp.eq.s32.totalorder %s25, 1
    %p43 = por %p41, %p42
    %p44 = scmp.ne.s32.totalorder %s33, %s34
    %p45 = scmp.eq.s32.totalorder %s25, 0
    %p46 = por %p44, %p45
    %p47 = scmp.ne.s32.totalorder %s33, %s34
    %p48 = scmp.eq.s32.totalorder %s26, 1
    %p49 = por %p47, %p48
    %p51 = scmp.ne.s32.totalorder %s34, %s50
    %p52 = scmp.eq.s32.totalorder %s26, 0
    %p53 = por %p51, %p52
    %s55 = sadd.s32 %s54, 1
    %p58 = scmp.eq.s32.totalorder %s20, 1
    %p59 = scmp.ne.s32.totalorder %s54, %s56
    %p60 = scmp.eq.s32.totalorder %s20, 0
    %p61 = por %p59, %p60
    %p62 = scmp.ne.s32.totalorder %s54, %s56
    %p63 = scmp.eq.s32.totalorder %s25, 1
    %p64 = por %p62, %p63
    %p65 = scmp.ne.s32.totalorder %s56, %s57
    %p66 = scmp.eq.s32.totalorder %s25, 0
    %p67 = por %p65, %p66
    %p68 = scmp.ne.s32.totalorder %s56, %s57
    %p69 = scmp.eq.s32.totalorder %s26, 1
    %p70 = por %p68, %p69
    %p72 = scmp.ne.s32.totalorder %s57, %s71
    %p73 = scmp.eq.s32.totalorder %s26, 0
    %p74 = por %p72, %p73
    %s76 = sadd.s32 %s75, 1
    %p79 = scmp.eq.s32.totalorder %s20, 1
    %p80 = scmp.ne.s32.totalorder %s75, %s77
    %p81 = scmp.eq.s32.totalorder %s20, 0
    %p82 = por %p80, %p81
    %p83 = scmp.ne.s32.totalorder %s75, %s77
    %p84 = scmp.eq.s32.totalorder %s25, 1
    %p85 = por %p83, %p84
    %p86 = scmp.ne.s32.totalorder %s77, %s78
    %p87 = scmp.eq.s32.totalorder %s25, 0
    %p88 = por %p86, %p87
    %p89 = scmp.ne.s32.totalorder %s77, %s78
    %p90 = scmp.eq.s32.totalorder %s26, 1
    %p91 = por %p89, %p90
    %p93 = scmp.ne.s32.totalorder %s78, %s92
    %p94 = scmp.eq.s32.totalorder %s26, 0
    %p95 = por %p93, %p94
    %s97 = sadd.s32 %s96, 1
    %p100 = scmp.eq.s32.totalorder %s20, 1
    %p101 = scmp.ne.s32.totalorder %s96, %s98
    %p102 = scmp.eq.s32.totalorder %s20, 0
    %p103 = por %p101, %p102
    %p104 = scmp.ne.s32.totalorder %s96, %s98
    %p105 = scmp.eq.s32.totalorder %s25, 1
    %p106 = por %p104, %p105
    %p107 = scmp.ne.s32.totalorder %s98, %s99
    %p108 = scmp.eq.s32.totalorder %s25, 0
    %p109 = por %p107, %p108
    %p110 = scmp.ne.s32.totalorder %s98, %s99
    %p111 = scmp.eq.s32.totalorder %s26, 1
    %p112 = por %p110, %p111
    %p114 = scmp.ne.s32.totalorder %s99, %s113
    %p115 = scmp.eq.s32.totalorder %s26, 0
    %p116 = por %p114, %p115
    %s118 = sadd.s32 %s117, 1
    %p121 = scmp.eq.s32.totalorder %s20, 1
    %p122 = scmp.ne.s32.totalorder %s117, %s119
    %p123 = scmp.eq.s32.totalorder %s20, 0
    %p124 = por %p122, %p123
    %p125 = scmp.ne.s32.totalorder %s117, %s119
    %p126 = scmp.eq.s32.totalorder %s25, 1
    %p127 = por %p125, %p126
    %p128 = scmp.ne.s32.totalorder %s119, %s120
    %p129 = scmp.eq.s32.totalorder %s25, 0
    %p130 = por %p128, %p129
    %p131 = scmp.ne.s32.totalorder %s119, %s120
    %p132 = scmp.eq.s32.totalorder %s26, 1
    %p133 = por %p131, %p132
    %p135 = scmp.ne.s32.totalorder %s120, %s134
    %p136 = scmp.eq.s32.totalorder %s26, 0
    %p137 = por %p135, %p136
    %s139 = sadd.s32 %s138, 1
    %p142 = scmp.eq.s32.totalorder %s20, 1
    %p143 = scmp.ne.s32.totalorder %s138, %s140
    %p144 = scmp.eq.s32.totalorder %s20, 0
    %p145 = por %p143, %p144
    %p146 = scmp.ne.s32.totalorder %s138, %s140
    %p147 = scmp.eq.s32.totalorder %s25, 1
    %p148 = por %p146, %p147
    %p149 = scmp.ne.s32.totalorder %s140, %s141
    %p150 = scmp.eq.s32.totalorder %s25, 0
    %p151 = por %p149, %p150
    %p152 = scmp.ne.s32.totalorder %s140, %s141
    %p153 = scmp.eq.s32.totalorder %s26, 1
    %p154 = por %p152, %p153
    %p156 = scmp.ne.s32.totalorder %s141, %s155
    %p157 = scmp.eq.s32.totalorder %s26, 0
    %p158 = por %p156, %p157
    %s160 = sadd.s32 %s159, 1
    %p163 = scmp.eq.s32.totalorder %s20, 1
    %p164 = scmp.ne.s32.totalorder %s159, %s161
    %p165 = scmp.eq.s32.totalorder %s20, 0
    %p166 = por %p164, %p165
    %p167 = scmp.ne.s32.totalorder %s159, %s161
    %p168 = scmp.eq.s32.totalorder %s25, 1
    %p169 = por %p167, %p168
    %p170 = scmp.ne.s32.totalorder %s161, %s162
    %p171 = scmp.eq.s32.totalorder %s25, 0
    %p172 = por %p170, %p171
    %p173 = scmp.ne.s32.totalorder %s161, %s162
    %p174 = scmp.eq.s32.totalorder %s26, 1
    %p175 = por %p173, %p174
    %p177 = scmp.ne.s32.totalorder %s162, %s176
    %p178 = scmp.eq.s32.totalorder %s26, 0
    %p179 = por %p177, %p178
    %s181 = sadd.s32 %s180, 1
    %p184 = scmp.eq.s32.totalorder %s20, 1
    %p185 = scmp.ne.s32.totalorder %s180, %s182
    %p186 = scmp.eq.s32.totalorder %s20, 0
    %p187 = por %p185, %p186
    %p188 = scmp.ne.s32.totalorder %s180, %s182
    %p189 = scmp.eq.s32.totalorder %s25, 1
    %p190 = por %p188, %p189
    %p191 = scmp.ne.s32.totalorder %s182, %s183
    %p192 = scmp.eq.s32.totalorder %s25, 0
    %p193 = por %p191, %p192
    %p194 = scmp.ne.s32.totalorder %s182, %s183
    %p195 = scmp.eq.s32.totalorder %s26, 1
    %p196 = por %p194, %p195
    %p198 = scmp.ne.s32.totalorder %s183, %s197
    %p199 = scmp.eq.s32.totalorder %s26, 0
    %p200 = por %p198, %p199
    %s202 = sadd.s32 %s201, 1
    %p205 = scmp.eq.s32.totalorder %s20, 1
    %p206 = scmp.ne.s32.totalorder %s201, %s203
    %p207 = scmp.eq.s32.totalorder %s20, 0
    %p208 = por %p206, %p207
    %p209 = scmp.ne.s32.totalorder %s201, %s203
    %p210 = scmp.eq.s32.totalorder %s25, 1
    %p211 = por %p209, %p210
    %p212 = scmp.ne.s32.totalorder %s203, %s204
    %p213 = scmp.eq.s32.totalorder %s25, 0
    %p214 = por %p212, %p213
    %p215 = scmp.ne.s32.totalorder %s203, %s204
    %p216 = scmp.eq.s32.totalorder %s26, 1
    %p217 = por %p215, %p216
    %p219 = scmp.ne.s32.totalorder %s204, %s218
    %p220 = scmp.eq.s32.totalorder %s26, 0
    %p221 = por %p219, %p220
    %s223 = sadd.s32 %s222, 1
    %p226 = scmp.eq.s32.totalorder %s20, 1
    %p227 = scmp.ne.s32.totalorder %s222, %s224
    %p228 = scmp.eq.s32.totalorder %s20, 0
    %p229 = por %p227, %p228
    %p230 = scmp.ne.s32.totalorder %s222, %s224
    %p231 = scmp.eq.s32.totalorder %s25, 1
    %p232 = por %p230, %p231
    %p233 = scmp.ne.s32.totalorder %s224, %s225
    %p234 = scmp.eq.s32.totalorder %s25, 0
    %p235 = por %p233, %p234
    %p236 = scmp.ne.s32.totalorder %s224, %s225
    %p237 = scmp.eq.s32.totalorder %s26, 1
    %p238 = por %p236, %p237
    %p240 = scmp.ne.s32.totalorder %s225, %s239
    %p241 = scmp.eq.s32.totalorder %s26, 0
    %p242 = por %p240, %p241
    %s244 = sadd.s32 %s243, 1
    %p247 = scmp.eq.s32.totalorder %s20, 1
    %p248 = scmp.ne.s32.totalorder %s243, %s245
    %p249 = scmp.eq.s32.totalorder %s20, 0
    %p250 = por %p248, %p249
    %p251 = scmp.ne.s32.totalorder %s243, %s245
    %p252 = scmp.eq.s32.totalorder %s25, 1
    %p253 = por %p251, %p252
    %p254 = scmp.ne.s32.totalorder %s245, %s246
    %p255 = scmp.eq.s32.totalorder %s25, 0
    %p256 = por %p254, %p255
    %p257 = scmp.ne.s32.totalorder %s245, %s246
    %p258 = scmp.eq.s32.totalorder %s26, 1
    %p259 = por %p257, %p258
    %p261 = scmp.ne.s32.totalorder %s246, %s260
    %p262 = scmp.eq.s32.totalorder %s26, 0
    %p263 = por %p261, %p262
    %s265 = sadd.s32 %s264, 1
    %p268 = scmp.eq.s32.totalorder %s20, 1
    %p269 = scmp.ne.s32.totalorder %s264, %s266
    %p270 = scmp.eq.s32.totalorder %s20, 0
    %p271 = por %p269, %p270
    %p272 = scmp.ne.s32.totalorder %s264, %s266
    %p273 = scmp.eq.s32.totalorder %s25, 1
    %p274 = por %p272, %p273
    %p275 = scmp.ne.s32.totalorder %s266, %s267
    %p276 = scmp.eq.s32.totalorder %s25, 0
    %p277 = por %p275, %p276
    %p278 = scmp.ne.s32.totalorder %s266, %s267
    %p279 = scmp.eq.s32.totalorder %s26, 1
    %p280 = por %p278, %p279
    %p282 = scmp.ne.s32.totalorder %s267, %s281
    %p283 = scmp.eq.s32.totalorder %s26, 0
    %p284 = por %p282, %p283
    %s286 = sadd.s32 %s285, 1
    %p289 = scmp.eq.s32.totalorder %s20, 1
    %p290 = scmp.ne.s32.totalorder %s285, %s287
    %p291 = scmp.eq.s32.totalorder %s20, 0
    %p292 = por %p290, %p291
    %p293 = scmp.ne.s32.totalorder %s285, %s287
    %p294 = scmp.eq.s32.totalorder %s25, 1
    %p295 = por %p293, %p294
    %p296 = scmp.ne.s32.totalorder %s287, %s288
    %p297 = scmp.eq.s32.totalorder %s25, 0
    %p298 = por %p296, %p297
    %p299 = scmp.ne.s32.totalorder %s287, %s288
    %p300 = scmp.eq.s32.totalorder %s26, 1
    %p301 = por %p299, %p300
    %p303 = scmp.ne.s32.totalorder %s288, %s302
    %p304 = scmp.eq.s32.totalorder %s26, 0
    %p305 = por %p303, %p304
    %s307 = sadd.s32 %s306, 1
    %p310 = scmp.eq.s32.totalorder %s20, 1
    %p311 = scmp.ne.s32.totalorder %s306, %s308
    %p312 = scmp.eq.s32.totalorder %s20, 0
    %p313 = por %p311, %p312
    %p314 = scmp.ne.s32.totalorder %s306, %s308
    %p315 = scmp.eq.s32.totalorder %s25, 1
    %p316 = por %p314, %p315
    %p317 = scmp.ne.s32.totalorder %s308, %s309
    %p318 = scmp.eq.s32.totalorder %s25, 0
    %p319 = por %p317, %p318
    %p320 = scmp.ne.s32.totalorder %s308, %s309
    %p321 = scmp.eq.s32.totalorder %s26, 1
    %p322 = por %p320, %p321
    %p324 = scmp.ne.s32.totalorder %s309, %s323
    %p325 = scmp.eq.s32.totalorder %s26, 0
    %p326 = por %p324, %p325
    %s327 = ssub.s32 %s20, %s27
    %p328 = scmp.eq.s32.totalorder %s327, 0
    %s330 = sadd.s32 %s329, 1
    %s331 = scalar_select %p328, %s329, %s330
    %p334 = pneg %p328
    %p335 = scmp.eq.s32.totalorder %s20, 1
    %p336 = por %p334, %p335
    %p337 = scmp.ne.s32.totalorder %s329, %s332
    %p338 = scmp.eq.s32.totalorder %s20, 0
    %p339 = por %p337, %p338
    %p340 = scmp.ne.s32.totalorder %s329, %s332
    %p341 = scmp.eq.s32.totalorder %s25, 1
    %p342 = por %p340, %p341
    %p343 = scmp.ne.s32.totalorder %s332, %s333
    %p344 = scmp.eq.s32.totalorder %s25, 0
    %p345 = por %p343, %p344
    %p346 = scmp.ne.s32.totalorder %s332, %s333
    %p347 = scmp.eq.s32.totalorder %s26, 1
    %p348 = por %p346, %p347
    %p350 = scmp.ne.s32.totalorder %s333, %s349
    %p351 = scmp.eq.s32.totalorder %s26, 0
    %p352 = por %p350, %p351
    %p353 = scmp.le.s32.totalorder 1, %s20
    %p354 = scmp.lt.s32.totalorder %s20, 3
    %p355 = pnand %p353, %p354
    %p356 = pneg %p355
    // Predicated region
    $region9: #{bottleneck_ir_se_forward.1} parent=5 // pred_check
      _
    $region10: #{bottleneck_ir_se_forward.1} parent=5 // pred_check_branch
      %358 = sbr.rel (%p355) target = $region12
    $region11: #{bottleneck_ir_se_forward.1} parent=5 // pred_region
      %s359 = ssub.s32 %s20, 1
      // Predicated region
      $region13: #{bottleneck_ir_se_forward.1} parent=11 // pred_check
        %p360 = pneg %p67
      $region14: #{bottleneck_ir_se_forward.1} parent=11 // pred_check_branch
        %362 = sbr.rel (%p360) target = $region16
      $region15: #{bottleneck_ir_se_forward.1} parent=11 // pred_region
        _
      $region16: #{bottleneck_ir_se_forward.1} parent=11 // pred_fallthru
        _
      // Predicated region
      $region17: #{bottleneck_ir_se_forward.1} parent=11 // pred_check
        %p363 = pneg %p88
      $region18: #{bottleneck_ir_se_forward.1} parent=11 // pred_check_branch
        %365 = sbr.rel (%p363) target = $region20
      $region19: #{bottleneck_ir_se_forward.1} parent=11 // pred_region
        _
      $region20: #{bottleneck_ir_se_forward.1} parent=11 // pred_fallthru
        _
      // Predicated region
      $region21: #{bottleneck_ir_se_forward.1} parent=11 // pred_check
        %p366 = pneg %p109
      $region22: #{bottleneck_ir_se_forward.1} parent=11 // pred_check_branch
        %368 = sbr.rel (%p366) target = $region24
      $region23: #{bottleneck_ir_se_forward.1} parent=11 // pred_region
        _
      $region24: #{bottleneck_ir_se_forward.1} parent=11 // pred_fallthru
        _
      // Predicated region
      $region25: #{bottleneck_ir_se_forward.1} parent=11 // pred_check
        %p369 = pneg %p130
      $region26: #{bottleneck_ir_se_forward.1} parent=11 // pred_check_branch
        %371 = sbr.rel (%p369) target = $region28
      $region27: #{bottleneck_ir_se_forward.1} parent=11 // pred_region
        _
      $region28: #{bottleneck_ir_se_forward.1} parent=11 // pred_fallthru
        _
      // Predicated region
      $region29: #{bottleneck_ir_se_forward.1} parent=11 // pred_check
        %p372 = pneg %p151
      $region30: #{bottleneck_ir_se_forward.1} parent=11 // pred_check_branch
        %374 = sbr.rel (%p372) target = $region32
      $region31: #{bottleneck_ir_se_forward.1} parent=11 // pred_region
        _
      $region32: #{bottleneck_ir_se_forward.1} parent=11 // pred_fallthru
        _
      // Predicated region
      $region33: #{bottleneck_ir_se_forward.1} parent=11 // pred_check
        %p375 = pneg %p172
      $region34: #{bottleneck_ir_se_forward.1} parent=11 // pred_check_branch
        %377 = sbr.rel (%p375) target = $region36
      $region35: #{bottleneck_ir_se_forward.1} parent=11 // pred_region
        _
      $region36: #{bottleneck_ir_se_forward.1} parent=11 // pred_fallthru
        _
      // Predicated region
      $region37: #{bottleneck_ir_se_forward.1} parent=11 // pred_check
        %p378 = pneg %p193
      $region38: #{bottleneck_ir_se_forward.1} parent=11 // pred_check_branch
        %380 = sbr.rel (%p378) target = $region40
      $region39: #{bottleneck_ir_se_forward.1} parent=11 // pred_region
        _
      $region40: #{bottleneck_ir_se_forward.1} parent=11 // pred_fallthru
        _
      // Predicated region
      $region41: #{bottleneck_ir_se_forward.1} parent=11 // pred_check
        %p381 = pneg %p214
      $region42: #{bottleneck_ir_se_forward.1} parent=11 // pred_check_branch
        %383 = sbr.rel (%p381) target = $region44
      $region43: #{bottleneck_ir_se_forward.1} parent=11 // pred_region
        _
      $region44: #{bottleneck_ir_se_forward.1} parent=11 // pred_fallthru
        _
      // Predicated region
      $region45: #{bottleneck_ir_se_forward.1} parent=11 // pred_check
        %p384 = pneg %p235
      $region46: #{bottleneck_ir_se_forward.1} parent=11 // pred_check_branch
        %386 = sbr.rel (%p384) target = $region48
      $region47: #{bottleneck_ir_se_forward.1} parent=11 // pred_region
        _
      $region48: #{bottleneck_ir_se_forward.1} parent=11 // pred_fallthru
        _
      // Predicated region
      $region49: #{bottleneck_ir_se_forward.1} parent=11 // pred_check
        %p387 = pneg %p256
      $region50: #{bottleneck_ir_se_forward.1} parent=11 // pred_check_branch
        %389 = sbr.rel (%p387) target = $region52
      $region51: #{bottleneck_ir_se_forward.1} parent=11 // pred_region
        _
      $region52: #{bottleneck_ir_se_forward.1} parent=11 // pred_fallthru
        _
      // Predicated region
      $region53: #{bottleneck_ir_se_forward.1} parent=11 // pred_check
        %p390 = pneg %p277
      $region54: #{bottleneck_ir_se_forward.1} parent=11 // pred_check_branch
        %392 = sbr.rel (%p390) target = $region56
      $region55: #{bottleneck_ir_se_forward.1} parent=11 // pred_region
        _
      $region56: #{bottleneck_ir_se_forward.1} parent=11 // pred_fallthru
        _
      // Predicated region
      $region57: #{bottleneck_ir_se_forward.1} parent=11 // pred_check
        %p393 = pneg %p298
      $region58: #{bottleneck_ir_se_forward.1} parent=11 // pred_check_branch
        %395 = sbr.rel (%p393) target = $region60
      $region59: #{bottleneck_ir_se_forward.1} parent=11 // pred_region
        _
      $region60: #{bottleneck_ir_se_forward.1} parent=11 // pred_fallthru
        _
      // Predicated region
      $region61: #{bottleneck_ir_se_forward.1} parent=11 // pred_check
        %p396 = pneg %p319
      $region62: #{bottleneck_ir_se_forward.1} parent=11 // pred_check_branch
        %398 = sbr.rel (%p396) target = $region64
      $region63: #{bottleneck_ir_se_forward.1} parent=11 // pred_region
        _
      $region64: #{bottleneck_ir_se_forward.1} parent=11 // pred_fallthru
        _
    $region12: #{bottleneck_ir_se_forward.1} parent=5 // pred_fallthru
      _
    %p399 = scmp.lt.s32.totalorder %s20, 2
    // Predicated region
    $region65: #{bottleneck_ir_se_forward.1} parent=5 // pred_check
      %p400 = pneg %p399
    $region66: #{bottleneck_ir_se_forward.1} parent=5 // pred_check_branch
      %402 = sbr.rel (%p400) target = $region68
    $region67: #{bottleneck_ir_se_forward.1} parent=5 // pred_region
      // Predicated region
      $region69: #{bottleneck_ir_se_forward.1} parent=67 // pred_check
        %p403 = pneg %p40
      $region70: #{bottleneck_ir_se_forward.1} parent=67 // pred_check_branch
        %405 = sbr.rel (%p403) target = $region72
      $region71: #{bottleneck_ir_se_forward.1} parent=67 // pred_region
        %p406 = scmp.lt.s32.totalorder %s20, 1
        %s407 = scalar_select %p406, %s20, 1
        %s408 = smul.addr %s407, 59
        %s409 = smul.addr %s408, 4
        %s410 = scalar_lea.vmem %s0, %s409
      $region72: #{bottleneck_ir_se_forward.1} parent=67 // pred_fallthru
        _
    $region68: #{bottleneck_ir_se_forward.1} parent=5 // pred_fallthru
      _
    %p411 = scmp.le.s32.totalorder 1, %s20
    %p412 = scmp.lt.s32.totalorder %s20, 3
    %p413 = pnand %p411, %p412
    %p414 = pneg %p413
    // Predicated region
    $region73: #{bottleneck_ir_se_forward.1} parent=5 // pred_check
      _
    $region74: #{bottleneck_ir_se_forward.1} parent=5 // pred_check_branch
      %416 = sbr.rel (%p413) target = $region76
    $region75: #{bottleneck_ir_se_forward.1} parent=5 // pred_region
      %s417 = ssub.s32 %s20, 1
      %p418 = scmp.lt.s32.totalorder %s25, 1
      %s419 = scalar_select %p418, %s25, 1
      %s420 = smul.addr %s419, 59
      %s421 = smul.addr %s420, 4
      %s422 = scalar_lea.vmem %s0, %s421
      %p423 = pneg %p46
      %p424 = pneg %p43
      %p425 = pneg %p67
      %p426 = pneg %p64
      %p427 = pneg %p88
      %p428 = pneg %p85
      %p429 = pneg %p109
      %p430 = pneg %p106
      %p431 = pneg %p130
      %p432 = pneg %p127
      %p433 = pneg %p151
      %p434 = pneg %p148
      %p435 = pneg %p172
      %p436 = pneg %p169
      %p437 = pneg %p193
      %p438 = pneg %p190
      %p439 = pneg %p214
      %p440 = pneg %p211
      %p441 = pneg %p235
      %p442 = pneg %p232
      %p443 = pneg %p256
      %p444 = pneg %p253
      %p445 = pneg %p277
      %p446 = pneg %p274
      %p447 = pneg %p298
      %p448 = pneg %p295
      %p449 = pneg %p319
      %p450 = pneg %p316
      %p451 = pneg %p345
      %p452 = pneg %p342
      %p453 = scmp.lt.s32.totalorder %s25, 1
      %s454 = scalar_select %p453, %s25, 1
      %s455 = smul.addr %s454, 36
      %s456 = smul.addr %s455, 8
      %s457 = scalar_lea.vmem %s14, %s456
      %p458 = scmp.lt.s32.totalorder %s25, 1
      %s459 = scalar_select %p458, %s25, 1
      %s460 = smul.addr %s459, 59
      %s461 = smul.addr %s460, 4
      %s462 = scalar_lea.vmem %s0, %s461
      %p463 = scmp.lt.s32.totalorder %s25, 1
      %s464 = scalar_select %p463, %s25, 1
      %s465 = smul.addr %s464, 36
      %s466 = smul.addr %s465, 8
      %s467 = scalar_lea.vmem %s14, %s466
      %v469 = vld [vmem:[%s462 + $0x8] sm:$0xf]
      %v470 = vld [vmem:[%s462 + $0xc] sm:$0xf]
      %v471 = vld [vmem:[%s462 + $0x10] sm:$0xf]
      %v472 = vld [vmem:[%s462 + $0x14] sm:$0xf]
      %v473 = vld [vmem:[%s462 + $0x18] sm:$0xf]
      %v474 = vld [vmem:[%s462 + $0x1c] sm:$0xf]
      %v475 = vld [vmem:[%s462 + $0x20] sm:$0xf]
      %v476 = vld [vmem:[%s462 + $0x24] sm:$0xf]
      %v477 = vld [vmem:[%s462 + $0x28] sm:$0xf]
      %v478 = vld [vmem:[%s462 + $0x2c] sm:$0xf]
      %v479 = vld [vmem:[%s462 + $0x30] sm:$0xf]
      %v480 = vld [vmem:[%s462 + $0x34] sm:$0xf]
      %v481 = vld [vmem:[%s462 + $0x38] sm:$0xf]
      %v482 = vld [vmem:[%s462 + $0x3c] sm:$0xf]
      %v483 = vld [vmem:[%s462 + $0x40] sm:$0xf]
      %v484 = vld [vmem:[%s462 + $0x44] sm:$0xf]
      %v485 = vld [vmem:[%s462 + $0x48] sm:$0xf]
      %v486 = vld [vmem:[%s462 + $0x4c] sm:$0xf]
      %v487 = vld [vmem:[%s462 + $0x50] sm:$0xf]
      %v488 = vld [vmem:[%s462 + $0x54] sm:$0xf]
      %v489 = vld [vmem:[%s462 + $0x58] sm:$0xf]
      %v490 = vld [vmem:[%s462 + $0x5c] sm:$0xf]
      %v491 = vld [vmem:[%s462 + $0x60] sm:$0xf]
      %v492 = vld [vmem:[%s462 + $0x64] sm:$0xf]
      %v493 = vld [vmem:[%s462 + $0x68] sm:$0xf]
      %v494 = vld [vmem:[%s462 + $0x6c] sm:$0xf]
      %v495 = vld [vmem:[%s462 + $0x70] sm:$0xf]
      %v496 = vld [vmem:[%s462 + $0x74] sm:$0xf]
      %v497 = vld [vmem:[%s462 + $0x78] sm:$0xf]
      %v498 = vld [vmem:[%s462 + $0x7c] sm:$0xf]
      %v499 = vld [vmem:[%s462 + $0x80] sm:$0xf]
      %v500 = vld [vmem:[%s462 + $0x84] sm:$0xf]
      %v501 = vld [vmem:[%s462 + $0x88] sm:$0xf]
      %v502 = vld [vmem:[%s462 + $0x8c] sm:$0xf]
      %v503 = vld [vmem:[%s462 + $0x90] sm:$0xf]
      %v504 = vld [vmem:[%s462 + $0x94] sm:$0xf]
      %v505 = vld [vmem:[%s462 + $0x98] sm:$0xf]
      %v506 = vld [vmem:[%s462 + $0x9c] sm:$0xf]
      %v507 = vld [vmem:[%s462 + $0xa0] sm:$0xf]
      %v508 = vld [vmem:[%s462 + $0xa4] sm:$0xf]
      %v509 = vld [vmem:[%s462 + $0xa8] sm:$0xf]
      %v510 = vld [vmem:[%s462 + $0xac] sm:$0xf]
      %v511 = vld [vmem:[%s462 + $0xb0] sm:$0xf]
      %v512 = vld [vmem:[%s462 + $0xb4] sm:$0xf]
      %v513 = vld [vmem:[%s462 + $0xb8] sm:$0xf]
      %v514 = vld [vmem:[%s462 + $0xbc] sm:$0xf]
      %v515 = vld [vmem:[%s462 + $0xc0] sm:$0xf]
      %v516 = vld [vmem:[%s462 + $0xc4] sm:$0xf]
      %v517 = vld [vmem:[%s462 + $0xc8] sm:$0xf]
      %v518 = vld [vmem:[%s462 + $0xcc] sm:$0xf]
      %v519 = vld [vmem:[%s462 + $0xd0] sm:$0xf]
      %v520 = vld [vmem:[%s462 + $0xd4] sm:$0xf]
      %v521 = vld [vmem:[%s462 + $0xd8] sm:$0xf]
      %v522 = vld [vmem:[%s462 + $0xdc] sm:$0xf]
      %v523 = vld [vmem:[%s462 + $0xe0] sm:$0xf]
      %v524 = vld [vmem:[%s462 + $0xe4] sm:$0xf]
      %v525 = vunpack.c.l.bf16 %v469
      %v526 = vunpack.c.l.bf16 %v470
      %v527 = vunpack.c.l.bf16 %v471
      %v528 = vunpack.c.l.bf16 %v472
      %v529 = vunpack.c.l.bf16 %v473
      %v530 = vunpack.c.l.bf16 %v474
      %v531 = vunpack.c.l.bf16 %v475
      %v532 = vunpack.c.l.bf16 %v476
      %v533 = vunpack.c.l.bf16 %v477
      %v534 = vunpack.c.l.bf16 %v478
      %v535 = vunpack.c.l.bf16 %v479
      %v536 = vunpack.c.l.bf16 %v480
      %v537 = vunpack.c.l.bf16 %v481
      %v538 = vunpack.c.l.bf16 %v482
      %v539 = vunpack.c.l.bf16 %v483
      %v540 = vunpack.c.l.bf16 %v484
      %v541 = vunpack.c.l.bf16 %v485
      %v542 = vunpack.c.l.bf16 %v486
      %v543 = vunpack.c.l.bf16 %v487
      %v544 = vunpack.c.l.bf16 %v488
      %v545 = vunpack.c.l.bf16 %v489
      %v546 = vunpack.c.l.bf16 %v490
      %v547 = vunpack.c.l.bf16 %v491
      %v548 = vunpack.c.l.bf16 %v492
      %v549 = vunpack.c.l.bf16 %v493
      %v550 = vunpack.c.l.bf16 %v494
      %v551 = vunpack.c.l.bf16 %v495
      %v552 = vunpack.c.l.bf16 %v496
      %v553 = vunpack.c.l.bf16 %v497
      %v554 = vunpack.c.l.bf16 %v498
      %v555 = vunpack.c.l.bf16 %v499
      %v556 = vunpack.c.l.bf16 %v500
      %v557 = vunpack.c.l.bf16 %v501
      %v558 = vunpack.c.l.bf16 %v502
      %v559 = vunpack.c.l.bf16 %v503
      %v560 = vunpack.c.l.bf16 %v504
      %v561 = vunpack.c.l.bf16 %v505
      %v562 = vunpack.c.l.bf16 %v506
      %v563 = vunpack.c.l.bf16 %v507
      %v564 = vunpack.c.l.bf16 %v508
      %v565 = vunpack.c.l.bf16 %v509
      %v566 = vunpack.c.l.bf16 %v510
      %v567 = vunpack.c.l.bf16 %v511
      %v568 = vunpack.c.l.bf16 %v512
      %v569 = vunpack.c.l.bf16 %v513
      %v570 = vunpack.c.l.bf16 %v514
      %v571 = vunpack.c.l.bf16 %v515
      %v572 = vunpack.c.l.bf16 %v516
      %v573 = vunpack.c.l.bf16 %v517
      %v574 = vunpack.c.l.bf16 %v518
      %v575 = vunpack.c.l.bf16 %v519
      %v576 = vunpack.c.l.bf16 %v520
      %v577 = vunpack.c.l.bf16 %v521
      %v578 = vunpack.c.l.bf16 %v522
      %v579 = vunpack.c.l.bf16 %v523
      %v580 = vunpack.c.l.bf16 %v524
      %v581 = vld [vmem:[%s5] sm:$0x1]
      %v583 = vlaneseq
      %v584 = vshrl.u32 %v583, 7
      %v585 = vsub.s32 0, %v584
      %v586 = vrot.slane %v581, %v585
      %v588 = vmul.f32 %v525, %v586
      %v589 = vmul.f32 %v526, %v586
      %v590 = vmul.f32 %v527, %v586
      %v591 = vmul.f32 %v528, %v586
      %v592 = vmul.f32 %v529, %v586
      %v593 = vmul.f32 %v530, %v586
      %v594 = vmul.f32 %v531, %v586
      %v595 = vmul.f32 %v532, %v586
      %v596 = vmul.f32 %v533, %v586
      %v597 = vmul.f32 %v534, %v586
      %v598 = vmul.f32 %v535, %v586
      %v599 = vmul.f32 %v536, %v586
      %v600 = vmul.f32 %v537, %v586
      %v601 = vmul.f32 %v538, %v586
      %v602 = vmul.f32 %v539, %v586
      %v603 = vmul.f32 %v540, %v586
      %v604 = vmul.f32 %v541, %v586
      %v605 = vmul.f32 %v542, %v586
      %v606 = vmul.f32 %v543, %v586
      %v607 = vmul.f32 %v544, %v586
      %v608 = vmul.f32 %v545, %v586
      %v609 = vmul.f32 %v546, %v586
      %v610 = vmul.f32 %v547, %v586
      %v611 = vmul.f32 %v548, %v586
      %v612 = vmul.f32 %v549, %v586
      %v613 = vmul.f32 %v550, %v586
      %v614 = vmul.f32 %v551, %v586
      %v615 = vmul.f32 %v552, %v586
      %v616 = vmul.f32 %v553, %v586
      %v617 = vmul.f32 %v554, %v586
      %v618 = vmul.f32 %v555, %v586
      %v619 = vmul.f32 %v556, %v586
      %v620 = vmul.f32 %v557, %v586
      %v621 = vmul.f32 %v558, %v586
      %v622 = vmul.f32 %v559, %v586
      %v623 = vmul.f32 %v560, %v586
      %v624 = vmul.f32 %v561, %v586
      %v625 = vmul.f32 %v562, %v586
      %v626 = vmul.f32 %v563, %v586
      %v627 = vmul.f32 %v564, %v586
      %v628 = vmul.f32 %v565, %v586
      %v629 = vmul.f32 %v566, %v586
      %v630 = vmul.f32 %v567, %v586
      %v631 = vmul.f32 %v568, %v586
      %v632 = vmul.f32 %v569, %v586
      %v633 = vmul.f32 %v570, %v586
      %v634 = vmul.f32 %v571, %v586
      %v635 = vmul.f32 %v572, %v586
      %v636 = vmul.f32 %v573, %v586
      %v637 = vmul.f32 %v574, %v586
      %v638 = vmul.f32 %v575, %v586
      %v639 = vmul.f32 %v576, %v586
      %v640 = vmul.f32 %v577, %v586
      %v641 = vmul.f32 %v578, %v586
      %v642 = vmul.f32 %v579, %v586
      %v643 = vmul.f32 %v580, %v586
      %v644 = vld [vmem:[%s1 + $0x10] sm:$0xff]
      %v645 = vld [vmem:[%s1 + $0x18] sm:$0xff]
      %v646 = vld [vmem:[%s1 + $0x20] sm:$0xff]
      %v647 = vld [vmem:[%s1 + $0x28] sm:$0xff]
      %v648 = vld [vmem:[%s1 + $0x30] sm:$0xff]
      %v649 = vld [vmem:[%s1 + $0x38] sm:$0xff]
      %v650 = vld [vmem:[%s1 + $0x40] sm:$0xff]
      %v651 = vld [vmem:[%s1 + $0x48] sm:$0xff]
      %v652 = vld [vmem:[%s1 + $0x50] sm:$0xff]
      %v653 = vld [vmem:[%s1 + $0x58] sm:$0xff]
      %v654 = vld [vmem:[%s1 + $0x60] sm:$0xff]
      %v655 = vld [vmem:[%s1 + $0x68] sm:$0xff]
      %v656 = vld [vmem:[%s1 + $0x70] sm:$0xff]
      %v657 = vld [vmem:[%s1 + $0x78] sm:$0xff]
      %v658 = vld [vmem:[%s1 + $0x80] sm:$0xff]
      %v659 = vld [vmem:[%s1 + $0x88] sm:$0xff]
      %v660 = vld [vmem:[%s1 + $0x90] sm:$0xff]
      %v661 = vld [vmem:[%s1 + $0x98] sm:$0xff]
      %v662 = vld [vmem:[%s1 + $0xa0] sm:$0xff]
      %v663 = vld [vmem:[%s1 + $0xa8] sm:$0xff]
      %v664 = vld [vmem:[%s1 + $0xb0] sm:$0xff]
      %v665 = vld [vmem:[%s1 + $0xb8] sm:$0xff]
      %v666 = vld [vmem:[%s1 + $0xc0] sm:$0xff]
      %v667 = vld [vmem:[%s1 + $0xc8] sm:$0xff]
      %v668 = vld [vmem:[%s1 + $0xd0] sm:$0xff]
      %v669 = vld [vmem:[%s1 + $0xd8] sm:$0xff]
      %v670 = vld [vmem:[%s1 + $0xe0] sm:$0xff]
      %v671 = vld [vmem:[%s1 + $0xe8] sm:$0xff]
      %v672 = vld [vmem:[%s1 + $0xf0] sm:$0xff]
      %v673 = vld [vmem:[%s1 + $0xf8] sm:$0xff]
      %v674 = vld [vmem:[%s1 + $0x100] sm:$0xff]
      %v675 = vld [vmem:[%s1 + $0x108] sm:$0xff]
      %v676 = vld [vmem:[%s1 + $0x110] sm:$0xff]
      %v677 = vld [vmem:[%s1 + $0x118] sm:$0xff]
      %v678 = vld [vmem:[%s1 + $0x120] sm:$0xff]
      %v679 = vld [vmem:[%s1 + $0x128] sm:$0xff]
      %v680 = vld [vmem:[%s1 + $0x130] sm:$0xff]
      %v681 = vld [vmem:[%s1 + $0x138] sm:$0xff]
      %v682 = vld [vmem:[%s1 + $0x140] sm:$0xff]
      %v683 = vld [vmem:[%s1 + $0x148] sm:$0xff]
      %v684 = vld [vmem:[%s1 + $0x150] sm:$0xff]
      %v685 = vld [vmem:[%s1 + $0x158] sm:$0xff]
      %v686 = vld [vmem:[%s1 + $0x160] sm:$0xff]
      %v687 = vld [vmem:[%s1 + $0x168] sm:$0xff]
      %v688 = vld [vmem:[%s1 + $0x170] sm:$0xff]
      %v689 = vld [vmem:[%s1 + $0x178] sm:$0xff]
      %v690 = vld [vmem:[%s1 + $0x180] sm:$0xff]
      %v691 = vld [vmem:[%s1 + $0x188] sm:$0xff]
      %v692 = vld [vmem:[%s1 + $0x190] sm:$0xff]
      %v693 = vld [vmem:[%s1 + $0x198] sm:$0xff]
      %v694 = vld [vmem:[%s1 + $0x1a0] sm:$0xff]
      %v695 = vld [vmem:[%s1 + $0x1a8] sm:$0xff]
      %v696 = vld [vmem:[%s1 + $0x1b0] sm:$0xff]
      %v697 = vld [vmem:[%s1 + $0x1b8] sm:$0xff]
      %v698 = vld [vmem:[%s1 + $0x1c0] sm:$0xff]
      %v699 = vld [vmem:[%s1 + $0x1c8] sm:$0xff]
      %v700 = vadd.f32 %v588, %v644
      %v701 = vadd.f32 %v589, %v645
      %v702 = vadd.f32 %v590, %v646
      %v703 = vadd.f32 %v591, %v647
      %v704 = vadd.f32 %v592, %v648
      %v705 = vadd.f32 %v593, %v649
      %v706 = vadd.f32 %v594, %v650
      %v707 = vadd.f32 %v595, %v651
      %v708 = vadd.f32 %v596, %v652
      %v709 = vadd.f32 %v597, %v653
      %v710 = vadd.f32 %v598, %v654
      %v711 = vadd.f32 %v599, %v655
      %v712 = vadd.f32 %v600, %v656
      %v713 = vadd.f32 %v601, %v657
      %v714 = vadd.f32 %v602, %v658
      %v715 = vadd.f32 %v603, %v659
      %v716 = vadd.f32 %v604, %v660
      %v717 = vadd.f32 %v605, %v661
      %v718 = vadd.f32 %v606, %v662
      %v719 = vadd.f32 %v607, %v663
      %v720 = vadd.f32 %v608, %v664
      %v721 = vadd.f32 %v609, %v665
      %v722 = vadd.f32 %v610, %v666
      %v723 = vadd.f32 %v611, %v667
      %v724 = vadd.f32 %v612, %v668
      %v725 = vadd.f32 %v613, %v669
      %v726 = vadd.f32 %v614, %v670
      %v727 = vadd.f32 %v615, %v671
      %v728 = vadd.f32 %v616, %v672
      %v729 = vadd.f32 %v617, %v673
      %v730 = vadd.f32 %v618, %v674
      %v731 = vadd.f32 %v619, %v675
      %v732 = vadd.f32 %v620, %v676
      %v733 = vadd.f32 %v621, %v677
      %v734 = vadd.f32 %v622, %v678
      %v735 = vadd.f32 %v623, %v679
      %v736 = vadd.f32 %v624, %v680
      %v737 = vadd.f32 %v625, %v681
      %v738 = vadd.f32 %v626, %v682
      %v739 = vadd.f32 %v627, %v683
      %v740 = vadd.f32 %v628, %v684
      %v741 = vadd.f32 %v629, %v685
      %v742 = vadd.f32 %v630, %v686
      %v743 = vadd.f32 %v631, %v687
      %v744 = vadd.f32 %v632, %v688
      %v745 = vadd.f32 %v633, %v689
      %v746 = vadd.f32 %v634, %v690
      %v747 = vadd.f32 %v635, %v691
      %v748 = vadd.f32 %v636, %v692
      %v749 = vadd.f32 %v637, %v693
      %v750 = vadd.f32 %v638, %v694
      %v751 = vadd.f32 %v639, %v695
      %v752 = vadd.f32 %v640, %v696
      %v753 = vadd.f32 %v641, %v697
      %v754 = vadd.f32 %v642, %v698
      %v755 = vadd.f32 %v643, %v699
      %v756 = vpack.c.bf16 %v701, %v700
      %v757 = vpack.c.bf16 %v703, %v702
      %v758 = vpack.c.bf16 %v705, %v704
      %v759 = vpack.c.bf16 %v707, %v706
      %v760 = vpack.c.bf16 %v709, %v708
      %v761 = vpack.c.bf16 %v711, %v710
      %v762 = vpack.c.bf16 %v713, %v712
      %v763 = vpack.c.bf16 %v715, %v714
      %v764 = vpack.c.bf16 %v717, %v716
      %v765 = vpack.c.bf16 %v719, %v718
      %v766 = vpack.c.bf16 %v721, %v720
      %v767 = vpack.c.bf16 %v723, %v722
      %v768 = vpack.c.bf16 %v725, %v724
      %v769 = vpack.c.bf16 %v727, %v726
      %v770 = vpack.c.bf16 %v729, %v728
      %v771 = vpack.c.bf16 %v731, %v730
      %v772 = vpack.c.bf16 %v733, %v732
      %v773 = vpack.c.bf16 %v735, %v734
      %v774 = vpack.c.bf16 %v737, %v736
      %v775 = vpack.c.bf16 %v739, %v738
      %v776 = vpack.c.bf16 %v741, %v740
      %v777 = vpack.c.bf16 %v743, %v742
      %v778 = vpack.c.bf16 %v745, %v744
      %v779 = vpack.c.bf16 %v747, %v746
      %v780 = vpack.c.bf16 %v749, %v748
      %v781 = vpack.c.bf16 %v751, %v750
      %v782 = vpack.c.bf16 %v753, %v752
      %v783 = vpack.c.bf16 %v755, %v754
      %v784 = vld [vmem:[%s4] sm:$0xf]
      %v785 = vld [vmem:[%s4 + $0x4] sm:$0xf]
      %s786 = scalar_lea.vmem %s4, 8
      %v787 = vld [vmem:[%s786] sm:$0xf]
      %v788 = vld [vmem:[%s786 + $0x4] sm:$0xf]
      %vm814 = vcmask 1046528
      %v815 = vrot.slane %v756, 1
      %v816 = vrot.slane %v757, 1
      %v817 = vsel %vm814, %v815, %v816
      %v818 = vrot.slane %v758, 1
      %v819 = vsel %vm814, %v816, %v818
      %v820 = vrot.slane %v759, 1
      %v821 = vsel %vm814, %v818, %v820
      %v822 = vrot.slane %v760, 1
      %v823 = vsel %vm814, %v820, %v822
      %v824 = vrot.slane %v761, 1
      %v825 = vsel %vm814, %v822, %v824
      %v826 = vrot.slane %v762, 1
      %v827 = vsel %vm814, %v824, %v826
      %v828 = vrot.slane %v763, 1
      %v829 = vsel %vm814, %v826, %v828
      %v830 = vrot.slane %v764, 1
      %v831 = vsel %vm814, %v828, %v830
      %v832 = vrot.slane %v765, 1
      %v833 = vsel %vm814, %v830, %v832
      %v834 = vrot.slane %v766, 1
      %v835 = vsel %vm814, %v832, %v834
      %v836 = vrot.slane %v767, 1
      %v837 = vsel %vm814, %v834, %v836
      %v838 = vrot.slane %v768, 1
      %v839 = vsel %vm814, %v836, %v838
      %v840 = vrot.slane %v769, 1
      %v841 = vsel %vm814, %v838, %v840
      %v842 = vrot.slane %v770, 1
      %v843 = vsel %vm814, %v840, %v842
      %v844 = vrot.slane %v771, 1
      %v845 = vsel %vm814, %v842, %v844
      %v846 = vrot.slane %v772, 1
      %v847 = vsel %vm814, %v844, %v846
      %v848 = vrot.slane %v773, 1
      %v849 = vsel %vm814, %v846, %v848
      %v850 = vrot.slane %v774, 1
      %v851 = vsel %vm814, %v848, %v850
      %v852 = vrot.slane %v775, 1
      %v853 = vsel %vm814, %v850, %v852
      %v854 = vrot.slane %v776, 1
      %v855 = vsel %vm814, %v852, %v854
      %v856 = vrot.slane %v777, 1
      %v857 = vsel %vm814, %v854, %v856
      %v858 = vrot.slane %v778, 1
      %v859 = vsel %vm814, %v856, %v858
      %v860 = vrot.slane %v779, 1
      %v861 = vsel %vm814, %v858, %v860
      %v862 = vrot.slane %v780, 1
      %v863 = vsel %vm814, %v860, %v862
      %v866 = vunpack.c.l.b16 %v787
      %v867 = vunpack.c.l.b16 %v788
      %v868 = vpack.c.b16 %v867, %v866
      %vm870 = vcmask 130048
      %v872 = vsel %vm870, %v817, 0
      %v875 = vsel %vm870, %v819, 0
      %v878 = vsel %vm870, %v821, 0
      %v881 = vsel %vm870, %v823, 0
      %v884 = vsel %vm870, %v825, 0
      %v887 = vsel %vm870, %v827, 0
      %v890 = vsel %vm870, %v829, 0
      %v893 = vsel %vm870, %v831, 0
      %v896 = vsel %vm870, %v833, 0
      %v899 = vsel %vm870, %v835, 0
      %v902 = vsel %vm870, %v837, 0
      %v905 = vsel %vm870, %v839, 0
      %v908 = vsel %vm870, %v841, 0
      %v911 = vsel %vm870, %v843, 0
      %v914 = vsel %vm870, %v845, 0
      %v917 = vsel %vm870, %v847, 0
      %v920 = vsel %vm870, %v849, 0
      %v923 = vsel %vm870, %v851, 0
      %v926 = vsel %vm870, %v853, 0
      %v929 = vsel %vm870, %v855, 0
      %v932 = vsel %vm870, %v857, 0
      %v935 = vsel %vm870, %v859, 0
      %v938 = vsel %vm870, %v861, 0
      %v941 = vsel %vm870, %v863, 0
      %v944 = vsel %vm870, %v862, 0
      %946 = vmatprep.subr.bf16.mxu0 0
      %947 = vmatpush1.bf16.msra.mxu0 %v868
      %948 = vmatprep.subr.bf16.mxu0 0
      %949 = vmatpush1.bf16.msra.mxu0 0
      %950 = vmatprep.subr.bf16.mxu0 0
      %951 = vmatpush1.bf16.msra.mxu0 0
      %952 = vmatprep.subr.bf16.mxu0 0
      %953 = vmatpush1.bf16.msra.mxu0 0
      %954 = vmatprep.subr.bf16.mxu0 0
      %955 = vmatpush1.bf16.msra.mxu0 0
      %956 = vmatprep.subr.bf16.mxu0 0
      %957 = vmatpush1.bf16.msra.mxu0 0
      %958 = vmatprep.subr.bf16.mxu0 0
      %959 = vmatpush1.bf16.msra.mxu0 0
      %960 = vmatprep.subr.bf16.mxu0 0
      %961 = vmatpush1.bf16.msra.mxu0 0
      %962 = vmatprep.subr.bf16.mxu0 0
      %963 = vmatpush1.bf16.msra.mxu0 0
      %964 = vmatprep.subr.bf16.mxu0 0
      %965 = vmatpush1.bf16.msra.mxu0 0
      %966 = vmatprep.subr.bf16.mxu0 0
      %967 = vmatpush1.bf16.msra.mxu0 0
      %968 = vmatprep.subr.bf16.mxu0 0
      %969 = vmatpush1.bf16.msra.mxu0 0
      %970 = vmatprep.subr.bf16.mxu0 0
      %971 = vmatpush1.bf16.msra.mxu0 0
      %972 = vmatprep.subr.bf16.mxu0 0
      %973 = vmatpush1.bf16.msra.mxu0 0
      %974 = vmatprep.subr.bf16.mxu0 0
      %975 = vmatpush1.bf16.msra.mxu0 0
      %976 = vmatprep.subr.bf16.mxu0 0
      %977 = vmatpush1.bf16.msra.mxu0 0
      %978 = vmatprep.mubr.bf16.mxu0 0
      %979 = vmatmul.mubr.bf16.gmra.mrb[0].mxu0 %v872
      %v980 = vpop.f32.mrb[0].mxu0
      %v981 = vpop.f32.mrb[0].mxu0
      %v982 = vpop.f32.mrb[0].mxu0
      %v983 = vpop.f32.mrb[0].mxu0
      %984 = vmatprep.mubr.bf16.mxu0 0
      %985 = vmatmul.mubr.bf16.gmra.mrb[0].mxu0 %v875
      %v986 = vpop.f32.mrb[0].mxu0
      %v987 = vpop.f32.mrb[0].mxu0
      %v988 = vpop.f32.mrb[0].mxu0
      %v989 = vpop.f32.mrb[0].mxu0
      %990 = vmatprep.mubr.bf16.mxu0 0
      %991 = vmatmul.mubr.bf16.gmra.mrb[0].mxu0 %v878
      %v992 = vpop.f32.mrb[0].mxu0
      %v993 = vadd.f32 0.0, %v992
      %v994 = vpop.f32.mrb[0].mxu0
      %v995 = vpop.f32.mrb[0].mxu0
      %v996 = vadd.f32 0.0, %v995
      %v997 = vpop.f32.mrb[0].mxu0
      %998 = vmatprep.mubr.bf16.mxu0 0
      %999 = vmatmul.mubr.bf16.gmra.mrb[0].mxu0 %v881
      %v1000 = vpop.f32.mrb[0].mxu0
      %v1001 = vadd.f32 0.0, %v1000
      %v1002 = vpop.f32.mrb[0].mxu0
      %v1003 = vpop.f32.mrb[0].mxu0
      %v1004 = vadd.f32 0.0, %v1003
      %v1005 = vpop.f32.mrb[0].mxu0
      %1006 = vmatprep.mubr.bf16.mxu0 0
      %1007 = vmatmul.mubr.bf16.gmra.mrb[0].mxu0 %v884
      %v1008 = vpop.f32.mrb[0].mxu0
      %v1009 = vadd.f32 0.0, %v1008
      %v1010 = vpop.f32.mrb[0].mxu0
      %v1011 = vpop.f32.mrb[0].mxu0
      %v1012 = vadd.f32 0.0, %v1011
      %v1013 = vpop.f32.mrb[0].mxu0
      %1014 = vmatprep.mubr.bf16.mxu0 0
      %1015 = vmatmul.mubr.bf16.gmra.mrb[0].mxu0 %v887
      %v1016 = vpop.f32.mrb[0].mxu0
      %v1017 = vadd.f32 0.0, %v1016
      %v1018 = vpop.f32.mrb[0].mxu0
      %v1019 = vpop.f32.mrb[0].mxu0
      %v1020 = vadd.f32 0.0, %v1019
      %v1021 = vpop.f32.mrb[0].mxu0
      %1022 = vmatprep.mubr.bf16.mxu0 0
      %1023 = vmatmul.mubr.bf16.gmra.mrb[0].mxu0 %v890
      %v1024 = vpop.f32.mrb[0].mxu0
      %v1025 = vadd.f32 0.0, %v1024
      %v1026 = vpop.f32.mrb[0].mxu0
      %v1027 = vpop.f32.mrb[0].mxu0
      %v1028 = vadd.f32 0.0, %v1027
      %v1029 = vpop.f32.mrb[0].mxu0
      %1030 = vmatprep.mubr.bf16.mxu0 0
      %1031 = vmatmul.mubr.bf16.gmra.mrb[0].mxu0 %v893
      %v1032 = vpop.f32.mrb[0].mxu0
      %v1033 = vadd.f32 0.0, %v1032
      %v1034 = vpop.f32.mrb[0].mxu0
      %v1035 = vpop.f32.mrb[0].mxu0
      %v1036 = vadd.f32 0.0, %v1035
      %v1037 = vpop.f32.mrb[0].mxu0
      %1038 = vmatprep.mubr.bf16.mxu0 0
      %1039 = vmatmul.mubr.bf16.gmra.mrb[0].mxu0 %v896
      %v1040 = vpop.f32.mrb[0].mxu0
      %v1041 = vadd.f32 0.0, %v1040
      %v1042 = vpop.f32.mrb[0].mxu0
      %v1043 = vpop.f32.mrb[0].mxu0
      %v1044 = vadd.f32 0.0, %v1043
      %v1045 = vpop.f32.mrb[0].mxu0
      %1046 = vmatprep.mubr.bf16.mxu0 0
      %1047 = vmatmul.mubr.bf16.gmra.mrb[0].mxu0 %v899
      %v1048 = vpop.f32.mrb[0].mxu0
      %v1049 = vadd.f32 0.0, %v1048
      %v1050 = vpop.f32.mrb[0].mxu0
      %v1051 = vpop.f32.mrb[0].mxu0
      %v1052 = vadd.f32 0.0, %v1051
      %v1053 = vpop.f32.mrb[0].mxu0
      %1054 = vmatprep.mubr.bf16.mxu0 0
      %1055 = vmatmul.mubr.bf16.gmra.mrb[0].mxu0 %v902
      %v1056 = vpop.f32.mrb[0].mxu0
      %v1057 = vadd.f32 0.0, %v1056
      %v1058 = vpop.f32.mrb[0].mxu0
      %v1059 = vpop.f32.mrb[0].mxu0
      %v1060 = vadd.f32 0.0, %v1059
      %v1061 = vpop.f32.mrb[0].mxu0
      %1062 = vmatprep.mubr.bf16.mxu0 0
      %1063 = vmatmul.mubr.bf16.gmra.mrb[0].mxu0 %v905
      %v1064 = vpop.f32.mrb[0].mxu0
      %v1065 = vadd.f32 0.0, %v1064
      %v1066 = vpop.f32.mrb[0].mxu0
      %v1067 = vpop.f32.mrb[0].mxu0
      %v1068 = vadd.f32 0.0, %v1067
      %v1069 = vpop.f32.mrb[0].mxu0
      %1070 = vmatprep.mubr.bf16.mxu0 0
      %1071 = vmatmul.mubr.bf16.gmra.mrb[0].mxu0 %v908
      %v1072 = vpop.f32.mrb[0].mxu0
      %v1073 = vadd.f32 0.0, %v1072
      %v1074 = vpop.f32.mrb[0].mxu0
      %v1075 = vpop.f32.mrb[0].mxu0
      %v1076 = vadd.f32 0.0, %v1075
      %v1077 = vpop.f32.mrb[0].mxu0
      %1078 = vmatprep.mubr.bf16.mxu0 0
      %1079 = vmatmul.mubr.bf16.gmra.mrb[0].mxu0 %v911
      %v1080 = vpop.f32.mrb[0].mxu0
      %v1081 = vadd.f32 0.0, %v1080
      %v1082 = vpop.f32.mrb[0].mxu0
      %v1083 = vpop.f32.mrb[0].mxu0
      %v1084 = vadd.f32 0.0, %v1083
      %v1085 = vpop.f32.mrb[0].mxu0
      %1086 = vmatprep.mubr.bf16.mxu0 0
      %1087 = vmatmul.mubr.bf16.gmra.mrb[0].mxu0 %v914
      %v1088 = vpop.f32.mrb[0].mxu0
      %v1089 = vadd.f32 0.0, %v1088
      %v1090 = vpop.f32.mrb[0].mxu0
      %v1091 = vpop.f32.mrb[0].mxu0
      %v1092 = vadd.f32 0.0, %v1091
      %v1093 = vpop.f32.mrb[0].mxu0
      %1094 = vmatprep.mubr.bf16.mxu0 0
      %1095 = vmatmul.mubr.bf16.gmra.mrb[0].mxu0 %v917
      %v1096 = vpop.f32.mrb[0].mxu0
      %v1097 = vadd.f32 0.0, %v1096
      %v1098 = vpop.f32.mrb[0].mxu0
      %v1099 = vpop.f32.mrb[0].mxu0
      %v1100 = vadd.f32 0.0, %v1099
      %v1101 = vpop.f32.mrb[0].mxu0
      %1102 = vmatprep.mubr.bf16.mxu0 0
      %1103 = vmatmul.mubr.bf16.gmra.mrb[0].mxu0 %v920
      %v1104 = vpop.f32.mrb[0].mxu0
      %v1105 = vadd.f32 0.0, %v1104
      %v1106 = vpop.f32.mrb[0].mxu0
      %v1107 = vpop.f32.mrb[0].mxu0
      %v1108 = vadd.f32 0.0, %v1107
      %v1109 = vpop.f32.mrb[0].mxu0
      %1110 = vmatprep.mubr.bf16.mxu0 0
      %1111 = vmatmul.mubr.bf16.gmra.mrb[0].mxu0 %v923
      %v1112 = vpop.f32.mrb[0].mxu0
      %v1113 = vadd.f32 0.0, %v1112
      %v1114 = vpop.f32.mrb[0].mxu0
      %v1115 = vpop.f32.mrb[0].mxu0
      %v1116 = vadd.f32 0.0, %v1115
      %v1117 = vpop.f32.mrb[0].mxu0
      %1118 = vmatprep.mubr.bf16.mxu0 0
      %1119 = vmatmul.mubr.bf16.gmra.mrb[0].mxu0 %v926
      %v1120 = vpop.f32.mrb[0].mxu0
      %v1121 = vadd.f32 0.0, %v1120
      %v1122 = vpop.f32.mrb[0].mxu0
      %v1123 = vpop.f32.mrb[0].mxu0
      %v1124 = vadd.f32 0.0, %v1123
      %v1125 = vpop.f32.mrb[0].mxu0
      %1126 = vmatprep.mubr.bf16.mxu0 0
      %1127 = vmatmul.mubr.bf16.gmra.mrb[0].mxu0 %v929
      %v1128 = vpop.f32.mrb[0].mxu0
      %v1129 = vadd.f32 0.0, %v1128
      %v1130 = vpop.f32.mrb[0].mxu0
      %v1131 = vpop.f32.mrb[0].mxu0
      %v1132 = vadd.f32 0.0, %v1131
      %v1133 = vpop.f32.mrb[0].mxu0
      %1134 = vmatprep.mubr.bf16.mxu0 0
      %1135 = vmatmul.mubr.bf16.gmra.mrb[0].mxu0 %v932
      %v1136 = vpop.f32.mrb[0].mxu0
      %v1137 = vadd.f32 0.0, %v1136
      %v1138 = vpop.f32.mrb[0].mxu0
      %v1139 = vpop.f32.mrb[0].mxu0
      %v1140 = vadd.f32 0.0, %v1139
      %v1141 = vpop.f32.mrb[0].mxu0
      %1142 = vmatprep.mubr.bf16.mxu0 0
      %1143 = vmatmul.mubr.bf16.gmra.mrb[0].mxu0 %v935
      %v1144 = vpop.f32.mrb[0].mxu0
      %v1145 = vadd.f32 0.0, %v1144
      %v1146 = vpop.f32.mrb[0].mxu0
      %v1147 = vpop.f32.mrb[0].mxu0
      %v1148 = vadd.f32 0.0, %v1147
      %v1149 = vpop.f32.mrb[0].mxu0
      %1150 = vmatprep.mubr.bf16.mxu0 0
      %1151 = vmatmul.mubr.bf16.gmra.mrb[0].mxu0 %v938
      %v1152 = vpop.f32.mrb[0].mxu0
      %v1153 = vadd.f32 0.0, %v1152
      %v1154 = vpop.f32.mrb[0].mxu0
      %v1155 = vpop.f32.mrb[0].mxu0
      %v1156 = vadd.f32 0.0, %v1155
      %v1157 = vpop.f32.mrb[0].mxu0
      %1158 = vmatprep.mubr.bf16.mxu0 0
      %1159 = vmatmul.mubr.bf16.gmra.mrb[0].mxu0 %v941
      %v1160 = vpop.f32.mrb[0].mxu0
      %v1161 = vpop.f32.mrb[0].mxu0
      %v1162 = vpop.f32.mrb[0].mxu0
      %v1163 = vpop.f32.mrb[0].mxu0
      %1164 = vmatprep.mubr.bf16.mxu0 0
      %1165 = vmatmul.mubr.bf16.gmra.mrb[0].mxu0 %v944
      %v1166 = vpop.f32.mrb[0].mxu0
      %v1167 = vpop.f32.mrb[0].mxu0
      %v1168 = vpop.f32.mrb[0].mxu0
      %v1169 = vpop.f32.mrb[0].mxu0
      %1170 = vdwg.mxu0
      %vm1171 = vsmask.f32 7424
      %v1173 = vshrl.u32 %v756, 16
      %v1175 = vshll.u32 %v756, 16
      %v1177 = vrot.slane %v1175, 1
      %v1178 = vor.u32 %v1173, %v1177
      %v1180 = vshll.u32 %v757, 16
      %v1182 = vrot.slane %v1180, 1
      %v1183 = vsel %vm1171, %v1178, %v1182
      %v1184 = vshrl.u32 %v757, 16
      %v1186 = vor.u32 %v1184, %v1182
      %v1188 = vshll.u32 %v758, 16
      %v1190 = vrot.slane %v1188, 1
      %v1191 = vsel %vm1171, %v1186, %v1190
      %v1192 = vshrl.u32 %v758, 16
      %v1194 = vor.u32 %v1192, %v1190
      %v1196 = vshll.u32 %v759, 16
      %v1198 = vrot.slane %v1196, 1
      %v1199 = vsel %vm1171, %v1194, %v1198
      %v1200 = vshrl.u32 %v759, 16
      %v1202 = vor.u32 %v1200, %v1198
      %v1204 = vshll.u32 %v760, 16
      %v1206 = vrot.slane %v1204, 1
      %v1207 = vsel %vm1171, %v1202, %v1206
      %v1208 = vshrl.u32 %v760, 16
      %v1210 = vor.u32 %v1208, %v1206
      %v1212 = vshll.u32 %v761, 16
      %v1214 = vrot.slane %v1212, 1
      %v1215 = vsel %vm1171, %v1210, %v1214
      %v1216 = vshrl.u32 %v761, 16
      %v1218 = vor.u32 %v1216, %v1214
      %v1220 = vshll.u32 %v762, 16
      %v1222 = vrot.slane %v1220, 1
      %v1223 = vsel %vm1171, %v1218, %v1222
      %v1224 = vshrl.u32 %v762, 16
      %v1226 = vor.u32 %v1224, %v1222
      %v1228 = vshll.u32 %v763, 16
      %v1230 = vrot.slane %v1228, 1
      %v1231 = vsel %vm1171, %v1226, %v1230
      %v1232 = vshrl.u32 %v763, 16
      %v1234 = vor.u32 %v1232, %v1230
      %v1236 = vshll.u32 %v764, 16
      %v1238 = vrot.slane %v1236, 1
      %v1239 = vsel %vm1171, %v1234, %v1238
      %v1240 = vshrl.u32 %v764, 16
      %v1242 = vor.u32 %v1240, %v1238
      %v1244 = vshll.u32 %v765, 16
      %v1246 = vrot.slane %v1244, 1
      %v1247 = vsel %vm1171, %v1242, %v1246
      %v1248 = vshrl.u32 %v765, 16
      %v1250 = vor.u32 %v1248, %v1246
      %v1252 = vshll.u32 %v766, 16
      %v1254 = vrot.slane %v1252, 1
      %v1255 = vsel %vm1171, %v1250, %v1254
      %v1256 = vshrl.u32 %v766, 16
      %v1258 = vor.u32 %v1256, %v1254
      %v1260 = vshll.u32 %v767, 16
      %v1262 = vrot.slane %v1260, 1
      %v1263 = vsel %vm1171, %v1258, %v1262
      %v1264 = vshrl.u32 %v767, 16
      %v1266 = vor.u32 %v1264, %v1262
      %v1268 = vshll.u32 %v768, 16
      %v1270 = vrot.slane %v1268, 1
      %v1271 = vsel %vm1171, %v1266, %v1270
      %v1272 = vshrl.u32 %v768, 16
      %v1274 = vor.u32 %v1272, %v1270
      %v1276 = vshll.u32 %v769, 16
      %v1278 = vrot.slane %v1276, 1
      %v1279 = vsel %vm1171, %v1274, %v1278
      %v1280 = vshrl.u32 %v769, 16
      %v1282 = vor.u32 %v1280, %v1278
      %v1284 = vshll.u32 %v770, 16
      %v1286 = vrot.slane %v1284, 1
      %v1287 = vsel %vm1171, %v1282, %v1286
      %v1288 = vshrl.u32 %v770, 16
      %v1290 = vor.u32 %v1288, %v1286
      %v1292 = vshll.u32 %v771, 16
      %v1294 = vrot.slane %v1292, 1
      %v1295 = vsel %vm1171, %v1290, %v1294
      %v1296 = vshrl.u32 %v771, 16
      %v1298 = vor.u32 %v1296, %v1294
      %v1300 = vshll.u32 %v772, 16
      %v1302 = vrot.slane %v1300, 1
      %v1303 = vsel %vm1171, %v1298, %v1302
      %v1304 = vshrl.u32 %v772, 16
      %v1306 = vor.u32 %v1304, %v1302
      %v1308 = vshll.u32 %v773, 16
      %v1310 = vrot.slane %v1308, 1
      %v1311 = vsel %vm1171, %v1306, %v1310
      %v1312 = vshrl.u32 %v773, 16
      %v1314 = vor.u32 %v1312, %v1310
      %v1316 = vshll.u32 %v774, 16
      %v1318 = vrot.slane %v1316, 1
      %v1319 = vsel %vm1171, %v1314, %v1318
      %v1320 = vshrl.u32 %v774, 16
      %v1322 = vor.u32 %v1320, %v1318
      %v1324 = vshll.u32 %v775, 16
      %v1326 = vrot.slane %v1324, 1
      %v1327 = vsel %vm1171, %v1322, %v1326
      %v1328 = vshrl.u32 %v775, 16
      %v1330 = vor.u32 %v1328, %v1326
      %v1332 = vshll.u32 %v776, 16
      %v1334 = vrot.slane %v1332, 1
      %v1335 = vsel %vm1171, %v1330, %v1334
      %v1336 = vshrl.u32 %v776, 16
      %v1338 = vor.u32 %v1336, %v1334
      %v1340 = vshll.u32 %v777, 16
      %v1342 = vrot.slane %v1340, 1
      %v1343 = vsel %vm1171, %v1338, %v1342
      %v1344 = vshrl.u32 %v777, 16
      %v1346 = vor.u32 %v1344, %v1342
      %v1348 = vshll.u32 %v778, 16
      %v1350 = vrot.slane %v1348, 1
      %v1351 = vsel %vm1171, %v1346, %v1350
      %v1352 = vshrl.u32 %v778, 16
      %v1354 = vor.u32 %v1352, %v1350
      %v1356 = vshll.u32 %v779, 16
      %v1358 = vrot.slane %v1356, 1
      %v1359 = vsel %vm1171, %v1354, %v1358
      %v1360 = vshrl.u32 %v779, 16
      %v1362 = vor.u32 %v1360, %v1358
      %v1364 = vshll.u32 %v780, 16
      %v1366 = vrot.slane %v1364, 1
      %v1367 = vsel %vm1171, %v1362, %v1366
      %v1368 = vshrl.u32 %v780, 16
      %v1370 = vor.u32 %v1368, %v1366
      %v1373 = vunpack.c.l.b16 %v784
      %v1374 = vunpack.c.l.b16 %v785
      %v1375 = vpack.c.b16 %v1374, %v1373
      %v1378 = vsel %vm870, %v1183, 0
      %v1381 = vsel %vm870, %v1191, 0
      %v1384 = vsel %vm870, %v1199, 0
      %v1387 = vsel %vm870, %v1207, 0
      %v1390 = vsel %vm870, %v1215, 0
      %v1393 = vsel %vm870, %v1223, 0
      %v1396 = vsel %vm870, %v1231, 0
      %v1399 = vsel %vm870, %v1239, 0
      %v1402 = vsel %vm870, %v1247, 0
      %v1405 = vsel %vm870, %v1255, 0
      %v1408 = vsel %vm870, %v1263, 0
      %v1411 = vsel %vm870, %v1271, 0
      %v1414 = vsel %vm870, %v1279, 0
      %v1417 = vsel %vm870, %v1287, 0
      %v1420 = vsel %vm870, %v1295, 0
      %v1423 = vsel %vm870, %v1303, 0
      %v1426 = vsel %vm870, %v1311, 0
      %v1429 = vsel %vm870, %v1319, 0
      %v1432 = vsel %vm870, %v1327, 0
      %v1435 = vsel %vm870, %v1335, 0
      %v1438 = vsel %vm870, %v1343, 0
      %v1441 = vsel %vm870, %v1351, 0
      %v1444 = vsel %vm870, %v1359, 0
      %v1447 = vsel %vm870, %v1367, 0
      %v1450 = vsel %vm870, %v1370, 0
      %1452 = vmatprep.subr.bf16.mxu0 0
      %1453 = vmatpush1.bf16.msra.mxu0 %v1375
      %1454 = vmatprep.subr.bf16.mxu0 0
      %1455 = vmatpush1.bf16.msra.mxu0 0
      %1456 = vmatprep.subr.bf16.mxu0 0
      %1457 = vmatpush1.bf16.msra.mxu0 0
      %1458 = vmatprep.subr.bf16.mxu0 0
      %1459 = vmatpush1.bf16.msra.mxu0 0
      %1460 = vmatprep.subr.bf16.mxu0 0
      %1461 = vmatpush1.bf16.msra.mxu0 0
      %1462 = vmatprep.subr.bf16.mxu0 0
      %1463 = vmatpush1.bf16.msra.mxu0 0
      %1464 = vmatprep.subr.bf16.mxu0 0
      %1465 = vmatpush1.bf16.msra.mxu0 0
      %1466 = vmatprep.subr.bf16.mxu0 0
      %1467 = vmatpush1.bf16.msra.mxu0 0
      %1468 = vmatprep.subr.bf16.mxu0 0
      %1469 = vmatpush1.bf16.msra.mxu0 0
      %1470 = vmatprep.subr.bf16.mxu0 0
      %1471 = vmatpush1.bf16.msra.mxu0 0
      %1472 = vmatprep.subr.bf16.mxu0 0
      %1473 = vmatpush1.bf16.msra.mxu0 0
      %1474 = vmatprep.subr.bf16.mxu0 0
      %1475 = vmatpush1.bf16.msra.mxu0 0
      %1476 = vmatprep.subr.bf16.mxu0 0
      %1477 = vmatpush1.bf16.msra.mxu0 0
      %1478 = vmatprep.subr.bf16.mxu0 0
      %1479 = vmatpush1.bf16.msra.mxu0 0
      %1480 = vmatprep.subr.bf16.mxu0 0
      %1481 = vmatpush1.bf16.msra.mxu0 0
      %1482 = vmatprep.subr.bf16.mxu0 0
      %1483 = vmatpush1.bf16.msra.mxu0 0
      %1484 = vmatprep.mubr.bf16.mxu0 0
      %1485 = vmatmul.mubr.bf16.gmra.mrb[0].mxu0 %v1378
      %v1486 = vpop.f32.mrb[0].mxu0
      %v1487 = vpop.f32.mrb[0].mxu0
      %v1488 = vpop.f32.mrb[0].mxu0
      %v1489 = vpop.f32.mrb[0].mxu0
      %1490 = vmatprep.mubr.bf16.mxu0 0
      %1491 = vmatmul.mubr.bf16.gmra.mrb[0].mxu0 %v1381
      %v1492 = vpop.f32.mrb[0].mxu0
      %v1493 = vpop.f32.mrb[0].mxu0
      %v1494 = vpop.f32.mrb[0].mxu0
      %v1495 = vpop.f32.mrb[0].mxu0
      %1496 = vmatprep.mubr.bf16.mxu0 0
      %1497 = vmatmul.mubr.bf16.gmra.mrb[0].mxu0 %v1384
      %v1498 = vpop.f32.mrb[0].mxu0
      %v1499 = vadd.f32 %v993, %v1498
      %v1500 = vpop.f32.mrb[0].mxu0
      %v1501 = vpop.f32.mrb[0].mxu0
      %v1502 = vadd.f32 %v996, %v1501
      %v1503 = vpop.f32.mrb[0].mxu0
      %1504 = vmatprep.mubr.bf16.mxu0 0
      %1505 = vmatmul.mubr.bf16.gmra.mrb[0].mxu0 %v1387
      %v1506 = vpop.f32.mrb[0].mxu0
      %v1507 = vadd.f32 %v1001, %v1506
      %v1508 = vpop.f32.mrb[0].mxu0
      %v1509 = vpop.f32.mrb[0].mxu0
      %v1510 = vadd.f32 %v1004, %v1509
      %v1511 = vpop.f32.mrb[0].mxu0
      %1512 = vmatprep.mubr.bf16.mxu0 0
      %1513 = vmatmul.mubr.bf16.gmra.mrb[0].mxu0 %v1390
      %v1514 = vpop.f32.mrb[0].mxu0
      %v1515 = vadd.f32 %v1009, %v1514
      %v1516 = vpop.f32.mrb[0].mxu0
      %v1517 = vpop.f32.mrb[0].mxu0
      %v1518 = vadd.f32 %v1012, %v1517
      %v1519 = vpop.f32.mrb[0].mxu0
      %1520 = vmatprep.mubr.bf16.mxu0 0
      %1521 = vmatmul.mubr.bf16.gmra.mrb[0].mxu0 %v1393
      %v1522 = vpop.f32.mrb[0].mxu0
      %v1523 = vadd.f32 %v1017, %v1522
      %v1524 = vpop.f32.mrb[0].mxu0
      %v1525 = vpop.f32.mrb[0].mxu0
      %v1526 = vadd.f32 %v1020, %v1525
      %v1527 = vpop.f32.mrb[0].mxu0
      %1528 = vmatprep.mubr.bf16.mxu0 0
      %1529 = vmatmul.mubr.bf16.gmra.mrb[0].mxu0 %v1396
      %v1530 = vpop.f32.mrb[0].mxu0
      %v1531 = vadd.f32 %v1025, %v1530
      %v1532 = vpop.f32.mrb[0].mxu0
      %v1533 = vpop.f32.mrb[0].mxu0
      %v1534 = vadd.f32 %v1028, %v1533
      %v1535 = vpop.f32.mrb[0].mxu0
      %1536 = vmatprep.mubr.bf16.mxu0 0
      %1537 = vmatmul.mubr.bf16.gmra.mrb[0].mxu0 %v1399
      %v1538 = vpop.f32.mrb[0].mxu0
      %v1539 = vadd.f32 %v1033, %v1538
      %v1540 = vpop.f32.mrb[0].mxu0
      %v1541 = vpop.f32.mrb[0].mxu0
      %v1542 = vadd.f32 %v1036, %v1541
      %v1543 = vpop.f32.mrb[0].mxu0
      %1544 = vmatprep.mubr.bf16.mxu0 0
      %1545 = vmatmul.mubr.bf16.gmra.mrb[0].mxu0 %v1402
      %v1546 = vpop.f32.mrb[0].mxu0
      %v1547 = vadd.f32 %v1041, %v1546
      %v1548 = vpop.f32.mrb[0].mxu0
      %v1549 = vpop.f32.mrb[0].mxu0
      %v1550 = vadd.f32 %v1044, %v1549
      %v1551 = vpop.f32.mrb[0].mxu0
      %1552 = vmatprep.mubr.bf16.mxu0 0
      %1553 = vmatmul.mubr.bf16.gmra.mrb[0].mxu0 %v1405
      %v1554 = vpop.f32.mrb[0].mxu0
      %v1555 = vadd.f32 %v1049, %v1554
      %v1556 = vpop.f32.mrb[0].mxu0
      %v1557 = vpop.f32.mrb[0].mxu0
      %v1558 = vadd.f32 %v1052, %v1557
      %v1559 = vpop.f32.mrb[0].mxu0
      %1560 = vmatprep.mubr.bf16.mxu0 0
      %1561 = vmatmul.mubr.bf16.gmra.mrb[0].mxu0 %v1408
      %v1562 = vpop.f32.mrb[0].mxu0
      %v1563 = vadd.f32 %v1057, %v1562
      %v1564 = vpop.f32.mrb[0].mxu0
      %v1565 = vpop.f32.mrb[0].mxu0
      %v1566 = vadd.f32 %v1060, %v1565
      %v1567 = vpop.f32.mrb[0].mxu0
      %1568 = vmatprep.mubr.bf16.mxu0 0
      %1569 = vmatmul.mubr.bf16.gmra.mrb[0].mxu0 %v1411
      %v1570 = vpop.f32.mrb[0].mxu0
      %v1571 = vadd.f32 %v1065, %v1570
      %v1572 = vpop.f32.mrb[0].mxu0
      %v1573 = vpop.f32.mrb[0].mxu0
      %v1574 = vadd.f32 %v1068, %v1573
      %v1575 = vpop.f32.mrb[0].mxu0
      %1576 = vmatprep.mubr.bf16.mxu0 0
      %1577 = vmatmul.mubr.bf16.gmra.mrb[0].mxu0 %v1414
      %v1578 = vpop.f32.mrb[0].mxu0
      %v1579 = vadd.f32 %v1073, %v1578
      %v1580 = vpop.f32.mrb[0].mxu0
      %v1581 = vpop.f32.mrb[0].mxu0
      %v1582 = vadd.f32 %v1076, %v1581
      %v1583 = vpop.f32.mrb[0].mxu0
      %1584 = vmatprep.mubr.bf16.mxu0 0
      %1585 = vmatmul.mubr.bf16.gmra.mrb[0].mxu0 %v1417
      %v1586 = vpop.f32.mrb[0].mxu0
      %v1587 = vadd.f32 %v1081, %v1586
      %v1588 = vpop.f32.mrb[0].mxu0
      %v1589 = vpop.f32.mrb[0].mxu0
      %v1590 = vadd.f32 %v1084, %v1589
      %v1591 = vpop.f32.mrb[0].mxu0
      %1592 = vmatprep.mubr.bf16.mxu0 0
      %1593 = vmatmul.mubr.bf16.gmra.mrb[0].mxu0 %v1420
      %v1594 = vpop.f32.mrb[0].mxu0
      %v1595 = vadd.f32 %v1089, %v1594
      %v1596 = vpop.f32.mrb[0].mxu0
      %v1597 = vpop.f32.mrb[0].mxu0
      %v1598 = vadd.f32 %v1092, %v1597
      %v1599 = vpop.f32.mrb[0].mxu0
      %1600 = vmatprep.mubr.bf16.mxu0 0
      %1601 = vmatmul.mubr.bf16.gmra.mrb[0].mxu0 %v1423
      %v1602 = vpop.f32.mrb[0].mxu0
      %v1603 = vadd.f32 %v1097, %v1602
      %v1604 = vpop.f32.mrb[0].mxu0
      %v1605 = vpop.f32.mrb[0].mxu0
      %v1606 = vadd.f32 %v1100, %v1605
      %v1607 = vpop.f32.mrb[0].mxu0
      %1608 = vmatprep.mubr.bf16.mxu0 0
      %1609 = vmatmul.mubr.bf16.gmra.mrb[0].mxu0 %v1426
      %v1610 = vpop.f32.mrb[0].mxu0
      %v1611 = vadd.f32 %v1105, %v1610
      %v1612 = vpop.f32.mrb[0].mxu0
      %v1613 = vpop.f32.mrb[0].mxu0
      %v1614 = vadd.f32 %v1108, %v1613
      %v1615 = vpop.f32.mrb[0].mxu0
      %1616 = vmatprep.mubr.bf16.mxu0 0
      %1617 = vmatmul.mubr.bf16.gmra.mrb[0].mxu0 %v1429
      %v1618 = vpop.f32.mrb[0].mxu0
      %v1619 = vadd.f32 %v1113, %v1618
      %v1620 = vpop.f32.mrb[0].mxu0
      %v1621 = vpop.f32.mrb[0].mxu0
      %v1622 = vadd.f32 %v1116, %v1621
      %v1623 = vpop.f32.mrb[0].mxu0
      %1624 = vmatprep.mubr.bf16.mxu0 0
      %1625 = vmatmul.mubr.bf16.gmra.mrb[0].mxu0 %v1432
      %v1626 = vpop.f32.mrb[0].mxu0
      %v1627 = vadd.f32 %v1121, %v1626
      %v1628 = vpop.f32.mrb[0].mxu0
      %v1629 = vpop.f32.mrb[0].mxu0
      %v1630 = vadd.f32 %v1124, %v1629
      %v1631 = vpop.f32.mrb[0].mxu0
      %1632 = vmatprep.mubr.bf16.mxu0 0
      %1633 = vmatmul.mubr.bf16.gmra.mrb[0].mxu0 %v1435
      %v1634 = vpop.f32.mrb[0].mxu0
      %v1635 = vadd.f32 %v1129, %v1634
      %v1636 = vpop.f32.mrb[0].mxu0
      %v1637 = vpop.f32.mrb[0].mxu0
      %v1638 = vadd.f32 %v1132, %v1637
      %v1639 = vpop.f32.mrb[0].mxu0
      %1640 = vmatprep.mubr.bf16.mxu0 0
      %1641 = vmatmul.mubr.bf16.gmra.mrb[0].mxu0 %v1438
      %v1642 = vpop.f32.mrb[0].mxu0
      %v1643 = vadd.f32 %v1137, %v1642
      %v1644 = vpop.f32.mrb[0].mxu0
      %v1645 = vpop.f32.mrb[0].mxu0
      %v1646 = vadd.f32 %v1140, %v1645
      %v1647 = vpop.f32.mrb[0].mxu0
      %1648 = vmatprep.mubr.bf16.mxu0 0
      %1649 = vmatmul.mubr.bf16.gmra.mrb[0].mxu0 %v1441
      %v1650 = vpop.f32.mrb[0].mxu0
      %v1651 = vadd.f32 %v1145, %v1650
      %v1652 = vpop.f32.mrb[0].mxu0
      %v1653 = vpop.f32.mrb[0].mxu0
      %v1654 = vadd.f32 %v1148, %v1653
      %v1655 = vpop.f32.mrb[0].mxu0
      %1656 = vmatprep.mubr.bf16.mxu0 0
      %1657 = vmatmul.mubr.bf16.gmra.mrb[0].mxu0 %v1444
      %v1658 = vpop.f32.mrb[0].mxu0
      %v1659 = vadd.f32 %v1153, %v1658
      %v1660 = vpop.f32.mrb[0].mxu0
      %v1661 = vpop.f32.mrb[0].mxu0
      %v1662 = vadd.f32 %v1156, %v1661
      %v1663 = vpop.f32.mrb[0].mxu0
      %1664 = vmatprep.mubr.bf16.mxu0 0
      %1665 = vmatmul.mubr.bf16.gmra.mrb[0].mxu0 %v1447
      %v1666 = vpop.f32.mrb[0].mxu0
      %v1667 = vpop.f32.mrb[0].mxu0
      %v1668 = vpop.f32.mrb[0].mxu0
      %v1669 = vpop.f32.mrb[0].mxu0
      %1670 = vmatprep.mubr.bf16.mxu0 0
      %1671 = vmatmul.mubr.bf16.gmra.mrb[0].mxu0 %v1450
      %v1672 = vpop.f32.mrb[0].mxu0
      %v1673 = vpop.f32.mrb[0].mxu0
      %v1674 = vpop.f32.mrb[0].mxu0
      %v1675 = vpop.f32.mrb[0].mxu0
      %1676 = vdwg.mxu0
      %s1677 = scalar_lea.vmem %s4, 16
      %v1678 = vld [vmem:[%s1677] sm:$0xf]
      %v1679 = vld [vmem:[%s1677 + $0x4] sm:$0xf]
      %vm1680 = vsmask.f32 6400
      %v1681 = vrot.slane %v1173, 1
      %v1682 = vrot.slane %v1175, 2
      %v1683 = vor.u32 %v1681, %v1682
      %v1684 = vrot.slane %v1184, 1
      %v1685 = vrot.slane %v1180, 2
      %v1686 = vor.u32 %v1684, %v1685
      %v1687 = vsel %vm1680, %v1683, %v1686
      %v1688 = vrot.slane %v1192, 1
      %v1689 = vrot.slane %v1188, 2
      %v1690 = vor.u32 %v1688, %v1689
      %v1691 = vsel %vm1680, %v1686, %v1690
      %v1692 = vrot.slane %v1200, 1
      %v1693 = vrot.slane %v1196, 2
      %v1694 = vor.u32 %v1692, %v1693
      %v1695 = vsel %vm1680, %v1690, %v1694
      %v1696 = vrot.slane %v1208, 1
      %v1697 = vrot.slane %v1204, 2
      %v1698 = vor.u32 %v1696, %v1697
      %v1699 = vsel %vm1680, %v1694, %v1698
      %v1700 = vrot.slane %v1216, 1
      %v1701 = vrot.slane %v1212, 2
      %v1702 = vor.u32 %v1700, %v1701
      %v1703 = vsel %vm1680, %v1698, %v1702
      %v1704 = vrot.slane %v1224, 1
      %v1705 = vrot.slane %v1220, 2
      %v1706 = vor.u32 %v1704, %v1705
      %v1707 = vsel %vm1680, %v1702, %v1706
      %v1708 = vrot.slane %v1232, 1
      %v1709 = vrot.slane %v1228, 2
      %v1710 = vor.u32 %v1708, %v1709
      %v1711 = vsel %vm1680, %v1706, %v1710
      %v1712 = vrot.slane %v1240, 1
      %v1713 = vrot.slane %v1236, 2
      %v1714 = vor.u32 %v1712, %v1713
      %v1715 = vsel %vm1680, %v1710, %v1714
      %v1716 = vrot.slane %v1248, 1
      %v1717 = vrot.slane %v1244, 2
      %v1718 = vor.u32 %v1716, %v1717
      %v1719 = vsel %vm1680, %v1714, %v1718
      %v1720 = vrot.slane %v1256, 1
      %v1721 = vrot.slane %v1252, 2
      %v1722 = vor.u32 %v1720, %v1721
      %v1723 = vsel %vm1680, %v1718, %v1722
      %v1724 = vrot.slane %v1264, 1
      %v1725 = vrot.slane %v1260, 2
      %v1726 = vor.u32 %v1724, %v1725
      %v1727 = vsel %vm1680, %v1722, %v1726
      %v1728 = vrot.slane %v1272, 1
      %v1729 = vrot.slane %v1268, 2
      %v1730 = vor.u32 %v1728, %v1729
      %v1731 = vsel %vm1680, %v1726, %v1730
      %v1732 = vrot.slane %v1280, 1
      %v1733 = vrot.slane %v1276, 2
      %v1734 = vor.u32 %v1732, %v1733
      %v1735 = vsel %vm1680, %v1730, %v1734
      %v1736 = vrot.slane %v1288, 1
      %v1737 = vrot.slane %v1284, 2
      %v1738 = vor.u32 %v1736, %v1737
      %v1739 = vsel %vm1680, %v1734, %v1738
      %v1740 = vrot.slane %v1296, 1
      %v1741 = vrot.slane %v1292, 2
      %v1742 = vor.u32 %v1740, %v1741
      %v1743 = vsel %vm1680, %v1738, %v1742
      %v1744 = vrot.slane %v1304, 1
      %v1745 = vrot.slane %v1300, 2
      %v1746 = vor.u32 %v1744, %v1745
      %v1747 = vsel %vm1680, %v1742, %v1746
      %v1748 = vrot.slane %v1312, 1
      %v1749 = vrot.slane %v1308, 2
      %v1750 = vor.u32 %v1748, %v1749
      %v1751 = vsel %vm1680, %v1746, %v1750
      %v1752 = vrot.slane %v1320, 1
      %v1753 = vrot.slane %v1316, 2
      %v1754 = vor.u32 %v1752, %v1753
      %v1755 = vsel %vm1680, %v1750, %v1754
      %v1756 = vrot.slane %v1328, 1
      %v1757 = vrot.slane %v1324, 2
      %v1758 = vor.u32 %v1756, %v1757
      %v1759 = vsel %vm1680, %v1754, %v1758
      %v1760 = vrot.slane %v1336, 1
      %v1761 = vrot.slane %v1332, 2
      %v1762 = vor.u32 %v1760, %v1761
      %v1763 = vsel %vm1680, %v1758, %v1762
      %v1764 = vrot.slane %v1344, 1
      %v1765 = vrot.slane %v1340, 2
      %v1766 = vor.u32 %v1764, %v1765
      %v1767 = vsel %vm1680, %v1762, %v1766
      %v1768 = vrot.slane %v1352, 1
      %v1769 = vrot.slane %v1348, 2
      %v1770 = vor.u32 %v1768, %v1769
      %v1771 = vsel %vm1680, %v1766, %v1770
      %v1772 = vrot.slane %v1360, 1
      %v1773 = vrot.slane %v1356, 2
      %v1774 = vor.u32 %v1772, %v1773
      %v1775 = vsel %vm1680, %v1770, %v1774
      %v1776 = vrot.slane %v1368, 1
      %v1777 = vrot.slane %v1364, 2
      %v1778 = vor.u32 %v1776, %v1777
      %v1779 = vsel %vm1680, %v1774, %v1778
      %v1782 = vunpack.c.l.b16 %v1678
      %v1783 = vunpack.c.l.b16 %v1679
      %v1784 = vpack.c.b16 %v1783, %v1782
      %v1787 = vsel %vm870, %v1687, 0
      %v1790 = vsel %vm870, %v1691, 0
      %v1793 = vsel %vm870, %v1695, 0
      %v1796 = vsel %vm870, %v1699, 0
      %v1799 = vsel %vm870, %v1703, 0
      %v1802 = vsel %vm870, %v1707, 0
      %v1805 = vsel %vm870, %v1711, 0
      %v1808 = vsel %vm870, %v1715, 0
      %v1811 = vsel %vm870, %v1719, 0
      %v1814 = vsel %vm870, %v1723, 0
      %v1817 = vsel %vm870, %v1727, 0
      %v1820 = vsel %vm870, %v1731, 0
      %v1823 = vsel %vm870, %v1735, 0
      %v1826 = vsel %vm870, %v1739, 0
      %v1829 = vsel %vm870, %v1743, 0
      %v1832 = vsel %vm870, %v1747, 0
      %v1835 = vsel %vm870, %v1751, 0
      %v1838 = vsel %vm870, %v1755, 0
      %v1841 = vsel %vm870, %v1759, 0
      %v1844 = vsel %vm870, %v1763, 0
      %v1847 = vsel %vm870, %v1767, 0
      %v1850 = vsel %vm870, %v1771, 0
      %v1853 = vsel %vm870, %v1775, 0
      %v1856 = vsel %vm870, %v1779, 0
      %v1859 = vsel %vm870, %v1778, 0
      %1861 = vmatprep.subr.bf16.mxu0 0
      %1862 = vmatpush1.bf16.msra.mxu0 %v1784
      %1863 = vmatprep.subr.bf16.mxu0 0
      %1864 = vmatpush1.bf16.msra.mxu0 0
      %1865 = vmatprep.subr.bf16.mxu0 0
      %1866 = vmatpush1.bf16.msra.mxu0 0
      %1867 = vmatprep.subr.bf16.mxu0 0
      %1868 = vmatpush1.bf16.msra.mxu0 0
      %1869 = vmatprep.subr.bf16.mxu0 0
      %1870 = vmatpush1.bf16.msra.mxu0 0
      %1871 = vmatprep.subr.bf16.mxu0 0
      %1872 = vmatpush1.bf16.msra.mxu0 0
      %1873 = vmatprep.subr.bf16.mxu0 0
      %1874 = vmatpush1.bf16.msra.mxu0 0
      %1875 = vmatprep.subr.bf16.mxu0 0
      %1876 = vmatpush1.bf16.msra.mxu0 0
      %1877 = vmatprep.subr.bf16.mxu0 0
      %1878 = vmatpush1.bf16.msra.mxu0 0
      %1879 = vmatprep.subr.bf16.mxu0 0
      %1880 = vmatpush1.bf16.msra.mxu0 0
      %1881 = vmatprep.subr.bf16.mxu0 0
      %1882 = vmatpush1.bf16.msra.mxu0 0
      %1883 = vmatprep.subr.bf16.mxu0 0
      %1884 = vmatpush1.bf16.msra.mxu0 0
      %1885 = vmatprep.subr.bf16.mxu0 0
      %1886 = vmatpush1.bf16.msra.mxu0 0
      %1887 = vmatprep.subr.bf16.mxu0 0
      %1888 = vmatpush1.bf16.msra.mxu0 0
      %1889 = vmatprep.subr.bf16.mxu0 0
      %1890 = vmatpush1.bf16.msra.mxu0 0
      %1891 = vmatprep.subr.bf16.mxu0 0
      %1892 = vmatpush1.bf16.msra.mxu0 0
      %1893 = vmatprep.mubr.bf16.mxu0 0
      %1894 = vmatmul.mubr.bf16.gmra.mrb[0].mxu0 %v1787
      %v1895 = vpop.f32.mrb[0].mxu0
      %v1896 = vpop.f32.mrb[0].mxu0
      %v1897 = vpop.f32.mrb[0].mxu0
      %v1898 = vpop.f32.mrb[0].mxu0
      %1899 = vmatprep.mubr.bf16.mxu0 0
      %1900 = vmatmul.mubr.bf16.gmra.mrb[0].mxu0 %v1790
      %v1901 = vpop.f32.mrb[0].mxu0
      %v1902 = vpop.f32.mrb[0].mxu0
      %v1903 = vpop.f32.mrb[0].mxu0
      %v1904 = vpop.f32.mrb[0].mxu0
      %1905 = vmatprep.mubr.bf16.mxu0 0
      %1906 = vmatmul.mubr.bf16.gmra.mrb[0].mxu0 %v1793
      %v1907 = vpop.f32.mrb[0].mxu0
      %v1908 = vadd.f32 0.0, %v1907
      %v1909 = vpop.f32.mrb[0].mxu0
      %v1910 = vpop.f32.mrb[0].mxu0
      %v1911 = vadd.f32 0.0, %v1910
      %v1912 = vpop.f32.mrb[0].mxu0
      %1913 = vmatprep.mubr.bf16.mxu0 0
      %1914 = vmatmul.mubr.bf16.gmra.mrb[0].mxu0 %v1796
      %v1915 = vpop.f32.mrb[0].mxu0
      %v1916 = vadd.f32 0.0, %v1915
      %v1917 = vpop.f32.mrb[0].mxu0
      %v1918 = vpop.f32.mrb[0].mxu0
      %v1919 = vadd.f32 0.0, %v1918
      %v1920 = vpop.f32.mrb[0].mxu0
      %1921 = vmatprep.mubr.bf16.mxu0 0
      %1922 = vmatmul.mubr.bf16.gmra.mrb[0].mxu0 %v1799
      %v1923 = vpop.f32.mrb[0].mxu0
      %v1924 = vadd.f32 0.0, %v1923
      %v1925 = vpop.f32.mrb[0].mxu0
      %v1926 = vpop.f32.mrb[0].mxu0
      %v1927 = vadd.f32 0.0, %v1926
      %v1928 = vpop.f32.mrb[0].mxu0
      %1929 = vmatprep.mubr.bf16.mxu0 0
      %1930 = vmatmul.mubr.bf16.gmra.mrb[0].mxu0 %v1802
      %v1931 = vpop.f32.mrb[0].mxu0
      %v1932 = vadd.f32 0.0, %v1931
      %v1933 = vpop.f32.mrb[0].mxu0
      %v1934 = vpop.f32.mrb[0].mxu0
      %v1935 = vadd.f32 0.0, %v1934
      %v1936 = vpop.f32.mrb[0].mxu0
      %1937 = vmatprep.mubr.bf16.mxu0 0
      %1938 = vmatmul.mubr.bf16.gmra.mrb[0].mxu0 %v1805
      %v1939 = vpop.f32.mrb[0].mxu0
      %v1940 = vadd.f32 0.0, %v1939
      %v1941 = vpop.f32.mrb[0].mxu0
      %v1942 = vpop.f32.mrb[0].mxu0
      %v1943 = vadd.f32 0.0, %v1942
      %v1944 = vpop.f32.mrb[0].mxu0
      %1945 = vmatprep.mubr.bf16.mxu0 0
      %1946 = vmatmul.mubr.bf16.gmra.mrb[0].mxu0 %v1808
      %v1947 = vpop.f32.mrb[0].mxu0
      %v1948 = vadd.f32 0.0, %v1947
      %v1949 = vpop.f32.mrb[0].mxu0
      %v1950 = vpop.f32.mrb[0].mxu0
      %v1951 = vadd.f32 0.0, %v1950
      %v1952 = vpop.f32.mrb[0].mxu0
      %1953 = vmatprep.mubr.bf16.mxu0 0
      %1954 = vmatmul.mubr.bf16.gmra.mrb[0].mxu0 %v1811
      %v1955 = vpop.f32.mrb[0].mxu0
      %v1956 = vadd.f32 0.0, %v1955
      %v1957 = vpop.f32.mrb[0].mxu0
      %v1958 = vpop.f32.mrb[0].mxu0
      %v1959 = vadd.f32 0.0, %v1958
      %v1960 = vpop.f32.mrb[0].mxu0
      %1961 = vmatprep.mubr.bf16.mxu0 0
      %1962 = vmatmul.mubr.bf16.gmra.mrb[0].mxu0 %v1814
      %v1963 = vpop.f32.mrb[0].mxu0
      %v1964 = vadd.f32 0.0, %v1963
      %v1965 = vpop.f32.mrb[0].mxu0
      %v1966 = vpop.f32.mrb[0].mxu0
      %v1967 = vadd.f32 0.0, %v1966
      %v1968 = vpop.f32.mrb[0].mxu0
      %1969 = vmatprep.mubr.bf16.mxu0 0
      %1970 = vmatmul.mubr.bf16.gmra.mrb[0].mxu0 %v1817
      %v1971 = vpop.f32.mrb[0].mxu0
      %v1972 = vadd.f32 0.0, %v1971
      %v1973 = vpop.f32.mrb[0].mxu0
      %v1974 = vpop.f32.mrb[0].mxu0
      %v1975 = vadd.f32 0.0, %v1974
      %v1976 = vpop.f32.mrb[0].mxu0
      %1977 = vmatprep.mubr.bf16.mxu0 0
      %1978 = vmatmul.mubr.bf16.gmra.mrb[0].mxu0 %v1820
      %v1979 = vpop.f32.mrb[0].mxu0
      %v1980 = vadd.f32 0.0, %v1979
      %v1981 = vpop.f32.mrb[0].mxu0
      %v1982 = vpop.f32.mrb[0].mxu0
      %v1983 = vadd.f32 0.0, %v1982
      %v1984 = vpop.f32.mrb[0].mxu0
      %1985 = vmatprep.mubr.bf16.mxu0 0
      %1986 = vmatmul.mubr.bf16.gmra.mrb[0].mxu0 %v1823
      %v1987 = vpop.f32.mrb[0].mxu0
      %v1988 = vadd.f32 0.0, %v1987
      %v1989 = vpop.f32.mrb[0].mxu0
      %v1990 = vpop.f32.mrb[0].mxu0
      %v1991 = vadd.f32 0.0, %v1990
      %v1992 = vpop.f32.mrb[0].mxu0
      %1993 = vmatprep.mubr.bf16.mxu0 0
      %1994 = vmatmul.mubr.bf16.gmra.mrb[0].mxu0 %v1826
      %v1995 = vpop.f32.mrb[0].mxu0
      %v1996 = vadd.f32 0.0, %v1995
      %v1997 = vpop.f32.mrb[0].mxu0
      %v1998 = vpop.f32.mrb[0].mxu0
      %v1999 = vadd.f32 0.0, %v1998
      %v2000 = vpop.f32.mrb[0].mxu0
      %2001 = vmatprep.mubr.bf16.mxu0 0
      %2002 = vmatmul.mubr.bf16.gmra.mrb[0].mxu0 %v1829
      %v2003 = vpop.f32.mrb[0].mxu0
      %v2004 = vadd.f32 0.0, %v2003
      %v2005 = vpop.f32.mrb[0].mxu0
      %v2006 = vpop.f32.mrb[0].mxu0
      %v2007 = vadd.f32 0.0, %v2006
      %v2008 = vpop.f32.mrb[0].mxu0
      %2009 = vmatprep.mubr.bf16.mxu0 0
      %2010 = vmatmul.mubr.bf16.gmra.mrb[0].mxu0 %v1832
      %v2011 = vpop.f32.mrb[0].mxu0
      %v2012 = vadd.f32 0.0, %v2011
      %v2013 = vpop.f32.mrb[0].mxu0
      %v2014 = vpop.f32.mrb[0].mxu0
      %v2015 = vadd.f32 0.0, %v2014
      %v2016 = vpop.f32.mrb[0].mxu0
      %2017 = vmatprep.mubr.bf16.mxu0 0
      %2018 = vmatmul.mubr.bf16.gmra.mrb[0].mxu0 %v1835
      %v2019 = vpop.f32.mrb[0].mxu0
      %v2020 = vadd.f32 0.0, %v2019
      %v2021 = vpop.f32.mrb[0].mxu0
      %v2022 = vpop.f32.mrb[0].mxu0
      %v2023 = vadd.f32 0.0, %v2022
      %v2024 = vpop.f32.mrb[0].mxu0
      %2025 = vmatprep.mubr.bf16.mxu0 0
      %2026 = vmatmul.mubr.bf16.gmra.mrb[0].mxu0 %v1838
      %v2027 = vpop.f32.mrb[0].mxu0
      %v2028 = vadd.f32 0.0, %v2027
      %v2029 = vpop.f32.mrb[0].mxu0
      %v2030 = vpop.f32.mrb[0].mxu0
      %v2031 = vadd.f32 0.0, %v2030
      %v2032 = vpop.f32.mrb[0].mxu0
      %2033 = vmatprep.mubr.bf16.mxu0 0
      %2034 = vmatmul.mubr.bf16.gmra.mrb[0].mxu0 %v1841
      %v2035 = vpop.f32.mrb[0].mxu0
      %v2036 = vadd.f32 0.0, %v2035
      %v2037 = vpop.f32.mrb[0].mxu0
      %v2038 = vpop.f32.mrb[0].mxu0
      %v2039 = vadd.f32 0.0, %v2038
      %v2040 = vpop.f32.mrb[0].mxu0
      %2041 = vmatprep.mubr.bf16.mxu0 0
      %2042 = vmatmul.mubr.bf16.gmra.mrb[0].mxu0 %v1844
      %v2043 = vpop.f32.mrb[0].mxu0
      %v2044 = vadd.f32 0.0, %v2043
      %v2045 = vpop.f32.mrb[0].mxu0
      %v2046 = vpop.f32.mrb[0].mxu0
      %v2047 = vadd.f32 0.0, %v2046
      %v2048 = vpop.f32.mrb[0].mxu0
      %2049 = vmatprep.mubr.bf16.mxu0 0
      %2050 = vmatmul.mubr.bf16.gmra.mrb[0].mxu0 %v1847
      %v2051 = vpop.f32.mrb[0].mxu0
      %v2052 = vadd.f32 0.0, %v2051
      %v2053 = vpop.f32.mrb[0].mxu0
      %v2054 = vpop.f32.mrb[0].mxu0
      %v2055 = vadd.f32 0.0, %v2054
      %v2056 = vpop.f32.mrb[0].mxu0
      %2057 = vmatprep.mubr.bf16.mxu0 0
      %2058 = vmatmul.mubr.bf16.gmra.mrb[0].mxu0 %v1850
      %v2059 = vpop.f32.mrb[0].mxu0
      %v2060 = vadd.f32 0.0, %v2059
      %v2061 = vpop.f32.mrb[0].mxu0
      %v2062 = vpop.f32.mrb[0].mxu0
      %v2063 = vadd.f32 0.0, %v2062
      %v2064 = vpop.f32.mrb[0].mxu0
      %2065 = vmatprep.mubr.bf16.mxu0 0
      %2066 = vmatmul.mubr.bf16.gmra.mrb[0].mxu0 %v1853
      %v2067 = vpop.f32.mrb[0].mxu0
      %v2068 = vadd.f32 0.0, %v2067
      %v2069 = vpop.f32.mrb[0].mxu0
      %v2070 = vpop.f32.mrb[0].mxu0
      %v2071 = vadd.f32 0.0, %v2070
      %v2072 = vpop.f32.mrb[0].mxu0
      %2073 = vmatprep.mubr.bf16.mxu0 0
      %2074 = vmatmul.mubr.bf16.gmra.mrb[0].mxu0 %v1856
      %v2075 = vpop.f32.mrb[0].mxu0
      %v2076 = vpop.f32.mrb[0].mxu0
      %v2077 = vpop.f32.mrb[0].mxu0
      %v2078 = vpop.f32.mrb[0].mxu0
      %2079 = vmatprep.mubr.bf16.mxu0 0
      %2080 = vmatmul.mubr.bf16.gmra.mrb[0].mxu0 %v1859
      %v2081 = vpop.f32.mrb[0].mxu0
      %v2082 = vpop.f32.mrb[0].mxu0
      %v2083 = vpop.f32.mrb[0].mxu0
      %v2084 = vpop.f32.mrb[0].mxu0
      %2085 = vdwg.mxu0
      %v2086 = vadd.f32 %v1499, %v1908
      %v2087 = vadd.f32 %v1502, %v1911
      %v2088 = vadd.f32 %v1507, %v1916
      %v2089 = vadd.f32 %v1510, %v1919
      %v2090 = vadd.f32 %v1515, %v1924
      %v2091 = vadd.f32 %v1518, %v1927
      %v2092 = vadd.f32 %v1523, %v1932
      %v2093 = vadd.f32 %v1526, %v1935
      %v2094 = vadd.f32 %v1531, %v1940
      %v2095 = vadd.f32 %v1534, %v1943
      %v2096 = vadd.f32 %v1539, %v1948
      %v2097 = vadd.f32 %v1542, %v1951
      %v2098 = vadd.f32 %v1547, %v1956
      %v2099 = vadd.f32 %v1550, %v1959
      %v2100 = vadd.f32 %v1555, %v1964
      %v2101 = vadd.f32 %v1558, %v1967
      %v2102 = vadd.f32 %v1563, %v1972
      %v2103 = vadd.f32 %v1566, %v1975
      %v2104 = vadd.f32 %v1571, %v1980
      %v2105 = vadd.f32 %v1574, %v1983
      %v2106 = vadd.f32 %v1579, %v1988
      %v2107 = vadd.f32 %v1582, %v1991
      %v2108 = vadd.f32 %v1587, %v1996
      %v2109 = vadd.f32 %v1590, %v1999
      %v2110 = vadd.f32 %v1595, %v2004
      %v2111 = vadd.f32 %v1598, %v2007
      %v2112 = vadd.f32 %v1603, %v2012
      %v2113 = vadd.f32 %v1606, %v2015
      %v2114 = vadd.f32 %v1611, %v2020
      %v2115 = vadd.f32 %v1614, %v2023
      %v2116 = vadd.f32 %v1619, %v2028
      %v2117 = vadd.f32 %v1622, %v2031
      %v2118 = vadd.f32 %v1627, %v2036
      %v2119 = vadd.f32 %v1630, %v2039
      %v2120 = vadd.f32 %v1635, %v2044
      %v2121 = vadd.f32 %v1638, %v2047
      %v2122 = vadd.f32 %v1643, %v2052
      %v2123 = vadd.f32 %v1646, %v2055
      %v2124 = vadd.f32 %v1651, %v2060
      %v2125 = vadd.f32 %v1654, %v2063
      %v2126 = vadd.f32 %v1659, %v2068
      %v2127 = vadd.f32 %v1662, %v2071
      %s2128 = scalar_lea.vmem %s4, 24
      %v2129 = vld [vmem:[%s2128] sm:$0xf]
      %v2130 = vld [vmem:[%s2128 + $0x4] sm:$0xf]
      %v2132 = vshrl.u32 %v781, 16
      %v2134 = vrot.slane %v2132, 1
      %v2135 = vshll.u32 %v781, 16
      %v2137 = vrot.slane %v2135, 2
      %v2138 = vor.u32 %v2134, %v2137
      %v2139 = vsel %vm1680, %v1778, %v2138
      %v2142 = vunpack.c.l.b16 %v2129
      %v2143 = vunpack.c.l.b16 %v2130
      %v2144 = vpack.c.b16 %v2143, %v2142
      %v2147 = vsel %vm870, %v2139, 0
      %v2150 = vsel %vm870, %v2138, 0
      %2152 = vmatprep.subr.bf16.mxu0 0
      %2153 = vmatpush1.bf16.msra.mxu0 %v2144
      %2154 = vmatprep.subr.bf16.mxu0 0
      %2155 = vmatpush1.bf16.msra.mxu0 0
      %2156 = vmatprep.subr.bf16.mxu0 0
      %2157 = vmatpush1.bf16.msra.mxu0 0
      %2158 = vmatprep.subr.bf16.mxu0 0
      %2159 = vmatpush1.bf16.msra.mxu0 0
      %2160 = vmatprep.subr.bf16.mxu0 0
      %2161 = vmatpush1.bf16.msra.mxu0 0
      %2162 = vmatprep.subr.bf16.mxu0 0
      %2163 = vmatpush1.bf16.msra.mxu0 0
      %2164 = vmatprep.subr.bf16.mxu0 0
      %2165 = vmatpush1.bf16.msra.mxu0 0
      %2166 = vmatprep.subr.bf16.mxu0 0
      %2167 = vmatpush1.bf16.msra.mxu0 0
      %2168 = vmatprep.subr.bf16.mxu0 0
      %2169 = vmatpush1.bf16.msra.mxu0 0
      %2170 = vmatprep.subr.bf16.mxu0 0
      %2171 = vmatpush1.bf16.msra.mxu0 0
      %2172 = vmatprep.subr.bf16.mxu0 0
      %2173 = vmatpush1.bf16.msra.mxu0 0
      %2174 = vmatprep.subr.bf16.mxu0 0
      %2175 = vmatpush1.bf16.msra.mxu0 0
      %2176 = vmatprep.subr.bf16.mxu0 0
      %2177 = vmatpush1.bf16.msra.mxu0 0
      %2178 = vmatprep.subr.bf16.mxu0 0
      %2179 = vmatpush1.bf16.msra.mxu0 0
      %2180 = vmatprep.subr.bf16.mxu0 0
      %2181 = vmatpush1.bf16.msra.mxu0 0
      %2182 = vmatprep.subr.bf16.mxu0 0
      %2183 = vmatpush1.bf16.msra.mxu0 0
      %2184 = vmatprep.mubr.bf16.mxu0 0
      %2185 = vmatmul.mubr.bf16.gmra.mrb[0].mxu0 %v1790
      %v2186 = vpop.f32.mrb[0].mxu0
      %v2187 = vpop.f32.mrb[0].mxu0
      %v2188 = vpop.f32.mrb[0].mxu0
      %v2189 = vpop.f32.mrb[0].mxu0
      %2190 = vmatprep.mubr.bf16.mxu0 0
      %2191 = vmatmul.mubr.bf16.gmra.mrb[0].mxu0 %v1793
      %v2192 = vpop.f32.mrb[0].mxu0
      %v2193 = vpop.f32.mrb[0].mxu0
      %v2194 = vpop.f32.mrb[0].mxu0
      %v2195 = vpop.f32.mrb[0].mxu0
      %2196 = vmatprep.mubr.bf16.mxu0 0
      %2197 = vmatmul.mubr.bf16.gmra.mrb[0].mxu0 %v1796
      %v2198 = vpop.f32.mrb[0].mxu0
      %v2199 = vadd.f32 0.0, %v2198
      %v2200 = vpop.f32.mrb[0].mxu0
      %v2201 = vpop.f32.mrb[0].mxu0
      %v2202 = vadd.f32 0.0, %v2201
      %v2203 = vpop.f32.mrb[0].mxu0
      %2204 = vmatprep.mubr.bf16.mxu0 0
      %2205 = vmatmul.mubr.bf16.gmra.mrb[0].mxu0 %v1799
      %v2206 = vpop.f32.mrb[0].mxu0
      %v2207 = vadd.f32 0.0, %v2206
      %v2208 = vpop.f32.mrb[0].mxu0
      %v2209 = vpop.f32.mrb[0].mxu0
      %v2210 = vadd.f32 0.0, %v2209
      %v2211 = vpop.f32.mrb[0].mxu0
      %2212 = vmatprep.mubr.bf16.mxu0 0
      %2213 = vmatmul.mubr.bf16.gmra.mrb[0].mxu0 %v1802
      %v2214 = vpop.f32.mrb[0].mxu0
      %v2215 = vadd.f32 0.0, %v2214
      %v2216 = vpop.f32.mrb[0].mxu0
      %v2217 = vpop.f32.mrb[0].mxu0
      %v2218 = vadd.f32 0.0, %v2217
      %v2219 = vpop.f32.mrb[0].mxu0
      %2220 = vmatprep.mubr.bf16.mxu0 0
      %2221 = vmatmul.mubr.bf16.gmra.mrb[0].mxu0 %v1805
      %v2222 = vpop.f32.mrb[0].mxu0
      %v2223 = vadd.f32 0.0, %v2222
      %v2224 = vpop.f32.mrb[0].mxu0
      %v2225 = vpop.f32.mrb[0].mxu0
      %v2226 = vadd.f32 0.0, %v2225
      %v2227 = vpop.f32.mrb[0].mxu0
      %2228 = vmatprep.mubr.bf16.mxu0 0
      %2229 = vmatmul.mubr.bf16.gmra.mrb[0].mxu0 %v1808
      %v2230 = vpop.f32.mrb[0].mxu0
      %v2231 = vadd.f32 0.0, %v2230
      %v2232 = vpop.f32.mrb[0].mxu0
      %v2233 = vpop.f32.mrb[0].mxu0
      %v2234 = vadd.f32 0.0, %v2233
      %v2235 = vpop.f32.mrb[0].mxu0
      %2236 = vmatprep.mubr.bf16.mxu0 0
      %2237 = vmatmul.mubr.bf16.gmra.mrb[0].mxu0 %v1811
      %v2238 = vpop.f32.mrb[0].mxu0
      %v2239 = vadd.f32 0.0, %v2238
      %v2240 = vpop.f32.mrb[0].mxu0
      %v2241 = vpop.f32.mrb[0].mxu0
      %v2242 = vadd.f32 0.0, %v2241
      %v2243 = vpop.f32.mrb[0].mxu0
      %2244 = vmatprep.mubr.bf16.mxu0 0
      %2245 = vmatmul.mubr.bf16.gmra.mrb[0].mxu0 %v1814
      %v2246 = vpop.f32.mrb[0].mxu0
      %v2247 = vadd.f32 0.0, %v2246
      %v2248 = vpop.f32.mrb[0].mxu0
      %v2249 = vpop.f32.mrb[0].mxu0
      %v2250 = vadd.f32 0.0, %v2249
      %v2251 = vpop.f32.mrb[0].mxu0
      %2252 = vmatprep.mubr.bf16.mxu0 0
      %2253 = vmatmul.mubr.bf16.gmra.mrb[0].mxu0 %v1817
      %v2254 = vpop.f32.mrb[0].mxu0
      %v2255 = vadd.f32 0.0, %v2254
      %v2256 = vpop.f32.mrb[0].mxu0
      %v2257 = vpop.f32.mrb[0].mxu0
      %v2258 = vadd.f32 0.0, %v2257
      %v2259 = vpop.f32.mrb[0].mxu0
      %2260 = vmatprep.mubr.bf16.mxu0 0
      %2261 = vmatmul.mubr.bf16.gmra.mrb[0].mxu0 %v1820
      %v2262 = vpop.f32.mrb[0].mxu0
      %v2263 = vadd.f32 0.0, %v2262
      %v2264 = vpop.f32.mrb[0].mxu0
      %v2265 = vpop.f32.mrb[0].mxu0
      %v2266 = vadd.f32 0.0, %v2265
      %v2267 = vpop.f32.mrb[0].mxu0
      %2268 = vmatprep.mubr.bf16.mxu0 0
      %2269 = vmatmul.mubr.bf16.gmra.mrb[0].mxu0 %v1823
      %v2270 = vpop.f32.mrb[0].mxu0
      %v2271 = vadd.f32 0.0, %v2270
      %v2272 = vpop.f32.mrb[0].mxu0
      %v2273 = vpop.f32.mrb[0].mxu0
      %v2274 = vadd.f32 0.0, %v2273
      %v2275 = vpop.f32.mrb[0].mxu0
      %2276 = vmatprep.mubr.bf16.mxu0 0
      %2277 = vmatmul.mubr.bf16.gmra.mrb[0].mxu0 %v1826
      %v2278 = vpop.f32.mrb[0].mxu0
      %v2279 = vadd.f32 0.0, %v2278
      %v2280 = vpop.f32.mrb[0].mxu0
      %v2281 = vpop.f32.mrb[0].mxu0
      %v2282 = vadd.f32 0.0, %v2281
      %v2283 = vpop.f32.mrb[0].mxu0
      %2284 = vmatprep.mubr.bf16.mxu0 0
      %2285 = vmatmul.mubr.bf16.gmra.mrb[0].mxu0 %v1829
      %v2286 = vpop.f32.mrb[0].mxu0
      %v2287 = vadd.f32 0.0, %v2286
      %v2288 = vpop.f32.mrb[0].mxu0
      %v2289 = vpop.f32.mrb[0].mxu0
      %v2290 = vadd.f32 0.0, %v2289
      %v2291 = vpop.f32.mrb[0].mxu0
      %2292 = vmatprep.mubr.bf16.mxu0 0
      %2293 = vmatmul.mubr.bf16.gmra.mrb[0].mxu0 %v1832
      %v2294 = vpop.f32.mrb[0].mxu0
      %v2295 = vadd.f32 0.0, %v2294
      %v2296 = vpop.f32.mrb[0].mxu0
      %v2297 = vpop.f32.mrb[0].mxu0
      %v2298 = vadd.f32 0.0, %v2297
      %v2299 = vpop.f32.mrb[0].mxu0
      %2300 = vmatprep.mubr.bf16.mxu0 0
      %2301 = vmatmul.mubr.bf16.gmra.mrb[0].mxu0 %v1835
      %v2302 = vpop.f32.mrb[0].mxu0
      %v2303 = vadd.f32 0.0, %v2302
      %v2304 = vpop.f32.mrb[0].mxu0
      %v2305 = vpop.f32.mrb[0].mxu0
      %v2306 = vadd.f32 0.0, %v2305
      %v2307 = vpop.f32.mrb[0].mxu0
      %2308 = vmatprep.mubr.bf16.mxu0 0
      %2309 = vmatmul.mubr.bf16.gmra.mrb[0].mxu0 %v1838
      %v2310 = vpop.f32.mrb[0].mxu0
      %v2311 = vadd.f32 0.0, %v2310
      %v2312 = vpop.f32.mrb[0].mxu0
      %v2313 = vpop.f32.mrb[0].mxu0
      %v2314 = vadd.f32 0.0, %v2313
      %v2315 = vpop.f32.mrb[0].mxu0
      %2316 = vmatprep.mubr.bf16.mxu0 0
      %2317 = vmatmul.mubr.bf16.gmra.mrb[0].mxu0 %v1841
      %v2318 = vpop.f32.mrb[0].mxu0
      %v2319 = vadd.f32 0.0, %v2318
      %v2320 = vpop.f32.mrb[0].mxu0
      %v2321 = vpop.f32.mrb[0].mxu0
      %v2322 = vadd.f32 0.0, %v2321
      %v2323 = vpop.f32.mrb[0].mxu0
      %2324 = vmatprep.mubr.bf16.mxu0 0
      %2325 = vmatmul.mubr.bf16.gmra.mrb[0].mxu0 %v1844
      %v2326 = vpop.f32.mrb[0].mxu0
      %v2327 = vadd.f32 0.0, %v2326
      %v2328 = vpop.f32.mrb[0].mxu0
      %v2329 = vpop.f32.mrb[0].mxu0
      %v2330 = vadd.f32 0.0, %v2329
      %v2331 = vpop.f32.mrb[0].mxu0
      %2332 = vmatprep.mubr.bf16.mxu0 0
      %2333 = vmatmul.mubr.bf16.gmra.mrb[0].mxu0 %v1847
      %v2334 = vpop.f32.mrb[0].mxu0
      %v2335 = vadd.f32 0.0, %v2334
      %v2336 = vpop.f32.mrb[0].mxu0
      %v2337 = vpop.f32.mrb[0].mxu0
      %v2338 = vadd.f32 0.0, %v2337
      %v2339 = vpop.f32.mrb[0].mxu0
      %2340 = vmatprep.mubr.bf16.mxu0 0
      %2341 = vmatmul.mubr.bf16.gmra.mrb[0].mxu0 %v1850
      %v2342 = vpop.f32.mrb[0].mxu0
      %v2343 = vadd.f32 0.0, %v2342
      %v2344 = vpop.f32.mrb[0].mxu0
      %v2345 = vpop.f32.mrb[0].mxu0
      %v2346 = vadd.f32 0.0, %v2345
      %v2347 = vpop.f32.mrb[0].mxu0
      %2348 = vmatprep.mubr.bf16.mxu0 0
      %2349 = vmatmul.mubr.bf16.gmra.mrb[0].mxu0 %v1853
      %v2350 = vpop.f32.mrb[0].mxu0
      %v2351 = vadd.f32 0.0, %v2350
      %v2352 = vpop.f32.mrb[0].mxu0
      %v2353 = vpop.f32.mrb[0].mxu0
      %v2354 = vadd.f32 0.0, %v2353
      %v2355 = vpop.f32.mrb[0].mxu0
      %2356 = vmatprep.mubr.bf16.mxu0 0
      %2357 = vmatmul.mubr.bf16.gmra.mrb[0].mxu0 %v1856
      %v2358 = vpop.f32.mrb[0].mxu0
      %v2359 = vadd.f32 0.0, %v2358
      %v2360 = vpop.f32.mrb[0].mxu0
      %v2361 = vpop.f32.mrb[0].mxu0
      %v2362 = vadd.f32 0.0, %v2361
      %v2363 = vpop.f32.mrb[0].mxu0
      %2364 = vmatprep.mubr.bf16.mxu0 0
      %2365 = vmatmul.mubr.bf16.gmra.mrb[0].mxu0 %v2147
      %v2366 = vpop.f32.mrb[0].mxu0
      %v2367 = vpop.f32.mrb[0].mxu0
      %v2368 = vpop.f32.mrb[0].mxu0
      %v2369 = vpop.f32.mrb[0].mxu0
      %2370 = vmatprep.mubr.bf16.mxu0 0
      %2371 = vmatmul.mubr.bf16.gmra.mrb[0].mxu0 %v2150
      %v2372 = vpop.f32.mrb[0].mxu0
      %v2373 = vpop.f32.mrb[0].mxu0
      %v2374 = vpop.f32.mrb[0].mxu0
      %v2375 = vpop.f32.mrb[0].mxu0
      %2376 = vdwg.mxu0
      %v2377 = vadd.f32 %v2086, %v2199
      %v2378 = vadd.f32 %v2087, %v2202
      %v2379 = vadd.f32 %v2088, %v2207
      %v2380 = vadd.f32 %v2089, %v2210
      %v2381 = vadd.f32 %v2090, %v2215
      %v2382 = vadd.f32 %v2091, %v2218
      %v2383 = vadd.f32 %v2092, %v2223
      %v2384 = vadd.f32 %v2093, %v2226
      %v2385 = vadd.f32 %v2094, %v2231
      %v2386 = vadd.f32 %v2095, %v2234
      %v2387 = vadd.f32 %v2096, %v2239
      %v2388 = vadd.f32 %v2097, %v2242
      %v2389 = vadd.f32 %v2098, %v2247
      %v2390 = vadd.f32 %v2099, %v2250
      %v2391 = vadd.f32 %v2100, %v2255
      %v2392 = vadd.f32 %v2101, %v2258
      %v2393 = vadd.f32 %v2102, %v2263
      %v2394 = vadd.f32 %v2103, %v2266
      %v2395 = vadd.f32 %v2104, %v2271
      %v2396 = vadd.f32 %v2105, %v2274
      %v2397 = vadd.f32 %v2106, %v2279
      %v2398 = vadd.f32 %v2107, %v2282
      %v2399 = vadd.f32 %v2108, %v2287
      %v2400 = vadd.f32 %v2109, %v2290
      %v2401 = vadd.f32 %v2110, %v2295
      %v2402 = vadd.f32 %v2111, %v2298
      %v2403 = vadd.f32 %v2112, %v2303
      %v2404 = vadd.f32 %v2113, %v2306
      %v2405 = vadd.f32 %v2114, %v2311
      %v2406 = vadd.f32 %v2115, %v2314
      %v2407 = vadd.f32 %v2116, %v2319
      %v2408 = vadd.f32 %v2117, %v2322
      %v2409 = vadd.f32 %v2118, %v2327
      %v2410 = vadd.f32 %v2119, %v2330
      %v2411 = vadd.f32 %v2120, %v2335
      %v2412 = vadd.f32 %v2121, %v2338
      %v2413 = vadd.f32 %v2122, %v2343
      %v2414 = vadd.f32 %v2123, %v2346
      %v2415 = vadd.f32 %v2124, %v2351
      %v2416 = vadd.f32 %v2125, %v2354
      %v2417 = vadd.f32 %v2126, %v2359
      %v2418 = vadd.f32 %v2127, %v2362
      %s2419 = scalar_lea.vmem %s4, 32
      %v2420 = vld [vmem:[%s2419] sm:$0xf]
      %v2421 = vld [vmem:[%s2419 + $0x4] sm:$0xf]
      %vm2423 = vcmask 1045504
      %v2424 = vrot.slane %v757, 2
      %v2425 = vrot.slane %v758, 2
      %v2426 = vsel %vm2423, %v2424, %v2425
      %v2427 = vrot.slane %v759, 2
      %v2428 = vsel %vm2423, %v2425, %v2427
      %v2429 = vrot.slane %v760, 2
      %v2430 = vsel %vm2423, %v2427, %v2429
      %v2431 = vrot.slane %v761, 2
      %v2432 = vsel %vm2423, %v2429, %v2431
      %v2433 = vrot.slane %v762, 2
      %v2434 = vsel %vm2423, %v2431, %v2433
      %v2435 = vrot.slane %v763, 2
      %v2436 = vsel %vm2423, %v2433, %v2435
      %v2437 = vrot.slane %v764, 2
      %v2438 = vsel %vm2423, %v2435, %v2437
      %v2439 = vrot.slane %v765, 2
      %v2440 = vsel %vm2423, %v2437, %v2439
      %v2441 = vrot.slane %v766, 2
      %v2442 = vsel %vm2423, %v2439, %v2441
      %v2443 = vrot.slane %v767, 2
      %v2444 = vsel %vm2423, %v2441, %v2443
      %v2445 = vrot.slane %v768, 2
      %v2446 = vsel %vm2423, %v2443, %v2445
      %v2447 = vrot.slane %v769, 2
      %v2448 = vsel %vm2423, %v2445, %v2447
      %v2449 = vrot.slane %v770, 2
      %v2450 = vsel %vm2423, %v2447, %v2449
      %v2451 = vrot.slane %v771, 2
      %v2452 = vsel %vm2423, %v2449, %v2451
      %v2453 = vrot.slane %v772, 2
      %v2454 = vsel %vm2423, %v2451, %v2453
      %v2455 = vrot.slane %v773, 2
      %v2456 = vsel %vm2423, %v2453, %v2455
      %v2457 = vrot.slane %v774, 2
      %v2458 = vsel %vm2423, %v2455, %v2457
      %v2459 = vrot.slane %v775, 2
      %v2460 = vsel %vm2423, %v2457, %v2459
      %v2461 = vrot.slane %v776, 2
      %v2462 = vsel %vm2423, %v2459, %v2461
      %v2463 = vrot.slane %v777, 2
      %v2464 = vsel %vm2423, %v2461, %v2463
      %v2465 = vrot.slane %v778, 2
      %v2466 = vsel %vm2423, %v2463, %v2465
      %v2467 = vrot.slane %v779, 2
      %v2468 = vsel %vm2423, %v2465, %v2467
      %v2469 = vrot.slane %v780, 2
      %v2470 = vsel %vm2423, %v2467, %v2469
      %v2471 = vrot.slane %v781, 2
      %v2472 = vsel %vm2423, %v2469, %v2471
      %v2475 = vunpack.c.l.b16 %v2420
      %v2476 = vunpack.c.l.b16 %v2421
      %v2477 = vpack.c.b16 %v2476, %v2475
      %v2480 = vsel %vm870, %v2426, 0
      %v2483 = vsel %vm870, %v2428, 0
      %v2486 = vsel %vm870, %v2430, 0
      %v2489 = vsel %vm870, %v2432, 0
      %v2492 = vsel %vm870, %v2434, 0
      %v2495 = vsel %vm870, %v2436, 0
      %v2498 = vsel %vm870, %v2438, 0
      %v2501 = vsel %vm870, %v2440, 0
      %v2504 = vsel %vm870, %v2442, 0
      %v2507 = vsel %vm870, %v2444, 0
      %v2510 = vsel %vm870, %v2446, 0
      %v2513 = vsel %vm870, %v2448, 0
      %v2516 = vsel %vm870, %v2450, 0
      %v2519 = vsel %vm870, %v2452, 0
      %v2522 = vsel %vm870, %v2454, 0
      %v2525 = vsel %vm870, %v2456, 0
      %v2528 = vsel %vm870, %v2458, 0
      %v2531 = vsel %vm870, %v2460, 0
      %v2534 = vsel %vm870, %v2462, 0
      %v2537 = vsel %vm870, %v2464, 0
      %v2540 = vsel %vm870, %v2466, 0
      %v2543 = vsel %vm870, %v2468, 0
      %v2546 = vsel %vm870, %v2470, 0
      %v2549 = vsel %vm870, %v2472, 0
      %v2552 = vsel %vm870, %v2471, 0
      %2554 = vmatprep.subr.bf16.mxu0 0
      %2555 = vmatpush1.bf16.msra.mxu0 %v2477
      %2556 = vmatprep.subr.bf16.mxu0 0
      %2557 = vmatpush1.bf16.msra.mxu0 0
      %2558 = vmatprep.subr.bf16.mxu0 0
      %2559 = vmatpush1.bf16.msra.mxu0 0
      %2560 = vmatprep.subr.bf16.mxu0 0
      %2561 = vmatpush1.bf16.msra.mxu0 0
      %2562 = vmatprep.subr.bf16.mxu0 0
      %2563 = vmatpush1.bf16.msra.mxu0 0
      %2564 = vmatprep.subr.bf16.mxu0 0
      %2565 = vmatpush1.bf16.msra.mxu0 0
      %2566 = vmatprep.subr.bf16.mxu0 0
      %2567 = vmatpush1.bf16.msra.mxu0 0
      %2568 = vmatprep.subr.bf16.mxu0 0
      %2569 = vmatpush1.bf16.msra.mxu0 0
      %2570 = vmatprep.subr.bf16.mxu0 0
      %2571 = vmatpush1.bf16.msra.mxu0 0
      %2572 = vmatprep.subr.bf16.mxu0 0
      %2573 = vmatpush1.bf16.msra.mxu0 0
      %2574 = vmatprep.subr.bf16.mxu0 0
      %2575 = vmatpush1.bf16.msra.mxu0 0
      %2576 = vmatprep.subr.bf16.mxu0 0
      %2577 = vmatpush1.bf16.msra.mxu0 0
      %2578 = vmatprep.subr.bf16.mxu0 0
      %2579 = vmatpush1.bf16.msra.mxu0 0
      %2580 = vmatprep.subr.bf16.mxu0 0
      %2581 = vmatpush1.bf16.msra.mxu0 0
      %2582 = vmatprep.subr.bf16.mxu0 0
      %2583 = vmatpush1.bf16.msra.mxu0 0
      %2584 = vmatprep.subr.bf16.mxu0 0
      %2585 = vmatpush1.bf16.msra.mxu0 0
      %2586 = vmatprep.mubr.bf16.mxu0 0
      %2587 = vmatmul.mubr.bf16.gmra.mrb[0].mxu0 %v2480
      %v2588 = vpop.f32.mrb[0].mxu0
      %v2589 = vpop.f32.mrb[0].mxu0
      %v2590 = vpop.f32.mrb[0].mxu0
      %v2591 = vpop.f32.mrb[0].mxu0
      %2592 = vmatprep.mubr.bf16.mxu0 0
      %2593 = vmatmul.mubr.bf16.gmra.mrb[0].mxu0 %v2483
      %v2594 = vpop.f32.mrb[0].mxu0
      %v2595 = vpop.f32.mrb[0].mxu0
      %v2596 = vpop.f32.mrb[0].mxu0
      %v2597 = vpop.f32.mrb[0].mxu0
      %2598 = vmatprep.mubr.bf16.mxu0 0
      %2599 = vmatmul.mubr.bf16.gmra.mrb[0].mxu0 %v2486
      %v2600 = vpop.f32.mrb[0].mxu0
      %v2601 = vadd.f32 0.0, %v2600
      %v2602 = vpop.f32.mrb[0].mxu0
      %v2603 = vpop.f32.mrb[0].mxu0
      %v2604 = vadd.f32 0.0, %v2603
      %v2605 = vpop.f32.mrb[0].mxu0
      %2606 = vmatprep.mubr.bf16.mxu0 0
      %2607 = vmatmul.mubr.bf16.gmra.mrb[0].mxu0 %v2489
      %v2608 = vpop.f32.mrb[0].mxu0
      %v2609 = vadd.f32 0.0, %v2608
      %v2610 = vpop.f32.mrb[0].mxu0
      %v2611 = vpop.f32.mrb[0].mxu0
      %v2612 = vadd.f32 0.0, %v2611
      %v2613 = vpop.f32.mrb[0].mxu0
      %2614 = vmatprep.mubr.bf16.mxu0 0
      %2615 = vmatmul.mubr.bf16.gmra.mrb[0].mxu0 %v2492
      %v2616 = vpop.f32.mrb[0].mxu0
      %v2617 = vadd.f32 0.0, %v2616
      %v2618 = vpop.f32.mrb[0].mxu0
      %v2619 = vpop.f32.mrb[0].mxu0
      %v2620 = vadd.f32 0.0, %v2619
      %v2621 = vpop.f32.mrb[0].mxu0
      %2622 = vmatprep.mubr.bf16.mxu0 0
      %2623 = vmatmul.mubr.bf16.gmra.mrb[0].mxu0 %v2495
      %v2624 = vpop.f32.mrb[0].mxu0
      %v2625 = vadd.f32 0.0, %v2624
      %v2626 = vpop.f32.mrb[0].mxu0
      %v2627 = vpop.f32.mrb[0].mxu0
      %v2628 = vadd.f32 0.0, %v2627
      %v2629 = vpop.f32.mrb[0].mxu0
      %2630 = vmatprep.mubr.bf16.mxu0 0
      %2631 = vmatmul.mubr.bf16.gmra.mrb[0].mxu0 %v2498
      %v2632 = vpop.f32.mrb[0].mxu0
      %v2633 = vadd.f32 0.0, %v2632
      %v2634 = vpop.f32.mrb[0].mxu0
      %v2635 = vpop.f32.mrb[0].mxu0
      %v2636 = vadd.f32 0.0, %v2635
      %v2637 = vpop.f32.mrb[0].mxu0
      %2638 = vmatprep.mubr.bf16.mxu0 0
      %2639 = vmatmul.mubr.bf16.gmra.mrb[0].mxu0 %v2501
      %v2640 = vpop.f32.mrb[0].mxu0
      %v2641 = vadd.f32 0.0, %v2640
      %v2642 = vpop.f32.mrb[0].mxu0
      %v2643 = vpop.f32.mrb[0].mxu0
      %v2644 = vadd.f32 0.0, %v2643
      %v2645 = vpop.f32.mrb[0].mxu0
      %2646 = vmatprep.mubr.bf16.mxu0 0
      %2647 = vmatmul.mubr.bf16.gmra.mrb[0].mxu0 %v2504
      %v2648 = vpop.f32.mrb[0].mxu0
      %v2649 = vadd.f32 0.0, %v2648
      %v2650 = vpop.f32.mrb[0].mxu0
      %v2651 = vpop.f32.mrb[0].mxu0
      %v2652 = vadd.f32 0.0, %v2651
      %v2653 = vpop.f32.mrb[0].mxu0
      %2654 = vmatprep.mubr.bf16.mxu0 0
      %2655 = vmatmul.mubr.bf16.gmra.mrb[0].mxu0 %v2507
      %v2656 = vpop.f32.mrb[0].mxu0
      %v2657 = vadd.f32 0.0, %v2656
      %v2658 = vpop.f32.mrb[0].mxu0
      %v2659 = vpop.f32.mrb[0].mxu0
      %v2660 = vadd.f32 0.0, %v2659
      %v2661 = vpop.f32.mrb[0].mxu0
      %2662 = vmatprep.mubr.bf16.mxu0 0
      %2663 = vmatmul.mubr.bf16.gmra.mrb[0].mxu0 %v2510
      %v2664 = vpop.f32.mrb[0].mxu0
      %v2665 = vadd.f32 0.0, %v2664
      %v2666 = vpop.f32.mrb[0].mxu0
      %v2667 = vpop.f32.mrb[0].mxu0
      %v2668 = vadd.f32 0.0, %v2667
      %v2669 = vpop.f32.mrb[0].mxu0
      %2670 = vmatprep.mubr.bf16.mxu0 0
      %2671 = vmatmul.mubr.bf16.gmra.mrb[0].mxu0 %v2513
      %v2672 = vpop.f32.mrb[0].mxu0
      %v2673 = vadd.f32 0.0, %v2672
      %v2674 = vpop.f32.mrb[0].mxu0
      %v2675 = vpop.f32.mrb[0].mxu0
      %v2676 = vadd.f32 0.0, %v2675
      %v2677 = vpop.f32.mrb[0].mxu0
      %2678 = vmatprep.mubr.bf16.mxu0 0
      %2679 = vmatmul.mubr.bf16.gmra.mrb[0].mxu0 %v2516
      %v2680 = vpop.f32.mrb[0].mxu0
      %v2681 = vadd.f32 0.0, %v2680
      %v2682 = vpop.f32.mrb[0].mxu0
      %v2683 = vpop.f32.mrb[0].mxu0
      %v2684 = vadd.f32 0.0, %v2683
      %v2685 = vpop.f32.mrb[0].mxu0
      %2686 = vmatprep.mubr.bf16.mxu0 0
      %2687 = vmatmul.mubr.bf16.gmra.mrb[0].mxu0 %v2519
      %v2688 = vpop.f32.mrb[0].mxu0
      %v2689 = vadd.f32 0.0, %v2688
      %v2690 = vpop.f32.mrb[0].mxu0
      %v2691 = vpop.f32.mrb[0].mxu0
      %v2692 = vadd.f32 0.0, %v2691
      %v2693 = vpop.f32.mrb[0].mxu0
      %2694 = vmatprep.mubr.bf16.mxu0 0
      %2695 = vmatmul.mubr.bf16.gmra.mrb[0].mxu0 %v2522
      %v2696 = vpop.f32.mrb[0].mxu0
      %v2697 = vadd.f32 0.0, %v2696
      %v2698 = vpop.f32.mrb[0].mxu0
      %v2699 = vpop.f32.mrb[0].mxu0
      %v2700 = vadd.f32 0.0, %v2699
      %v2701 = vpop.f32.mrb[0].mxu0
      %2702 = vmatprep.mubr.bf16.mxu0 0
      %2703 = vmatmul.mubr.bf16.gmra.mrb[0].mxu0 %v2525
      %v2704 = vpop.f32.mrb[0].mxu0
      %v2705 = vadd.f32 0.0, %v2704
      %v2706 = vpop.f32.mrb[0].mxu0
      %v2707 = vpop.f32.mrb[0].mxu0
      %v2708 = vadd.f32 0.0, %v2707
      %v2709 = vpop.f32.mrb[0].mxu0
      %2710 = vmatprep.mubr.bf16.mxu0 0
      %2711 = vmatmul.mubr.bf16.gmra.mrb[0].mxu0 %v2528
      %v2712 = vpop.f32.mrb[0].mxu0
      %v2713 = vadd.f32 0.0, %v2712
      %v2714 = vpop.f32.mrb[0].mxu0
      %v2715 = vpop.f32.mrb[0].mxu0
      %v2716 = vadd.f32 0.0, %v2715
      %v2717 = vpop.f32.mrb[0].mxu0
      %2718 = vmatprep.mubr.bf16.mxu0 0
      %2719 = vmatmul.mubr.bf16.gmra.mrb[0].mxu0 %v2531
      %v2720 = vpop.f32.mrb[0].mxu0
      %v2721 = vadd.f32 0.0, %v2720
      %v2722 = vpop.f32.mrb[0].mxu0
      %v2723 = vpop.f32.mrb[0].mxu0
      %v2724 = vadd.f32 0.0, %v2723
      %v2725 = vpop.f32.mrb[0].mxu0
      %2726 = vmatprep.mubr.bf16.mxu0 0
      %2727 = vmatmul.mubr.bf16.gmra.mrb[0].mxu0 %v2534
      %v2728 = vpop.f32.mrb[0].mxu0
      %v2729 = vadd.f32 0.0, %v2728
      %v2730 = vpop.f32.mrb[0].mxu0
      %v2731 = vpop.f32.mrb[0].mxu0
      %v2732 = vadd.f32 0.0, %v2731
      %v2733 = vpop.f32.mrb[0].mxu0
      %2734 = vmatprep.mubr.bf16.mxu0 0
      %2735 = vmatmul.mubr.bf16.gmra.mrb[0].mxu0 %v2537
      %v2736 = vpop.f32.mrb[0].mxu0
      %v2737 = vadd.f32 0.0, %v2736
      %v2738 = vpop.f32.mrb[0].mxu0
      %v2739 = vpop.f32.mrb[0].mxu0
      %v2740 = vadd.f32 0.0, %v2739
      %v2741 = vpop.f32.mrb[0].mxu0
      %2742 = vmatprep.mubr.bf16.mxu0 0
      %2743 = vmatmul.mubr.bf16.gmra.mrb[0].mxu0 %v2540
      %v2744 = vpop.f32.mrb[0].mxu0
      %v2745 = vadd.f32 0.0, %v2744
      %v2746 = vpop.f32.mrb[0].mxu0
      %v2747 = vpop.f32.mrb[0].mxu0
      %v2748 = vadd.f32 0.0, %v2747
      %v2749 = vpop.f32.mrb[0].mxu0
      %2750 = vmatprep.mubr.bf16.mxu0 0
      %2751 = vmatmul.mubr.bf16.gmra.mrb[0].mxu0 %v2543
      %v2752 = vpop.f32.mrb[0].mxu0
      %v2753 = vadd.f32 0.0, %v2752
      %v2754 = vpop.f32.mrb[0].mxu0
      %v2755 = vpop.f32.mrb[0].mxu0
      %v2756 = vadd.f32 0.0, %v2755
      %v2757 = vpop.f32.mrb[0].mxu0
      %2758 = vmatprep.mubr.bf16.mxu0 0
      %2759 = vmatmul.mubr.bf16.gmra.mrb[0].mxu0 %v2546
      %v2760 = vpop.f32.mrb[0].mxu0
      %v2761 = vadd.f32 0.0, %v2760
      %v2762 = vpop.f32.mrb[0].mxu0
      %v2763 = vpop.f32.mrb[0].mxu0
      %v2764 = vadd.f32 0.0, %v2763
      %v2765 = vpop.f32.mrb[0].mxu0
      %2766 = vmatprep.mubr.bf16.mxu0 0
      %2767 = vmatmul.mubr.bf16.gmra.mrb[0].mxu0 %v2549
      %v2768 = vpop.f32.mrb[0].mxu0
      %v2769 = vpop.f32.mrb[0].mxu0
      %v2770 = vpop.f32.mrb[0].mxu0
      %v2771 = vpop.f32.mrb[0].mxu0
      %2772 = vmatprep.mubr.bf16.mxu0 0
      %2773 = vmatmul.mubr.bf16.gmra.mrb[0].mxu0 %v2552
      %v2774 = vpop.f32.mrb[0].mxu0
      %v2775 = vpop.f32.mrb[0].mxu0
      %v2776 = vpop.f32.mrb[0].mxu0
      %v2777 = vpop.f32.mrb[0].mxu0
      %2778 = vdwg.mxu0
      %v2779 = vadd.f32 %v2377, %v2601
      %v2780 = vadd.f32 %v2378, %v2604
      %v2781 = vadd.f32 %v2379, %v2609
      %v2782 = vadd.f32 %v2380, %v2612
      %v2783 = vadd.f32 %v2381, %v2617
      %v2784 = vadd.f32 %v2382, %v2620
      %v2785 = vadd.f32 %v2383, %v2625
      %v2786 = vadd.f32 %v2384, %v2628
      %v2787 = vadd.f32 %v2385, %v2633
      %v2788 = vadd.f32 %v2386, %v2636
      %v2789 = vadd.f32 %v2387, %v2641
      %v2790 = vadd.f32 %v2388, %v2644
      %v2791 = vadd.f32 %v2389, %v2649
      %v2792 = vadd.f32 %v2390, %v2652
      %v2793 = vadd.f32 %v2391, %v2657
      %v2794 = vadd.f32 %v2392, %v2660
      %v2795 = vadd.f32 %v2393, %v2665
      %v2796 = vadd.f32 %v2394, %v2668
      %v2797 = vadd.f32 %v2395, %v2673
      %v2798 = vadd.f32 %v2396, %v2676
      %v2799 = vadd.f32 %v2397, %v2681
      %v2800 = vadd.f32 %v2398, %v2684
      %v2801 = vadd.f32 %v2399, %v2689
      %v2802 = vadd.f32 %v2400, %v2692
      %v2803 = vadd.f32 %v2401, %v2697
      %v2804 = vadd.f32 %v2402, %v2700
      %v2805 = vadd.f32 %v2403, %v2705
      %v2806 = vadd.f32 %v2404, %v2708
      %v2807 = vadd.f32 %v2405, %v2713
      %v2808 = vadd.f32 %v2406, %v2716
      %v2809 = vadd.f32 %v2407, %v2721
      %v2810 = vadd.f32 %v2408, %v2724
      %v2811 = vadd.f32 %v2409, %v2729
      %v2812 = vadd.f32 %v2410, %v2732
      %v2813 = vadd.f32 %v2411, %v2737
      %v2814 = vadd.f32 %v2412, %v2740
      %v2815 = vadd.f32 %v2413, %v2745
      %v2816 = vadd.f32 %v2414, %v2748
      %v2817 = vadd.f32 %v2415, %v2753
      %v2818 = vadd.f32 %v2416, %v2756
      %v2819 = vadd.f32 %v2417, %v2761
      %v2820 = vadd.f32 %v2418, %v2764
      %s2821 = scalar_lea.vmem %s4, 40
      %v2822 = vld [vmem:[%s2821] sm:$0xf]
      %v2823 = vld [vmem:[%s2821 + $0x4] sm:$0xf]
      %vm2824 = vsmask.f32 5376
      %v2825 = vrot.slane %v1184, 2
      %v2826 = vrot.slane %v1180, 3
      %v2827 = vor.u32 %v2825, %v2826
      %v2828 = vrot.slane %v1192, 2
      %v2829 = vrot.slane %v1188, 3
      %v2830 = vor.u32 %v2828, %v2829
      %v2831 = vsel %vm2824, %v2827, %v2830
      %v2832 = vrot.slane %v1200, 2
      %v2833 = vrot.slane %v1196, 3
      %v2834 = vor.u32 %v2832, %v2833
      %v2835 = vsel %vm2824, %v2830, %v2834
      %v2836 = vrot.slane %v1208, 2
      %v2837 = vrot.slane %v1204, 3
      %v2838 = vor.u32 %v2836, %v2837
      %v2839 = vsel %vm2824, %v2834, %v2838
      %v2840 = vrot.slane %v1216, 2
      %v2841 = vrot.slane %v1212, 3
      %v2842 = vor.u32 %v2840, %v2841
      %v2843 = vsel %vm2824, %v2838, %v2842
      %v2844 = vrot.slane %v1224, 2
      %v2845 = vrot.slane %v1220, 3
      %v2846 = vor.u32 %v2844, %v2845
      %v2847 = vsel %vm2824, %v2842, %v2846
      %v2848 = vrot.slane %v1232, 2
      %v2849 = vrot.slane %v1228, 3
      %v2850 = vor.u32 %v2848, %v2849
      %v2851 = vsel %vm2824, %v2846, %v2850
      %v2852 = vrot.slane %v1240, 2
      %v2853 = vrot.slane %v1236, 3
      %v2854 = vor.u32 %v2852, %v2853
      %v2855 = vsel %vm2824, %v2850, %v2854
      %v2856 = vrot.slane %v1248, 2
      %v2857 = vrot.slane %v1244, 3
      %v2858 = vor.u32 %v2856, %v2857
      %v2859 = vsel %vm2824, %v2854, %v2858
      %v2860 = vrot.slane %v1256, 2
      %v2861 = vrot.slane %v1252, 3
      %v2862 = vor.u32 %v2860, %v2861
      %v2863 = vsel %vm2824, %v2858, %v2862
      %v2864 = vrot.slane %v1264, 2
      %v2865 = vrot.slane %v1260, 3
      %v2866 = vor.u32 %v2864, %v2865
      %v2867 = vsel %vm2824, %v2862, %v2866
      %v2868 = vrot.slane %v1272, 2
      %v2869 = vrot.slane %v1268, 3
      %v2870 = vor.u32 %v2868, %v2869
      %v2871 = vsel %vm2824, %v2866, %v2870
      %v2872 = vrot.slane %v1280, 2
      %v2873 = vrot.slane %v1276, 3
      %v2874 = vor.u32 %v2872, %v2873
      %v2875 = vsel %vm2824, %v2870, %v2874
      %v2876 = vrot.slane %v1288, 2
      %v2877 = vrot.slane %v1284, 3
      %v2878 = vor.u32 %v2876, %v2877
      %v2879 = vsel %vm2824, %v2874, %v2878
      %v2880 = vrot.slane %v1296, 2
      %v2881 = vrot.slane %v1292, 3
      %v2882 = vor.u32 %v2880, %v2881
      %v2883 = vsel %vm2824, %v2878, %v2882
      %v2884 = vrot.slane %v1304, 2
      %v2885 = vrot.slane %v1300, 3
      %v2886 = vor.u32 %v2884, %v2885
      %v2887 = vsel %vm2824, %v2882, %v2886
      %v2888 = vrot.slane %v1312, 2
      %v2889 = vrot.slane %v1308, 3
      %v2890 = vor.u32 %v2888, %v2889
      %v2891 = vsel %vm2824, %v2886, %v2890
      %v2892 = vrot.slane %v1320, 2
      %v2893 = vrot.slane %v1316, 3
      %v2894 = vor.u32 %v2892, %v2893
      %v2895 = vsel %vm2824, %v2890, %v2894
      %v2896 = vrot.slane %v1328, 2
      %v2897 = vrot.slane %v1324, 3
      %v2898 = vor.u32 %v2896, %v2897
      %v2899 = vsel %vm2824, %v2894, %v2898
      %v2900 = vrot.slane %v1336, 2
      %v2901 = vrot.slane %v1332, 3
      %v2902 = vor.u32 %v2900, %v2901
      %v2903 = vsel %vm2824, %v2898, %v2902
      %v2904 = vrot.slane %v1344, 2
      %v2905 = vrot.slane %v1340, 3
      %v2906 = vor.u32 %v2904, %v2905
      %v2907 = vsel %vm2824, %v2902, %v2906
      %v2908 = vrot.slane %v1352, 2
      %v2909 = vrot.slane %v1348, 3
      %v2910 = vor.u32 %v2908, %v2909
      %v2911 = vsel %vm2824, %v2906, %v2910
      %v2912 = vrot.slane %v1360, 2
      %v2913 = vrot.slane %v1356, 3
      %v2914 = vor.u32 %v2912, %v2913
      %v2915 = vsel %vm2824, %v2910, %v2914
      %v2916 = vrot.slane %v1368, 2
      %v2917 = vrot.slane %v1364, 3
      %v2918 = vor.u32 %v2916, %v2917
      %v2919 = vsel %vm2824, %v2914, %v2918
      %v2920 = vrot.slane %v2132, 2
      %v2921 = vrot.slane %v2135, 3
      %v2922 = vor.u32 %v2920, %v2921
      %v2923 = vsel %vm2824, %v2918, %v2922
      %v2925 = vshll.u32 %v782, 16
      %v2927 = vrot.slane %v2925, 3
      %v2928 = vsel %vm2824, %v2922, %v2927
      %v2931 = vunpack.c.l.b16 %v2822
      %v2932 = vunpack.c.l.b16 %v2823
      %v2933 = vpack.c.b16 %v2932, %v2931
      %v2936 = vsel %vm870, %v2831, 0
      %v2939 = vsel %vm870, %v2835, 0
      %v2942 = vsel %vm870, %v2839, 0
      %v2945 = vsel %vm870, %v2843, 0
      %v2948 = vsel %vm870, %v2847, 0
      %v2951 = vsel %vm870, %v2851, 0
      %v2954 = vsel %vm870, %v2855, 0
      %v2957 = vsel %vm870, %v2859, 0
      %v2960 = vsel %vm870, %v2863, 0
      %v2963 = vsel %vm870, %v2867, 0
      %v2966 = vsel %vm870, %v2871, 0
      %v2969 = vsel %vm870, %v2875, 0
      %v2972 = vsel %vm870, %v2879, 0
      %v2975 = vsel %vm870, %v2883, 0
      %v2978 = vsel %vm870, %v2887, 0
      %v2981 = vsel %vm870, %v2891, 0
      %v2984 = vsel %vm870, %v2895, 0
      %v2987 = vsel %vm870, %v2899, 0
      %v2990 = vsel %vm870, %v2903, 0
      %v2993 = vsel %vm870, %v2907, 0
      %v2996 = vsel %vm870, %v2911, 0
      %v2999 = vsel %vm870, %v2915, 0
      %v3002 = vsel %vm870, %v2919, 0
      %v3005 = vsel %vm870, %v2923, 0
      %v3008 = vsel %vm870, %v2928, 0
      %3010 = vmatprep.subr.bf16.mxu0 0
      %3011 = vmatpush1.bf16.msra.mxu0 %v2933
      %3012 = vmatprep.subr.bf16.mxu0 0
      %3013 = vmatpush1.bf16.msra.mxu0 0
      %3014 = vmatprep.subr.bf16.mxu0 0
      %3015 = vmatpush1.bf16.msra.mxu0 0
      %3016 = vmatprep.subr.bf16.mxu0 0
      %3017 = vmatpush1.bf16.msra.mxu0 0
      %3018 = vmatprep.subr.bf16.mxu0 0
      %3019 = vmatpush1.bf16.msra.mxu0 0
      %3020 = vmatprep.subr.bf16.mxu0 0
      %3021 = vmatpush1.bf16.msra.mxu0 0
      %3022 = vmatprep.subr.bf16.mxu0 0
      %3023 = vmatpush1.bf16.msra.mxu0 0
      %3024 = vmatprep.subr.bf16.mxu0 0
      %3025 = vmatpush1.bf16.msra.mxu0 0
      %3026 = vmatprep.subr.bf16.mxu0 0
      %3027 = vmatpush1.bf16.msra.mxu0 0
      %3028 = vmatprep.subr.bf16.mxu0 0
      %3029 = vmatpush1.bf16.msra.mxu0 0
      %3030 = vmatprep.subr.bf16.mxu0 0
      %3031 = vmatpush1.bf16.msra.mxu0 0
      %3032 = vmatprep.subr.bf16.mxu0 0
      %3033 = vmatpush1.bf16.msra.mxu0 0
      %3034 = vmatprep.subr.bf16.mxu0 0
      %3035 = vmatpush1.bf16.msra.mxu0 0
      %3036 = vmatprep.subr.bf16.mxu0 0
      %3037 = vmatpush1.bf16.msra.mxu0 0
      %3038 = vmatprep.subr.bf16.mxu0 0
      %3039 = vmatpush1.bf16.msra.mxu0 0
      %3040 = vmatprep.subr.bf16.mxu0 0
      %3041 = vmatpush1.bf16.msra.mxu0 0
      %3042 = vmatprep.mubr.bf16.mxu0 0
      %3043 = vmatmul.mubr.bf16.gmra.mrb[0].mxu0 %v2936
      %v3044 = vpop.f32.mrb[0].mxu0
      %v3045 = vpop.f32.mrb[0].mxu0
      %v3046 = vpop.f32.mrb[0].mxu0
      %v3047 = vpop.f32.mrb[0].mxu0
      %3048 = vmatprep.mubr.bf16.mxu0 0
      %3049 = vmatmul.mubr.bf16.gmra.mrb[0].mxu0 %v2939
      %v3050 = vpop.f32.mrb[0].mxu0
      %v3051 = vpop.f32.mrb[0].mxu0
      %v3052 = vpop.f32.mrb[0].mxu0
      %v3053 = vpop.f32.mrb[0].mxu0
      %3054 = vmatprep.mubr.bf16.mxu0 0
      %3055 = vmatmul.mubr.bf16.gmra.mrb[0].mxu0 %v2942
      %v3056 = vpop.f32.mrb[0].mxu0
      %v3057 = vadd.f32 0.0, %v3056
      %v3058 = vpop.f32.mrb[0].mxu0
      %v3059 = vpop.f32.mrb[0].mxu0
      %v3060 = vadd.f32 0.0, %v3059
      %v3061 = vpop.f32.mrb[0].mxu0
      %3062 = vmatprep.mubr.bf16.mxu0 0
      %3063 = vmatmul.mubr.bf16.gmra.mrb[0].mxu0 %v2945
      %v3064 = vpop.f32.mrb[0].mxu0
      %v3065 = vadd.f32 0.0, %v3064
      %v3066 = vpop.f32.mrb[0].mxu0
      %v3067 = vpop.f32.mrb[0].mxu0
      %v3068 = vadd.f32 0.0, %v3067
      %v3069 = vpop.f32.mrb[0].mxu0
      %3070 = vmatprep.mubr.bf16.mxu0 0
      %3071 = vmatmul.mubr.bf16.gmra.mrb[0].mxu0 %v2948
      %v3072 = vpop.f32.mrb[0].mxu0
      %v3073 = vadd.f32 0.0, %v3072
      %v3074 = vpop.f32.mrb[0].mxu0
      %v3075 = vpop.f32.mrb[0].mxu0
      %v3076 = vadd.f32 0.0, %v3075
      %v3077 = vpop.f32.mrb[0].mxu0
      %3078 = vmatprep.mubr.bf16.mxu0 0
      %3079 = vmatmul.mubr.bf16.gmra.mrb[0].mxu0 %v2951
      %v3080 = vpop.f32.mrb[0].mxu0
      %v3081 = vadd.f32 0.0, %v3080
      %v3082 = vpop.f32.mrb[0].mxu0
      %v3083 = vpop.f32.mrb[0].mxu0
      %v3084 = vadd.f32 0.0, %v3083
      %v3085 = vpop.f32.mrb[0].mxu0
      %3086 = vmatprep.mubr.bf16.mxu0 0
      %3087 = vmatmul.mubr.bf16.gmra.mrb[0].mxu0 %v2954
      %v3088 = vpop.f32.mrb[0].mxu0
      %v3089 = vadd.f32 0.0, %v3088
      %v3090 = vpop.f32.mrb[0].mxu0
      %v3091 = vpop.f32.mrb[0].mxu0
      %v3092 = vadd.f32 0.0, %v3091
      %v3093 = vpop.f32.mrb[0].mxu0
      %3094 = vmatprep.mubr.bf16.mxu0 0
      %3095 = vmatmul.mubr.bf16.gmra.mrb[0].mxu0 %v2957
      %v3096 = vpop.f32.mrb[0].mxu0
      %v3097 = vadd.f32 0.0, %v3096
      %v3098 = vpop.f32.mrb[0].mxu0
      %v3099 = vpop.f32.mrb[0].mxu0
      %v3100 = vadd.f32 0.0, %v3099
      %v3101 = vpop.f32.mrb[0].mxu0
      %3102 = vmatprep.mubr.bf16.mxu0 0
      %3103 = vmatmul.mubr.bf16.gmra.mrb[0].mxu0 %v2960
      %v3104 = vpop.f32.mrb[0].mxu0
      %v3105 = vadd.f32 0.0, %v3104
      %v3106 = vpop.f32.mrb[0].mxu0
      %v3107 = vpop.f32.mrb[0].mxu0
      %v3108 = vadd.f32 0.0, %v3107
      %v3109 = vpop.f32.mrb[0].mxu0
      %3110 = vmatprep.mubr.bf16.mxu0 0
      %3111 = vmatmul.mubr.bf16.gmra.mrb[0].mxu0 %v2963
      %v3112 = vpop.f32.mrb[0].mxu0
      %v3113 = vadd.f32 0.0, %v3112
      %v3114 = vpop.f32.mrb[0].mxu0
      %v3115 = vpop.f32.mrb[0].mxu0
      %v3116 = vadd.f32 0.0, %v3115
      %v3117 = vpop.f32.mrb[0].mxu0
      %3118 = vmatprep.mubr.bf16.mxu0 0
      %3119 = vmatmul.mubr.bf16.gmra.mrb[0].mxu0 %v2966
      %v3120 = vpop.f32.mrb[0].mxu0
      %v3121 = vadd.f32 0.0, %v3120
      %v3122 = vpop.f32.mrb[0].mxu0
      %v3123 = vpop.f32.mrb[0].mxu0
      %v3124 = vadd.f32 0.0, %v3123
      %v3125 = vpop.f32.mrb[0].mxu0
      %3126 = vmatprep.mubr.bf16.mxu0 0
      %3127 = vmatmul.mubr.bf16.gmra.mrb[0].mxu0 %v2969
      %v3128 = vpop.f32.mrb[0].mxu0
      %v3129 = vadd.f32 0.0, %v3128
      %v3130 = vpop.f32.mrb[0].mxu0
      %v3131 = vpop.f32.mrb[0].mxu0
      %v3132 = vadd.f32 0.0, %v3131
      %v3133 = vpop.f32.mrb[0].mxu0
      %3134 = vmatprep.mubr.bf16.mxu0 0
      %3135 = vmatmul.mubr.bf16.gmra.mrb[0].mxu0 %v2972
      %v3136 = vpop.f32.mrb[0].mxu0
      %v3137 = vadd.f32 0.0, %v3136
      %v3138 = vpop.f32.mrb[0].mxu0
      %v3139 = vpop.f32.mrb[0].mxu0
      %v3140 = vadd.f32 0.0, %v3139
      %v3141 = vpop.f32.mrb[0].mxu0
      %3142 = vmatprep.mubr.bf16.mxu0 0
      %3143 = vmatmul.mubr.bf16.gmra.mrb[0].mxu0 %v2975
      %v3144 = vpop.f32.mrb[0].mxu0
      %v3145 = vadd.f32 0.0, %v3144
      %v3146 = vpop.f32.mrb[0].mxu0
      %v3147 = vpop.f32.mrb[0].mxu0
      %v3148 = vadd.f32 0.0, %v3147
      %v3149 = vpop.f32.mrb[0].mxu0
      %3150 = vmatprep.mubr.bf16.mxu0 0
      %3151 = vmatmul.mubr.bf16.gmra.mrb[0].mxu0 %v2978
      %v3152 = vpop.f32.mrb[0].mxu0
      %v3153 = vadd.f32 0.0, %v3152
      %v3154 = vpop.f32.mrb[0].mxu0
      %v3155 = vpop.f32.mrb[0].mxu0
      %v3156 = vadd.f32 0.0, %v3155
      %v3157 = vpop.f32.mrb[0].mxu0
      %3158 = vmatprep.mubr.bf16.mxu0 0
      %3159 = vmatmul.mubr.bf16.gmra.mrb[0].mxu0 %v2981
      %v3160 = vpop.f32.mrb[0].mxu0
      %v3161 = vadd.f32 0.0, %v3160
      %v3162 = vpop.f32.mrb[0].mxu0
      %v3163 = vpop.f32.mrb[0].mxu0
      %v3164 = vadd.f32 0.0, %v3163
      %v3165 = vpop.f32.mrb[0].mxu0
      %3166 = vmatprep.mubr.bf16.mxu0 0
      %3167 = vmatmul.mubr.bf16.gmra.mrb[0].mxu0 %v2984
      %v3168 = vpop.f32.mrb[0].mxu0
      %v3169 = vadd.f32 0.0, %v3168
      %v3170 = vpop.f32.mrb[0].mxu0
      %v3171 = vpop.f32.mrb[0].mxu0
      %v3172 = vadd.f32 0.0, %v3171
      %v3173 = vpop.f32.mrb[0].mxu0
      %3174 = vmatprep.mubr.bf16.mxu0 0
      %3175 = vmatmul.mubr.bf16.gmra.mrb[0].mxu0 %v2987
      %v3176 = vpop.f32.mrb[0].mxu0
      %v3177 = vadd.f32 0.0, %v3176
      %v3178 = vpop.f32.mrb[0].mxu0
      %v3179 = vpop.f32.mrb[0].mxu0
      %v3180 = vadd.f32 0.0, %v3179
      %v3181 = vpop.f32.mrb[0].mxu0
      %3182 = vmatprep.mubr.bf16.mxu0 0
      %3183 = vmatmul.mubr.bf16.gmra.mrb[0].mxu0 %v2990
      %v3184 = vpop.f32.mrb[0].mxu0
      %v3185 = vadd.f32 0.0, %v3184
      %v3186 = vpop.f32.mrb[0].mxu0
      %v3187 = vpop.f32.mrb[0].mxu0
      %v3188 = vadd.f32 0.0, %v3187
      %v3189 = vpop.f32.mrb[0].mxu0
      %3190 = vmatprep.mubr.bf16.mxu0 0
      %3191 = vmatmul.mubr.bf16.gmra.mrb[0].mxu0 %v2993
      %v3192 = vpop.f32.mrb[0].mxu0
      %v3193 = vadd.f32 0.0, %v3192
      %v3194 = vpop.f32.mrb[0].mxu0
      %v3195 = vpop.f32.mrb[0].mxu0
      %v3196 = vadd.f32 0.0, %v3195
      %v3197 = vpop.f32.mrb[0].mxu0
      %3198 = vmatprep.mubr.bf16.mxu0 0
      %3199 = vmatmul.mubr.bf16.gmra.mrb[0].mxu0 %v2996
      %v3200 = vpop.f32.mrb[0].mxu0
      %v3201 = vadd.f32 0.0, %v3200
      %v3202 = vpop.f32.mrb[0].mxu0
      %v3203 = vpop.f32.mrb[0].mxu0
      %v3204 = vadd.f32 0.0, %v3203
      %v3205 = vpop.f32.mrb[0].mxu0
      %3206 = vmatprep.mubr.bf16.mxu0 0
      %3207 = vmatmul.mubr.bf16.gmra.mrb[0].mxu0 %v2999
      %v3208 = vpop.f32.mrb[0].mxu0
      %v3209 = vadd.f32 0.0, %v3208
      %v3210 = vpop.f32.mrb[0].mxu0
      %v3211 = vpop.f32.mrb[0].mxu0
      %v3212 = vadd.f32 0.0, %v3211
      %v3213 = vpop.f32.mrb[0].mxu0
      %3214 = vmatprep.mubr.bf16.mxu0 0
      %3215 = vmatmul.mubr.bf16.gmra.mrb[0].mxu0 %v3002
      %v3216 = vpop.f32.mrb[0].mxu0
      %v3217 = vadd.f32 0.0, %v3216
      %v3218 = vpop.f32.mrb[0].mxu0
      %v3219 = vpop.f32.mrb[0].mxu0
      %v3220 = vadd.f32 0.0, %v3219
      %v3221 = vpop.f32.mrb[0].mxu0
      %3222 = vmatprep.mubr.bf16.mxu0 0
      %3223 = vmatmul.mubr.bf16.gmra.mrb[0].mxu0 %v3005
      %v3224 = vpop.f32.mrb[0].mxu0
      %v3225 = vpop.f32.mrb[0].mxu0
      %v3226 = vpop.f32.mrb[0].mxu0
      %v3227 = vpop.f32.mrb[0].mxu0
      %3228 = vmatprep.mubr.bf16.mxu0 0
      %3229 = vmatmul.mubr.bf16.gmra.mrb[0].mxu0 %v3008
      %v3230 = vpop.f32.mrb[0].mxu0
      %v3231 = vpop.f32.mrb[0].mxu0
      %v3232 = vpop.f32.mrb[0].mxu0
      %v3233 = vpop.f32.mrb[0].mxu0
      %3234 = vdwg.mxu0
      %v3235 = vadd.f32 %v2779, %v3057
      %v3236 = vadd.f32 %v2780, %v3060
      %v3237 = vadd.f32 %v2781, %v3065
      %v3238 = vadd.f32 %v2782, %v3068
      %v3239 = vadd.f32 %v2783, %v3073
      %v3240 = vadd.f32 %v2784, %v3076
      %v3241 = vadd.f32 %v2785, %v3081
      %v3242 = vadd.f32 %v2786, %v3084
      %v3243 = vadd.f32 %v2787, %v3089
      %v3244 = vadd.f32 %v2788, %v3092
      %v3245 = vadd.f32 %v2789, %v3097
      %v3246 = vadd.f32 %v2790, %v3100
      %v3247 = vadd.f32 %v2791, %v3105
      %v3248 = vadd.f32 %v2792, %v3108
      %v3249 = vadd.f32 %v2793, %v3113
      %v3250 = vadd.f32 %v2794, %v3116
      %v3251 = vadd.f32 %v2795, %v3121
      %v3252 = vadd.f32 %v2796, %v3124
      %v3253 = vadd.f32 %v2797, %v3129
      %v3254 = vadd.f32 %v2798, %v3132
      %v3255 = vadd.f32 %v2799, %v3137
      %v3256 = vadd.f32 %v2800, %v3140
      %v3257 = vadd.f32 %v2801, %v3145
      %v3258 = vadd.f32 %v2802, %v3148
      %v3259 = vadd.f32 %v2803, %v3153
      %v3260 = vadd.f32 %v2804, %v3156
      %v3261 = vadd.f32 %v2805, %v3161
      %v3262 = vadd.f32 %v2806, %v3164
      %v3263 = vadd.f32 %v2807, %v3169
      %v3264 = vadd.f32 %v2808, %v3172
      %v3265 = vadd.f32 %v2809, %v3177
      %v3266 = vadd.f32 %v2810, %v3180
      %v3267 = vadd.f32 %v2811, %v3185
      %v3268 = vadd.f32 %v2812, %v3188
      %v3269 = vadd.f32 %v2813, %v3193
      %v3270 = vadd.f32 %v2814, %v3196
      %v3271 = vadd.f32 %v2815, %v3201
      %v3272 = vadd.f32 %v2816, %v3204
      %v3273 = vadd.f32 %v2817, %v3209
      %v3274 = vadd.f32 %v2818, %v3212
      %v3275 = vadd.f32 %v2819, %v3217
      %v3276 = vadd.f32 %v2820, %v3220
      %s3277 = scalar_lea.vmem %s4, 48
      %v3278 = vld [vmem:[%s3277] sm:$0xf]
      %v3279 = vld [vmem:[%s3277 + $0x4] sm:$0xf]
      %v3280 = vshrl.u32 %v782, 16
      %v3282 = vrot.slane %v3280, 2
      %v3283 = vor.u32 %v3282, %v2927
      %v3284 = vsel %vm2824, %v2922, %v3283
      %v3286 = vshll.u32 %v783, 16
      %v3288 = vrot.slane %v3286, 3
      %v3289 = vsel %vm2824, %v3283, %v3288
      %v3292 = vunpack.c.l.b16 %v3278
      %v3293 = vunpack.c.l.b16 %v3279
      %v3294 = vpack.c.b16 %v3293, %v3292
      %v3297 = vsel %vm870, %v3284, 0
      %v3300 = vsel %vm870, %v3289, 0
      %3302 = vmatprep.subr.bf16.mxu0 0
      %3303 = vmatpush1.bf16.msra.mxu0 %v3294
      %3304 = vmatprep.subr.bf16.mxu0 0
      %3305 = vmatpush1.bf16.msra.mxu0 0
      %3306 = vmatprep.subr.bf16.mxu0 0
      %3307 = vmatpush1.bf16.msra.mxu0 0
      %3308 = vmatprep.subr.bf16.mxu0 0
      %3309 = vmatpush1.bf16.msra.mxu0 0
      %3310 = vmatprep.subr.bf16.mxu0 0
      %3311 = vmatpush1.bf16.msra.mxu0 0
      %3312 = vmatprep.subr.bf16.mxu0 0
      %3313 = vmatpush1.bf16.msra.mxu0 0
      %3314 = vmatprep.subr.bf16.mxu0 0
      %3315 = vmatpush1.bf16.msra.mxu0 0
      %3316 = vmatprep.subr.bf16.mxu0 0
      %3317 = vmatpush1.bf16.msra.mxu0 0
      %3318 = vmatprep.subr.bf16.mxu0 0
      %3319 = vmatpush1.bf16.msra.mxu0 0
      %3320 = vmatprep.subr.bf16.mxu0 0
      %3321 = vmatpush1.bf16.msra.mxu0 0
      %3322 = vmatprep.subr.bf16.mxu0 0
      %3323 = vmatpush1.bf16.msra.mxu0 0
      %3324 = vmatprep.subr.bf16.mxu0 0
      %3325 = vmatpush1.bf16.msra.mxu0 0
      %3326 = vmatprep.subr.bf16.mxu0 0
      %3327 = vmatpush1.bf16.msra.mxu0 0
      %3328 = vmatprep.subr.bf16.mxu0 0
      %3329 = vmatpush1.bf16.msra.mxu0 0
      %3330 = vmatprep.subr.bf16.mxu0 0
      %3331 = vmatpush1.bf16.msra.mxu0 0
      %3332 = vmatprep.subr.bf16.mxu0 0
      %3333 = vmatpush1.bf16.msra.mxu0 0
      %3334 = vmatprep.mubr.bf16.mxu0 0
      %3335 = vmatmul.mubr.bf16.gmra.mrb[0].mxu0 %v2939
      %v3336 = vpop.f32.mrb[0].mxu0
      %v3337 = vpop.f32.mrb[0].mxu0
      %v3338 = vpop.f32.mrb[0].mxu0
      %v3339 = vpop.f32.mrb[0].mxu0
      %3340 = vmatprep.mubr.bf16.mxu0 0
      %3341 = vmatmul.mubr.bf16.gmra.mrb[0].mxu0 %v2942
      %v3342 = vpop.f32.mrb[0].mxu0
      %v3343 = vpop.f32.mrb[0].mxu0
      %v3344 = vpop.f32.mrb[0].mxu0
      %v3345 = vpop.f32.mrb[0].mxu0
      %3346 = vmatprep.mubr.bf16.mxu0 0
      %3347 = vmatmul.mubr.bf16.gmra.mrb[0].mxu0 %v2945
      %v3348 = vpop.f32.mrb[0].mxu0
      %v3349 = vadd.f32 0.0, %v3348
      %v3350 = vpop.f32.mrb[0].mxu0
      %v3351 = vpop.f32.mrb[0].mxu0
      %v3352 = vadd.f32 0.0, %v3351
      %v3353 = vpop.f32.mrb[0].mxu0
      %3354 = vmatprep.mubr.bf16.mxu0 0
      %3355 = vmatmul.mubr.bf16.gmra.mrb[0].mxu0 %v2948
      %v3356 = vpop.f32.mrb[0].mxu0
      %v3357 = vadd.f32 0.0, %v3356
      %v3358 = vpop.f32.mrb[0].mxu0
      %v3359 = vpop.f32.mrb[0].mxu0
      %v3360 = vadd.f32 0.0, %v3359
      %v3361 = vpop.f32.mrb[0].mxu0
      %3362 = vmatprep.mubr.bf16.mxu0 0
      %3363 = vmatmul.mubr.bf16.gmra.mrb[0].mxu0 %v2951
      %v3364 = vpop.f32.mrb[0].mxu0
      %v3365 = vadd.f32 0.0, %v3364
      %v3366 = vpop.f32.mrb[0].mxu0
      %v3367 = vpop.f32.mrb[0].mxu0
      %v3368 = vadd.f32 0.0, %v3367
      %v3369 = vpop.f32.mrb[0].mxu0
      %3370 = vmatprep.mubr.bf16.mxu0 0
      %3371 = vmatmul.mubr.bf16.gmra.mrb[0].mxu0 %v2954
      %v3372 = vpop.f32.mrb[0].mxu0
      %v3373 = vadd.f32 0.0, %v3372
      %v3374 = vpop.f32.mrb[0].mxu0
      %v3375 = vpop.f32.mrb[0].mxu0
      %v3376 = vadd.f32 0.0, %v3375
      %v3377 = vpop.f32.mrb[0].mxu0
      %3378 = vmatprep.mubr.bf16.mxu0 0
      %3379 = vmatmul.mubr.bf16.gmra.mrb[0].mxu0 %v2957
      %v3380 = vpop.f32.mrb[0].mxu0
      %v3381 = vadd.f32 0.0, %v3380
      %v3382 = vpop.f32.mrb[0].mxu0
      %v3383 = vpop.f32.mrb[0].mxu0
      %v3384 = vadd.f32 0.0, %v3383
      %v3385 = vpop.f32.mrb[0].mxu0
      %3386 = vmatprep.mubr.bf16.mxu0 0
      %3387 = vmatmul.mubr.bf16.gmra.mrb[0].mxu0 %v2960
      %v3388 = vpop.f32.mrb[0].mxu0
      %v3389 = vadd.f32 0.0, %v3388
      %v3390 = vpop.f32.mrb[0].mxu0
      %v3391 = vpop.f32.mrb[0].mxu0
      %v3392 = vadd.f32 0.0, %v3391
      %v3393 = vpop.f32.mrb[0].mxu0
      %3394 = vmatprep.mubr.bf16.mxu0 0
      %3395 = vmatmul.mubr.bf16.gmra.mrb[0].mxu0 %v2963
      %v3396 = vpop.f32.mrb[0].mxu0
      %v3397 = vadd.f32 0.0, %v3396
      %v3398 = vpop.f32.mrb[0].mxu0
      %v3399 = vpop.f32.mrb[0].mxu0
      %v3400 = vadd.f32 0.0, %v3399
      %v3401 = vpop.f32.mrb[0].mxu0
      %3402 = vmatprep.mubr.bf16.mxu0 0
      %3403 = vmatmul.mubr.bf16.gmra.mrb[0].mxu0 %v2966
      %v3404 = vpop.f32.mrb[0].mxu0
      %v3405 = vadd.f32 0.0, %v3404
      %v3406 = vpop.f32.mrb[0].mxu0
      %v3407 = vpop.f32.mrb[0].mxu0
      %v3408 = vadd.f32 0.0, %v3407
      %v3409 = vpop.f32.mrb[0].mxu0
      %3410 = vmatprep.mubr.bf16.mxu0 0
      %3411 = vmatmul.mubr.bf16.gmra.mrb[0].mxu0 %v2969
      %v3412 = vpop.f32.mrb[0].mxu0
      %v3413 = vadd.f32 0.0, %v3412
      %v3414 = vpop.f32.mrb[0].mxu0
      %v3415 = vpop.f32.mrb[0].mxu0
      %v3416 = vadd.f32 0.0, %v3415
      %v3417 = vpop.f32.mrb[0].mxu0
      %3418 = vmatprep.mubr.bf16.mxu0 0
      %3419 = vmatmul.mubr.bf16.gmra.mrb[0].mxu0 %v2972
      %v3420 = vpop.f32.mrb[0].mxu0
      %v3421 = vadd.f32 0.0, %v3420
      %v3422 = vpop.f32.mrb[0].mxu0
      %v3423 = vpop.f32.mrb[0].mxu0
      %v3424 = vadd.f32 0.0, %v3423
      %v3425 = vpop.f32.mrb[0].mxu0
      %3426 = vmatprep.mubr.bf16.mxu0 0
      %3427 = vmatmul.mubr.bf16.gmra.mrb[0].mxu0 %v2975
      %v3428 = vpop.f32.mrb[0].mxu0
      %v3429 = vadd.f32 0.0, %v3428
      %v3430 = vpop.f32.mrb[0].mxu0
      %v3431 = vpop.f32.mrb[0].mxu0
      %v3432 = vadd.f32 0.0, %v3431
      %v3433 = vpop.f32.mrb[0].mxu0
      %3434 = vmatprep.mubr.bf16.mxu0 0
      %3435 = vmatmul.mubr.bf16.gmra.mrb[0].mxu0 %v2978
      %v3436 = vpop.f32.mrb[0].mxu0
      %v3437 = vadd.f32 0.0, %v3436
      %v3438 = vpop.f32.mrb[0].mxu0
      %v3439 = vpop.f32.mrb[0].mxu0
      %v3440 = vadd.f32 0.0, %v3439
      %v3441 = vpop.f32.mrb[0].mxu0
      %3442 = vmatprep.mubr.bf16.mxu0 0
      %3443 = vmatmul.mubr.bf16.gmra.mrb[0].mxu0 %v2981
      %v3444 = vpop.f32.mrb[0].mxu0
      %v3445 = vadd.f32 0.0, %v3444
      %v3446 = vpop.f32.mrb[0].mxu0
      %v3447 = vpop.f32.mrb[0].mxu0
      %v3448 = vadd.f32 0.0, %v3447
      %v3449 = vpop.f32.mrb[0].mxu0
      %3450 = vmatprep.mubr.bf16.mxu0 0
      %3451 = vmatmul.mubr.bf16.gmra.mrb[0].mxu0 %v2984
      %v3452 = vpop.f32.mrb[0].mxu0
      %v3453 = vadd.f32 0.0, %v3452
      %v3454 = vpop.f32.mrb[0].mxu0
      %v3455 = vpop.f32.mrb[0].mxu0
      %v3456 = vadd.f32 0.0, %v3455
      %v3457 = vpop.f32.mrb[0].mxu0
      %3458 = vmatprep.mubr.bf16.mxu0 0
      %3459 = vmatmul.mubr.bf16.gmra.mrb[0].mxu0 %v2987
      %v3460 = vpop.f32.mrb[0].mxu0
      %v3461 = vadd.f32 0.0, %v3460
      %v3462 = vpop.f32.mrb[0].mxu0
      %v3463 = vpop.f32.mrb[0].mxu0
      %v3464 = vadd.f32 0.0, %v3463
      %v3465 = vpop.f32.mrb[0].mxu0
      %3466 = vmatprep.mubr.bf16.mxu0 0
      %3467 = vmatmul.mubr.bf16.gmra.mrb[0].mxu0 %v2990
      %v3468 = vpop.f32.mrb[0].mxu0
      %v3469 = vadd.f32 0.0, %v3468
      %v3470 = vpop.f32.mrb[0].mxu0
      %v3471 = vpop.f32.mrb[0].mxu0
      %v3472 = vadd.f32 0.0, %v3471
      %v3473 = vpop.f32.mrb[0].mxu0
      %3474 = vmatprep.mubr.bf16.mxu0 0
      %3475 = vmatmul.mubr.bf16.gmra.mrb[0].mxu0 %v2993
      %v3476 = vpop.f32.mrb[0].mxu0
      %v3477 = vadd.f32 0.0, %v3476
      %v3478 = vpop.f32.mrb[0].mxu0
      %v3479 = vpop.f32.mrb[0].mxu0
      %v3480 = vadd.f32 0.0, %v3479
      %v3481 = vpop.f32.mrb[0].mxu0
      %3482 = vmatprep.mubr.bf16.mxu0 0
      %3483 = vmatmul.mubr.bf16.gmra.mrb[0].mxu0 %v2996
      %v3484 = vpop.f32.mrb[0].mxu0
      %v3485 = vadd.f32 0.0, %v3484
      %v3486 = vpop.f32.mrb[0].mxu0
      %v3487 = vpop.f32.mrb[0].mxu0
      %v3488 = vadd.f32 0.0, %v3487
      %v3489 = vpop.f32.mrb[0].mxu0
      %3490 = vmatprep.mubr.bf16.mxu0 0
      %3491 = vmatmul.mubr.bf16.gmra.mrb[0].mxu0 %v2999
      %v3492 = vpop.f32.mrb[0].mxu0
      %v3493 = vadd.f32 0.0, %v3492
      %v3494 = vpop.f32.mrb[0].mxu0
      %v3495 = vpop.f32.mrb[0].mxu0
      %v3496 = vadd.f32 0.0, %v3495
      %v3497 = vpop.f32.mrb[0].mxu0
      %3498 = vmatprep.mubr.bf16.mxu0 0
      %3499 = vmatmul.mubr.bf16.gmra.mrb[0].mxu0 %v3002
      %v3500 = vpop.f32.mrb[0].mxu0
      %v3501 = vadd.f32 0.0, %v3500
      %v3502 = vpop.f32.mrb[0].mxu0
      %v3503 = vpop.f32.mrb[0].mxu0
      %v3504 = vadd.f32 0.0, %v3503
      %v3505 = vpop.f32.mrb[0].mxu0
      %3506 = vmatprep.mubr.bf16.mxu0 0
      %3507 = vmatmul.mubr.bf16.gmra.mrb[0].mxu0 %v3005
      %v3508 = vpop.f32.mrb[0].mxu0
      %v3509 = vadd.f32 0.0, %v3508
      %v3510 = vpop.f32.mrb[0].mxu0
      %v3511 = vpop.f32.mrb[0].mxu0
      %v3512 = vadd.f32 0.0, %v3511
      %v3513 = vpop.f32.mrb[0].mxu0
      %3514 = vmatprep.mubr.bf16.mxu0 0
      %3515 = vmatmul.mubr.bf16.gmra.mrb[0].mxu0 %v3297
      %v3516 = vpop.f32.mrb[0].mxu0
      %v3517 = vpop.f32.mrb[0].mxu0
      %v3518 = vpop.f32.mrb[0].mxu0
      %v3519 = vpop.f32.mrb[0].mxu0
      %3520 = vmatprep.mubr.bf16.mxu0 0
      %3521 = vmatmul.mubr.bf16.gmra.mrb[0].mxu0 %v3300
      %v3522 = vpop.f32.mrb[0].mxu0
      %v3523 = vpop.f32.mrb[0].mxu0
      %v3524 = vpop.f32.mrb[0].mxu0
      %v3525 = vpop.f32.mrb[0].mxu0
      %3526 = vdwg.mxu0
      %v3527 = vadd.f32 %v3235, %v3349
      %v3528 = vadd.f32 %v3236, %v3352
      %v3529 = vadd.f32 %v3237, %v3357
      %v3530 = vadd.f32 %v3238, %v3360
      %v3531 = vadd.f32 %v3239, %v3365
      %v3532 = vadd.f32 %v3240, %v3368
      %v3533 = vadd.f32 %v3241, %v3373
      %v3534 = vadd.f32 %v3242, %v3376
      %v3535 = vadd.f32 %v3243, %v3381
      %v3536 = vadd.f32 %v3244, %v3384
      %v3537 = vadd.f32 %v3245, %v3389
      %v3538 = vadd.f32 %v3246, %v3392
      %v3539 = vadd.f32 %v3247, %v3397
      %v3540 = vadd.f32 %v3248, %v3400
      %v3541 = vadd.f32 %v3249, %v3405
      %v3542 = vadd.f32 %v3250, %v3408
      %v3543 = vadd.f32 %v3251, %v3413
      %v3544 = vadd.f32 %v3252, %v3416
      %v3545 = vadd.f32 %v3253, %v3421
      %v3546 = vadd.f32 %v3254, %v3424
      %v3547 = vadd.f32 %v3255, %v3429
      %v3548 = vadd.f32 %v3256, %v3432
      %v3549 = vadd.f32 %v3257, %v3437
      %v3550 = vadd.f32 %v3258, %v3440
      %v3551 = vadd.f32 %v3259, %v3445
      %v3552 = vadd.f32 %v3260, %v3448
      %v3553 = vadd.f32 %v3261, %v3453
      %v3554 = vadd.f32 %v3262, %v3456
      %v3555 = vadd.f32 %v3263, %v3461
      %v3556 = vadd.f32 %v3264, %v3464
      %v3557 = vadd.f32 %v3265, %v3469
      %v3558 = vadd.f32 %v3266, %v3472
      %v3559 = vadd.f32 %v3267, %v3477
      %v3560 = vadd.f32 %v3268, %v3480
      %v3561 = vadd.f32 %v3269, %v3485
      %v3562 = vadd.f32 %v3270, %v3488
      %v3563 = vadd.f32 %v3271, %v3493
      %v3564 = vadd.f32 %v3272, %v3496
      %v3565 = vadd.f32 %v3273, %v3501
      %v3566 = vadd.f32 %v3274, %v3504
      %v3567 = vadd.f32 %v3275, %v3509
      %v3568 = vadd.f32 %v3276, %v3512
      %s3569 = scalar_lea.vmem %s4, 56
      %v3570 = vld [vmem:[%s3569] sm:$0xf]
      %v3571 = vld [vmem:[%s3569 + $0x4] sm:$0xf]
      %vm3574 = vcmask 1044480
      %v3575 = vrot.slane %v758, 3
      %v3576 = vrot.slane %v759, 3
      %v3577 = vsel %vm3574, %v3575, %v3576
      %v3578 = vrot.slane %v760, 3
      %v3579 = vsel %vm3574, %v3576, %v3578
      %v3580 = vrot.slane %v761, 3
      %v3581 = vsel %vm3574, %v3578, %v3580
      %v3582 = vrot.slane %v762, 3
      %v3583 = vsel %vm3574, %v3580, %v3582
      %v3584 = vrot.slane %v763, 3
      %v3585 = vsel %vm3574, %v3582, %v3584
      %v3586 = vrot.slane %v764, 3
      %v3587 = vsel %vm3574, %v3584, %v3586
      %v3588 = vrot.slane %v765, 3
      %v3589 = vsel %vm3574, %v3586, %v3588
      %v3590 = vrot.slane %v766, 3
      %v3591 = vsel %vm3574, %v3588, %v3590
      %v3592 = vrot.slane %v767, 3
      %v3593 = vsel %vm3574, %v3590, %v3592
      %v3594 = vrot.slane %v768, 3
      %v3595 = vsel %vm3574, %v3592, %v3594
      %v3596 = vrot.slane %v769, 3
      %v3597 = vsel %vm3574, %v3594, %v3596
      %v3598 = vrot.slane %v770, 3
      %v3599 = vsel %vm3574, %v3596, %v3598
      %v3600 = vrot.slane %v771, 3
      %v3601 = vsel %vm3574, %v3598, %v3600
      %v3602 = vrot.slane %v772, 3
      %v3603 = vsel %vm3574, %v3600, %v3602
      %v3604 = vrot.slane %v773, 3
      %v3605 = vsel %vm3574, %v3602, %v3604
      %v3606 = vrot.slane %v774, 3
      %v3607 = vsel %vm3574, %v3604, %v3606
      %v3608 = vrot.slane %v775, 3
      %v3609 = vsel %vm3574, %v3606, %v3608
      %v3610 = vrot.slane %v776, 3
      %v3611 = vsel %vm3574, %v3608, %v3610
      %v3612 = vrot.slane %v777, 3
      %v3613 = vsel %vm3574, %v3610, %v3612
      %v3614 = vrot.slane %v778, 3
      %v3615 = vsel %vm3574, %v3612, %v3614
      %v3616 = vrot.slane %v779, 3
      %v3617 = vsel %vm3574, %v3614, %v3616
      %v3618 = vrot.slane %v780, 3
      %v3619 = vsel %vm3574, %v3616, %v3618
      %v3620 = vrot.slane %v781, 3
      %v3621 = vsel %vm3574, %v3618, %v3620
      %v3622 = vrot.slane %v782, 3
      %v3623 = vsel %vm3574, %v3620, %v3622
      %v3624 = vrot.slane %v783, 3
      %v3625 = vsel %vm3574, %v3622, %v3624
      %v3628 = vunpack.c.l.b16 %v3570
      %v3629 = vunpack.c.l.b16 %v3571
      %v3630 = vpack.c.b16 %v3629, %v3628
      %v3633 = vsel %vm870, %v3577, 0
      %v3636 = vsel %vm870, %v3579, 0
      %v3639 = vsel %vm870, %v3581, 0
      %v3642 = vsel %vm870, %v3583, 0
      %v3645 = vsel %vm870, %v3585, 0
      %v3648 = vsel %vm870, %v3587, 0
      %v3651 = vsel %vm870, %v3589, 0
      %v3654 = vsel %vm870, %v3591, 0
      %v3657 = vsel %vm870, %v3593, 0
      %v3660 = vsel %vm870, %v3595, 0
      %v3663 = vsel %vm870, %v3597, 0
      %v3666 = vsel %vm870, %v3599, 0
      %v3669 = vsel %vm870, %v3601, 0
      %v3672 = vsel %vm870, %v3603, 0
      %v3675 = vsel %vm870, %v3605, 0
      %v3678 = vsel %vm870, %v3607, 0
      %v3681 = vsel %vm870, %v3609, 0
      %v3684 = vsel %vm870, %v3611, 0
      %v3687 = vsel %vm870, %v3613, 0
      %v3690 = vsel %vm870, %v3615, 0
      %v3693 = vsel %vm870, %v3617, 0
      %v3696 = vsel %vm870, %v3619, 0
      %v3699 = vsel %vm870, %v3621, 0
      %v3702 = vsel %vm870, %v3623, 0
      %v3705 = vsel %vm870, %v3625, 0
      %3707 = vmatprep.subr.bf16.mxu0 0
      %3708 = vmatpush1.bf16.msra.mxu0 %v3630
      %3709 = vmatprep.subr.bf16.mxu0 0
      %3710 = vmatpush1.bf16.msra.mxu0 0
      %3711 = vmatprep.subr.bf16.mxu0 0
      %3712 = vmatpush1.bf16.msra.mxu0 0
      %3713 = vmatprep.subr.bf16.mxu0 0
      %3714 = vmatpush1.bf16.msra.mxu0 0
      %3715 = vmatprep.subr.bf16.mxu0 0
      %3716 = vmatpush1.bf16.msra.mxu0 0
      %3717 = vmatprep.subr.bf16.mxu0 0
      %3718 = vmatpush1.bf16.msra.mxu0 0
      %3719 = vmatprep.subr.bf16.mxu0 0
      %3720 = vmatpush1.bf16.msra.mxu0 0
      %3721 = vmatprep.subr.bf16.mxu0 0
      %3722 = vmatpush1.bf16.msra.mxu0 0
      %3723 = vmatprep.subr.bf16.mxu0 0
      %3724 = vmatpush1.bf16.msra.mxu0 0
      %3725 = vmatprep.subr.bf16.mxu0 0
      %3726 = vmatpush1.bf16.msra.mxu0 0
      %3727 = vmatprep.subr.bf16.mxu0 0
      %3728 = vmatpush1.bf16.msra.mxu0 0
      %3729 = vmatprep.subr.bf16.mxu0 0
      %3730 = vmatpush1.bf16.msra.mxu0 0
      %3731 = vmatprep.subr.bf16.mxu0 0
      %3732 = vmatpush1.bf16.msra.mxu0 0
      %3733 = vmatprep.subr.bf16.mxu0 0
      %3734 = vmatpush1.bf16.msra.mxu0 0
      %3735 = vmatprep.subr.bf16.mxu0 0
      %3736 = vmatpush1.bf16.msra.mxu0 0
      %3737 = vmatprep.subr.bf16.mxu0 0
      %3738 = vmatpush1.bf16.msra.mxu0 0
      %3739 = vmatprep.mubr.bf16.mxu0 0
      %3740 = vmatmul.mubr.bf16.gmra.mrb[0].mxu0 %v3633
      %v3741 = vpop.f32.mrb[0].mxu0
      %v3742 = vpop.f32.mrb[0].mxu0
      %v3743 = vpop.f32.mrb[0].mxu0
      %v3744 = vpop.f32.mrb[0].mxu0
      %3745 = vmatprep.mubr.bf16.mxu0 0
      %3746 = vmatmul.mubr.bf16.gmra.mrb[0].mxu0 %v3636
      %v3747 = vpop.f32.mrb[0].mxu0
      %v3748 = vpop.f32.mrb[0].mxu0
      %v3749 = vpop.f32.mrb[0].mxu0
      %v3750 = vpop.f32.mrb[0].mxu0
      %3751 = vmatprep.mubr.bf16.mxu0 0
      %3752 = vmatmul.mubr.bf16.gmra.mrb[0].mxu0 %v3639
      %v3753 = vpop.f32.mrb[0].mxu0
      %v3754 = vadd.f32 0.0, %v3753
      %v3755 = vpop.f32.mrb[0].mxu0
      %v3756 = vpop.f32.mrb[0].mxu0
      %v3757 = vadd.f32 0.0, %v3756
      %v3758 = vpop.f32.mrb[0].mxu0
      %3759 = vmatprep.mubr.bf16.mxu0 0
      %3760 = vmatmul.mubr.bf16.gmra.mrb[0].mxu0 %v3642
      %v3761 = vpop.f32.mrb[0].mxu0
      %v3762 = vadd.f32 0.0, %v3761
      %v3763 = vpop.f32.mrb[0].mxu0
      %v3764 = vpop.f32.mrb[0].mxu0
      %v3765 = vadd.f32 0.0, %v3764
      %v3766 = vpop.f32.mrb[0].mxu0
      %3767 = vmatprep.mubr.bf16.mxu0 0
      %3768 = vmatmul.mubr.bf16.gmra.mrb[0].mxu0 %v3645
      %v3769 = vpop.f32.mrb[0].mxu0
      %v3770 = vadd.f32 0.0, %v3769
      %v3771 = vpop.f32.mrb[0].mxu0
      %v3772 = vpop.f32.mrb[0].mxu0
      %v3773 = vadd.f32 0.0, %v3772
      %v3774 = vpop.f32.mrb[0].mxu0
      %3775 = vmatprep.mubr.bf16.mxu0 0
      %3776 = vmatmul.mubr.bf16.gmra.mrb[0].mxu0 %v3648
      %v3777 = vpop.f32.mrb[0].mxu0
      %v3778 = vadd.f32 0.0, %v3777
      %v3779 = vpop.f32.mrb[0].mxu0
      %v3780 = vpop.f32.mrb[0].mxu0
      %v3781 = vadd.f32 0.0, %v3780
      %v3782 = vpop.f32.mrb[0].mxu0
      %3783 = vmatprep.mubr.bf16.mxu0 0
      %3784 = vmatmul.mubr.bf16.gmra.mrb[0].mxu0 %v3651
      %v3785 = vpop.f32.mrb[0].mxu0
      %v3786 = vadd.f32 0.0, %v3785
      %v3787 = vpop.f32.mrb[0].mxu0
      %v3788 = vpop.f32.mrb[0].mxu0
      %v3789 = vadd.f32 0.0, %v3788
      %v3790 = vpop.f32.mrb[0].mxu0
      %3791 = vmatprep.mubr.bf16.mxu0 0
      %3792 = vmatmul.mubr.bf16.gmra.mrb[0].mxu0 %v3654
      %v3793 = vpop.f32.mrb[0].mxu0
      %v3794 = vadd.f32 0.0, %v3793
      %v3795 = vpop.f32.mrb[0].mxu0
      %v3796 = vpop.f32.mrb[0].mxu0
      %v3797 = vadd.f32 0.0, %v3796
      %v3798 = vpop.f32.mrb[0].mxu0
      %3799 = vmatprep.mubr.bf16.mxu0 0
      %3800 = vmatmul.mubr.bf16.gmra.mrb[0].mxu0 %v3657
      %v3801 = vpop.f32.mrb[0].mxu0
      %v3802 = vadd.f32 0.0, %v3801
      %v3803 = vpop.f32.mrb[0].mxu0
      %v3804 = vpop.f32.mrb[0].mxu0
      %v3805 = vadd.f32 0.0, %v3804
      %v3806 = vpop.f32.mrb[0].mxu0
      %3807 = vmatprep.mubr.bf16.mxu0 0
      %3808 = vmatmul.mubr.bf16.gmra.mrb[0].mxu0 %v3660
      %v3809 = vpop.f32.mrb[0].mxu0
      %v3810 = vadd.f32 0.0, %v3809
      %v3811 = vpop.f32.mrb[0].mxu0
      %v3812 = vpop.f32.mrb[0].mxu0
      %v3813 = vadd.f32 0.0, %v3812
      %v3814 = vpop.f32.mrb[0].mxu0
      %3815 = vmatprep.mubr.bf16.mxu0 0
      %3816 = vmatmul.mubr.bf16.gmra.mrb[0].mxu0 %v3663
      %v3817 = vpop.f32.mrb[0].mxu0
      %v3818 = vadd.f32 0.0, %v3817
      %v3819 = vpop.f32.mrb[0].mxu0
      %v3820 = vpop.f32.mrb[0].mxu0
      %v3821 = vadd.f32 0.0, %v3820
      %v3822 = vpop.f32.mrb[0].mxu0
      %3823 = vmatprep.mubr.bf16.mxu0 0
      %3824 = vmatmul.mubr.bf16.gmra.mrb[0].mxu0 %v3666
      %v3825 = vpop.f32.mrb[0].mxu0
      %v3826 = vadd.f32 0.0, %v3825
      %v3827 = vpop.f32.mrb[0].mxu0
      %v3828 = vpop.f32.mrb[0].mxu0
      %v3829 = vadd.f32 0.0, %v3828
      %v3830 = vpop.f32.mrb[0].mxu0
      %3831 = vmatprep.mubr.bf16.mxu0 0
      %3832 = vmatmul.mubr.bf16.gmra.mrb[0].mxu0 %v3669
      %v3833 = vpop.f32.mrb[0].mxu0
      %v3834 = vadd.f32 0.0, %v3833
      %v3835 = vpop.f32.mrb[0].mxu0
      %v3836 = vpop.f32.mrb[0].mxu0
      %v3837 = vadd.f32 0.0, %v3836
      %v3838 = vpop.f32.mrb[0].mxu0
      %3839 = vmatprep.mubr.bf16.mxu0 0
      %3840 = vmatmul.mubr.bf16.gmra.mrb[0].mxu0 %v3672
      %v3841 = vpop.f32.mrb[0].mxu0
      %v3842 = vadd.f32 0.0, %v3841
      %v3843 = vpop.f32.mrb[0].mxu0
      %v3844 = vpop.f32.mrb[0].mxu0
      %v3845 = vadd.f32 0.0, %v3844
      %v3846 = vpop.f32.mrb[0].mxu0
      %3847 = vmatprep.mubr.bf16.mxu0 0
      %3848 = vmatmul.mubr.bf16.gmra.mrb[0].mxu0 %v3675
      %v3849 = vpop.f32.mrb[0].mxu0
      %v3850 = vadd.f32 0.0, %v3849
      %v3851 = vpop.f32.mrb[0].mxu0
      %v3852 = vpop.f32.mrb[0].mxu0
      %v3853 = vadd.f32 0.0, %v3852
      %v3854 = vpop.f32.mrb[0].mxu0
      %3855 = vmatprep.mubr.bf16.mxu0 0
      %3856 = vmatmul.mubr.bf16.gmra.mrb[0].mxu0 %v3678
      %v3857 = vpop.f32.mrb[0].mxu0
      %v3858 = vadd.f32 0.0, %v3857
      %v3859 = vpop.f32.mrb[0].mxu0
      %v3860 = vpop.f32.mrb[0].mxu0
      %v3861 = vadd.f32 0.0, %v3860
      %v3862 = vpop.f32.mrb[0].mxu0
      %3863 = vmatprep.mubr.bf16.mxu0 0
      %3864 = vmatmul.mubr.bf16.gmra.mrb[0].mxu0 %v3681
      %v3865 = vpop.f32.mrb[0].mxu0
      %v3866 = vadd.f32 0.0, %v3865
      %v3867 = vpop.f32.mrb[0].mxu0
      %v3868 = vpop.f32.mrb[0].mxu0
      %v3869 = vadd.f32 0.0, %v3868
      %v3870 = vpop.f32.mrb[0].mxu0
      %3871 = vmatprep.mubr.bf16.mxu0 0
      %3872 = vmatmul.mubr.bf16.gmra.mrb[0].mxu0 %v3684
      %v3873 = vpop.f32.mrb[0].mxu0
      %v3874 = vadd.f32 0.0, %v3873
      %v3875 = vpop.f32.mrb[0].mxu0
      %v3876 = vpop.f32.mrb[0].mxu0
      %v3877 = vadd.f32 0.0, %v3876
      %v3878 = vpop.f32.mrb[0].mxu0
      %3879 = vmatprep.mubr.bf16.mxu0 0
      %3880 = vmatmul.mubr.bf16.gmra.mrb[0].mxu0 %v3687
      %v3881 = vpop.f32.mrb[0].mxu0
      %v3882 = vadd.f32 0.0, %v3881
      %v3883 = vpop.f32.mrb[0].mxu0
      %v3884 = vpop.f32.mrb[0].mxu0
      %v3885 = vadd.f32 0.0, %v3884
      %v3886 = vpop.f32.mrb[0].mxu0
      %3887 = vmatprep.mubr.bf16.mxu0 0
      %3888 = vmatmul.mubr.bf16.gmra.mrb[0].mxu0 %v3690
      %v3889 = vpop.f32.mrb[0].mxu0
      %v3890 = vadd.f32 0.0, %v3889
      %v3891 = vpop.f32.mrb[0].mxu0
      %v3892 = vpop.f32.mrb[0].mxu0
      %v3893 = vadd.f32 0.0, %v3892
      %v3894 = vpop.f32.mrb[0].mxu0
      %3895 = vmatprep.mubr.bf16.mxu0 0
      %3896 = vmatmul.mubr.bf16.gmra.mrb[0].mxu0 %v3693
      %v3897 = vpop.f32.mrb[0].mxu0
      %v3898 = vadd.f32 0.0, %v3897
      %v3899 = vpop.f32.mrb[0].mxu0
      %v3900 = vpop.f32.mrb[0].mxu0
      %v3901 = vadd.f32 0.0, %v3900
      %v3902 = vpop.f32.mrb[0].mxu0
      %3903 = vmatprep.mubr.bf16.mxu0 0
      %3904 = vmatmul.mubr.bf16.gmra.mrb[0].mxu0 %v3696
      %v3905 = vpop.f32.mrb[0].mxu0
      %v3906 = vadd.f32 0.0, %v3905
      %v3907 = vpop.f32.mrb[0].mxu0
      %v3908 = vpop.f32.mrb[0].mxu0
      %v3909 = vadd.f32 0.0, %v3908
      %v3910 = vpop.f32.mrb[0].mxu0
      %3911 = vmatprep.mubr.bf16.mxu0 0
      %3912 = vmatmul.mubr.bf16.gmra.mrb[0].mxu0 %v3699
      %v3913 = vpop.f32.mrb[0].mxu0
      %v3914 = vadd.f32 0.0, %v3913
      %v3915 = vpop.f32.mrb[0].mxu0
      %v3916 = vpop.f32.mrb[0].mxu0
      %v3917 = vadd.f32 0.0, %v3916
      %v3918 = vpop.f32.mrb[0].mxu0
      %3919 = vmatprep.mubr.bf16.mxu0 0
      %3920 = vmatmul.mubr.bf16.gmra.mrb[0].mxu0 %v3702
      %v3921 = vpop.f32.mrb[0].mxu0
      %v3922 = vpop.f32.mrb[0].mxu0
      %v3923 = vpop.f32.mrb[0].mxu0
      %v3924 = vpop.f32.mrb[0].mxu0
      %3925 = vmatprep.mubr.bf16.mxu0 0
      %3926 = vmatmul.mubr.bf16.gmra.mrb[0].mxu0 %v3705
      %v3927 = vpop.f32.mrb[0].mxu0
      %v3928 = vpop.f32.mrb[0].mxu0
      %v3929 = vpop.f32.mrb[0].mxu0
      %v3930 = vpop.f32.mrb[0].mxu0
      %3931 = vdwg.mxu0
      %v3932 = vadd.f32 %v3527, %v3754
      %v3933 = vadd.f32 %v3528, %v3757
      %v3934 = vadd.f32 %v3529, %v3762
      %v3935 = vadd.f32 %v3530, %v3765
      %v3936 = vadd.f32 %v3531, %v3770
      %v3937 = vadd.f32 %v3532, %v3773
      %v3938 = vadd.f32 %v3533, %v3778
      %v3939 = vadd.f32 %v3534, %v3781
      %v3940 = vadd.f32 %v3535, %v3786
      %v3941 = vadd.f32 %v3536, %v3789
      %v3942 = vadd.f32 %v3537, %v3794
      %v3943 = vadd.f32 %v3538, %v3797
      %v3944 = vadd.f32 %v3539, %v3802
      %v3945 = vadd.f32 %v3540, %v3805
      %v3946 = vadd.f32 %v3541, %v3810
      %v3947 = vadd.f32 %v3542, %v3813
      %v3948 = vadd.f32 %v3543, %v3818
      %v3949 = vadd.f32 %v3544, %v3821
      %v3950 = vadd.f32 %v3545, %v3826
      %v3951 = vadd.f32 %v3546, %v3829
      %v3952 = vadd.f32 %v3547, %v3834
      %v3953 = vadd.f32 %v3548, %v3837
      %v3954 = vadd.f32 %v3549, %v3842
      %v3955 = vadd.f32 %v3550, %v3845
      %v3956 = vadd.f32 %v3551, %v3850
      %v3957 = vadd.f32 %v3552, %v3853
      %v3958 = vadd.f32 %v3553, %v3858
      %v3959 = vadd.f32 %v3554, %v3861
      %v3960 = vadd.f32 %v3555, %v3866
      %v3961 = vadd.f32 %v3556, %v3869
      %v3962 = vadd.f32 %v3557, %v3874
      %v3963 = vadd.f32 %v3558, %v3877
      %v3964 = vadd.f32 %v3559, %v3882
      %v3965 = vadd.f32 %v3560, %v3885
      %v3966 = vadd.f32 %v3561, %v3890
      %v3967 = vadd.f32 %v3562, %v3893
      %v3968 = vadd.f32 %v3563, %v3898
      %v3969 = vadd.f32 %v3564, %v3901
      %v3970 = vadd.f32 %v3565, %v3906
      %v3971 = vadd.f32 %v3566, %v3909
      %v3972 = vadd.f32 %v3567, %v3914
      %v3973 = vadd.f32 %v3568, %v3917
      %s3974 = scalar_lea.vmem %s4, 64
      %v3975 = vld [vmem:[%s3974] sm:$0xf]
      %v3976 = vld [vmem:[%s3974 + $0x4] sm:$0xf]
      %vm3977 = vsmask.f32 4352
      %v3978 = vrot.slane %v1192, 3
      %v3979 = vrot.slane %v1188, 4
      %v3980 = vor.u32 %v3978, %v3979
      %v3981 = vrot.slane %v1200, 3
      %v3982 = vrot.slane %v1196, 4
      %v3983 = vor.u32 %v3981, %v3982
      %v3984 = vsel %vm3977, %v3980, %v3983
      %v3985 = vrot.slane %v1208, 3
      %v3986 = vrot.slane %v1204, 4
      %v3987 = vor.u32 %v3985, %v3986
      %v3988 = vsel %vm3977, %v3983, %v3987
      %v3989 = vrot.slane %v1216, 3
      %v3990 = vrot.slane %v1212, 4
      %v3991 = vor.u32 %v3989, %v3990
      %v3992 = vsel %vm3977, %v3987, %v3991
      %v3993 = vrot.slane %v1224, 3
      %v3994 = vrot.slane %v1220, 4
      %v3995 = vor.u32 %v3993, %v3994
      %v3996 = vsel %vm3977, %v3991, %v3995
      %v3997 = vrot.slane %v1232, 3
      %v3998 = vrot.slane %v1228, 4
      %v3999 = vor.u32 %v3997, %v3998
      %v4000 = vsel %vm3977, %v3995, %v3999
      %v4001 = vrot.slane %v1240, 3
      %v4002 = vrot.slane %v1236, 4
      %v4003 = vor.u32 %v4001, %v4002
      %v4004 = vsel %vm3977, %v3999, %v4003
      %v4005 = vrot.slane %v1248, 3
      %v4006 = vrot.slane %v1244, 4
      %v4007 = vor.u32 %v4005, %v4006
      %v4008 = vsel %vm3977, %v4003, %v4007
      %v4009 = vrot.slane %v1256, 3
      %v4010 = vrot.slane %v1252, 4
      %v4011 = vor.u32 %v4009, %v4010
      %v4012 = vsel %vm3977, %v4007, %v4011
      %v4013 = vrot.slane %v1264, 3
      %v4014 = vrot.slane %v1260, 4
      %v4015 = vor.u32 %v4013, %v4014
      %v4016 = vsel %vm3977, %v4011, %v4015
      %v4017 = vrot.slane %v1272, 3
      %v4018 = vrot.slane %v1268, 4
      %v4019 = vor.u32 %v4017, %v4018
      %v4020 = vsel %vm3977, %v4015, %v4019
      %v4021 = vrot.slane %v1280, 3
      %v4022 = vrot.slane %v1276, 4
      %v4023 = vor.u32 %v4021, %v4022
      %v4024 = vsel %vm3977, %v4019, %v4023
      %v4025 = vrot.slane %v1288, 3
      %v4026 = vrot.slane %v1284, 4
      %v4027 = vor.u32 %v4025, %v4026
      %v4028 = vsel %vm3977, %v4023, %v4027
      %v4029 = vrot.slane %v1296, 3
      %v4030 = vrot.slane %v1292, 4
      %v4031 = vor.u32 %v4029, %v4030
      %v4032 = vsel %vm3977, %v4027, %v4031
      %v4033 = vrot.slane %v1304, 3
      %v4034 = vrot.slane %v1300, 4
      %v4035 = vor.u32 %v4033, %v4034
      %v4036 = vsel %vm3977, %v4031, %v4035
      %v4037 = vrot.slane %v1312, 3
      %v4038 = vrot.slane %v1308, 4
      %v4039 = vor.u32 %v4037, %v4038
      %v4040 = vsel %vm3977, %v4035, %v4039
      %v4041 = vrot.slane %v1320, 3
      %v4042 = vrot.slane %v1316, 4
      %v4043 = vor.u32 %v4041, %v4042
      %v4044 = vsel %vm3977, %v4039, %v4043
      %v4045 = vrot.slane %v1328, 3
      %v4046 = vrot.slane %v1324, 4
      %v4047 = vor.u32 %v4045, %v4046
      %v4048 = vsel %vm3977, %v4043, %v4047
      %v4049 = vrot.slane %v1336, 3
      %v4050 = vrot.slane %v1332, 4
      %v4051 = vor.u32 %v4049, %v4050
      %v4052 = vsel %vm3977, %v4047, %v4051
      %v4053 = vrot.slane %v1344, 3
      %v4054 = vrot.slane %v1340, 4
      %v4055 = vor.u32 %v4053, %v4054
      %v4056 = vsel %vm3977, %v4051, %v4055
      %v4057 = vrot.slane %v1352, 3
      %v4058 = vrot.slane %v1348, 4
      %v4059 = vor.u32 %v4057, %v4058
      %v4060 = vsel %vm3977, %v4055, %v4059
      %v4061 = vrot.slane %v1360, 3
      %v4062 = vrot.slane %v1356, 4
      %v4063 = vor.u32 %v4061, %v4062
      %v4064 = vsel %vm3977, %v4059, %v4063
      %v4065 = vrot.slane %v1368, 3
      %v4066 = vrot.slane %v1364, 4
      %v4067 = vor.u32 %v4065, %v4066
      %v4068 = vsel %vm3977, %v4063, %v4067
      %v4069 = vrot.slane %v2132, 3
      %v4070 = vrot.slane %v2135, 4
      %v4071 = vor.u32 %v4069, %v4070
      %v4072 = vsel %vm3977, %v4067, %v4071
      %v4073 = vrot.slane %v3280, 3
      %v4074 = vrot.slane %v2925, 4
      %v4075 = vor.u32 %v4073, %v4074
      %v4076 = vsel %vm3977, %v4071, %v4075
      %v4077 = vshrl.u32 %v783, 16
      %v4079 = vrot.slane %v4077, 3
      %v4080 = vrot.slane %v3286, 4
      %v4081 = vor.u32 %v4079, %v4080
      %v4082 = vsel %vm3977, %v4075, %v4081
      %v4085 = vunpack.c.l.b16 %v3975
      %v4086 = vunpack.c.l.b16 %v3976
      %v4087 = vpack.c.b16 %v4086, %v4085
      %v4090 = vsel %vm870, %v3984, 0
      %v4093 = vsel %vm870, %v3988, 0
      %v4096 = vsel %vm870, %v3992, 0
      %v4099 = vsel %vm870, %v3996, 0
      %v4102 = vsel %vm870, %v4000, 0
      %v4105 = vsel %vm870, %v4004, 0
      %v4108 = vsel %vm870, %v4008, 0
      %v4111 = vsel %vm870, %v4012, 0
      %v4114 = vsel %vm870, %v4016, 0
      %v4117 = vsel %vm870, %v4020, 0
      %v4120 = vsel %vm870, %v4024, 0
      %v4123 = vsel %vm870, %v4028, 0
      %v4126 = vsel %vm870, %v4032, 0
      %v4129 = vsel %vm870, %v4036, 0
      %v4132 = vsel %vm870, %v4040, 0
      %v4135 = vsel %vm870, %v4044, 0
      %v4138 = vsel %vm870, %v4048, 0
      %v4141 = vsel %vm870, %v4052, 0
      %v4144 = vsel %vm870, %v4056, 0
      %v4147 = vsel %vm870, %v4060, 0
      %v4150 = vsel %vm870, %v4064, 0
      %v4153 = vsel %vm870, %v4068, 0
      %v4156 = vsel %vm870, %v4072, 0
      %v4159 = vsel %vm870, %v4076, 0
      %v4162 = vsel %vm870, %v4082, 0
      %4164 = vmatprep.subr.bf16.mxu0 0
      %4165 = vmatpush1.bf16.msra.mxu0 %v4087
      %4166 = vmatprep.subr.bf16.mxu0 0
      %4167 = vmatpush1.bf16.msra.mxu0 0
      %4168 = vmatprep.subr.bf16.mxu0 0
      %4169 = vmatpush1.bf16.msra.mxu0 0
      %4170 = vmatprep.subr.bf16.mxu0 0
      %4171 = vmatpush1.bf16.msra.mxu0 0
      %4172 = vmatprep.subr.bf16.mxu0 0
      %4173 = vmatpush1.bf16.msra.mxu0 0
      %4174 = vmatprep.subr.bf16.mxu0 0
      %4175 = vmatpush1.bf16.msra.mxu0 0
      %4176 = vmatprep.subr.bf16.mxu0 0
      %4177 = vmatpush1.bf16.msra.mxu0 0
      %4178 = vmatprep.subr.bf16.mxu0 0
      %4179 = vmatpush1.bf16.msra.mxu0 0
      %4180 = vmatprep.subr.bf16.mxu0 0
      %4181 = vmatpush1.bf16.msra.mxu0 0
      %4182 = vmatprep.subr.bf16.mxu0 0
      %4183 = vmatpush1.bf16.msra.mxu0 0
      %4184 = vmatprep.subr.bf16.mxu0 0
      %4185 = vmatpush1.bf16.msra.mxu0 0
      %4186 = vmatprep.subr.bf16.mxu0 0
      %4187 = vmatpush1.bf16.msra.mxu0 0
      %4188 = vmatprep.subr.bf16.mxu0 0
      %4189 = vmatpush1.bf16.msra.mxu0 0
      %4190 = vmatprep.subr.bf16.mxu0 0
      %4191 = vmatpush1.bf16.msra.mxu0 0
      %4192 = vmatprep.subr.bf16.mxu0 0
      %4193 = vmatpush1.bf16.msra.mxu0 0
      %4194 = vmatprep.subr.bf16.mxu0 0
      %4195 = vmatpush1.bf16.msra.mxu0 0
      %4196 = vmatprep.mubr.bf16.mxu0 0
      %4197 = vmatmul.mubr.bf16.gmra.mrb[0].mxu0 %v4090
      %v4198 = vpop.f32.mrb[0].mxu0
      %v4199 = vpop.f32.mrb[0].mxu0
      %v4200 = vpop.f32.mrb[0].mxu0
      %v4201 = vpop.f32.mrb[0].mxu0
      %4202 = vmatprep.mubr.bf16.mxu0 0
      %4203 = vmatmul.mubr.bf16.gmra.mrb[0].mxu0 %v4093
      %v4204 = vpop.f32.mrb[0].mxu0
      %v4205 = vpop.f32.mrb[0].mxu0
      %v4206 = vpop.f32.mrb[0].mxu0
      %v4207 = vpop.f32.mrb[0].mxu0
      %4208 = vmatprep.mubr.bf16.mxu0 0
      %4209 = vmatmul.mubr.bf16.gmra.mrb[0].mxu0 %v4096
      %v4210 = vpop.f32.mrb[0].mxu0
      %v4211 = vadd.f32 0.0, %v4210
      %v4212 = vpop.f32.mrb[0].mxu0
      %v4213 = vpop.f32.mrb[0].mxu0
      %v4214 = vadd.f32 0.0, %v4213
      %v4215 = vpop.f32.mrb[0].mxu0
      %4216 = vmatprep.mubr.bf16.mxu0 0
      %4217 = vmatmul.mubr.bf16.gmra.mrb[0].mxu0 %v4099
      %v4218 = vpop.f32.mrb[0].mxu0
      %v4219 = vadd.f32 0.0, %v4218
      %v4220 = vpop.f32.mrb[0].mxu0
      %v4221 = vpop.f32.mrb[0].mxu0
      %v4222 = vadd.f32 0.0, %v4221
      %v4223 = vpop.f32.mrb[0].mxu0
      %4224 = vmatprep.mubr.bf16.mxu0 0
      %4225 = vmatmul.mubr.bf16.gmra.mrb[0].mxu0 %v4102
      %v4226 = vpop.f32.mrb[0].mxu0
      %v4227 = vadd.f32 0.0, %v4226
      %v4228 = vpop.f32.mrb[0].mxu0
      %v4229 = vpop.f32.mrb[0].mxu0
      %v4230 = vadd.f32 0.0, %v4229
      %v4231 = vpop.f32.mrb[0].mxu0
      %4232 = vmatprep.mubr.bf16.mxu0 0
      %4233 = vmatmul.mubr.bf16.gmra.mrb[0].mxu0 %v4105
      %v4234 = vpop.f32.mrb[0].mxu0
      %v4235 = vadd.f32 0.0, %v4234
      %v4236 = vpop.f32.mrb[0].mxu0
      %v4237 = vpop.f32.mrb[0].mxu0
      %v4238 = vadd.f32 0.0, %v4237
      %v4239 = vpop.f32.mrb[0].mxu0
      %4240 = vmatprep.mubr.bf16.mxu0 0
      %4241 = vmatmul.mubr.bf16.gmra.mrb[0].mxu0 %v4108
      %v4242 = vpop.f32.mrb[0].mxu0
      %v4243 = vadd.f32 0.0, %v4242
      %v4244 = vpop.f32.mrb[0].mxu0
      %v4245 = vpop.f32.mrb[0].mxu0
      %v4246 = vadd.f32 0.0, %v4245
      %v4247 = vpop.f32.mrb[0].mxu0
      %4248 = vmatprep.mubr.bf16.mxu0 0
      %4249 = vmatmul.mubr.bf16.gmra.mrb[0].mxu0 %v4111
      %v4250 = vpop.f32.mrb[0].mxu0
      %v4251 = vadd.f32 0.0, %v4250
      %v4252 = vpop.f32.mrb[0].mxu0
      %v4253 = vpop.f32.mrb[0].mxu0
      %v4254 = vadd.f32 0.0, %v4253
      %v4255 = vpop.f32.mrb[0].mxu0
      %4256 = vmatprep.mubr.bf16.mxu0 0
      %4257 = vmatmul.mubr.bf16.gmra.mrb[0].mxu0 %v4114
      %v4258 = vpop.f32.mrb[0].mxu0
      %v4259 = vadd.f32 0.0, %v4258
      %v4260 = vpop.f32.mrb[0].mxu0
      %v4261 = vpop.f32.mrb[0].mxu0
      %v4262 = vadd.f32 0.0, %v4261
      %v4263 = vpop.f32.mrb[0].mxu0
      %4264 = vmatprep.mubr.bf16.mxu0 0
      %4265 = vmatmul.mubr.bf16.gmra.mrb[0].mxu0 %v4117
      %v4266 = vpop.f32.mrb[0].mxu0
      %v4267 = vadd.f32 0.0, %v4266
      %v4268 = vpop.f32.mrb[0].mxu0
      %v4269 = vpop.f32.mrb[0].mxu0
      %v4270 = vadd.f32 0.0, %v4269
      %v4271 = vpop.f32.mrb[0].mxu0
      %4272 = vmatprep.mubr.bf16.mxu0 0
      %4273 = vmatmul.mubr.bf16.gmra.mrb[0].mxu0 %v4120
      %v4274 = vpop.f32.mrb[0].mxu0
      %v4275 = vadd.f32 0.0, %v4274
      %v4276 = vpop.f32.mrb[0].mxu0
      %v4277 = vpop.f32.mrb[0].mxu0
      %v4278 = vadd.f32 0.0, %v4277
      %v4279 = vpop.f32.mrb[0].mxu0
      %4280 = vmatprep.mubr.bf16.mxu0 0
      %4281 = vmatmul.mubr.bf16.gmra.mrb[0].mxu0 %v4123
      %v4282 = vpop.f32.mrb[0].mxu0
      %v4283 = vadd.f32 0.0, %v4282
      %v4284 = vpop.f32.mrb[0].mxu0
      %v4285 = vpop.f32.mrb[0].mxu0
      %v4286 = vadd.f32 0.0, %v4285
      %v4287 = vpop.f32.mrb[0].mxu0
      %4288 = vmatprep.mubr.bf16.mxu0 0
      %4289 = vmatmul.mubr.bf16.gmra.mrb[0].mxu0 %v4126
      %v4290 = vpop.f32.mrb[0].mxu0
      %v4291 = vadd.f32 0.0, %v4290
      %v4292 = vpop.f32.mrb[0].mxu0
      %v4293 = vpop.f32.mrb[0].mxu0
      %v4294 = vadd.f32 0.0, %v4293
      %v4295 = vpop.f32.mrb[0].mxu0
      %4296 = vmatprep.mubr.bf16.mxu0 0
      %4297 = vmatmul.mubr.bf16.gmra.mrb[0].mxu0 %v4129
      %v4298 = vpop.f32.mrb[0].mxu0
      %v4299 = vadd.f32 0.0, %v4298
      %v4300 = vpop.f32.mrb[0].mxu0
      %v4301 = vpop.f32.mrb[0].mxu0
      %v4302 = vadd.f32 0.0, %v4301
      %v4303 = vpop.f32.mrb[0].mxu0
      %4304 = vmatprep.mubr.bf16.mxu0 0
      %4305 = vmatmul.mubr.bf16.gmra.mrb[0].mxu0 %v4132
      %v4306 = vpop.f32.mrb[0].mxu0
      %v4307 = vadd.f32 0.0, %v4306
      %v4308 = vpop.f32.mrb[0].mxu0
      %v4309 = vpop.f32.mrb[0].mxu0
      %v4310 = vadd.f32 0.0, %v4309
      %v4311 = vpop.f32.mrb[0].mxu0
      %4312 = vmatprep.mubr.bf16.mxu0 0
      %4313 = vmatmul.mubr.bf16.gmra.mrb[0].mxu0 %v4135
      %v4314 = vpop.f32.mrb[0].mxu0
      %v4315 = vadd.f32 0.0, %v4314
      %v4316 = vpop.f32.mrb[0].mxu0
      %v4317 = vpop.f32.mrb[0].mxu0
      %v4318 = vadd.f32 0.0, %v4317
      %v4319 = vpop.f32.mrb[0].mxu0
      %4320 = vmatprep.mubr.bf16.mxu0 0
      %4321 = vmatmul.mubr.bf16.gmra.mrb[0].mxu0 %v4138
      %v4322 = vpop.f32.mrb[0].mxu0
      %v4323 = vadd.f32 0.0, %v4322
      %v4324 = vpop.f32.mrb[0].mxu0
      %v4325 = vpop.f32.mrb[0].mxu0
      %v4326 = vadd.f32 0.0, %v4325
      %v4327 = vpop.f32.mrb[0].mxu0
      %4328 = vmatprep.mubr.bf16.mxu0 0
      %4329 = vmatmul.mubr.bf16.gmra.mrb[0].mxu0 %v4141
      %v4330 = vpop.f32.mrb[0].mxu0
      %v4331 = vadd.f32 0.0, %v4330
      %v4332 = vpop.f32.mrb[0].mxu0
      %v4333 = vpop.f32.mrb[0].mxu0
      %v4334 = vadd.f32 0.0, %v4333
      %v4335 = vpop.f32.mrb[0].mxu0
      %4336 = vmatprep.mubr.bf16.mxu0 0
      %4337 = vmatmul.mubr.bf16.gmra.mrb[0].mxu0 %v4144
      %v4338 = vpop.f32.mrb[0].mxu0
      %v4339 = vadd.f32 0.0, %v4338
      %v4340 = vpop.f32.mrb[0].mxu0
      %v4341 = vpop.f32.mrb[0].mxu0
      %v4342 = vadd.f32 0.0, %v4341
      %v4343 = vpop.f32.mrb[0].mxu0
      %4344 = vmatprep.mubr.bf16.mxu0 0
      %4345 = vmatmul.mubr.bf16.gmra.mrb[0].mxu0 %v4147
      %v4346 = vpop.f32.mrb[0].mxu0
      %v4347 = vadd.f32 0.0, %v4346
      %v4348 = vpop.f32.mrb[0].mxu0
      %v4349 = vpop.f32.mrb[0].mxu0
      %v4350 = vadd.f32 0.0, %v4349
      %v4351 = vpop.f32.mrb[0].mxu0
      %4352 = vmatprep.mubr.bf16.mxu0 0
      %4353 = vmatmul.mubr.bf16.gmra.mrb[0].mxu0 %v4150
      %v4354 = vpop.f32.mrb[0].mxu0
      %v4355 = vadd.f32 0.0, %v4354
      %v4356 = vpop.f32.mrb[0].mxu0
      %v4357 = vpop.f32.mrb[0].mxu0
      %v4358 = vadd.f32 0.0, %v4357
      %v4359 = vpop.f32.mrb[0].mxu0
      %4360 = vmatprep.mubr.bf16.mxu0 0
      %4361 = vmatmul.mubr.bf16.gmra.mrb[0].mxu0 %v4153
      %v4362 = vpop.f32.mrb[0].mxu0
      %v4363 = vadd.f32 0.0, %v4362
      %v4364 = vpop.f32.mrb[0].mxu0
      %v4365 = vpop.f32.mrb[0].mxu0
      %v4366 = vadd.f32 0.0, %v4365
      %v4367 = vpop.f32.mrb[0].mxu0
      %4368 = vmatprep.mubr.bf16.mxu0 0
      %4369 = vmatmul.mubr.bf16.gmra.mrb[0].mxu0 %v4156
      %v4370 = vpop.f32.mrb[0].mxu0
      %v4371 = vadd.f32 0.0, %v4370
      %v4372 = vpop.f32.mrb[0].mxu0
      %v4373 = vpop.f32.mrb[0].mxu0
      %v4374 = vadd.f32 0.0, %v4373
      %v4375 = vpop.f32.mrb[0].mxu0
      %4376 = vmatprep.mubr.bf16.mxu0 0
      %4377 = vmatmul.mubr.bf16.gmra.mrb[0].mxu0 %v4159
      %v4378 = vpop.f32.mrb[0].mxu0
      %v4379 = vpop.f32.mrb[0].mxu0
      %v4380 = vpop.f32.mrb[0].mxu0
      %v4381 = vpop.f32.mrb[0].mxu0
      %4382 = vmatprep.mubr.bf16.mxu0 0
      %4383 = vmatmul.mubr.bf16.gmra.mrb[0].mxu0 %v4162
      %v4384 = vpop.f32.mrb[0].mxu0
      %v4385 = vpop.f32.mrb[0].mxu0
      %v4386 = vpop.f32.mrb[0].mxu0
      %v4387 = vpop.f32.mrb[0].mxu0
      %4388 = vdwg.mxu0
      %v4389 = vadd.f32 %v3932, %v4211
      %v4390 = vadd.f32 %v3933, %v4214
      %v4391 = vadd.f32 %v3934, %v4219
      %v4392 = vadd.f32 %v3935, %v4222
      %v4393 = vadd.f32 %v3936, %v4227
      %v4394 = vadd.f32 %v3937, %v4230
      %v4395 = vadd.f32 %v3938, %v4235
      %v4396 = vadd.f32 %v3939, %v4238
      %v4397 = vadd.f32 %v3940, %v4243
      %v4398 = vadd.f32 %v3941, %v4246
      %v4399 = vadd.f32 %v3942, %v4251
      %v4400 = vadd.f32 %v3943, %v4254
      %v4401 = vadd.f32 %v3944, %v4259
      %v4402 = vadd.f32 %v3945, %v4262
      %v4403 = vadd.f32 %v3946, %v4267
      %v4404 = vadd.f32 %v3947, %v4270
      %v4405 = vadd.f32 %v3948, %v4275
      %v4406 = vadd.f32 %v3949, %v4278
      %v4407 = vadd.f32 %v3950, %v4283
      %v4408 = vadd.f32 %v3951, %v4286
      %v4409 = vadd.f32 %v3952, %v4291
      %v4410 = vadd.f32 %v3953, %v4294
      %v4411 = vadd.f32 %v3954, %v4299
      %v4412 = vadd.f32 %v3955, %v4302
      %v4413 = vadd.f32 %v3956, %v4307
      %v4414 = vadd.f32 %v3957, %v4310
      %v4415 = vadd.f32 %v3958, %v4315
      %v4416 = vadd.f32 %v3959, %v4318
      %v4417 = vadd.f32 %v3960, %v4323
      %v4418 = vadd.f32 %v3961, %v4326
      %v4419 = vadd.f32 %v3962, %v4331
      %v4420 = vadd.f32 %v3963, %v4334
      %v4421 = vadd.f32 %v3964, %v4339
      %v4422 = vadd.f32 %v3965, %v4342
      %v4423 = vadd.f32 %v3966, %v4347
      %v4424 = vadd.f32 %v3967, %v4350
      %v4425 = vadd.f32 %v3968, %v4355
      %v4426 = vadd.f32 %v3969, %v4358
      %v4427 = vadd.f32 %v3970, %v4363
      %v4428 = vadd.f32 %v3971, %v4366
      %v4429 = vadd.f32 %v3972, %v4371
      %v4430 = vadd.f32 %v3973, %v4374
      %v4431 = vld [vmem:[%s6] sm:$0x1]
      %v4433 = vlaneseq
      %v4434 = vshrl.u32 %v4433, 7
      %v4435 = vsub.s32 0, %v4434
      %v4436 = vrot.slane %v4431, %v4435
      %v4438 = vadd.f32 %v4389, %v4436
      %v4439 = vadd.f32 %v4390, %v4436
      %v4440 = vadd.f32 %v4391, %v4436
      %v4441 = vadd.f32 %v4392, %v4436
      %v4442 = vadd.f32 %v4393, %v4436
      %v4443 = vadd.f32 %v4394, %v4436
      %v4444 = vadd.f32 %v4395, %v4436
      %v4445 = vadd.f32 %v4396, %v4436
      %v4446 = vadd.f32 %v4397, %v4436
      %v4447 = vadd.f32 %v4398, %v4436
      %v4448 = vadd.f32 %v4399, %v4436
      %v4449 = vadd.f32 %v4400, %v4436
      %v4450 = vadd.f32 %v4401, %v4436
      %v4451 = vadd.f32 %v4402, %v4436
      %v4452 = vadd.f32 %v4403, %v4436
      %v4453 = vadd.f32 %v4404, %v4436
      %v4454 = vadd.f32 %v4405, %v4436
      %v4455 = vadd.f32 %v4406, %v4436
      %v4456 = vadd.f32 %v4407, %v4436
      %v4457 = vadd.f32 %v4408, %v4436
      %v4458 = vadd.f32 %v4409, %v4436
      %v4459 = vadd.f32 %v4410, %v4436
      %v4460 = vadd.f32 %v4411, %v4436
      %v4461 = vadd.f32 %v4412, %v4436
      %v4462 = vadd.f32 %v4413, %v4436
      %v4463 = vadd.f32 %v4414, %v4436
      %v4464 = vadd.f32 %v4415, %v4436
      %v4465 = vadd.f32 %v4416, %v4436
      %v4466 = vadd.f32 %v4417, %v4436
      %v4467 = vadd.f32 %v4418, %v4436
      %v4468 = vadd.f32 %v4419, %v4436
      %v4469 = vadd.f32 %v4420, %v4436
      %v4470 = vadd.f32 %v4421, %v4436
      %v4471 = vadd.f32 %v4422, %v4436
      %v4472 = vadd.f32 %v4423, %v4436
      %v4473 = vadd.f32 %v4424, %v4436
      %v4474 = vadd.f32 %v4425, %v4436
      %v4475 = vadd.f32 %v4426, %v4436
      %v4476 = vadd.f32 %v4427, %v4436
      %v4477 = vadd.f32 %v4428, %v4436
      %v4478 = vadd.f32 %v4429, %v4436
      %v4479 = vadd.f32 %v4430, %v4436
      %vm4480 = vcmp.gt.f32.partialorder %v4438, 0.0
      %vm4481 = vcmp.gt.f32.partialorder %v4439, 0.0
      %vm4482 = vcmp.gt.f32.partialorder %v4440, 0.0
      %vm4483 = vcmp.gt.f32.partialorder %v4441, 0.0
      %vm4484 = vcmp.gt.f32.partialorder %v4442, 0.0
      %vm4485 = vcmp.gt.f32.partialorder %v4443, 0.0
      %vm4486 = vcmp.gt.f32.partialorder %v4444, 0.0
      %vm4487 = vcmp.gt.f32.partialorder %v4445, 0.0
      %vm4488 = vcmp.gt.f32.partialorder %v4446, 0.0
      %vm4489 = vcmp.gt.f32.partialorder %v4447, 0.0
      %vm4490 = vcmp.gt.f32.partialorder %v4448, 0.0
      %vm4491 = vcmp.gt.f32.partialorder %v4449, 0.0
      %vm4492 = vcmp.gt.f32.partialorder %v4450, 0.0
      %vm4493 = vcmp.gt.f32.partialorder %v4451, 0.0
      %vm4494 = vcmp.gt.f32.partialorder %v4452, 0.0
      %vm4495 = vcmp.gt.f32.partialorder %v4453, 0.0
      %vm4496 = vcmp.gt.f32.partialorder %v4454, 0.0
      %vm4497 = vcmp.gt.f32.partialorder %v4455, 0.0
      %vm4498 = vcmp.gt.f32.partialorder %v4456, 0.0
      %vm4499 = vcmp.gt.f32.partialorder %v4457, 0.0
      %vm4500 = vcmp.gt.f32.partialorder %v4458, 0.0
      %vm4501 = vcmp.gt.f32.partialorder %v4459, 0.0
      %vm4502 = vcmp.gt.f32.partialorder %v4460, 0.0
      %vm4503 = vcmp.gt.f32.partialorder %v4461, 0.0
      %vm4504 = vcmp.gt.f32.partialorder %v4462, 0.0
      %vm4505 = vcmp.gt.f32.partialorder %v4463, 0.0
      %vm4506 = vcmp.gt.f32.partialorder %v4464, 0.0
      %vm4507 = vcmp.gt.f32.partialorder %v4465, 0.0
      %vm4508 = vcmp.gt.f32.partialorder %v4466, 0.0
      %vm4509 = vcmp.gt.f32.partialorder %v4467, 0.0
      %vm4510 = vcmp.gt.f32.partialorder %v4468, 0.0
      %vm4511 = vcmp.gt.f32.partialorder %v4469, 0.0
      %vm4512 = vcmp.gt.f32.partialorder %v4470, 0.0
      %vm4513 = vcmp.gt.f32.partialorder %v4471, 0.0
      %vm4514 = vcmp.gt.f32.partialorder %v4472, 0.0
      %vm4515 = vcmp.gt.f32.partialorder %v4473, 0.0
      %vm4516 = vcmp.gt.f32.partialorder %v4474, 0.0
      %vm4517 = vcmp.gt.f32.partialorder %v4475, 0.0
      %vm4518 = vcmp.gt.f32.partialorder %v4476, 0.0
      %vm4519 = vcmp.gt.f32.partialorder %v4477, 0.0
      %vm4520 = vcmp.gt.f32.partialorder %v4478, 0.0
      %vm4521 = vcmp.gt.f32.partialorder %v4479, 0.0
      %v4522 = vld [vmem:[%s7] sm:$0x1]
      %v4524 = vlaneseq
      %v4525 = vshrl.u32 %v4524, 7
      %v4526 = vsub.s32 0, %v4525
      %v4527 = vrot.slane %v4522, %v4526
      %v4529 = vmul.f32 %v4527, %v4438
      %v4530 = vmul.f32 %v4527, %v4439
      %v4531 = vmul.f32 %v4527, %v4440
      %v4532 = vmul.f32 %v4527, %v4441
      %v4533 = vmul.f32 %v4527, %v4442
      %v4534 = vmul.f32 %v4527, %v4443
      %v4535 = vmul.f32 %v4527, %v4444
      %v4536 = vmul.f32 %v4527, %v4445
      %v4537 = vmul.f32 %v4527, %v4446
      %v4538 = vmul.f32 %v4527, %v4447
      %v4539 = vmul.f32 %v4527, %v4448
      %v4540 = vmul.f32 %v4527, %v4449
      %v4541 = vmul.f32 %v4527, %v4450
      %v4542 = vmul.f32 %v4527, %v4451
      %v4543 = vmul.f32 %v4527, %v4452
      %v4544 = vmul.f32 %v4527, %v4453
      %v4545 = vmul.f32 %v4527, %v4454
      %v4546 = vmul.f32 %v4527, %v4455
      %v4547 = vmul.f32 %v4527, %v4456
      %v4548 = vmul.f32 %v4527, %v4457
      %v4549 = vmul.f32 %v4527, %v4458
      %v4550 = vmul.f32 %v4527, %v4459
      %v4551 = vmul.f32 %v4527, %v4460
      %v4552 = vmul.f32 %v4527, %v4461
      %v4553 = vmul.f32 %v4527, %v4462
      %v4554 = vmul.f32 %v4527, %v4463
      %v4555 = vmul.f32 %v4527, %v4464
      %v4556 = vmul.f32 %v4527, %v4465
      %v4557 = vmul.f32 %v4527, %v4466
      %v4558 = vmul.f32 %v4527, %v4467
      %v4559 = vmul.f32 %v4527, %v4468
      %v4560 = vmul.f32 %v4527, %v4469
      %v4561 = vmul.f32 %v4527, %v4470
      %v4562 = vmul.f32 %v4527, %v4471
      %v4563 = vmul.f32 %v4527, %v4472
      %v4564 = vmul.f32 %v4527, %v4473
      %v4565 = vmul.f32 %v4527, %v4474
      %v4566 = vmul.f32 %v4527, %v4475
      %v4567 = vmul.f32 %v4527, %v4476
      %v4568 = vmul.f32 %v4527, %v4477
      %v4569 = vmul.f32 %v4527, %v4478
      %v4570 = vmul.f32 %v4527, %v4479
      %v4571 = vsel %vm4480, %v4438, %v4529
      %v4572 = vsel %vm4481, %v4439, %v4530
      %v4573 = vsel %vm4482, %v4440, %v4531
      %v4574 = vsel %vm4483, %v4441, %v4532
      %v4575 = vsel %vm4484, %v4442, %v4533
      %v4576 = vsel %vm4485, %v4443, %v4534
      %v4577 = vsel %vm4486, %v4444, %v4535
      %v4578 = vsel %vm4487, %v4445, %v4536
      %v4579 = vsel %vm4488, %v4446, %v4537
      %v4580 = vsel %vm4489, %v4447, %v4538
      %v4581 = vsel %vm4490, %v4448, %v4539
      %v4582 = vsel %vm4491, %v4449, %v4540
      %v4583 = vsel %vm4492, %v4450, %v4541
      %v4584 = vsel %vm4493, %v4451, %v4542
      %v4585 = vsel %vm4494, %v4452, %v4543
      %v4586 = vsel %vm4495, %v4453, %v4544
      %v4587 = vsel %vm4496, %v4454, %v4545
      %v4588 = vsel %vm4497, %v4455, %v4546
      %v4589 = vsel %vm4498, %v4456, %v4547
      %v4590 = vsel %vm4499, %v4457, %v4548
      %v4591 = vsel %vm4500, %v4458, %v4549
      %v4592 = vsel %vm4501, %v4459, %v4550
      %v4593 = vsel %vm4502, %v4460, %v4551
      %v4594 = vsel %vm4503, %v4461, %v4552
      %v4595 = vsel %vm4504, %v4462, %v4553
      %v4596 = vsel %vm4505, %v4463, %v4554
      %v4597 = vsel %vm4506, %v4464, %v4555
      %v4598 = vsel %vm4507, %v4465, %v4556
      %v4599 = vsel %vm4508, %v4466, %v4557
      %v4600 = vsel %vm4509, %v4467, %v4558
      %v4601 = vsel %vm4510, %v4468, %v4559
      %v4602 = vsel %vm4511, %v4469, %v4560
      %v4603 = vsel %vm4512, %v4470, %v4561
      %v4604 = vsel %vm4513, %v4471, %v4562
      %v4605 = vsel %vm4514, %v4472, %v4563
      %v4606 = vsel %vm4515, %v4473, %v4564
      %v4607 = vsel %vm4516, %v4474, %v4565
      %v4608 = vsel %vm4517, %v4475, %v4566
      %v4609 = vsel %vm4518, %v4476, %v4567
      %v4610 = vsel %vm4519, %v4477, %v4568
      %v4611 = vsel %vm4520, %v4478, %v4569
      %v4612 = vsel %vm4521, %v4479, %v4570
      %v4613 = vld [vmem:[%s2 + $0x20] sm:$0xff]
      %v4614 = vld [vmem:[%s2 + $0x28] sm:$0xff]
      %v4615 = vld [vmem:[%s2 + $0x30] sm:$0xff]
      %v4616 = vld [vmem:[%s2 + $0x38] sm:$0xff]
      %v4617 = vld [vmem:[%s2 + $0x40] sm:$0xff]
      %v4618 = vld [vmem:[%s2 + $0x48] sm:$0xff]
      %v4619 = vld [vmem:[%s2 + $0x50] sm:$0xff]
      %v4620 = vld [vmem:[%s2 + $0x58] sm:$0xff]
      %v4621 = vld [vmem:[%s2 + $0x60] sm:$0xff]
      %v4622 = vld [vmem:[%s2 + $0x68] sm:$0xff]
      %v4623 = vld [vmem:[%s2 + $0x70] sm:$0xff]
      %v4624 = vld [vmem:[%s2 + $0x78] sm:$0xff]
      %v4625 = vld [vmem:[%s2 + $0x80] sm:$0xff]
      %v4626 = vld [vmem:[%s2 + $0x88] sm:$0xff]
      %v4627 = vld [vmem:[%s2 + $0x90] sm:$0xff]
      %v4628 = vld [vmem:[%s2 + $0x98] sm:$0xff]
      %v4629 = vld [vmem:[%s2 + $0xa0] sm:$0xff]
      %v4630 = vld [vmem:[%s2 + $0xa8] sm:$0xff]
      %v4631 = vld [vmem:[%s2 + $0xb0] sm:$0xff]
      %v4632 = vld [vmem:[%s2 + $0xb8] sm:$0xff]
      %v4633 = vld [vmem:[%s2 + $0xc0] sm:$0xff]
      %v4634 = vld [vmem:[%s2 + $0xc8] sm:$0xff]
      %v4635 = vld [vmem:[%s2 + $0xd0] sm:$0xff]
      %v4636 = vld [vmem:[%s2 + $0xd8] sm:$0xff]
      %v4637 = vld [vmem:[%s2 + $0xe0] sm:$0xff]
      %v4638 = vld [vmem:[%s2 + $0xe8] sm:$0xff]
      %v4639 = vld [vmem:[%s2 + $0xf0] sm:$0xff]
      %v4640 = vld [vmem:[%s2 + $0xf8] sm:$0xff]
      %v4641 = vld [vmem:[%s2 + $0x100] sm:$0xff]
      %v4642 = vld [vmem:[%s2 + $0x108] sm:$0xff]
      %v4643 = vld [vmem:[%s2 + $0x110] sm:$0xff]
      %v4644 = vld [vmem:[%s2 + $0x118] sm:$0xff]
      %v4645 = vld [vmem:[%s2 + $0x120] sm:$0xff]
      %v4646 = vld [vmem:[%s2 + $0x128] sm:$0xff]
      %v4647 = vld [vmem:[%s2 + $0x130] sm:$0xff]
      %v4648 = vld [vmem:[%s2 + $0x138] sm:$0xff]
      %v4649 = vld [vmem:[%s2 + $0x140] sm:$0xff]
      %v4650 = vld [vmem:[%s2 + $0x148] sm:$0xff]
      %v4651 = vld [vmem:[%s2 + $0x150] sm:$0xff]
      %v4652 = vld [vmem:[%s2 + $0x158] sm:$0xff]
      %v4653 = vld [vmem:[%s2 + $0x160] sm:$0xff]
      %v4654 = vld [vmem:[%s2 + $0x168] sm:$0xff]
      %4656 = vset.pattern.permute.xlu0 0
      %4657 = vperm.xlu0 %4656, %v4613
      %v4658 = vpop.permute.xlu0 %4657
      %4661 = vset.pattern.permute.xlu0 0
      %4662 = vperm.xlu0 %4661, %v4614
      %v4663 = vpop.permute.xlu0 %4662
      %4666 = vset.pattern.permute.xlu0 0
      %4667 = vperm.xlu0 %4666, %v4615
      %v4668 = vpop.permute.xlu0 %4667
      %4671 = vset.pattern.permute.xlu0 0
      %4672 = vperm.xlu0 %4671, %v4616
      %v4673 = vpop.permute.xlu0 %4672
      %4676 = vset.pattern.permute.xlu0 0
      %4677 = vperm.xlu0 %4676, %v4617
      %v4678 = vpop.permute.xlu0 %4677
      %4681 = vset.pattern.permute.xlu0 0
      %4682 = vperm.xlu0 %4681, %v4618
      %v4683 = vpop.permute.xlu0 %4682
      %4686 = vset.pattern.permute.xlu0 0
      %4687 = vperm.xlu0 %4686, %v4619
      %v4688 = vpop.permute.xlu0 %4687
      %4691 = vset.pattern.permute.xlu0 0
      %4692 = vperm.xlu0 %4691, %v4620
      %v4693 = vpop.permute.xlu0 %4692
      %4696 = vset.pattern.permute.xlu0 0
      %4697 = vperm.xlu0 %4696, %v4621
      %v4698 = vpop.permute.xlu0 %4697
      %4701 = vset.pattern.permute.xlu0 0
      %4702 = vperm.xlu0 %4701, %v4622
      %v4703 = vpop.permute.xlu0 %4702
      %4706 = vset.pattern.permute.xlu0 0
      %4707 = vperm.xlu0 %4706, %v4623
      %v4708 = vpop.permute.xlu0 %4707
      %4711 = vset.pattern.permute.xlu0 0
      %4712 = vperm.xlu0 %4711, %v4624
      %v4713 = vpop.permute.xlu0 %4712
      %4716 = vset.pattern.permute.xlu0 0
      %4717 = vperm.xlu0 %4716, %v4625
      %v4718 = vpop.permute.xlu0 %4717
      %4721 = vset.pattern.permute.xlu0 0
      %4722 = vperm.xlu0 %4721, %v4626
      %v4723 = vpop.permute.xlu0 %4722
      %4726 = vset.pattern.permute.xlu0 0
      %4727 = vperm.xlu0 %4726, %v4627
      %v4728 = vpop.permute.xlu0 %4727
      %4731 = vset.pattern.permute.xlu0 0
      %4732 = vperm.xlu0 %4731, %v4628
      %v4733 = vpop.permute.xlu0 %4732
      %4736 = vset.pattern.permute.xlu0 0
      %4737 = vperm.xlu0 %4736, %v4629
      %v4738 = vpop.permute.xlu0 %4737
      %4741 = vset.pattern.permute.xlu0 0
      %4742 = vperm.xlu0 %4741, %v4630
      %v4743 = vpop.permute.xlu0 %4742
      %4746 = vset.pattern.permute.xlu0 0
      %4747 = vperm.xlu0 %4746, %v4631
      %v4748 = vpop.permute.xlu0 %4747
      %4751 = vset.pattern.permute.xlu0 0
      %4752 = vperm.xlu0 %4751, %v4632
      %v4753 = vpop.permute.xlu0 %4752
      %4756 = vset.pattern.permute.xlu0 0
      %4757 = vperm.xlu0 %4756, %v4633
      %v4758 = vpop.permute.xlu0 %4757
      %4761 = vset.pattern.permute.xlu0 0
      %4762 = vperm.xlu0 %4761, %v4634
      %v4763 = vpop.permute.xlu0 %4762
      %4766 = vset.pattern.permute.xlu0 0
      %4767 = vperm.xlu0 %4766, %v4635
      %v4768 = vpop.permute.xlu0 %4767
      %4771 = vset.pattern.permute.xlu0 0
      %4772 = vperm.xlu0 %4771, %v4636
      %v4773 = vpop.permute.xlu0 %4772
      %4776 = vset.pattern.permute.xlu0 0
      %4777 = vperm.xlu0 %4776, %v4637
      %v4778 = vpop.permute.xlu0 %4777
      %4781 = vset.pattern.permute.xlu0 0
      %4782 = vperm.xlu0 %4781, %v4638
      %v4783 = vpop.permute.xlu0 %4782
      %4786 = vset.pattern.permute.xlu0 0
      %4787 = vperm.xlu0 %4786, %v4639
      %v4788 = vpop.permute.xlu0 %4787
      %4791 = vset.pattern.permute.xlu0 0
      %4792 = vperm.xlu0 %4791, %v4640
      %v4793 = vpop.permute.xlu0 %4792
      %4796 = vset.pattern.permute.xlu0 0
      %4797 = vperm.xlu0 %4796, %v4641
      %v4798 = vpop.permute.xlu0 %4797
      %4801 = vset.pattern.permute.xlu0 0
      %4802 = vperm.xlu0 %4801, %v4642
      %v4803 = vpop.permute.xlu0 %4802
      %4806 = vset.pattern.permute.xlu0 0
      %4807 = vperm.xlu0 %4806, %v4643
      %v4808 = vpop.permute.xlu0 %4807
      %4811 = vset.pattern.permute.xlu0 0
      %4812 = vperm.xlu0 %4811, %v4644
      %v4813 = vpop.permute.xlu0 %4812
      %4816 = vset.pattern.permute.xlu0 0
      %4817 = vperm.xlu0 %4816, %v4645
      %v4818 = vpop.permute.xlu0 %4817
      %4821 = vset.pattern.permute.xlu0 0
      %4822 = vperm.xlu0 %4821, %v4646
      %v4823 = vpop.permute.xlu0 %4822
      %4826 = vset.pattern.permute.xlu0 0
      %4827 = vperm.xlu0 %4826, %v4647
      %v4828 = vpop.permute.xlu0 %4827
      %4831 = vset.pattern.permute.xlu0 0
      %4832 = vperm.xlu0 %4831, %v4648
      %v4833 = vpop.permute.xlu0 %4832
      %4836 = vset.pattern.permute.xlu0 0
      %4837 = vperm.xlu0 %4836, %v4649
      %v4838 = vpop.permute.xlu0 %4837
      %4841 = vset.pattern.permute.xlu0 0
      %4842 = vperm.xlu0 %4841, %v4650
      %v4843 = vpop.permute.xlu0 %4842
      %4846 = vset.pattern.permute.xlu0 0
      %4847 = vperm.xlu0 %4846, %v4651
      %v4848 = vpop.permute.xlu0 %4847
      %4851 = vset.pattern.permute.xlu0 0
      %4852 = vperm.xlu0 %4851, %v4652
      %v4853 = vpop.permute.xlu0 %4852
      %4856 = vset.pattern.permute.xlu0 0
      %4857 = vperm.xlu0 %4856, %v4653
      %v4858 = vpop.permute.xlu0 %4857
      %4861 = vset.pattern.permute.xlu0 0
      %4862 = vperm.xlu0 %4861, %v4654
      %v4863 = vpop.permute.xlu0 %4862
      %v4865 = vmul.f32 %v4571, %v4658
      %v4866 = vmul.f32 %v4572, %v4663
      %v4867 = vmul.f32 %v4573, %v4668
      %v4868 = vmul.f32 %v4574, %v4673
      %v4869 = vmul.f32 %v4575, %v4678
      %v4870 = vmul.f32 %v4576, %v4683
      %v4871 = vmul.f32 %v4577, %v4688
      %v4872 = vmul.f32 %v4578, %v4693
      %v4873 = vmul.f32 %v4579, %v4698
      %v4874 = vmul.f32 %v4580, %v4703
      %v4875 = vmul.f32 %v4581, %v4708
      %v4876 = vmul.f32 %v4582, %v4713
      %v4877 = vmul.f32 %v4583, %v4718
      %v4878 = vmul.f32 %v4584, %v4723
      %v4879 = vmul.f32 %v4585, %v4728
      %v4880 = vmul.f32 %v4586, %v4733
      %v4881 = vmul.f32 %v4587, %v4738
      %v4882 = vmul.f32 %v4588, %v4743
      %v4883 = vmul.f32 %v4589, %v4748
      %v4884 = vmul.f32 %v4590, %v4753
      %v4885 = vmul.f32 %v4591, %v4758
      %v4886 = vmul.f32 %v4592, %v4763
      %v4887 = vmul.f32 %v4593, %v4768
      %v4888 = vmul.f32 %v4594, %v4773
      %v4889 = vmul.f32 %v4595, %v4778
      %v4890 = vmul.f32 %v4596, %v4783
      %v4891 = vmul.f32 %v4597, %v4788
      %v4892 = vmul.f32 %v4598, %v4793
      %v4893 = vmul.f32 %v4599, %v4798
      %v4894 = vmul.f32 %v4600, %v4803
      %v4895 = vmul.f32 %v4601, %v4808
      %v4896 = vmul.f32 %v4602, %v4813
      %v4897 = vmul.f32 %v4603, %v4818
      %v4898 = vmul.f32 %v4604, %v4823
      %v4899 = vmul.f32 %v4605, %v4828
      %v4900 = vmul.f32 %v4606, %v4833
      %v4901 = vmul.f32 %v4607, %v4838
      %v4902 = vmul.f32 %v4608, %v4843
      %v4903 = vmul.f32 %v4609, %v4848
      %v4904 = vmul.f32 %v4610, %v4853
      %v4905 = vmul.f32 %v4611, %v4858
      %v4906 = vmul.f32 %v4612, %v4863
      %v4907 = vpack.c.bf16 %v4866, %v4865
      %v4908 = vpack.c.bf16 %v4868, %v4867
      %v4909 = vpack.c.bf16 %v4870, %v4869
      %v4910 = vpack.c.bf16 %v4872, %v4871
      %v4911 = vpack.c.bf16 %v4874, %v4873
      %v4912 = vpack.c.bf16 %v4876, %v4875
      %v4913 = vpack.c.bf16 %v4878, %v4877
      %v4914 = vpack.c.bf16 %v4880, %v4879
      %v4915 = vpack.c.bf16 %v4882, %v4881
      %v4916 = vpack.c.bf16 %v4884, %v4883
      %v4917 = vpack.c.bf16 %v4886, %v4885
      %v4918 = vpack.c.bf16 %v4888, %v4887
      %v4919 = vpack.c.bf16 %v4890, %v4889
      %v4920 = vpack.c.bf16 %v4892, %v4891
      %v4921 = vpack.c.bf16 %v4894, %v4893
      %v4922 = vpack.c.bf16 %v4896, %v4895
      %v4923 = vpack.c.bf16 %v4898, %v4897
      %v4924 = vpack.c.bf16 %v4900, %v4899
      %v4925 = vpack.c.bf16 %v4902, %v4901
      %v4926 = vpack.c.bf16 %v4904, %v4903
      %v4927 = vpack.c.bf16 %v4906, %v4905
      %v4928 = vld [vmem:[%s8] sm:$0xf]
      %v4929 = vld [vmem:[%s8 + $0x4] sm:$0xf]
      %v4930 = vld [vmem:[%s8 + $0x8] sm:$0xf]
      %v4931 = vld [vmem:[%s8 + $0xc] sm:$0xf]
      %s4932 = scalar_lea.vmem %s8, 16
      %v4933 = vld [vmem:[%s4932] sm:$0xf]
      %v4934 = vld [vmem:[%s4932 + $0x4] sm:$0xf]
      %v4935 = vld [vmem:[%s4932 + $0x8] sm:$0xf]
      %v4936 = vld [vmem:[%s4932 + $0xc] sm:$0xf]
      %v4938 = vshrl.u32 %v4907, 16
      %v4940 = vrot.slane %v4938, 2
      %v4941 = vshll.u32 %v4907, 16
      %v4943 = vrot.slane %v4941, 3
      %v4944 = vor.u32 %v4940, %v4943
      %v4946 = vshrl.u32 %v4908, 16
      %v4948 = vrot.slane %v4946, 2
      %v4949 = vshll.u32 %v4908, 16
      %v4951 = vrot.slane %v4949, 3
      %v4952 = vor.u32 %v4948, %v4951
      %v4953 = vsel %vm2824, %v4944, %v4952
      %v4955 = vshrl.u32 %v4909, 16
      %v4957 = vrot.slane %v4955, 2
      %v4958 = vshll.u32 %v4909, 16
      %v4960 = vrot.slane %v4958, 3
      %v4961 = vor.u32 %v4957, %v4960
      %v4962 = vsel %vm2824, %v4952, %v4961
      %v4964 = vshrl.u32 %v4910, 16
      %v4966 = vrot.slane %v4964, 2
      %v4967 = vshll.u32 %v4910, 16
      %v4969 = vrot.slane %v4967, 3
      %v4970 = vor.u32 %v4966, %v4969
      %v4971 = vsel %vm2824, %v4961, %v4970
      %v4973 = vshrl.u32 %v4911, 16
      %v4975 = vrot.slane %v4973, 2
      %v4976 = vshll.u32 %v4911, 16
      %v4978 = vrot.slane %v4976, 3
      %v4979 = vor.u32 %v4975, %v4978
      %v4980 = vsel %vm2824, %v4970, %v4979
      %v4982 = vshrl.u32 %v4912, 16
      %v4984 = vrot.slane %v4982, 2
      %v4985 = vshll.u32 %v4912, 16
      %v4987 = vrot.slane %v4985, 3
      %v4988 = vor.u32 %v4984, %v4987
      %v4989 = vsel %vm2824, %v4979, %v4988
      %v4991 = vshrl.u32 %v4913, 16
      %v4993 = vrot.slane %v4991, 2
      %v4994 = vshll.u32 %v4913, 16
      %v4996 = vrot.slane %v4994, 3
      %v4997 = vor.u32 %v4993, %v4996
      %v4998 = vsel %vm2824, %v4988, %v4997
      %v5000 = vshrl.u32 %v4914, 16
      %v5002 = vrot.slane %v5000, 2
      %v5003 = vshll.u32 %v4914, 16
      %v5005 = vrot.slane %v5003, 3
      %v5006 = vor.u32 %v5002, %v5005
      %v5007 = vsel %vm2824, %v4997, %v5006
      %v5009 = vshrl.u32 %v4915, 16
      %v5011 = vrot.slane %v5009, 2
      %v5012 = vshll.u32 %v4915, 16
      %v5014 = vrot.slane %v5012, 3
      %v5015 = vor.u32 %v5011, %v5014
      %v5016 = vsel %vm2824, %v5006, %v5015
      %v5018 = vshrl.u32 %v4916, 16
      %v5020 = vrot.slane %v5018, 2
      %v5021 = vshll.u32 %v4916, 16
      %v5023 = vrot.slane %v5021, 3
      %v5024 = vor.u32 %v5020, %v5023
      %v5025 = vsel %vm2824, %v5015, %v5024
      %v5027 = vshrl.u32 %v4917, 16
      %v5029 = vrot.slane %v5027, 2
      %v5030 = vshll.u32 %v4917, 16
      %v5032 = vrot.slane %v5030, 3
      %v5033 = vor.u32 %v5029, %v5032
      %v5034 = vsel %vm2824, %v5024, %v5033
      %v5036 = vshrl.u32 %v4918, 16
      %v5038 = vrot.slane %v5036, 2
      %v5039 = vshll.u32 %v4918, 16
      %v5041 = vrot.slane %v5039, 3
      %v5042 = vor.u32 %v5038, %v5041
      %v5043 = vsel %vm2824, %v5033, %v5042
      %v5045 = vshrl.u32 %v4919, 16
      %v5047 = vrot.slane %v5045, 2
      %v5048 = vshll.u32 %v4919, 16
      %v5050 = vrot.slane %v5048, 3
      %v5051 = vor.u32 %v5047, %v5050
      %v5052 = vsel %vm2824, %v5042, %v5051
      %v5054 = vshrl.u32 %v4920, 16
      %v5056 = vrot.slane %v5054, 2
      %v5057 = vshll.u32 %v4920, 16
      %v5059 = vrot.slane %v5057, 3
      %v5060 = vor.u32 %v5056, %v5059
      %v5061 = vsel %vm2824, %v5051, %v5060
      %v5063 = vshrl.u32 %v4921, 16
      %v5065 = vrot.slane %v5063, 2
      %v5066 = vshll.u32 %v4921, 16
      %v5068 = vrot.slane %v5066, 3
      %v5069 = vor.u32 %v5065, %v5068
      %v5070 = vsel %vm2824, %v5060, %v5069
      %v5072 = vshrl.u32 %v4922, 16
      %v5074 = vrot.slane %v5072, 2
      %v5075 = vshll.u32 %v4922, 16
      %v5077 = vrot.slane %v5075, 3
      %v5078 = vor.u32 %v5074, %v5077
      %v5079 = vsel %vm2824, %v5069, %v5078
      %v5081 = vshrl.u32 %v4923, 16
      %v5083 = vrot.slane %v5081, 2
      %v5084 = vshll.u32 %v4923, 16
      %v5086 = vrot.slane %v5084, 3
      %v5087 = vor.u32 %v5083, %v5086
      %v5088 = vsel %vm2824, %v5078, %v5087
      %v5090 = vshrl.u32 %v4924, 16
      %v5092 = vrot.slane %v5090, 2
      %v5093 = vshll.u32 %v4924, 16
      %v5095 = vrot.slane %v5093, 3
      %v5096 = vor.u32 %v5092, %v5095
      %v5097 = vsel %vm2824, %v5087, %v5096
      %v5099 = vshrl.u32 %v4925, 16
      %v5101 = vrot.slane %v5099, 2
      %v5102 = vshll.u32 %v4925, 16
      %v5104 = vrot.slane %v5102, 3
      %v5105 = vor.u32 %v5101, %v5104
      %v5106 = vsel %vm2824, %v5096, %v5105
      %v5111 = vunpack.c.l.b16 %v4933
      %v5112 = vunpack.c.l.b16 %v4934
      %v5113 = vunpack.c.l.b16 %v4935
      %v5114 = vunpack.c.l.b16 %v4936
      %v5115 = vpack.c.b16 %v5112, %v5111
      %v5116 = vpack.c.b16 %v5114, %v5113
      %vm5119 = vcmask 261120
      %v5121 = vsel %vm5119, %v4953, 0
      %v5124 = vsel %vm5119, %v4962, 0
      %v5127 = vsel %vm5119, %v4971, 0
      %v5130 = vsel %vm5119, %v4980, 0
      %v5133 = vsel %vm5119, %v4989, 0
      %v5136 = vsel %vm5119, %v4998, 0
      %v5139 = vsel %vm5119, %v5007, 0
      %v5142 = vsel %vm5119, %v5016, 0
      %v5145 = vsel %vm5119, %v5025, 0
      %v5148 = vsel %vm5119, %v5034, 0
      %v5151 = vsel %vm5119, %v5043, 0
      %v5154 = vsel %vm5119, %v5052, 0
      %v5157 = vsel %vm5119, %v5061, 0
      %v5160 = vsel %vm5119, %v5070, 0
      %v5163 = vsel %vm5119, %v5079, 0
      %v5166 = vsel %vm5119, %v5088, 0
      %v5169 = vsel %vm5119, %v5097, 0
      %v5172 = vsel %vm5119, %v5106, 0
      %5174 = vmatprep.subr.bf16.mxu0 0
      %5175 = vmatpush1.bf16.msra.mxu0 %v5115
      %5176 = vmatprep.subr.bf16.mxu0 0
      %5177 = vmatpush1.bf16.msra.mxu0 %v5116
      %5178 = vmatprep.subr.bf16.mxu0 0
      %5179 = vmatpush1.bf16.msra.mxu0 0
      %5180 = vmatprep.subr.bf16.mxu0 0
      %5181 = vmatpush1.bf16.msra.mxu0 0
      %5182 = vmatprep.subr.bf16.mxu0 0
      %5183 = vmatpush1.bf16.msra.mxu0 0
      %5184 = vmatprep.subr.bf16.mxu0 0
      %5185 = vmatpush1.bf16.msra.mxu0 0
      %5186 = vmatprep.subr.bf16.mxu0 0
      %5187 = vmatpush1.bf16.msra.mxu0 0
      %5188 = vmatprep.subr.bf16.mxu0 0
      %5189 = vmatpush1.bf16.msra.mxu0 0
      %5190 = vmatprep.subr.bf16.mxu0 0
      %5191 = vmatpush1.bf16.msra.mxu0 0
      %5192 = vmatprep.subr.bf16.mxu0 0
      %5193 = vmatpush1.bf16.msra.mxu0 0
      %5194 = vmatprep.subr.bf16.mxu0 0
      %5195 = vmatpush1.bf16.msra.mxu0 0
      %5196 = vmatprep.subr.bf16.mxu0 0
      %5197 = vmatpush1.bf16.msra.mxu0 0
      %5198 = vmatprep.subr.bf16.mxu0 0
      %5199 = vmatpush1.bf16.msra.mxu0 0
      %5200 = vmatprep.subr.bf16.mxu0 0
      %5201 = vmatpush1.bf16.msra.mxu0 0
      %5202 = vmatprep.subr.bf16.mxu0 0
      %5203 = vmatpush1.bf16.msra.mxu0 0
      %5204 = vmatprep.subr.bf16.mxu0 0
      %5205 = vmatpush1.bf16.msra.mxu0 0
      %5206 = vmatprep.mubr.bf16.mxu0 0
      %5207 = vmatmul.mubr.bf16.gmra.mrb[0].mxu0 %v5121
      %v5208 = vpop.f32.mrb[0].mxu0
      %v5209 = vadd.f32 0.0, %v5208
      %v5210 = vpop.f32.mrb[0].mxu0
      %v5211 = vpop.f32.mrb[0].mxu0
      %v5212 = vadd.f32 0.0, %v5211
      %v5213 = vpop.f32.mrb[0].mxu0
      %5214 = vmatprep.mubr.bf16.mxu0 0
      %5215 = vmatmul.mubr.bf16.gmra.mrb[0].mxu0 %v5124
      %v5216 = vpop.f32.mrb[0].mxu0
      %v5217 = vadd.f32 0.0, %v5216
      %v5218 = vpop.f32.mrb[0].mxu0
      %v5219 = vpop.f32.mrb[0].mxu0
      %v5220 = vadd.f32 0.0, %v5219
      %v5221 = vpop.f32.mrb[0].mxu0
      %5222 = vmatprep.mubr.bf16.mxu0 0
      %5223 = vmatmul.mubr.bf16.gmra.mrb[0].mxu0 %v5127
      %v5224 = vpop.f32.mrb[0].mxu0
      %v5225 = vadd.f32 0.0, %v5224
      %v5226 = vpop.f32.mrb[0].mxu0
      %v5227 = vpop.f32.mrb[0].mxu0
      %v5228 = vadd.f32 0.0, %v5227
      %v5229 = vpop.f32.mrb[0].mxu0
      %5230 = vmatprep.mubr.bf16.mxu0 0
      %5231 = vmatmul.mubr.bf16.gmra.mrb[0].mxu0 %v5130
      %v5232 = vpop.f32.mrb[0].mxu0
      %v5233 = vadd.f32 0.0, %v5232
      %v5234 = vpop.f32.mrb[0].mxu0
      %v5235 = vpop.f32.mrb[0].mxu0
      %v5236 = vadd.f32 0.0, %v5235
      %v5237 = vpop.f32.mrb[0].mxu0
      %5238 = vmatprep.mubr.bf16.mxu0 0
      %5239 = vmatmul.mubr.bf16.gmra.mrb[0].mxu0 %v5133
      %v5240 = vpop.f32.mrb[0].mxu0
      %v5241 = vadd.f32 0.0, %v5240
      %v5242 = vpop.f32.mrb[0].mxu0
      %v5243 = vpop.f32.mrb[0].mxu0
      %v5244 = vadd.f32 0.0, %v5243
      %v5245 = vpop.f32.mrb[0].mxu0
      %5246 = vmatprep.mubr.bf16.mxu0 0
      %5247 = vmatmul.mubr.bf16.gmra.mrb[0].mxu0 %v5136
      %v5248 = vpop.f32.mrb[0].mxu0
      %v5249 = vadd.f32 0.0, %v5248
      %v5250 = vpop.f32.mrb[0].mxu0
      %v5251 = vpop.f32.mrb[0].mxu0
      %v5252 = vadd.f32 0.0, %v5251
      %v5253 = vpop.f32.mrb[0].mxu0
      %5254 = vmatprep.mubr.bf16.mxu0 0
      %5255 = vmatmul.mubr.bf16.gmra.mrb[0].mxu0 %v5139
      %v5256 = vpop.f32.mrb[0].mxu0
      %v5257 = vadd.f32 0.0, %v5256
      %v5258 = vpop.f32.mrb[0].mxu0
      %v5259 = vpop.f32.mrb[0].mxu0
      %v5260 = vadd.f32 0.0, %v5259
      %v5261 = vpop.f32.mrb[0].mxu0
      %5262 = vmatprep.mubr.bf16.mxu0 0
      %5263 = vmatmul.mubr.bf16.gmra.mrb[0].mxu0 %v5142
      %v5264 = vpop.f32.mrb[0].mxu0
      %v5265 = vadd.f32 0.0, %v5264
      %v5266 = vpop.f32.mrb[0].mxu0
      %v5267 = vpop.f32.mrb[0].mxu0
      %v5268 = vadd.f32 0.0, %v5267
      %v5269 = vpop.f32.mrb[0].mxu0
      %5270 = vmatprep.mubr.bf16.mxu0 0
      %5271 = vmatmul.mubr.bf16.gmra.mrb[0].mxu0 %v5145
      %v5272 = vpop.f32.mrb[0].mxu0
      %v5273 = vadd.f32 0.0, %v5272
      %v5274 = vpop.f32.mrb[0].mxu0
      %v5275 = vpop.f32.mrb[0].mxu0
      %v5276 = vadd.f32 0.0, %v5275
      %v5277 = vpop.f32.mrb[0].mxu0
      %5278 = vmatprep.mubr.bf16.mxu0 0
      %5279 = vmatmul.mubr.bf16.gmra.mrb[0].mxu0 %v5148
      %v5280 = vpop.f32.mrb[0].mxu0
      %v5281 = vadd.f32 0.0, %v5280
      %v5282 = vpop.f32.mrb[0].mxu0
      %v5283 = vpop.f32.mrb[0].mxu0
      %v5284 = vadd.f32 0.0, %v5283
      %v5285 = vpop.f32.mrb[0].mxu0
      %5286 = vmatprep.mubr.bf16.mxu0 0
      %5287 = vmatmul.mubr.bf16.gmra.mrb[0].mxu0 %v5151
      %v5288 = vpop.f32.mrb[0].mxu0
      %v5289 = vadd.f32 0.0, %v5288
      %v5290 = vpop.f32.mrb[0].mxu0
      %v5291 = vpop.f32.mrb[0].mxu0
      %v5292 = vadd.f32 0.0, %v5291
      %v5293 = vpop.f32.mrb[0].mxu0
      %5294 = vmatprep.mubr.bf16.mxu0 0
      %5295 = vmatmul.mubr.bf16.gmra.mrb[0].mxu0 %v5154
      %v5296 = vpop.f32.mrb[0].mxu0
      %v5297 = vadd.f32 0.0, %v5296
      %v5298 = vpop.f32.mrb[0].mxu0
      %v5299 = vpop.f32.mrb[0].mxu0
      %v5300 = vadd.f32 0.0, %v5299
      %v5301 = vpop.f32.mrb[0].mxu0
      %5302 = vmatprep.mubr.bf16.mxu0 0
      %5303 = vmatmul.mubr.bf16.gmra.mrb[0].mxu0 %v5157
      %v5304 = vpop.f32.mrb[0].mxu0
      %v5305 = vadd.f32 0.0, %v5304
      %v5306 = vpop.f32.mrb[0].mxu0
      %v5307 = vpop.f32.mrb[0].mxu0
      %v5308 = vadd.f32 0.0, %v5307
      %v5309 = vpop.f32.mrb[0].mxu0
      %5310 = vmatprep.mubr.bf16.mxu0 0
      %5311 = vmatmul.mubr.bf16.gmra.mrb[0].mxu0 %v5160
      %v5312 = vpop.f32.mrb[0].mxu0
      %v5313 = vadd.f32 0.0, %v5312
      %v5314 = vpop.f32.mrb[0].mxu0
      %v5315 = vpop.f32.mrb[0].mxu0
      %v5316 = vadd.f32 0.0, %v5315
      %v5317 = vpop.f32.mrb[0].mxu0
      %5318 = vmatprep.mubr.bf16.mxu0 0
      %5319 = vmatmul.mubr.bf16.gmra.mrb[0].mxu0 %v5163
      %v5320 = vpop.f32.mrb[0].mxu0
      %v5321 = vadd.f32 0.0, %v5320
      %v5322 = vpop.f32.mrb[0].mxu0
      %v5323 = vpop.f32.mrb[0].mxu0
      %v5324 = vadd.f32 0.0, %v5323
      %v5325 = vpop.f32.mrb[0].mxu0
      %5326 = vmatprep.mubr.bf16.mxu0 0
      %5327 = vmatmul.mubr.bf16.gmra.mrb[0].mxu0 %v5166
      %v5328 = vpop.f32.mrb[0].mxu0
      %v5329 = vadd.f32 0.0, %v5328
      %v5330 = vpop.f32.mrb[0].mxu0
      %v5331 = vpop.f32.mrb[0].mxu0
      %v5332 = vadd.f32 0.0, %v5331
      %v5333 = vpop.f32.mrb[0].mxu0
      %5334 = vmatprep.mubr.bf16.mxu0 0
      %5335 = vmatmul.mubr.bf16.gmra.mrb[0].mxu0 %v5169
      %v5336 = vpop.f32.mrb[0].mxu0
      %v5337 = vadd.f32 0.0, %v5336
      %v5338 = vpop.f32.mrb[0].mxu0
      %v5339 = vpop.f32.mrb[0].mxu0
      %v5340 = vadd.f32 0.0, %v5339
      %v5341 = vpop.f32.mrb[0].mxu0
      %5342 = vmatprep.mubr.bf16.mxu0 0
      %5343 = vmatmul.mubr.bf16.gmra.mrb[0].mxu0 %v5172
      %v5344 = vpop.f32.mrb[0].mxu0
      %v5345 = vadd.f32 0.0, %v5344
      %v5346 = vpop.f32.mrb[0].mxu0
      %v5347 = vpop.f32.mrb[0].mxu0
      %v5348 = vadd.f32 0.0, %v5347
      %v5349 = vpop.f32.mrb[0].mxu0
      %5350 = vdwg.mxu0
      %v5370 = vrot.slane %v4907, 2
      %v5371 = vrot.slane %v4908, 2
      %v5372 = vsel %vm2423, %v5370, %v5371
      %v5373 = vrot.slane %v4909, 2
      %v5374 = vsel %vm2423, %v5371, %v5373
      %v5375 = vrot.slane %v4910, 2
      %v5376 = vsel %vm2423, %v5373, %v5375
      %v5377 = vrot.slane %v4911, 2
      %v5378 = vsel %vm2423, %v5375, %v5377
      %v5379 = vrot.slane %v4912, 2
      %v5380 = vsel %vm2423, %v5377, %v5379
      %v5381 = vrot.slane %v4913, 2
      %v5382 = vsel %vm2423, %v5379, %v5381
      %v5383 = vrot.slane %v4914, 2
      %v5384 = vsel %vm2423, %v5381, %v5383
      %v5385 = vrot.slane %v4915, 2
      %v5386 = vsel %vm2423, %v5383, %v5385
      %v5387 = vrot.slane %v4916, 2
      %v5388 = vsel %vm2423, %v5385, %v5387
      %v5389 = vrot.slane %v4917, 2
      %v5390 = vsel %vm2423, %v5387, %v5389
      %v5391 = vrot.slane %v4918, 2
      %v5392 = vsel %vm2423, %v5389, %v5391
      %v5393 = vrot.slane %v4919, 2
      %v5394 = vsel %vm2423, %v5391, %v5393
      %v5395 = vrot.slane %v4920, 2
      %v5396 = vsel %vm2423, %v5393, %v5395
      %v5397 = vrot.slane %v4921, 2
      %v5398 = vsel %vm2423, %v5395, %v5397
      %v5399 = vrot.slane %v4922, 2
      %v5400 = vsel %vm2423, %v5397, %v5399
      %v5401 = vrot.slane %v4923, 2
      %v5402 = vsel %vm2423, %v5399, %v5401
      %v5403 = vrot.slane %v4924, 2
      %v5404 = vsel %vm2423, %v5401, %v5403
      %v5405 = vrot.slane %v4925, 2
      %v5406 = vsel %vm2423, %v5403, %v5405
      %v5411 = vunpack.c.l.b16 %v4928
      %v5412 = vunpack.c.l.b16 %v4929
      %v5413 = vunpack.c.l.b16 %v4930
      %v5414 = vunpack.c.l.b16 %v4931
      %v5415 = vpack.c.b16 %v5412, %v5411
      %v5416 = vpack.c.b16 %v5414, %v5413
      %v5420 = vsel %vm5119, %v5372, 0
      %v5423 = vsel %vm5119, %v5374, 0
      %v5426 = vsel %vm5119, %v5376, 0
      %v5429 = vsel %vm5119, %v5378, 0
      %v5432 = vsel %vm5119, %v5380, 0
      %v5435 = vsel %vm5119, %v5382, 0
      %v5438 = vsel %vm5119, %v5384, 0
      %v5441 = vsel %vm5119, %v5386, 0
      %v5444 = vsel %vm5119, %v5388, 0
      %v5447 = vsel %vm5119, %v5390, 0
      %v5450 = vsel %vm5119, %v5392, 0
      %v5453 = vsel %vm5119, %v5394, 0
      %v5456 = vsel %vm5119, %v5396, 0
      %v5459 = vsel %vm5119, %v5398, 0
      %v5462 = vsel %vm5119, %v5400, 0
      %v5465 = vsel %vm5119, %v5402, 0
      %v5468 = vsel %vm5119, %v5404, 0
      %v5471 = vsel %vm5119, %v5406, 0
      %5473 = vmatprep.subr.bf16.mxu0 0
      %5474 = vmatpush1.bf16.msra.mxu0 %v5415
      %5475 = vmatprep.subr.bf16.mxu0 0
      %5476 = vmatpush1.bf16.msra.mxu0 %v5416
      %5477 = vmatprep.subr.bf16.mxu0 0
      %5478 = vmatpush1.bf16.msra.mxu0 0
      %5479 = vmatprep.subr.bf16.mxu0 0
      %5480 = vmatpush1.bf16.msra.mxu0 0
      %5481 = vmatprep.subr.bf16.mxu0 0
      %5482 = vmatpush1.bf16.msra.mxu0 0
      %5483 = vmatprep.subr.bf16.mxu0 0
      %5484 = vmatpush1.bf16.msra.mxu0 0
      %5485 = vmatprep.subr.bf16.mxu0 0
      %5486 = vmatpush1.bf16.msra.mxu0 0
      %5487 = vmatprep.subr.bf16.mxu0 0
      %5488 = vmatpush1.bf16.msra.mxu0 0
      %5489 = vmatprep.subr.bf16.mxu0 0
      %5490 = vmatpush1.bf16.msra.mxu0 0
      %5491 = vmatprep.subr.bf16.mxu0 0
      %5492 = vmatpush1.bf16.msra.mxu0 0
      %5493 = vmatprep.subr.bf16.mxu0 0
      %5494 = vmatpush1.bf16.msra.mxu0 0
      %5495 = vmatprep.subr.bf16.mxu0 0
      %5496 = vmatpush1.bf16.msra.mxu0 0
      %5497 = vmatprep.subr.bf16.mxu0 0
      %5498 = vmatpush1.bf16.msra.mxu0 0
      %5499 = vmatprep.subr.bf16.mxu0 0
      %5500 = vmatpush1.bf16.msra.mxu0 0
      %5501 = vmatprep.subr.bf16.mxu0 0
      %5502 = vmatpush1.bf16.msra.mxu0 0
      %5503 = vmatprep.subr.bf16.mxu0 0
      %5504 = vmatpush1.bf16.msra.mxu0 0
      %5505 = vmatprep.mubr.bf16.mxu0 0
      %5506 = vmatmul.mubr.bf16.gmra.mrb[0].mxu0 %v5420
      %v5507 = vpop.f32.mrb[0].mxu0
      %v5508 = vadd.f32 %v5209, %v5507
      %v5509 = vpop.f32.mrb[0].mxu0
      %v5510 = vpop.f32.mrb[0].mxu0
      %v5511 = vadd.f32 %v5212, %v5510
      %v5512 = vpop.f32.mrb[0].mxu0
      %5513 = vmatprep.mubr.bf16.mxu0 0
      %5514 = vmatmul.mubr.bf16.gmra.mrb[0].mxu0 %v5423
      %v5515 = vpop.f32.mrb[0].mxu0
      %v5516 = vadd.f32 %v5217, %v5515
      %v5517 = vpop.f32.mrb[0].mxu0
      %v5518 = vpop.f32.mrb[0].mxu0
      %v5519 = vadd.f32 %v5220, %v5518
      %v5520 = vpop.f32.mrb[0].mxu0
      %5521 = vmatprep.mubr.bf16.mxu0 0
      %5522 = vmatmul.mubr.bf16.gmra.mrb[0].mxu0 %v5426
      %v5523 = vpop.f32.mrb[0].mxu0
      %v5524 = vadd.f32 %v5225, %v5523
      %v5525 = vpop.f32.mrb[0].mxu0
      %v5526 = vpop.f32.mrb[0].mxu0
      %v5527 = vadd.f32 %v5228, %v5526
      %v5528 = vpop.f32.mrb[0].mxu0
      %5529 = vmatprep.mubr.bf16.mxu0 0
      %5530 = vmatmul.mubr.bf16.gmra.mrb[0].mxu0 %v5429
      %v5531 = vpop.f32.mrb[0].mxu0
      %v5532 = vadd.f32 %v5233, %v5531
      %v5533 = vpop.f32.mrb[0].mxu0
      %v5534 = vpop.f32.mrb[0].mxu0
      %v5535 = vadd.f32 %v5236, %v5534
      %v5536 = vpop.f32.mrb[0].mxu0
      %5537 = vmatprep.mubr.bf16.mxu0 0
      %5538 = vmatmul.mubr.bf16.gmra.mrb[0].mxu0 %v5432
      %v5539 = vpop.f32.mrb[0].mxu0
      %v5540 = vadd.f32 %v5241, %v5539
      %v5541 = vpop.f32.mrb[0].mxu0
      %v5542 = vpop.f32.mrb[0].mxu0
      %v5543 = vadd.f32 %v5244, %v5542
      %v5544 = vpop.f32.mrb[0].mxu0
      %5545 = vmatprep.mubr.bf16.mxu0 0
      %5546 = vmatmul.mubr.bf16.gmra.mrb[0].mxu0 %v5435
      %v5547 = vpop.f32.mrb[0].mxu0
      %v5548 = vadd.f32 %v5249, %v5547
      %v5549 = vpop.f32.mrb[0].mxu0
      %v5550 = vpop.f32.mrb[0].mxu0
      %v5551 = vadd.f32 %v5252, %v5550
      %v5552 = vpop.f32.mrb[0].mxu0
      %5553 = vmatprep.mubr.bf16.mxu0 0
      %5554 = vmatmul.mubr.bf16.gmra.mrb[0].mxu0 %v5438
      %v5555 = vpop.f32.mrb[0].mxu0
      %v5556 = vadd.f32 %v5257, %v5555
      %v5557 = vpop.f32.mrb[0].mxu0
      %v5558 = vpop.f32.mrb[0].mxu0
      %v5559 = vadd.f32 %v5260, %v5558
      %v5560 = vpop.f32.mrb[0].mxu0
      %5561 = vmatprep.mubr.bf16.mxu0 0
      %5562 = vmatmul.mubr.bf16.gmra.mrb[0].mxu0 %v5441
      %v5563 = vpop.f32.mrb[0].mxu0
      %v5564 = vadd.f32 %v5265, %v5563
      %v5565 = vpop.f32.mrb[0].mxu0
      %v5566 = vpop.f32.mrb[0].mxu0
      %v5567 = vadd.f32 %v5268, %v5566
      %v5568 = vpop.f32.mrb[0].mxu0
      %5569 = vmatprep.mubr.bf16.mxu0 0
      %5570 = vmatmul.mubr.bf16.gmra.mrb[0].mxu0 %v5444
      %v5571 = vpop.f32.mrb[0].mxu0
      %v5572 = vadd.f32 %v5273, %v5571
      %v5573 = vpop.f32.mrb[0].mxu0
      %v5574 = vpop.f32.mrb[0].mxu0
      %v5575 = vadd.f32 %v5276, %v5574
      %v5576 = vpop.f32.mrb[0].mxu0
      %5577 = vmatprep.mubr.bf16.mxu0 0
      %5578 = vmatmul.mubr.bf16.gmra.mrb[0].mxu0 %v5447
      %v5579 = vpop.f32.mrb[0].mxu0
      %v5580 = vadd.f32 %v5281, %v5579
      %v5581 = vpop.f32.mrb[0].mxu0
      %v5582 = vpop.f32.mrb[0].mxu0
      %v5583 = vadd.f32 %v5284, %v5582
      %v5584 = vpop.f32.mrb[0].mxu0
      %5585 = vmatprep.mubr.bf16.mxu0 0
      %5586 = vmatmul.mubr.bf16.gmra.mrb[0].mxu0 %v5450
      %v5587 = vpop.f32.mrb[0].mxu0
      %v5588 = vadd.f32 %v5289, %v5587
      %v5589 = vpop.f32.mrb[0].mxu0
      %v5590 = vpop.f32.mrb[0].mxu0
      %v5591 = vadd.f32 %v5292, %v5590
      %v5592 = vpop.f32.mrb[0].mxu0
      %5593 = vmatprep.mubr.bf16.mxu0 0
      %5594 = vmatmul.mubr.bf16.gmra.mrb[0].mxu0 %v5453
      %v5595 = vpop.f32.mrb[0].mxu0
      %v5596 = vadd.f32 %v5297, %v5595
      %v5597 = vpop.f32.mrb[0].mxu0
      %v5598 = vpop.f32.mrb[0].mxu0
      %v5599 = vadd.f32 %v5300, %v5598
      %v5600 = vpop.f32.mrb[0].mxu0
      %5601 = vmatprep.mubr.bf16.mxu0 0
      %5602 = vmatmul.mubr.bf16.gmra.mrb[0].mxu0 %v5456
      %v5603 = vpop.f32.mrb[0].mxu0
      %v5604 = vadd.f32 %v5305, %v5603
      %v5605 = vpop.f32.mrb[0].mxu0
      %v5606 = vpop.f32.mrb[0].mxu0
      %v5607 = vadd.f32 %v5308, %v5606
      %v5608 = vpop.f32.mrb[0].mxu0
      %5609 = vmatprep.mubr.bf16.mxu0 0
      %5610 = vmatmul.mubr.bf16.gmra.mrb[0].mxu0 %v5459
      %v5611 = vpop.f32.mrb[0].mxu0
      %v5612 = vadd.f32 %v5313, %v5611
      %v5613 = vpop.f32.mrb[0].mxu0
      %v5614 = vpop.f32.mrb[0].mxu0
      %v5615 = vadd.f32 %v5316, %v5614
      %v5616 = vpop.f32.mrb[0].mxu0
      %5617 = vmatprep.mubr.bf16.mxu0 0
      %5618 = vmatmul.mubr.bf16.gmra.mrb[0].mxu0 %v5462
      %v5619 = vpop.f32.mrb[0].mxu0
      %v5620 = vadd.f32 %v5321, %v5619
      %v5621 = vpop.f32.mrb[0].mxu0
      %v5622 = vpop.f32.mrb[0].mxu0
      %v5623 = vadd.f32 %v5324, %v5622
      %v5624 = vpop.f32.mrb[0].mxu0
      %5625 = vmatprep.mubr.bf16.mxu0 0
      %5626 = vmatmul.mubr.bf16.gmra.mrb[0].mxu0 %v5465
      %v5627 = vpop.f32.mrb[0].mxu0
      %v5628 = vadd.f32 %v5329, %v5627
      %v5629 = vpop.f32.mrb[0].mxu0
      %v5630 = vpop.f32.mrb[0].mxu0
      %v5631 = vadd.f32 %v5332, %v5630
      %v5632 = vpop.f32.mrb[0].mxu0
      %5633 = vmatprep.mubr.bf16.mxu0 0
      %5634 = vmatmul.mubr.bf16.gmra.mrb[0].mxu0 %v5468
      %v5635 = vpop.f32.mrb[0].mxu0
      %v5636 = vadd.f32 %v5337, %v5635
      %v5637 = vpop.f32.mrb[0].mxu0
      %v5638 = vpop.f32.mrb[0].mxu0
      %v5639 = vadd.f32 %v5340, %v5638
      %v5640 = vpop.f32.mrb[0].mxu0
      %5641 = vmatprep.mubr.bf16.mxu0 0
      %5642 = vmatmul.mubr.bf16.gmra.mrb[0].mxu0 %v5471
      %v5643 = vpop.f32.mrb[0].mxu0
      %v5644 = vadd.f32 %v5345, %v5643
      %v5645 = vpop.f32.mrb[0].mxu0
      %v5646 = vpop.f32.mrb[0].mxu0
      %v5647 = vadd.f32 %v5348, %v5646
      %v5648 = vpop.f32.mrb[0].mxu0
      %5649 = vdwg.mxu0
      %s5650 = scalar_lea.vmem %s8, 32
      %v5651 = vld [vmem:[%s5650] sm:$0xf]
      %v5652 = vld [vmem:[%s5650 + $0x4] sm:$0xf]
      %v5653 = vld [vmem:[%s5650 + $0x8] sm:$0xf]
      %v5654 = vld [vmem:[%s5650 + $0xc] sm:$0xf]
      %v5655 = vrot.slane %v4907, 3
      %v5656 = vrot.slane %v4908, 3
      %v5657 = vsel %vm3574, %v5655, %v5656
      %v5658 = vrot.slane %v4909, 3
      %v5659 = vsel %vm3574, %v5656, %v5658
      %v5660 = vrot.slane %v4910, 3
      %v5661 = vsel %vm3574, %v5658, %v5660
      %v5662 = vrot.slane %v4911, 3
      %v5663 = vsel %vm3574, %v5660, %v5662
      %v5664 = vrot.slane %v4912, 3
      %v5665 = vsel %vm3574, %v5662, %v5664
      %v5666 = vrot.slane %v4913, 3
      %v5667 = vsel %vm3574, %v5664, %v5666
      %v5668 = vrot.slane %v4914, 3
      %v5669 = vsel %vm3574, %v5666, %v5668
      %v5670 = vrot.slane %v4915, 3
      %v5671 = vsel %vm3574, %v5668, %v5670
      %v5672 = vrot.slane %v4916, 3
      %v5673 = vsel %vm3574, %v5670, %v5672
      %v5674 = vrot.slane %v4917, 3
      %v5675 = vsel %vm3574, %v5672, %v5674
      %v5676 = vrot.slane %v4918, 3
      %v5677 = vsel %vm3574, %v5674, %v5676
      %v5678 = vrot.slane %v4919, 3
      %v5679 = vsel %vm3574, %v5676, %v5678
      %v5680 = vrot.slane %v4920, 3
      %v5681 = vsel %vm3574, %v5678, %v5680
      %v5682 = vrot.slane %v4921, 3
      %v5683 = vsel %vm3574, %v5680, %v5682
      %v5684 = vrot.slane %v4922, 3
      %v5685 = vsel %vm3574, %v5682, %v5684
      %v5686 = vrot.slane %v4923, 3
      %v5687 = vsel %vm3574, %v5684, %v5686
      %v5688 = vrot.slane %v4924, 3
      %v5689 = vsel %vm3574, %v5686, %v5688
      %v5690 = vrot.slane %v4925, 3
      %v5691 = vsel %vm3574, %v5688, %v5690
      %v5696 = vunpack.c.l.b16 %v5651
      %v5697 = vunpack.c.l.b16 %v5652
      %v5698 = vunpack.c.l.b16 %v5653
      %v5699 = vunpack.c.l.b16 %v5654
      %v5700 = vpack.c.b16 %v5697, %v5696
      %v5701 = vpack.c.b16 %v5699, %v5698
      %v5705 = vsel %vm5119, %v5657, 0
      %v5708 = vsel %vm5119, %v5659, 0
      %v5711 = vsel %vm5119, %v5661, 0
      %v5714 = vsel %vm5119, %v5663, 0
      %v5717 = vsel %vm5119, %v5665, 0
      %v5720 = vsel %vm5119, %v5667, 0
      %v5723 = vsel %vm5119, %v5669, 0
      %v5726 = vsel %vm5119, %v5671, 0
      %v5729 = vsel %vm5119, %v5673, 0
      %v5732 = vsel %vm5119, %v5675, 0
      %v5735 = vsel %vm5119, %v5677, 0
      %v5738 = vsel %vm5119, %v5679, 0
      %v5741 = vsel %vm5119, %v5681, 0
      %v5744 = vsel %vm5119, %v5683, 0
      %v5747 = vsel %vm5119, %v5685, 0
      %v5750 = vsel %vm5119, %v5687, 0
      %v5753 = vsel %vm5119, %v5689, 0
      %v5756 = vsel %vm5119, %v5691, 0
      %5758 = vmatprep.subr.bf16.mxu0 0
      %5759 = vmatpush1.bf16.msra.mxu0 %v5700
      %5760 = vmatprep.subr.bf16.mxu0 0
      %5761 = vmatpush1.bf16.msra.mxu0 %v5701
      %5762 = vmatprep.subr.bf16.mxu0 0
      %5763 = vmatpush1.bf16.msra.mxu0 0
      %5764 = vmatprep.subr.bf16.mxu0 0
      %5765 = vmatpush1.bf16.msra.mxu0 0
      %5766 = vmatprep.subr.bf16.mxu0 0
      %5767 = vmatpush1.bf16.msra.mxu0 0
      %5768 = vmatprep.subr.bf16.mxu0 0
      %5769 = vmatpush1.bf16.msra.mxu0 0
      %5770 = vmatprep.subr.bf16.mxu0 0
      %5771 = vmatpush1.bf16.msra.mxu0 0
      %5772 = vmatprep.subr.bf16.mxu0 0
      %5773 = vmatpush1.bf16.msra.mxu0 0
      %5774 = vmatprep.subr.bf16.mxu0 0
      %5775 = vmatpush1.bf16.msra.mxu0 0
      %5776 = vmatprep.subr.bf16.mxu0 0
      %5777 = vmatpush1.bf16.msra.mxu0 0
      %5778 = vmatprep.subr.bf16.mxu0 0
      %5779 = vmatpush1.bf16.msra.mxu0 0
      %5780 = vmatprep.subr.bf16.mxu0 0
      %5781 = vmatpush1.bf16.msra.mxu0 0
      %5782 = vmatprep.subr.bf16.mxu0 0
      %5783 = vmatpush1.bf16.msra.mxu0 0
      %5784 = vmatprep.subr.bf16.mxu0 0
      %5785 = vmatpush1.bf16.msra.mxu0 0
      %5786 = vmatprep.subr.bf16.mxu0 0
      %5787 = vmatpush1.bf16.msra.mxu0 0
      %5788 = vmatprep.subr.bf16.mxu0 0
      %5789 = vmatpush1.bf16.msra.mxu0 0
      %5790 = vmatprep.mubr.bf16.mxu0 0
      %5791 = vmatmul.mubr.bf16.gmra.mrb[0].mxu0 %v5705
      %v5792 = vpop.f32.mrb[0].mxu0
      %v5793 = vadd.f32 0.0, %v5792
      %v5794 = vpop.f32.mrb[0].mxu0
      %v5795 = vpop.f32.mrb[0].mxu0
      %v5796 = vadd.f32 0.0, %v5795
      %v5797 = vpop.f32.mrb[0].mxu0
      %5798 = vmatprep.mubr.bf16.mxu0 0
      %5799 = vmatmul.mubr.bf16.gmra.mrb[0].mxu0 %v5708
      %v5800 = vpop.f32.mrb[0].mxu0
      %v5801 = vadd.f32 0.0, %v5800
      %v5802 = vpop.f32.mrb[0].mxu0
      %v5803 = vpop.f32.mrb[0].mxu0
      %v5804 = vadd.f32 0.0, %v5803
      %v5805 = vpop.f32.mrb[0].mxu0
      %5806 = vmatprep.mubr.bf16.mxu0 0
      %5807 = vmatmul.mubr.bf16.gmra.mrb[0].mxu0 %v5711
      %v5808 = vpop.f32.mrb[0].mxu0
      %v5809 = vadd.f32 0.0, %v5808
      %v5810 = vpop.f32.mrb[0].mxu0
      %v5811 = vpop.f32.mrb[0].mxu0
      %v5812 = vadd.f32 0.0, %v5811
      %v5813 = vpop.f32.mrb[0].mxu0
      %5814 = vmatprep.mubr.bf16.mxu0 0
      %5815 = vmatmul.mubr.bf16.gmra.mrb[0].mxu0 %v5714
      %v5816 = vpop.f32.mrb[0].mxu0
      %v5817 = vadd.f32 0.0, %v5816
      %v5818 = vpop.f32.mrb[0].mxu0
      %v5819 = vpop.f32.mrb[0].mxu0
      %v5820 = vadd.f32 0.0, %v5819
      %v5821 = vpop.f32.mrb[0].mxu0
      %5822 = vmatprep.mubr.bf16.mxu0 0
      %5823 = vmatmul.mubr.bf16.gmra.mrb[0].mxu0 %v5717
      %v5824 = vpop.f32.mrb[0].mxu0
      %v5825 = vadd.f32 0.0, %v5824
      %v5826 = vpop.f32.mrb[0].mxu0
      %v5827 = vpop.f32.mrb[0].mxu0
      %v5828 = vadd.f32 0.0, %v5827
      %v5829 = vpop.f32.mrb[0].mxu0
      %5830 = vmatprep.mubr.bf16.mxu0 0
      %5831 = vmatmul.mubr.bf16.gmra.mrb[0].mxu0 %v5720
      %v5832 = vpop.f32.mrb[0].mxu0
      %v5833 = vadd.f32 0.0, %v5832
      %v5834 = vpop.f32.mrb[0].mxu0
      %v5835 = vpop.f32.mrb[0].mxu0
      %v5836 = vadd.f32 0.0, %v5835
      %v5837 = vpop.f32.mrb[0].mxu0
      %5838 = vmatprep.mubr.bf16.mxu0 0
      %5839 = vmatmul.mubr.bf16.gmra.mrb[0].mxu0 %v5723
      %v5840 = vpop.f32.mrb[0].mxu0
      %v5841 = vadd.f32 0.0, %v5840
      %v5842 = vpop.f32.mrb[0].mxu0
      %v5843 = vpop.f32.mrb[0].mxu0
      %v5844 = vadd.f32 0.0, %v5843
      %v5845 = vpop.f32.mrb[0].mxu0
      %5846 = vmatprep.mubr.bf16.mxu0 0
      %5847 = vmatmul.mubr.bf16.gmra.mrb[0].mxu0 %v5726
      %v5848 = vpop.f32.mrb[0].mxu0
      %v5849 = vadd.f32 0.0, %v5848
      %v5850 = vpop.f32.mrb[0].mxu0
      %v5851 = vpop.f32.mrb[0].mxu0
      %v5852 = vadd.f32 0.0, %v5851
      %v5853 = vpop.f32.mrb[0].mxu0
      %5854 = vmatprep.mubr.bf16.mxu0 0
      %5855 = vmatmul.mubr.bf16.gmra.mrb[0].mxu0 %v5729
      %v5856 = vpop.f32.mrb[0].mxu0
      %v5857 = vadd.f32 0.0, %v5856
      %v5858 = vpop.f32.mrb[0].mxu0
      %v5859 = vpop.f32.mrb[0].mxu0
      %v5860 = vadd.f32 0.0, %v5859
      %v5861 = vpop.f32.mrb[0].mxu0
      %5862 = vmatprep.mubr.bf16.mxu0 0
      %5863 = vmatmul.mubr.bf16.gmra.mrb[0].mxu0 %v5732
      %v5864 = vpop.f32.mrb[0].mxu0
      %v5865 = vadd.f32 0.0, %v5864
      %v5866 = vpop.f32.mrb[0].mxu0
      %v5867 = vpop.f32.mrb[0].mxu0
      %v5868 = vadd.f32 0.0, %v5867
      %v5869 = vpop.f32.mrb[0].mxu0
      %5870 = vmatprep.mubr.bf16.mxu0 0
      %5871 = vmatmul.mubr.bf16.gmra.mrb[0].mxu0 %v5735
      %v5872 = vpop.f32.mrb[0].mxu0
      %v5873 = vadd.f32 0.0, %v5872
      %v5874 = vpop.f32.mrb[0].mxu0
      %v5875 = vpop.f32.mrb[0].mxu0
      %v5876 = vadd.f32 0.0, %v5875
      %v5877 = vpop.f32.mrb[0].mxu0
      %5878 = vmatprep.mubr.bf16.mxu0 0
      %5879 = vmatmul.mubr.bf16.gmra.mrb[0].mxu0 %v5738
      %v5880 = vpop.f32.mrb[0].mxu0
      %v5881 = vadd.f32 0.0, %v5880
      %v5882 = vpop.f32.mrb[0].mxu0
      %v5883 = vpop.f32.mrb[0].mxu0
      %v5884 = vadd.f32 0.0, %v5883
      %v5885 = vpop.f32.mrb[0].mxu0
      %5886 = vmatprep.mubr.bf16.mxu0 0
      %5887 = vmatmul.mubr.bf16.gmra.mrb[0].mxu0 %v5741
      %v5888 = vpop.f32.mrb[0].mxu0
      %v5889 = vadd.f32 0.0, %v5888
      %v5890 = vpop.f32.mrb[0].mxu0
      %v5891 = vpop.f32.mrb[0].mxu0
      %v5892 = vadd.f32 0.0, %v5891
      %v5893 = vpop.f32.mrb[0].mxu0
      %5894 = vmatprep.mubr.bf16.mxu0 0
      %5895 = vmatmul.mubr.bf16.gmra.mrb[0].mxu0 %v5744
      %v5896 = vpop.f32.mrb[0].mxu0
      %v5897 = vadd.f32 0.0, %v5896
      %v5898 = vpop.f32.mrb[0].mxu0
      %v5899 = vpop.f32.mrb[0].mxu0
      %v5900 = vadd.f32 0.0, %v5899
      %v5901 = vpop.f32.mrb[0].mxu0
      %5902 = vmatprep.mubr.bf16.mxu0 0
      %5903 = vmatmul.mubr.bf16.gmra.mrb[0].mxu0 %v5747
      %v5904 = vpop.f32.mrb[0].mxu0
      %v5905 = vadd.f32 0.0, %v5904
      %v5906 = vpop.f32.mrb[0].mxu0
      %v5907 = vpop.f32.mrb[0].mxu0
      %v5908 = vadd.f32 0.0, %v5907
      %v5909 = vpop.f32.mrb[0].mxu0
      %5910 = vmatprep.mubr.bf16.mxu0 0
      %5911 = vmatmul.mubr.bf16.gmra.mrb[0].mxu0 %v5750
      %v5912 = vpop.f32.mrb[0].mxu0
      %v5913 = vadd.f32 0.0, %v5912
      %v5914 = vpop.f32.mrb[0].mxu0
      %v5915 = vpop.f32.mrb[0].mxu0
      %v5916 = vadd.f32 0.0, %v5915
      %v5917 = vpop.f32.mrb[0].mxu0
      %5918 = vmatprep.mubr.bf16.mxu0 0
      %5919 = vmatmul.mubr.bf16.gmra.mrb[0].mxu0 %v5753
      %v5920 = vpop.f32.mrb[0].mxu0
      %v5921 = vadd.f32 0.0, %v5920
      %v5922 = vpop.f32.mrb[0].mxu0
      %v5923 = vpop.f32.mrb[0].mxu0
      %v5924 = vadd.f32 0.0, %v5923
      %v5925 = vpop.f32.mrb[0].mxu0
      %5926 = vmatprep.mubr.bf16.mxu0 0
      %5927 = vmatmul.mubr.bf16.gmra.mrb[0].mxu0 %v5756
      %v5928 = vpop.f32.mrb[0].mxu0
      %v5929 = vadd.f32 0.0, %v5928
      %v5930 = vpop.f32.mrb[0].mxu0
      %v5931 = vpop.f32.mrb[0].mxu0
      %v5932 = vadd.f32 0.0, %v5931
      %v5933 = vpop.f32.mrb[0].mxu0
      %5934 = vdwg.mxu0
      %v5935 = vadd.f32 %v5508, %v5793
      %v5936 = vadd.f32 %v5511, %v5796
      %v5937 = vadd.f32 %v5516, %v5801
      %v5938 = vadd.f32 %v5519, %v5804
      %v5939 = vadd.f32 %v5524, %v5809
      %v5940 = vadd.f32 %v5527, %v5812
      %v5941 = vadd.f32 %v5532, %v5817
      %v5942 = vadd.f32 %v5535, %v5820
      %v5943 = vadd.f32 %v5540, %v5825
      %v5944 = vadd.f32 %v5543, %v5828
      %v5945 = vadd.f32 %v5548, %v5833
      %v5946 = vadd.f32 %v5551, %v5836
      %v5947 = vadd.f32 %v5556, %v5841
      %v5948 = vadd.f32 %v5559, %v5844
      %v5949 = vadd.f32 %v5564, %v5849
      %v5950 = vadd.f32 %v5567, %v5852
      %v5951 = vadd.f32 %v5572, %v5857
      %v5952 = vadd.f32 %v5575, %v5860
      %v5953 = vadd.f32 %v5580, %v5865
      %v5954 = vadd.f32 %v5583, %v5868
      %v5955 = vadd.f32 %v5588, %v5873
      %v5956 = vadd.f32 %v5591, %v5876
      %v5957 = vadd.f32 %v5596, %v5881
      %v5958 = vadd.f32 %v5599, %v5884
      %v5959 = vadd.f32 %v5604, %v5889
      %v5960 = vadd.f32 %v5607, %v5892
      %v5961 = vadd.f32 %v5612, %v5897
      %v5962 = vadd.f32 %v5615, %v5900
      %v5963 = vadd.f32 %v5620, %v5905
      %v5964 = vadd.f32 %v5623, %v5908
      %v5965 = vadd.f32 %v5628, %v5913
      %v5966 = vadd.f32 %v5631, %v5916
      %v5967 = vadd.f32 %v5636, %v5921
      %v5968 = vadd.f32 %v5639, %v5924
      %v5969 = vadd.f32 %v5644, %v5929
      %v5970 = vadd.f32 %v5647, %v5932
      %s5971 = scalar_lea.vmem %s8, 48
      %v5972 = vld [vmem:[%s5971] sm:$0xf]
      %v5973 = vld [vmem:[%s5971 + $0x4] sm:$0xf]
      %v5974 = vld [vmem:[%s5971 + $0x8] sm:$0xf]
      %v5975 = vld [vmem:[%s5971 + $0xc] sm:$0xf]
      %v5977 = vrot.slane %v4926, 3
      %v5978 = vsel %vm3574, %v5690, %v5977
      %v5983 = vunpack.c.l.b16 %v5972
      %v5984 = vunpack.c.l.b16 %v5973
      %v5985 = vunpack.c.l.b16 %v5974
      %v5986 = vunpack.c.l.b16 %v5975
      %v5987 = vpack.c.b16 %v5984, %v5983
      %v5988 = vpack.c.b16 %v5986, %v5985
      %v5992 = vsel %vm5119, %v5978, 0
      %5994 = vmatprep.subr.bf16.mxu0 0
      %5995 = vmatpush1.bf16.msra.mxu0 %v5987
      %5996 = vmatprep.subr.bf16.mxu0 0
      %5997 = vmatpush1.bf16.msra.mxu0 %v5988
      %5998 = vmatprep.subr.bf16.mxu0 0
      %5999 = vmatpush1.bf16.msra.mxu0 0
      %6000 = vmatprep.subr.bf16.mxu0 0
      %6001 = vmatpush1.bf16.msra.mxu0 0
      %6002 = vmatprep.subr.bf16.mxu0 0
      %6003 = vmatpush1.bf16.msra.mxu0 0
      %6004 = vmatprep.subr.bf16.mxu0 0
      %6005 = vmatpush1.bf16.msra.mxu0 0
      %6006 = vmatprep.subr.bf16.mxu0 0
      %6007 = vmatpush1.bf16.msra.mxu0 0
      %6008 = vmatprep.subr.bf16.mxu0 0
      %6009 = vmatpush1.bf16.msra.mxu0 0
      %6010 = vmatprep.subr.bf16.mxu0 0
      %6011 = vmatpush1.bf16.msra.mxu0 0
      %6012 = vmatprep.subr.bf16.mxu0 0
      %6013 = vmatpush1.bf16.msra.mxu0 0
      %6014 = vmatprep.subr.bf16.mxu0 0
      %6015 = vmatpush1.bf16.msra.mxu0 0
      %6016 = vmatprep.subr.bf16.mxu0 0
      %6017 = vmatpush1.bf16.msra.mxu0 0
      %6018 = vmatprep.subr.bf16.mxu0 0
      %6019 = vmatpush1.bf16.msra.mxu0 0
      %6020 = vmatprep.subr.bf16.mxu0 0
      %6021 = vmatpush1.bf16.msra.mxu0 0
      %6022 = vmatprep.subr.bf16.mxu0 0
      %6023 = vmatpush1.bf16.msra.mxu0 0
      %6024 = vmatprep.subr.bf16.mxu0 0
      %6025 = vmatpush1.bf16.msra.mxu0 0
      %6026 = vmatprep.mubr.bf16.mxu0 0
      %6027 = vmatmul.mubr.bf16.gmra.mrb[0].mxu0 %v5708
      %v6028 = vpop.f32.mrb[0].mxu0
      %v6029 = vadd.f32 0.0, %v6028
      %v6030 = vpop.f32.mrb[0].mxu0
      %v6031 = vpop.f32.mrb[0].mxu0
      %v6032 = vadd.f32 0.0, %v6031
      %v6033 = vpop.f32.mrb[0].mxu0
      %6034 = vmatprep.mubr.bf16.mxu0 0
      %6035 = vmatmul.mubr.bf16.gmra.mrb[0].mxu0 %v5711
      %v6036 = vpop.f32.mrb[0].mxu0
      %v6037 = vadd.f32 0.0, %v6036
      %v6038 = vpop.f32.mrb[0].mxu0
      %v6039 = vpop.f32.mrb[0].mxu0
      %v6040 = vadd.f32 0.0, %v6039
      %v6041 = vpop.f32.mrb[0].mxu0
      %6042 = vmatprep.mubr.bf16.mxu0 0
      %6043 = vmatmul.mubr.bf16.gmra.mrb[0].mxu0 %v5714
      %v6044 = vpop.f32.mrb[0].mxu0
      %v6045 = vadd.f32 0.0, %v6044
      %v6046 = vpop.f32.mrb[0].mxu0
      %v6047 = vpop.f32.mrb[0].mxu0
      %v6048 = vadd.f32 0.0, %v6047
      %v6049 = vpop.f32.mrb[0].mxu0
      %6050 = vmatprep.mubr.bf16.mxu0 0
      %6051 = vmatmul.mubr.bf16.gmra.mrb[0].mxu0 %v5717
      %v6052 = vpop.f32.mrb[0].mxu0
      %v6053 = vadd.f32 0.0, %v6052
      %v6054 = vpop.f32.mrb[0].mxu0
      %v6055 = vpop.f32.mrb[0].mxu0
      %v6056 = vadd.f32 0.0, %v6055
      %v6057 = vpop.f32.mrb[0].mxu0
      %6058 = vmatprep.mubr.bf16.mxu0 0
      %6059 = vmatmul.mubr.bf16.gmra.mrb[0].mxu0 %v5720
      %v6060 = vpop.f32.mrb[0].mxu0
      %v6061 = vadd.f32 0.0, %v6060
      %v6062 = vpop.f32.mrb[0].mxu0
      %v6063 = vpop.f32.mrb[0].mxu0
      %v6064 = vadd.f32 0.0, %v6063
      %v6065 = vpop.f32.mrb[0].mxu0
      %6066 = vmatprep.mubr.bf16.mxu0 0
      %6067 = vmatmul.mubr.bf16.gmra.mrb[0].mxu0 %v5723
      %v6068 = vpop.f32.mrb[0].mxu0
      %v6069 = vadd.f32 0.0, %v6068
      %v6070 = vpop.f32.mrb[0].mxu0
      %v6071 = vpop.f32.mrb[0].mxu0
      %v6072 = vadd.f32 0.0, %v6071
      %v6073 = vpop.f32.mrb[0].mxu0
      %6074 = vmatprep.mubr.bf16.mxu0 0
      %6075 = vmatmul.mubr.bf16.gmra.mrb[0].mxu0 %v5726
      %v6076 = vpop.f32.mrb[0].mxu0
      %v6077 = vadd.f32 0.0, %v6076
      %v6078 = vpop.f32.mrb[0].mxu0
      %v6079 = vpop.f32.mrb[0].mxu0
      %v6080 = vadd.f32 0.0, %v6079
      %v6081 = vpop.f32.mrb[0].mxu0
      %6082 = vmatprep.mubr.bf16.mxu0 0
      %6083 = vmatmul.mubr.bf16.gmra.mrb[0].mxu0 %v5729
      %v6084 = vpop.f32.mrb[0].mxu0
      %v6085 = vadd.f32 0.0, %v6084
      %v6086 = vpop.f32.mrb[0].mxu0
      %v6087 = vpop.f32.mrb[0].mxu0
      %v6088 = vadd.f32 0.0, %v6087
      %v6089 = vpop.f32.mrb[0].mxu0
      %6090 = vmatprep.mubr.bf16.mxu0 0
      %6091 = vmatmul.mubr.bf16.gmra.mrb[0].mxu0 %v5732
      %v6092 = vpop.f32.mrb[0].mxu0
      %v6093 = vadd.f32 0.0, %v6092
      %v6094 = vpop.f32.mrb[0].mxu0
      %v6095 = vpop.f32.mrb[0].mxu0
      %v6096 = vadd.f32 0.0, %v6095
      %v6097 = vpop.f32.mrb[0].mxu0
      %6098 = vmatprep.mubr.bf16.mxu0 0
      %6099 = vmatmul.mubr.bf16.gmra.mrb[0].mxu0 %v5735
      %v6100 = vpop.f32.mrb[0].mxu0
      %v6101 = vadd.f32 0.0, %v6100
      %v6102 = vpop.f32.mrb[0].mxu0
      %v6103 = vpop.f32.mrb[0].mxu0
      %v6104 = vadd.f32 0.0, %v6103
      %v6105 = vpop.f32.mrb[0].mxu0
      %6106 = vmatprep.mubr.bf16.mxu0 0
      %6107 = vmatmul.mubr.bf16.gmra.mrb[0].mxu0 %v5738
      %v6108 = vpop.f32.mrb[0].mxu0
      %v6109 = vadd.f32 0.0, %v6108
      %v6110 = vpop.f32.mrb[0].mxu0
      %v6111 = vpop.f32.mrb[0].mxu0
      %v6112 = vadd.f32 0.0, %v6111
      %v6113 = vpop.f32.mrb[0].mxu0
      %6114 = vmatprep.mubr.bf16.mxu0 0
      %6115 = vmatmul.mubr.bf16.gmra.mrb[0].mxu0 %v5741
      %v6116 = vpop.f32.mrb[0].mxu0
      %v6117 = vadd.f32 0.0, %v6116
      %v6118 = vpop.f32.mrb[0].mxu0
      %v6119 = vpop.f32.mrb[0].mxu0
      %v6120 = vadd.f32 0.0, %v6119
      %v6121 = vpop.f32.mrb[0].mxu0
      %6122 = vmatprep.mubr.bf16.mxu0 0
      %6123 = vmatmul.mubr.bf16.gmra.mrb[0].mxu0 %v5744
      %v6124 = vpop.f32.mrb[0].mxu0
      %v6125 = vadd.f32 0.0, %v6124
      %v6126 = vpop.f32.mrb[0].mxu0
      %v6127 = vpop.f32.mrb[0].mxu0
      %v6128 = vadd.f32 0.0, %v6127
      %v6129 = vpop.f32.mrb[0].mxu0
      %6130 = vmatprep.mubr.bf16.mxu0 0
      %6131 = vmatmul.mubr.bf16.gmra.mrb[0].mxu0 %v5747
      %v6132 = vpop.f32.mrb[0].mxu0
      %v6133 = vadd.f32 0.0, %v6132
      %v6134 = vpop.f32.mrb[0].mxu0
      %v6135 = vpop.f32.mrb[0].mxu0
      %v6136 = vadd.f32 0.0, %v6135
      %v6137 = vpop.f32.mrb[0].mxu0
      %6138 = vmatprep.mubr.bf16.mxu0 0
      %6139 = vmatmul.mubr.bf16.gmra.mrb[0].mxu0 %v5750
      %v6140 = vpop.f32.mrb[0].mxu0
      %v6141 = vadd.f32 0.0, %v6140
      %v6142 = vpop.f32.mrb[0].mxu0
      %v6143 = vpop.f32.mrb[0].mxu0
      %v6144 = vadd.f32 0.0, %v6143
      %v6145 = vpop.f32.mrb[0].mxu0
      %6146 = vmatprep.mubr.bf16.mxu0 0
      %6147 = vmatmul.mubr.bf16.gmra.mrb[0].mxu0 %v5753
      %v6148 = vpop.f32.mrb[0].mxu0
      %v6149 = vadd.f32 0.0, %v6148
      %v6150 = vpop.f32.mrb[0].mxu0
      %v6151 = vpop.f32.mrb[0].mxu0
      %v6152 = vadd.f32 0.0, %v6151
      %v6153 = vpop.f32.mrb[0].mxu0
      %6154 = vmatprep.mubr.bf16.mxu0 0
      %6155 = vmatmul.mubr.bf16.gmra.mrb[0].mxu0 %v5756
      %v6156 = vpop.f32.mrb[0].mxu0
      %v6157 = vadd.f32 0.0, %v6156
      %v6158 = vpop.f32.mrb[0].mxu0
      %v6159 = vpop.f32.mrb[0].mxu0
      %v6160 = vadd.f32 0.0, %v6159
      %v6161 = vpop.f32.mrb[0].mxu0
      %6162 = vmatprep.mubr.bf16.mxu0 0
      %6163 = vmatmul.mubr.bf16.gmra.mrb[0].mxu0 %v5992
      %v6164 = vpop.f32.mrb[0].mxu0
      %v6165 = vadd.f32 0.0, %v6164
      %v6166 = vpop.f32.mrb[0].mxu0
      %v6167 = vpop.f32.mrb[0].mxu0
      %v6168 = vadd.f32 0.0, %v6167
      %v6169 = vpop.f32.mrb[0].mxu0
      %6170 = vdwg.mxu0
      %v6171 = vadd.f32 %v5935, %v6029
      %v6172 = vadd.f32 %v5936, %v6032
      %v6173 = vadd.f32 %v5937, %v6037
      %v6174 = vadd.f32 %v5938, %v6040
      %v6175 = vadd.f32 %v5939, %v6045
      %v6176 = vadd.f32 %v5940, %v6048
      %v6177 = vadd.f32 %v5941, %v6053
      %v6178 = vadd.f32 %v5942, %v6056
      %v6179 = vadd.f32 %v5943, %v6061
      %v6180 = vadd.f32 %v5944, %v6064
      %v6181 = vadd.f32 %v5945, %v6069
      %v6182 = vadd.f32 %v5946, %v6072
      %v6183 = vadd.f32 %v5947, %v6077
      %v6184 = vadd.f32 %v5948, %v6080
      %v6185 = vadd.f32 %v5949, %v6085
      %v6186 = vadd.f32 %v5950, %v6088
      %v6187 = vadd.f32 %v5951, %v6093
      %v6188 = vadd.f32 %v5952, %v6096
      %v6189 = vadd.f32 %v5953, %v6101
      %v6190 = vadd.f32 %v5954, %v6104
      %v6191 = vadd.f32 %v5955, %v6109
      %v6192 = vadd.f32 %v5956, %v6112
      %v6193 = vadd.f32 %v5957, %v6117
      %v6194 = vadd.f32 %v5958, %v6120
      %v6195 = vadd.f32 %v5959, %v6125
      %v6196 = vadd.f32 %v5960, %v6128
      %v6197 = vadd.f32 %v5961, %v6133
      %v6198 = vadd.f32 %v5962, %v6136
      %v6199 = vadd.f32 %v5963, %v6141
      %v6200 = vadd.f32 %v5964, %v6144
      %v6201 = vadd.f32 %v5965, %v6149
      %v6202 = vadd.f32 %v5966, %v6152
      %v6203 = vadd.f32 %v5967, %v6157
      %v6204 = vadd.f32 %v5968, %v6160
      %v6205 = vadd.f32 %v5969, %v6165
      %v6206 = vadd.f32 %v5970, %v6168
      %s6207 = scalar_lea.vmem %s8, 64
      %v6208 = vld [vmem:[%s6207] sm:$0xf]
      %v6209 = vld [vmem:[%s6207 + $0x4] sm:$0xf]
      %v6210 = vld [vmem:[%s6207 + $0x8] sm:$0xf]
      %v6211 = vld [vmem:[%s6207 + $0xc] sm:$0xf]
      %v6212 = vrot.slane %v4946, 3
      %v6213 = vrot.slane %v4949, 4
      %v6214 = vor.u32 %v6212, %v6213
      %v6215 = vrot.slane %v4955, 3
      %v6216 = vrot.slane %v4958, 4
      %v6217 = vor.u32 %v6215, %v6216
      %v6218 = vsel %vm3977, %v6214, %v6217
      %v6219 = vrot.slane %v4964, 3
      %v6220 = vrot.slane %v4967, 4
      %v6221 = vor.u32 %v6219, %v6220
      %v6222 = vsel %vm3977, %v6217, %v6221
      %v6223 = vrot.slane %v4973, 3
      %v6224 = vrot.slane %v4976, 4
      %v6225 = vor.u32 %v6223, %v6224
      %v6226 = vsel %vm3977, %v6221, %v6225
      %v6227 = vrot.slane %v4982, 3
      %v6228 = vrot.slane %v4985, 4
      %v6229 = vor.u32 %v6227, %v6228
      %v6230 = vsel %vm3977, %v6225, %v6229
      %v6231 = vrot.slane %v4991, 3
      %v6232 = vrot.slane %v4994, 4
      %v6233 = vor.u32 %v6231, %v6232
      %v6234 = vsel %vm3977, %v6229, %v6233
      %v6235 = vrot.slane %v5000, 3
      %v6236 = vrot.slane %v5003, 4
      %v6237 = vor.u32 %v6235, %v6236
      %v6238 = vsel %vm3977, %v6233, %v6237
      %v6239 = vrot.slane %v5009, 3
      %v6240 = vrot.slane %v5012, 4
      %v6241 = vor.u32 %v6239, %v6240
      %v6242 = vsel %vm3977, %v6237, %v6241
      %v6243 = vrot.slane %v5018, 3
      %v6244 = vrot.slane %v5021, 4
      %v6245 = vor.u32 %v6243, %v6244
      %v6246 = vsel %vm3977, %v6241, %v6245
      %v6247 = vrot.slane %v5027, 3
      %v6248 = vrot.slane %v5030, 4
      %v6249 = vor.u32 %v6247, %v6248
      %v6250 = vsel %vm3977, %v6245, %v6249
      %v6251 = vrot.slane %v5036, 3
      %v6252 = vrot.slane %v5039, 4
      %v6253 = vor.u32 %v6251, %v6252
      %v6254 = vsel %vm3977, %v6249, %v6253
      %v6255 = vrot.slane %v5045, 3
      %v6256 = vrot.slane %v5048, 4
      %v6257 = vor.u32 %v6255, %v6256
      %v6258 = vsel %vm3977, %v6253, %v6257
      %v6259 = vrot.slane %v5054, 3
      %v6260 = vrot.slane %v5057, 4
      %v6261 = vor.u32 %v6259, %v6260
      %v6262 = vsel %vm3977, %v6257, %v6261
      %v6263 = vrot.slane %v5063, 3
      %v6264 = vrot.slane %v5066, 4
      %v6265 = vor.u32 %v6263, %v6264
      %v6266 = vsel %vm3977, %v6261, %v6265
      %v6267 = vrot.slane %v5072, 3
      %v6268 = vrot.slane %v5075, 4
      %v6269 = vor.u32 %v6267, %v6268
      %v6270 = vsel %vm3977, %v6265, %v6269
      %v6271 = vrot.slane %v5081, 3
      %v6272 = vrot.slane %v5084, 4
      %v6273 = vor.u32 %v6271, %v6272
      %v6274 = vsel %vm3977, %v6269, %v6273
      %v6275 = vrot.slane %v5090, 3
      %v6276 = vrot.slane %v5093, 4
      %v6277 = vor.u32 %v6275, %v6276
      %v6278 = vsel %vm3977, %v6273, %v6277
      %v6279 = vrot.slane %v5099, 3
      %v6280 = vrot.slane %v5102, 4
      %v6281 = vor.u32 %v6279, %v6280
      %v6282 = vsel %vm3977, %v6277, %v6281
      %v6284 = vshrl.u32 %v4926, 16
      %v6286 = vrot.slane %v6284, 3
      %v6287 = vshll.u32 %v4926, 16
      %v6289 = vrot.slane %v6287, 4
      %v6290 = vor.u32 %v6286, %v6289
      %v6291 = vsel %vm3977, %v6281, %v6290
      %v6296 = vunpack.c.l.b16 %v6208
      %v6297 = vunpack.c.l.b16 %v6209
      %v6298 = vunpack.c.l.b16 %v6210
      %v6299 = vunpack.c.l.b16 %v6211
      %v6300 = vpack.c.b16 %v6297, %v6296
      %v6301 = vpack.c.b16 %v6299, %v6298
      %v6305 = vsel %vm5119, %v6218, 0
      %v6308 = vsel %vm5119, %v6222, 0
      %v6311 = vsel %vm5119, %v6226, 0
      %v6314 = vsel %vm5119, %v6230, 0
      %v6317 = vsel %vm5119, %v6234, 0
      %v6320 = vsel %vm5119, %v6238, 0
      %v6323 = vsel %vm5119, %v6242, 0
      %v6326 = vsel %vm5119, %v6246, 0
      %v6329 = vsel %vm5119, %v6250, 0
      %v6332 = vsel %vm5119, %v6254, 0
      %v6335 = vsel %vm5119, %v6258, 0
      %v6338 = vsel %vm5119, %v6262, 0
      %v6341 = vsel %vm5119, %v6266, 0
      %v6344 = vsel %vm5119, %v6270, 0
      %v6347 = vsel %vm5119, %v6274, 0
      %v6350 = vsel %vm5119, %v6278, 0
      %v6353 = vsel %vm5119, %v6282, 0
      %v6356 = vsel %vm5119, %v6291, 0
      %6358 = vmatprep.subr.bf16.mxu0 0
      %6359 = vmatpush1.bf16.msra.mxu0 %v6300
      %6360 = vmatprep.subr.bf16.mxu0 0
      %6361 = vmatpush1.bf16.msra.mxu0 %v6301
      %6362 = vmatprep.subr.bf16.mxu0 0
      %6363 = vmatpush1.bf16.msra.mxu0 0
      %6364 = vmatprep.subr.bf16.mxu0 0
      %6365 = vmatpush1.bf16.msra.mxu0 0
      %6366 = vmatprep.subr.bf16.mxu0 0
      %6367 = vmatpush1.bf16.msra.mxu0 0
      %6368 = vmatprep.subr.bf16.mxu0 0
      %6369 = vmatpush1.bf16.msra.mxu0 0
      %6370 = vmatprep.subr.bf16.mxu0 0
      %6371 = vmatpush1.bf16.msra.mxu0 0
      %6372 = vmatprep.subr.bf16.mxu0 0
      %6373 = vmatpush1.bf16.msra.mxu0 0
      %6374 = vmatprep.subr.bf16.mxu0 0
      %6375 = vmatpush1.bf16.msra.mxu0 0
      %6376 = vmatprep.subr.bf16.mxu0 0
      %6377 = vmatpush1.bf16.msra.mxu0 0
      %6378 = vmatprep.subr.bf16.mxu0 0
      %6379 = vmatpush1.bf16.msra.mxu0 0
      %6380 = vmatprep.subr.bf16.mxu0 0
      %6381 = vmatpush1.bf16.msra.mxu0 0
      %6382 = vmatprep.subr.bf16.mxu0 0
      %6383 = vmatpush1.bf16.msra.mxu0 0
      %6384 = vmatprep.subr.bf16.mxu0 0
      %6385 = vmatpush1.bf16.msra.mxu0 0
      %6386 = vmatprep.subr.bf16.mxu0 0
      %6387 = vmatpush1.bf16.msra.mxu0 0
      %6388 = vmatprep.subr.bf16.mxu0 0
      %6389 = vmatpush1.bf16.msra.mxu0 0
      %6390 = vmatprep.mubr.bf16.mxu0 0
      %6391 = vmatmul.mubr.bf16.gmra.mrb[0].mxu0 %v6305
      %v6392 = vpop.f32.mrb[0].mxu0
      %v6393 = vadd.f32 0.0, %v6392
      %v6394 = vpop.f32.mrb[0].mxu0
      %v6395 = vpop.f32.mrb[0].mxu0
      %v6396 = vadd.f32 0.0, %v6395
      %v6397 = vpop.f32.mrb[0].mxu0
      %6398 = vmatprep.mubr.bf16.mxu0 0
      %6399 = vmatmul.mubr.bf16.gmra.mrb[0].mxu0 %v6308
      %v6400 = vpop.f32.mrb[0].mxu0
      %v6401 = vadd.f32 0.0, %v6400
      %v6402 = vpop.f32.mrb[0].mxu0
      %v6403 = vpop.f32.mrb[0].mxu0
      %v6404 = vadd.f32 0.0, %v6403
      %v6405 = vpop.f32.mrb[0].mxu0
      %6406 = vmatprep.mubr.bf16.mxu0 0
      %6407 = vmatmul.mubr.bf16.gmra.mrb[0].mxu0 %v6311
      %v6408 = vpop.f32.mrb[0].mxu0
      %v6409 = vadd.f32 0.0, %v6408
      %v6410 = vpop.f32.mrb[0].mxu0
      %v6411 = vpop.f32.mrb[0].mxu0
      %v6412 = vadd.f32 0.0, %v6411
      %v6413 = vpop.f32.mrb[0].mxu0
      %6414 = vmatprep.mubr.bf16.mxu0 0
      %6415 = vmatmul.mubr.bf16.gmra.mrb[0].mxu0 %v6314
      %v6416 = vpop.f32.mrb[0].mxu0
      %v6417 = vadd.f32 0.0, %v6416
      %v6418 = vpop.f32.mrb[0].mxu0
      %v6419 = vpop.f32.mrb[0].mxu0
      %v6420 = vadd.f32 0.0, %v6419
      %v6421 = vpop.f32.mrb[0].mxu0
      %6422 = vmatprep.mubr.bf16.mxu0 0
      %6423 = vmatmul.mubr.bf16.gmra.mrb[0].mxu0 %v6317
      %v6424 = vpop.f32.mrb[0].mxu0
      %v6425 = vadd.f32 0.0, %v6424
      %v6426 = vpop.f32.mrb[0].mxu0
      %v6427 = vpop.f32.mrb[0].mxu0
      %v6428 = vadd.f32 0.0, %v6427
      %v6429 = vpop.f32.mrb[0].mxu0
      %6430 = vmatprep.mubr.bf16.mxu0 0
      %6431 = vmatmul.mubr.bf16.gmra.mrb[0].mxu0 %v6320
      %v6432 = vpop.f32.mrb[0].mxu0
      %v6433 = vadd.f32 0.0, %v6432
      %v6434 = vpop.f32.mrb[0].mxu0
      %v6435 = vpop.f32.mrb[0].mxu0
      %v6436 = vadd.f32 0.0, %v6435
      %v6437 = vpop.f32.mrb[0].mxu0
      %6438 = vmatprep.mubr.bf16.mxu0 0
      %6439 = vmatmul.mubr.bf16.gmra.mrb[0].mxu0 %v6323
      %v6440 = vpop.f32.mrb[0].mxu0
      %v6441 = vadd.f32 0.0, %v6440
      %v6442 = vpop.f32.mrb[0].mxu0
      %v6443 = vpop.f32.mrb[0].mxu0
      %v6444 = vadd.f32 0.0, %v6443
      %v6445 = vpop.f32.mrb[0].mxu0
      %6446 = vmatprep.mubr.bf16.mxu0 0
      %6447 = vmatmul.mubr.bf16.gmra.mrb[0].mxu0 %v6326
      %v6448 = vpop.f32.mrb[0].mxu0
      %v6449 = vadd.f32 0.0, %v6448
      %v6450 = vpop.f32.mrb[0].mxu0
      %v6451 = vpop.f32.mrb[0].mxu0
      %v6452 = vadd.f32 0.0, %v6451
      %v6453 = vpop.f32.mrb[0].mxu0
      %6454 = vmatprep.mubr.bf16.mxu0 0
      %6455 = vmatmul.mubr.bf16.gmra.mrb[0].mxu0 %v6329
      %v6456 = vpop.f32.mrb[0].mxu0
      %v6457 = vadd.f32 0.0, %v6456
      %v6458 = vpop.f32.mrb[0].mxu0
      %v6459 = vpop.f32.mrb[0].mxu0
      %v6460 = vadd.f32 0.0, %v6459
      %v6461 = vpop.f32.mrb[0].mxu0
      %6462 = vmatprep.mubr.bf16.mxu0 0
      %6463 = vmatmul.mubr.bf16.gmra.mrb[0].mxu0 %v6332
      %v6464 = vpop.f32.mrb[0].mxu0
      %v6465 = vadd.f32 0.0, %v6464
      %v6466 = vpop.f32.mrb[0].mxu0
      %v6467 = vpop.f32.mrb[0].mxu0
      %v6468 = vadd.f32 0.0, %v6467
      %v6469 = vpop.f32.mrb[0].mxu0
      %6470 = vmatprep.mubr.bf16.mxu0 0
      %6471 = vmatmul.mubr.bf16.gmra.mrb[0].mxu0 %v6335
      %v6472 = vpop.f32.mrb[0].mxu0
      %v6473 = vadd.f32 0.0, %v6472
      %v6474 = vpop.f32.mrb[0].mxu0
      %v6475 = vpop.f32.mrb[0].mxu0
      %v6476 = vadd.f32 0.0, %v6475
      %v6477 = vpop.f32.mrb[0].mxu0
      %6478 = vmatprep.mubr.bf16.mxu0 0
      %6479 = vmatmul.mubr.bf16.gmra.mrb[0].mxu0 %v6338
      %v6480 = vpop.f32.mrb[0].mxu0
      %v6481 = vadd.f32 0.0, %v6480
      %v6482 = vpop.f32.mrb[0].mxu0
      %v6483 = vpop.f32.mrb[0].mxu0
      %v6484 = vadd.f32 0.0, %v6483
      %v6485 = vpop.f32.mrb[0].mxu0
      %6486 = vmatprep.mubr.bf16.mxu0 0
      %6487 = vmatmul.mubr.bf16.gmra.mrb[0].mxu0 %v6341
      %v6488 = vpop.f32.mrb[0].mxu0
      %v6489 = vadd.f32 0.0, %v6488
      %v6490 = vpop.f32.mrb[0].mxu0
      %v6491 = vpop.f32.mrb[0].mxu0
      %v6492 = vadd.f32 0.0, %v6491
      %v6493 = vpop.f32.mrb[0].mxu0
      %6494 = vmatprep.mubr.bf16.mxu0 0
      %6495 = vmatmul.mubr.bf16.gmra.mrb[0].mxu0 %v6344
      %v6496 = vpop.f32.mrb[0].mxu0
      %v6497 = vadd.f32 0.0, %v6496
      %v6498 = vpop.f32.mrb[0].mxu0
      %v6499 = vpop.f32.mrb[0].mxu0
      %v6500 = vadd.f32 0.0, %v6499
      %v6501 = vpop.f32.mrb[0].mxu0
      %6502 = vmatprep.mubr.bf16.mxu0 0
      %6503 = vmatmul.mubr.bf16.gmra.mrb[0].mxu0 %v6347
      %v6504 = vpop.f32.mrb[0].mxu0
      %v6505 = vadd.f32 0.0, %v6504
      %v6506 = vpop.f32.mrb[0].mxu0
      %v6507 = vpop.f32.mrb[0].mxu0
      %v6508 = vadd.f32 0.0, %v6507
      %v6509 = vpop.f32.mrb[0].mxu0
      %6510 = vmatprep.mubr.bf16.mxu0 0
      %6511 = vmatmul.mubr.bf16.gmra.mrb[0].mxu0 %v6350
      %v6512 = vpop.f32.mrb[0].mxu0
      %v6513 = vadd.f32 0.0, %v6512
      %v6514 = vpop.f32.mrb[0].mxu0
      %v6515 = vpop.f32.mrb[0].mxu0
      %v6516 = vadd.f32 0.0, %v6515
      %v6517 = vpop.f32.mrb[0].mxu0
      %6518 = vmatprep.mubr.bf16.mxu0 0
      %6519 = vmatmul.mubr.bf16.gmra.mrb[0].mxu0 %v6353
      %v6520 = vpop.f32.mrb[0].mxu0
      %v6521 = vadd.f32 0.0, %v6520
      %v6522 = vpop.f32.mrb[0].mxu0
      %v6523 = vpop.f32.mrb[0].mxu0
      %v6524 = vadd.f32 0.0, %v6523
      %v6525 = vpop.f32.mrb[0].mxu0
      %6526 = vmatprep.mubr.bf16.mxu0 0
      %6527 = vmatmul.mubr.bf16.gmra.mrb[0].mxu0 %v6356
      %v6528 = vpop.f32.mrb[0].mxu0
      %v6529 = vadd.f32 0.0, %v6528
      %v6530 = vpop.f32.mrb[0].mxu0
      %v6531 = vpop.f32.mrb[0].mxu0
      %v6532 = vadd.f32 0.0, %v6531
      %v6533 = vpop.f32.mrb[0].mxu0
      %6534 = vdwg.mxu0
      %v6535 = vadd.f32 %v6171, %v6393
      %v6536 = vadd.f32 %v6172, %v6396
      %v6537 = vadd.f32 %v6173, %v6401
      %v6538 = vadd.f32 %v6174, %v6404
      %v6539 = vadd.f32 %v6175, %v6409
      %v6540 = vadd.f32 %v6176, %v6412
      %v6541 = vadd.f32 %v6177, %v6417
      %v6542 = vadd.f32 %v6178, %v6420
      %v6543 = vadd.f32 %v6179, %v6425
      %v6544 = vadd.f32 %v6180, %v6428
      %v6545 = vadd.f32 %v6181, %v6433
      %v6546 = vadd.f32 %v6182, %v6436
      %v6547 = vadd.f32 %v6183, %v6441
      %v6548 = vadd.f32 %v6184, %v6444
      %v6549 = vadd.f32 %v6185, %v6449
      %v6550 = vadd.f32 %v6186, %v6452
      %v6551 = vadd.f32 %v6187, %v6457
      %v6552 = vadd.f32 %v6188, %v6460
      %v6553 = vadd.f32 %v6189, %v6465
      %v6554 = vadd.f32 %v6190, %v6468
      %v6555 = vadd.f32 %v6191, %v6473
      %v6556 = vadd.f32 %v6192, %v6476
      %v6557 = vadd.f32 %v6193, %v6481
      %v6558 = vadd.f32 %v6194, %v6484
      %v6559 = vadd.f32 %v6195, %v6489
      %v6560 = vadd.f32 %v6196, %v6492
      %v6561 = vadd.f32 %v6197, %v6497
      %v6562 = vadd.f32 %v6198, %v6500
      %v6563 = vadd.f32 %v6199, %v6505
      %v6564 = vadd.f32 %v6200, %v6508
      %v6565 = vadd.f32 %v6201, %v6513
      %v6566 = vadd.f32 %v6202, %v6516
      %v6567 = vadd.f32 %v6203, %v6521
      %v6568 = vadd.f32 %v6204, %v6524
      %v6569 = vadd.f32 %v6205, %v6529
      %v6570 = vadd.f32 %v6206, %v6532
      %s6571 = scalar_lea.vmem %s8, 80
      %v6572 = vld [vmem:[%s6571] sm:$0xf]
      %v6573 = vld [vmem:[%s6571 + $0x4] sm:$0xf]
      %v6574 = vld [vmem:[%s6571 + $0x8] sm:$0xf]
      %v6575 = vld [vmem:[%s6571 + $0xc] sm:$0xf]
      %vm6576 = vcmask 1043456
      %v6577 = vrot.slane %v4908, 4
      %v6578 = vrot.slane %v4909, 4
      %v6579 = vsel %vm6576, %v6577, %v6578
      %v6580 = vrot.slane %v4910, 4
      %v6581 = vsel %vm6576, %v6578, %v6580
      %v6582 = vrot.slane %v4911, 4
      %v6583 = vsel %vm6576, %v6580, %v6582
      %v6584 = vrot.slane %v4912, 4
      %v6585 = vsel %vm6576, %v6582, %v6584
      %v6586 = vrot.slane %v4913, 4
      %v6587 = vsel %vm6576, %v6584, %v6586
      %v6588 = vrot.slane %v4914, 4
      %v6589 = vsel %vm6576, %v6586, %v6588
      %v6590 = vrot.slane %v4915, 4
      %v6591 = vsel %vm6576, %v6588, %v6590
      %v6592 = vrot.slane %v4916, 4
      %v6593 = vsel %vm6576, %v6590, %v6592
      %v6594 = vrot.slane %v4917, 4
      %v6595 = vsel %vm6576, %v6592, %v6594
      %v6596 = vrot.slane %v4918, 4
      %v6597 = vsel %vm6576, %v6594, %v6596
      %v6598 = vrot.slane %v4919, 4
      %v6599 = vsel %vm6576, %v6596, %v6598
      %v6600 = vrot.slane %v4920, 4
      %v6601 = vsel %vm6576, %v6598, %v6600
      %v6602 = vrot.slane %v4921, 4
      %v6603 = vsel %vm6576, %v6600, %v6602
      %v6604 = vrot.slane %v4922, 4
      %v6605 = vsel %vm6576, %v6602, %v6604
      %v6606 = vrot.slane %v4923, 4
      %v6607 = vsel %vm6576, %v6604, %v6606
      %v6608 = vrot.slane %v4924, 4
      %v6609 = vsel %vm6576, %v6606, %v6608
      %v6610 = vrot.slane %v4925, 4
      %v6611 = vsel %vm6576, %v6608, %v6610
      %v6612 = vrot.slane %v4926, 4
      %v6613 = vsel %vm6576, %v6610, %v6612
      %v6618 = vunpack.c.l.b16 %v6572
      %v6619 = vunpack.c.l.b16 %v6573
      %v6620 = vunpack.c.l.b16 %v6574
      %v6621 = vunpack.c.l.b16 %v6575
      %v6622 = vpack.c.b16 %v6619, %v6618
      %v6623 = vpack.c.b16 %v6621, %v6620
      %v6627 = vsel %vm5119, %v6579, 0
      %v6630 = vsel %vm5119, %v6581, 0
      %v6633 = vsel %vm5119, %v6583, 0
      %v6636 = vsel %vm5119, %v6585, 0
      %v6639 = vsel %vm5119, %v6587, 0
      %v6642 = vsel %vm5119, %v6589, 0
      %v6645 = vsel %vm5119, %v6591, 0
      %v6648 = vsel %vm5119, %v6593, 0
      %v6651 = vsel %vm5119, %v6595, 0
      %v6654 = vsel %vm5119, %v6597, 0
      %v6657 = vsel %vm5119, %v6599, 0
      %v6660 = vsel %vm5119, %v6601, 0
      %v6663 = vsel %vm5119, %v6603, 0
      %v6666 = vsel %vm5119, %v6605, 0
      %v6669 = vsel %vm5119, %v6607, 0
      %v6672 = vsel %vm5119, %v6609, 0
      %v6675 = vsel %vm5119, %v6611, 0
      %v6678 = vsel %vm5119, %v6613, 0
      %6680 = vmatprep.subr.bf16.mxu0 0
      %6681 = vmatpush1.bf16.msra.mxu0 %v6622
      %6682 = vmatprep.subr.bf16.mxu0 0
      %6683 = vmatpush1.bf16.msra.mxu0 %v6623
      %6684 = vmatprep.subr.bf16.mxu0 0
      %6685 = vmatpush1.bf16.msra.mxu0 0
      %6686 = vmatprep.subr.bf16.mxu0 0
      %6687 = vmatpush1.bf16.msra.mxu0 0
      %6688 = vmatprep.subr.bf16.mxu0 0
      %6689 = vmatpush1.bf16.msra.mxu0 0
      %6690 = vmatprep.subr.bf16.mxu0 0
      %6691 = vmatpush1.bf16.msra.mxu0 0
      %6692 = vmatprep.subr.bf16.mxu0 0
      %6693 = vmatpush1.bf16.msra.mxu0 0
      %6694 = vmatprep.subr.bf16.mxu0 0
      %6695 = vmatpush1.bf16.msra.mxu0 0
      %6696 = vmatprep.subr.bf16.mxu0 0
      %6697 = vmatpush1.bf16.msra.mxu0 0
      %6698 = vmatprep.subr.bf16.mxu0 0
      %6699 = vmatpush1.bf16.msra.mxu0 0
      %6700 = vmatprep.subr.bf16.mxu0 0
      %6701 = vmatpush1.bf16.msra.mxu0 0
      %6702 = vmatprep.subr.bf16.mxu0 0
      %6703 = vmatpush1.bf16.msra.mxu0 0
      %6704 = vmatprep.subr.bf16.mxu0 0
      %6705 = vmatpush1.bf16.msra.mxu0 0
      %6706 = vmatprep.subr.bf16.mxu0 0
      %6707 = vmatpush1.bf16.msra.mxu0 0
      %6708 = vmatprep.subr.bf16.mxu0 0
      %6709 = vmatpush1.bf16.msra.mxu0 0
      %6710 = vmatprep.subr.bf16.mxu0 0
      %6711 = vmatpush1.bf16.msra.mxu0 0
      %6712 = vmatprep.mubr.bf16.mxu0 0
      %6713 = vmatmul.mubr.bf16.gmra.mrb[0].mxu0 %v6627
      %v6714 = vpop.f32.mrb[0].mxu0
      %v6715 = vadd.f32 0.0, %v6714
      %v6716 = vpop.f32.mrb[0].mxu0
      %v6717 = vpop.f32.mrb[0].mxu0
      %v6718 = vadd.f32 0.0, %v6717
      %v6719 = vpop.f32.mrb[0].mxu0
      %6720 = vmatprep.mubr.bf16.mxu0 0
      %6721 = vmatmul.mubr.bf16.gmra.mrb[0].mxu0 %v6630
      %v6722 = vpop.f32.mrb[0].mxu0
      %v6723 = vadd.f32 0.0, %v6722
      %v6724 = vpop.f32.mrb[0].mxu0
      %v6725 = vpop.f32.mrb[0].mxu0
      %v6726 = vadd.f32 0.0, %v6725
      %v6727 = vpop.f32.mrb[0].mxu0
      %6728 = vmatprep.mubr.bf16.mxu0 0
      %6729 = vmatmul.mubr.bf16.gmra.mrb[0].mxu0 %v6633
      %v6730 = vpop.f32.mrb[0].mxu0
      %v6731 = vadd.f32 0.0, %v6730
      %v6732 = vpop.f32.mrb[0].mxu0
      %v6733 = vpop.f32.mrb[0].mxu0
      %v6734 = vadd.f32 0.0, %v6733
      %v6735 = vpop.f32.mrb[0].mxu0
      %6736 = vmatprep.mubr.bf16.mxu0 0
      %6737 = vmatmul.mubr.bf16.gmra.mrb[0].mxu0 %v6636
      %v6738 = vpop.f32.mrb[0].mxu0
      %v6739 = vadd.f32 0.0, %v6738
      %v6740 = vpop.f32.mrb[0].mxu0
      %v6741 = vpop.f32.mrb[0].mxu0
      %v6742 = vadd.f32 0.0, %v6741
      %v6743 = vpop.f32.mrb[0].mxu0
      %6744 = vmatprep.mubr.bf16.mxu0 0
      %6745 = vmatmul.mubr.bf16.gmra.mrb[0].mxu0 %v6639
      %v6746 = vpop.f32.mrb[0].mxu0
      %v6747 = vadd.f32 0.0, %v6746
      %v6748 = vpop.f32.mrb[0].mxu0
      %v6749 = vpop.f32.mrb[0].mxu0
      %v6750 = vadd.f32 0.0, %v6749
      %v6751 = vpop.f32.mrb[0].mxu0
      %6752 = vmatprep.mubr.bf16.mxu0 0
      %6753 = vmatmul.mubr.bf16.gmra.mrb[0].mxu0 %v6642
      %v6754 = vpop.f32.mrb[0].mxu0
      %v6755 = vadd.f32 0.0, %v6754
      %v6756 = vpop.f32.mrb[0].mxu0
      %v6757 = vpop.f32.mrb[0].mxu0
      %v6758 = vadd.f32 0.0, %v6757
      %v6759 = vpop.f32.mrb[0].mxu0
      %6760 = vmatprep.mubr.bf16.mxu0 0
      %6761 = vmatmul.mubr.bf16.gmra.mrb[0].mxu0 %v6645
      %v6762 = vpop.f32.mrb[0].mxu0
      %v6763 = vadd.f32 0.0, %v6762
      %v6764 = vpop.f32.mrb[0].mxu0
      %v6765 = vpop.f32.mrb[0].mxu0
      %v6766 = vadd.f32 0.0, %v6765
      %v6767 = vpop.f32.mrb[0].mxu0
      %6768 = vmatprep.mubr.bf16.mxu0 0
      %6769 = vmatmul.mubr.bf16.gmra.mrb[0].mxu0 %v6648
      %v6770 = vpop.f32.mrb[0].mxu0
      %v6771 = vadd.f32 0.0, %v6770
      %v6772 = vpop.f32.mrb[0].mxu0
      %v6773 = vpop.f32.mrb[0].mxu0
      %v6774 = vadd.f32 0.0, %v6773
      %v6775 = vpop.f32.mrb[0].mxu0
      %6776 = vmatprep.mubr.bf16.mxu0 0
      %6777 = vmatmul.mubr.bf16.gmra.mrb[0].mxu0 %v6651
      %v6778 = vpop.f32.mrb[0].mxu0
      %v6779 = vadd.f32 0.0, %v6778
      %v6780 = vpop.f32.mrb[0].mxu0
      %v6781 = vpop.f32.mrb[0].mxu0
      %v6782 = vadd.f32 0.0, %v6781
      %v6783 = vpop.f32.mrb[0].mxu0
      %6784 = vmatprep.mubr.bf16.mxu0 0
      %6785 = vmatmul.mubr.bf16.gmra.mrb[0].mxu0 %v6654
      %v6786 = vpop.f32.mrb[0].mxu0
      %v6787 = vadd.f32 0.0, %v6786
      %v6788 = vpop.f32.mrb[0].mxu0
      %v6789 = vpop.f32.mrb[0].mxu0
      %v6790 = vadd.f32 0.0, %v6789
      %v6791 = vpop.f32.mrb[0].mxu0
      %6792 = vmatprep.mubr.bf16.mxu0 0
      %6793 = vmatmul.mubr.bf16.gmra.mrb[0].mxu0 %v6657
      %v6794 = vpop.f32.mrb[0].mxu0
      %v6795 = vadd.f32 0.0, %v6794
      %v6796 = vpop.f32.mrb[0].mxu0
      %v6797 = vpop.f32.mrb[0].mxu0
      %v6798 = vadd.f32 0.0, %v6797
      %v6799 = vpop.f32.mrb[0].mxu0
      %6800 = vmatprep.mubr.bf16.mxu0 0
      %6801 = vmatmul.mubr.bf16.gmra.mrb[0].mxu0 %v6660
      %v6802 = vpop.f32.mrb[0].mxu0
      %v6803 = vadd.f32 0.0, %v6802
      %v6804 = vpop.f32.mrb[0].mxu0
      %v6805 = vpop.f32.mrb[0].mxu0
      %v6806 = vadd.f32 0.0, %v6805
      %v6807 = vpop.f32.mrb[0].mxu0
      %6808 = vmatprep.mubr.bf16.mxu0 0
      %6809 = vmatmul.mubr.bf16.gmra.mrb[0].mxu0 %v6663
      %v6810 = vpop.f32.mrb[0].mxu0
      %v6811 = vadd.f32 0.0, %v6810
      %v6812 = vpop.f32.mrb[0].mxu0
      %v6813 = vpop.f32.mrb[0].mxu0
      %v6814 = vadd.f32 0.0, %v6813
      %v6815 = vpop.f32.mrb[0].mxu0
      %6816 = vmatprep.mubr.bf16.mxu0 0
      %6817 = vmatmul.mubr.bf16.gmra.mrb[0].mxu0 %v6666
      %v6818 = vpop.f32.mrb[0].mxu0
      %v6819 = vadd.f32 0.0, %v6818
      %v6820 = vpop.f32.mrb[0].mxu0
      %v6821 = vpop.f32.mrb[0].mxu0
      %v6822 = vadd.f32 0.0, %v6821
      %v6823 = vpop.f32.mrb[0].mxu0
      %6824 = vmatprep.mubr.bf16.mxu0 0
      %6825 = vmatmul.mubr.bf16.gmra.mrb[0].mxu0 %v6669
      %v6826 = vpop.f32.mrb[0].mxu0
      %v6827 = vadd.f32 0.0, %v6826
      %v6828 = vpop.f32.mrb[0].mxu0
      %v6829 = vpop.f32.mrb[0].mxu0
      %v6830 = vadd.f32 0.0, %v6829
      %v6831 = vpop.f32.mrb[0].mxu0
      %6832 = vmatprep.mubr.bf16.mxu0 0
      %6833 = vmatmul.mubr.bf16.gmra.mrb[0].mxu0 %v6672
      %v6834 = vpop.f32.mrb[0].mxu0
      %v6835 = vadd.f32 0.0, %v6834
      %v6836 = vpop.f32.mrb[0].mxu0
      %v6837 = vpop.f32.mrb[0].mxu0
      %v6838 = vadd.f32 0.0, %v6837
      %v6839 = vpop.f32.mrb[0].mxu0
      %6840 = vmatprep.mubr.bf16.mxu0 0
      %6841 = vmatmul.mubr.bf16.gmra.mrb[0].mxu0 %v6675
      %v6842 = vpop.f32.mrb[0].mxu0
      %v6843 = vadd.f32 0.0, %v6842
      %v6844 = vpop.f32.mrb[0].mxu0
      %v6845 = vpop.f32.mrb[0].mxu0
      %v6846 = vadd.f32 0.0, %v6845
      %v6847 = vpop.f32.mrb[0].mxu0
      %6848 = vmatprep.mubr.bf16.mxu0 0
      %6849 = vmatmul.mubr.bf16.gmra.mrb[0].mxu0 %v6678
      %v6850 = vpop.f32.mrb[0].mxu0
      %v6851 = vadd.f32 0.0, %v6850
      %v6852 = vpop.f32.mrb[0].mxu0
      %v6853 = vpop.f32.mrb[0].mxu0
      %v6854 = vadd.f32 0.0, %v6853
      %v6855 = vpop.f32.mrb[0].mxu0
      %6856 = vdwg.mxu0
      %v6857 = vadd.f32 %v6535, %v6715
      %v6858 = vadd.f32 %v6536, %v6718
      %v6859 = vadd.f32 %v6537, %v6723
      %v6860 = vadd.f32 %v6538, %v6726
      %v6861 = vadd.f32 %v6539, %v6731
      %v6862 = vadd.f32 %v6540, %v6734
      %v6863 = vadd.f32 %v6541, %v6739
      %v6864 = vadd.f32 %v6542, %v6742
      %v6865 = vadd.f32 %v6543, %v6747
      %v6866 = vadd.f32 %v6544, %v6750
      %v6867 = vadd.f32 %v6545, %v6755
      %v6868 = vadd.f32 %v6546, %v6758
      %v6869 = vadd.f32 %v6547, %v6763
      %v6870 = vadd.f32 %v6548, %v6766
      %v6871 = vadd.f32 %v6549, %v6771
      %v6872 = vadd.f32 %v6550, %v6774
      %v6873 = vadd.f32 %v6551, %v6779
      %v6874 = vadd.f32 %v6552, %v6782
      %v6875 = vadd.f32 %v6553, %v6787
      %v6876 = vadd.f32 %v6554, %v6790
      %v6877 = vadd.f32 %v6555, %v6795
      %v6878 = vadd.f32 %v6556, %v6798
      %v6879 = vadd.f32 %v6557, %v6803
      %v6880 = vadd.f32 %v6558, %v6806
      %v6881 = vadd.f32 %v6559, %v6811
      %v6882 = vadd.f32 %v6560, %v6814
      %v6883 = vadd.f32 %v6561, %v6819
      %v6884 = vadd.f32 %v6562, %v6822
      %v6885 = vadd.f32 %v6563, %v6827
      %v6886 = vadd.f32 %v6564, %v6830
      %v6887 = vadd.f32 %v6565, %v6835
      %v6888 = vadd.f32 %v6566, %v6838
      %v6889 = vadd.f32 %v6567, %v6843
      %v6890 = vadd.f32 %v6568, %v6846
      %v6891 = vadd.f32 %v6569, %v6851
      %v6892 = vadd.f32 %v6570, %v6854
      %s6893 = scalar_lea.vmem %s8, 96
      %v6894 = vld [vmem:[%s6893] sm:$0xf]
      %v6895 = vld [vmem:[%s6893 + $0x4] sm:$0xf]
      %v6896 = vld [vmem:[%s6893 + $0x8] sm:$0xf]
      %v6897 = vld [vmem:[%s6893 + $0xc] sm:$0xf]
      %v6899 = vrot.slane %v4927, 4
      %v6900 = vsel %vm6576, %v6612, %v6899
      %v6905 = vunpack.c.l.b16 %v6894
      %v6906 = vunpack.c.l.b16 %v6895
      %v6907 = vunpack.c.l.b16 %v6896
      %v6908 = vunpack.c.l.b16 %v6897
      %v6909 = vpack.c.b16 %v6906, %v6905
      %v6910 = vpack.c.b16 %v6908, %v6907
      %v6914 = vsel %vm5119, %v6900, 0
      %6916 = vmatprep.subr.bf16.mxu0 0
      %6917 = vmatpush1.bf16.msra.mxu0 %v6909
      %6918 = vmatprep.subr.bf16.mxu0 0
      %6919 = vmatpush1.bf16.msra.mxu0 %v6910
      %6920 = vmatprep.subr.bf16.mxu0 0
      %6921 = vmatpush1.bf16.msra.mxu0 0
      %6922 = vmatprep.subr.bf16.mxu0 0
      %6923 = vmatpush1.bf16.msra.mxu0 0
      %6924 = vmatprep.subr.bf16.mxu0 0
      %6925 = vmatpush1.bf16.msra.mxu0 0
      %6926 = vmatprep.subr.bf16.mxu0 0
      %6927 = vmatpush1.bf16.msra.mxu0 0
      %6928 = vmatprep.subr.bf16.mxu0 0
      %6929 = vmatpush1.bf16.msra.mxu0 0
      %6930 = vmatprep.subr.bf16.mxu0 0
      %6931 = vmatpush1.bf16.msra.mxu0 0
      %6932 = vmatprep.subr.bf16.mxu0 0
      %6933 = vmatpush1.bf16.msra.mxu0 0
      %6934 = vmatprep.subr.bf16.mxu0 0
      %6935 = vmatpush1.bf16.msra.mxu0 0
      %6936 = vmatprep.subr.bf16.mxu0 0
      %6937 = vmatpush1.bf16.msra.mxu0 0
      %6938 = vmatprep.subr.bf16.mxu0 0
      %6939 = vmatpush1.bf16.msra.mxu0 0
      %6940 = vmatprep.subr.bf16.mxu0 0
      %6941 = vmatpush1.bf16.msra.mxu0 0
      %6942 = vmatprep.subr.bf16.mxu0 0
      %6943 = vmatpush1.bf16.msra.mxu0 0
      %6944 = vmatprep.subr.bf16.mxu0 0
      %6945 = vmatpush1.bf16.msra.mxu0 0
      %6946 = vmatprep.subr.bf16.mxu0 0
      %6947 = vmatpush1.bf16.msra.mxu0 0
      %6948 = vmatprep.mubr.bf16.mxu0 0
      %6949 = vmatmul.mubr.bf16.gmra.mrb[0].mxu0 %v6630
      %v6950 = vpop.f32.mrb[0].mxu0
      %v6951 = vadd.f32 0.0, %v6950
      %v6952 = vpop.f32.mrb[0].mxu0
      %v6953 = vpop.f32.mrb[0].mxu0
      %v6954 = vadd.f32 0.0, %v6953
      %v6955 = vpop.f32.mrb[0].mxu0
      %6956 = vmatprep.mubr.bf16.mxu0 0
      %6957 = vmatmul.mubr.bf16.gmra.mrb[0].mxu0 %v6633
      %v6958 = vpop.f32.mrb[0].mxu0
      %v6959 = vadd.f32 0.0, %v6958
      %v6960 = vpop.f32.mrb[0].mxu0
      %v6961 = vpop.f32.mrb[0].mxu0
      %v6962 = vadd.f32 0.0, %v6961
      %v6963 = vpop.f32.mrb[0].mxu0
      %6964 = vmatprep.mubr.bf16.mxu0 0
      %6965 = vmatmul.mubr.bf16.gmra.mrb[0].mxu0 %v6636
      %v6966 = vpop.f32.mrb[0].mxu0
      %v6967 = vadd.f32 0.0, %v6966
      %v6968 = vpop.f32.mrb[0].mxu0
      %v6969 = vpop.f32.mrb[0].mxu0
      %v6970 = vadd.f32 0.0, %v6969
      %v6971 = vpop.f32.mrb[0].mxu0
      %6972 = vmatprep.mubr.bf16.mxu0 0
      %6973 = vmatmul.mubr.bf16.gmra.mrb[0].mxu0 %v6639
      %v6974 = vpop.f32.mrb[0].mxu0
      %v6975 = vadd.f32 0.0, %v6974
      %v6976 = vpop.f32.mrb[0].mxu0
      %v6977 = vpop.f32.mrb[0].mxu0
      %v6978 = vadd.f32 0.0, %v6977
      %v6979 = vpop.f32.mrb[0].mxu0
      %6980 = vmatprep.mubr.bf16.mxu0 0
      %6981 = vmatmul.mubr.bf16.gmra.mrb[0].mxu0 %v6642
      %v6982 = vpop.f32.mrb[0].mxu0
      %v6983 = vadd.f32 0.0, %v6982
      %v6984 = vpop.f32.mrb[0].mxu0
      %v6985 = vpop.f32.mrb[0].mxu0
      %v6986 = vadd.f32 0.0, %v6985
      %v6987 = vpop.f32.mrb[0].mxu0
      %6988 = vmatprep.mubr.bf16.mxu0 0
      %6989 = vmatmul.mubr.bf16.gmra.mrb[0].mxu0 %v6645
      %v6990 = vpop.f32.mrb[0].mxu0
      %v6991 = vadd.f32 0.0, %v6990
      %v6992 = vpop.f32.mrb[0].mxu0
      %v6993 = vpop.f32.mrb[0].mxu0
      %v6994 = vadd.f32 0.0, %v6993
      %v6995 = vpop.f32.mrb[0].mxu0
      %6996 = vmatprep.mubr.bf16.mxu0 0
      %6997 = vmatmul.mubr.bf16.gmra.mrb[0].mxu0 %v6648
      %v6998 = vpop.f32.mrb[0].mxu0
      %v6999 = vadd.f32 0.0, %v6998
      %v7000 = vpop.f32.mrb[0].mxu0
      %v7001 = vpop.f32.mrb[0].mxu0
      %v7002 = vadd.f32 0.0, %v7001
      %v7003 = vpop.f32.mrb[0].mxu0
      %7004 = vmatprep.mubr.bf16.mxu0 0
      %7005 = vmatmul.mubr.bf16.gmra.mrb[0].mxu0 %v6651
      %v7006 = vpop.f32.mrb[0].mxu0
      %v7007 = vadd.f32 0.0, %v7006
      %v7008 = vpop.f32.mrb[0].mxu0
      %v7009 = vpop.f32.mrb[0].mxu0
      %v7010 = vadd.f32 0.0, %v7009
      %v7011 = vpop.f32.mrb[0].mxu0
      %7012 = vmatprep.mubr.bf16.mxu0 0
      %7013 = vmatmul.mubr.bf16.gmra.mrb[0].mxu0 %v6654
      %v7014 = vpop.f32.mrb[0].mxu0
      %v7015 = vadd.f32 0.0, %v7014
      %v7016 = vpop.f32.mrb[0].mxu0
      %v7017 = vpop.f32.mrb[0].mxu0
      %v7018 = vadd.f32 0.0, %v7017
      %v7019 = vpop.f32.mrb[0].mxu0
      %7020 = vmatprep.mubr.bf16.mxu0 0
      %7021 = vmatmul.mubr.bf16.gmra.mrb[0].mxu0 %v6657
      %v7022 = vpop.f32.mrb[0].mxu0
      %v7023 = vadd.f32 0.0, %v7022
      %v7024 = vpop.f32.mrb[0].mxu0
      %v7025 = vpop.f32.mrb[0].mxu0
      %v7026 = vadd.f32 0.0, %v7025
      %v7027 = vpop.f32.mrb[0].mxu0
      %7028 = vmatprep.mubr.bf16.mxu0 0
      %7029 = vmatmul.mubr.bf16.gmra.mrb[0].mxu0 %v6660
      %v7030 = vpop.f32.mrb[0].mxu0
      %v7031 = vadd.f32 0.0, %v7030
      %v7032 = vpop.f32.mrb[0].mxu0
      %v7033 = vpop.f32.mrb[0].mxu0
      %v7034 = vadd.f32 0.0, %v7033
      %v7035 = vpop.f32.mrb[0].mxu0
      %7036 = vmatprep.mubr.bf16.mxu0 0
      %7037 = vmatmul.mubr.bf16.gmra.mrb[0].mxu0 %v6663
      %v7038 = vpop.f32.mrb[0].mxu0
      %v7039 = vadd.f32 0.0, %v7038
      %v7040 = vpop.f32.mrb[0].mxu0
      %v7041 = vpop.f32.mrb[0].mxu0
      %v7042 = vadd.f32 0.0, %v7041
      %v7043 = vpop.f32.mrb[0].mxu0
      %7044 = vmatprep.mubr.bf16.mxu0 0
      %7045 = vmatmul.mubr.bf16.gmra.mrb[0].mxu0 %v6666
      %v7046 = vpop.f32.mrb[0].mxu0
      %v7047 = vadd.f32 0.0, %v7046
      %v7048 = vpop.f32.mrb[0].mxu0
      %v7049 = vpop.f32.mrb[0].mxu0
      %v7050 = vadd.f32 0.0, %v7049
      %v7051 = vpop.f32.mrb[0].mxu0
      %7052 = vmatprep.mubr.bf16.mxu0 0
      %7053 = vmatmul.mubr.bf16.gmra.mrb[0].mxu0 %v6669
      %v7054 = vpop.f32.mrb[0].mxu0
      %v7055 = vadd.f32 0.0, %v7054
      %v7056 = vpop.f32.mrb[0].mxu0
      %v7057 = vpop.f32.mrb[0].mxu0
      %v7058 = vadd.f32 0.0, %v7057
      %v7059 = vpop.f32.mrb[0].mxu0
      %7060 = vmatprep.mubr.bf16.mxu0 0
      %7061 = vmatmul.mubr.bf16.gmra.mrb[0].mxu0 %v6672
      %v7062 = vpop.f32.mrb[0].mxu0
      %v7063 = vadd.f32 0.0, %v7062
      %v7064 = vpop.f32.mrb[0].mxu0
      %v7065 = vpop.f32.mrb[0].mxu0
      %v7066 = vadd.f32 0.0, %v7065
      %v7067 = vpop.f32.mrb[0].mxu0
      %7068 = vmatprep.mubr.bf16.mxu0 0
      %7069 = vmatmul.mubr.bf16.gmra.mrb[0].mxu0 %v6675
      %v7070 = vpop.f32.mrb[0].mxu0
      %v7071 = vadd.f32 0.0, %v7070
      %v7072 = vpop.f32.mrb[0].mxu0
      %v7073 = vpop.f32.mrb[0].mxu0
      %v7074 = vadd.f32 0.0, %v7073
      %v7075 = vpop.f32.mrb[0].mxu0
      %7076 = vmatprep.mubr.bf16.mxu0 0
      %7077 = vmatmul.mubr.bf16.gmra.mrb[0].mxu0 %v6678
      %v7078 = vpop.f32.mrb[0].mxu0
      %v7079 = vadd.f32 0.0, %v7078
      %v7080 = vpop.f32.mrb[0].mxu0
      %v7081 = vpop.f32.mrb[0].mxu0
      %v7082 = vadd.f32 0.0, %v7081
      %v7083 = vpop.f32.mrb[0].mxu0
      %7084 = vmatprep.mubr.bf16.mxu0 0
      %7085 = vmatmul.mubr.bf16.gmra.mrb[0].mxu0 %v6914
      %v7086 = vpop.f32.mrb[0].mxu0
      %v7087 = vadd.f32 0.0, %v7086
      %v7088 = vpop.f32.mrb[0].mxu0
      %v7089 = vpop.f32.mrb[0].mxu0
      %v7090 = vadd.f32 0.0, %v7089
      %v7091 = vpop.f32.mrb[0].mxu0
      %7092 = vdwg.mxu0
      %v7093 = vadd.f32 %v6857, %v6951
      %v7094 = vadd.f32 %v6858, %v6954
      %v7095 = vadd.f32 %v6859, %v6959
      %v7096 = vadd.f32 %v6860, %v6962
      %v7097 = vadd.f32 %v6861, %v6967
      %v7098 = vadd.f32 %v6862, %v6970
      %v7099 = vadd.f32 %v6863, %v6975
      %v7100 = vadd.f32 %v6864, %v6978
      %v7101 = vadd.f32 %v6865, %v6983
      %v7102 = vadd.f32 %v6866, %v6986
      %v7103 = vadd.f32 %v6867, %v6991
      %v7104 = vadd.f32 %v6868, %v6994
      %v7105 = vadd.f32 %v6869, %v6999
      %v7106 = vadd.f32 %v6870, %v7002
      %v7107 = vadd.f32 %v6871, %v7007
      %v7108 = vadd.f32 %v6872, %v7010
      %v7109 = vadd.f32 %v6873, %v7015
      %v7110 = vadd.f32 %v6874, %v7018
      %v7111 = vadd.f32 %v6875, %v7023
      %v7112 = vadd.f32 %v6876, %v7026
      %v7113 = vadd.f32 %v6877, %v7031
      %v7114 = vadd.f32 %v6878, %v7034
      %v7115 = vadd.f32 %v6879, %v7039
      %v7116 = vadd.f32 %v6880, %v7042
      %v7117 = vadd.f32 %v6881, %v7047
      %v7118 = vadd.f32 %v6882, %v7050
      %v7119 = vadd.f32 %v6883, %v7055
      %v7120 = vadd.f32 %v6884, %v7058
      %v7121 = vadd.f32 %v6885, %v7063
      %v7122 = vadd.f32 %v6886, %v7066
      %v7123 = vadd.f32 %v6887, %v7071
      %v7124 = vadd.f32 %v6888, %v7074
      %v7125 = vadd.f32 %v6889, %v7079
      %v7126 = vadd.f32 %v6890, %v7082
      %v7127 = vadd.f32 %v6891, %v7087
      %v7128 = vadd.f32 %v6892, %v7090
      %s7129 = scalar_lea.vmem %s8, 112
      %v7130 = vld [vmem:[%s7129] sm:$0xf]
      %v7131 = vld [vmem:[%s7129 + $0x4] sm:$0xf]
      %v7132 = vld [vmem:[%s7129 + $0x8] sm:$0xf]
      %v7133 = vld [vmem:[%s7129 + $0xc] sm:$0xf]
      %vm7134 = vsmask.f32 3328
      %v7135 = vrot.slane %v4955, 4
      %v7136 = vrot.slane %v4958, 5
      %v7137 = vor.u32 %v7135, %v7136
      %v7138 = vrot.slane %v4964, 4
      %v7139 = vrot.slane %v4967, 5
      %v7140 = vor.u32 %v7138, %v7139
      %v7141 = vsel %vm7134, %v7137, %v7140
      %v7142 = vrot.slane %v4973, 4
      %v7143 = vrot.slane %v4976, 5
      %v7144 = vor.u32 %v7142, %v7143
      %v7145 = vsel %vm7134, %v7140, %v7144
      %v7146 = vrot.slane %v4982, 4
      %v7147 = vrot.slane %v4985, 5
      %v7148 = vor.u32 %v7146, %v7147
      %v7149 = vsel %vm7134, %v7144, %v7148
      %v7150 = vrot.slane %v4991, 4
      %v7151 = vrot.slane %v4994, 5
      %v7152 = vor.u32 %v7150, %v7151
      %v7153 = vsel %vm7134, %v7148, %v7152
      %v7154 = vrot.slane %v5000, 4
      %v7155 = vrot.slane %v5003, 5
      %v7156 = vor.u32 %v7154, %v7155
      %v7157 = vsel %vm7134, %v7152, %v7156
      %v7158 = vrot.slane %v5009, 4
      %v7159 = vrot.slane %v5012, 5
      %v7160 = vor.u32 %v7158, %v7159
      %v7161 = vsel %vm7134, %v7156, %v7160
      %v7162 = vrot.slane %v5018, 4
      %v7163 = vrot.slane %v5021, 5
      %v7164 = vor.u32 %v7162, %v7163
      %v7165 = vsel %vm7134, %v7160, %v7164
      %v7166 = vrot.slane %v5027, 4
      %v7167 = vrot.slane %v5030, 5
      %v7168 = vor.u32 %v7166, %v7167
      %v7169 = vsel %vm7134, %v7164, %v7168
      %v7170 = vrot.slane %v5036, 4
      %v7171 = vrot.slane %v5039, 5
      %v7172 = vor.u32 %v7170, %v7171
      %v7173 = vsel %vm7134, %v7168, %v7172
      %v7174 = vrot.slane %v5045, 4
      %v7175 = vrot.slane %v5048, 5
      %v7176 = vor.u32 %v7174, %v7175
      %v7177 = vsel %vm7134, %v7172, %v7176
      %v7178 = vrot.slane %v5054, 4
      %v7179 = vrot.slane %v5057, 5
      %v7180 = vor.u32 %v7178, %v7179
      %v7181 = vsel %vm7134, %v7176, %v7180
      %v7182 = vrot.slane %v5063, 4
      %v7183 = vrot.slane %v5066, 5
      %v7184 = vor.u32 %v7182, %v7183
      %v7185 = vsel %vm7134, %v7180, %v7184
      %v7186 = vrot.slane %v5072, 4
      %v7187 = vrot.slane %v5075, 5
      %v7188 = vor.u32 %v7186, %v7187
      %v7189 = vsel %vm7134, %v7184, %v7188
      %v7190 = vrot.slane %v5081, 4
      %v7191 = vrot.slane %v5084, 5
      %v7192 = vor.u32 %v7190, %v7191
      %v7193 = vsel %vm7134, %v7188, %v7192
      %v7194 = vrot.slane %v5090, 4
      %v7195 = vrot.slane %v5093, 5
      %v7196 = vor.u32 %v7194, %v7195
      %v7197 = vsel %vm7134, %v7192, %v7196
      %v7198 = vrot.slane %v5099, 4
      %v7199 = vrot.slane %v5102, 5
      %v7200 = vor.u32 %v7198, %v7199
      %v7201 = vsel %vm7134, %v7196, %v7200
      %v7202 = vrot.slane %v6284, 4
      %v7203 = vrot.slane %v6287, 5
      %v7204 = vor.u32 %v7202, %v7203
      %v7205 = vsel %vm7134, %v7200, %v7204
      %v7207 = vshrl.u32 %v4927, 16
      %v7209 = vrot.slane %v7207, 4
      %v7210 = vshll.u32 %v4927, 16
      %v7212 = vrot.slane %v7210, 5
      %v7213 = vor.u32 %v7209, %v7212
      %v7214 = vsel %vm7134, %v7204, %v7213
      %v7219 = vunpack.c.l.b16 %v7130
      %v7220 = vunpack.c.l.b16 %v7131
      %v7221 = vunpack.c.l.b16 %v7132
      %v7222 = vunpack.c.l.b16 %v7133
      %v7223 = vpack.c.b16 %v7220, %v7219
      %v7224 = vpack.c.b16 %v7222, %v7221
      %v7228 = vsel %vm5119, %v7141, 0
      %v7231 = vsel %vm5119, %v7145, 0
      %v7234 = vsel %vm5119, %v7149, 0
      %v7237 = vsel %vm5119, %v7153, 0
      %v7240 = vsel %vm5119, %v7157, 0
      %v7243 = vsel %vm5119, %v7161, 0
      %v7246 = vsel %vm5119, %v7165, 0
      %v7249 = vsel %vm5119, %v7169, 0
      %v7252 = vsel %vm5119, %v7173, 0
      %v7255 = vsel %vm5119, %v7177, 0
      %v7258 = vsel %vm5119, %v7181, 0
      %v7261 = vsel %vm5119, %v7185, 0
      %v7264 = vsel %vm5119, %v7189, 0
      %v7267 = vsel %vm5119, %v7193, 0
      %v7270 = vsel %vm5119, %v7197, 0
      %v7273 = vsel %vm5119, %v7201, 0
      %v7276 = vsel %vm5119, %v7205, 0
      %v7279 = vsel %vm5119, %v7214, 0
      %7281 = vmatprep.subr.bf16.mxu0 0
      %7282 = vmatpush1.bf16.msra.mxu0 %v7223
      %7283 = vmatprep.subr.bf16.mxu0 0
      %7284 = vmatpush1.bf16.msra.mxu0 %v7224
      %7285 = vmatprep.subr.bf16.mxu0 0
      %7286 = vmatpush1.bf16.msra.mxu0 0
      %7287 = vmatprep.subr.bf16.mxu0 0
      %7288 = vmatpush1.bf16.msra.mxu0 0
      %7289 = vmatprep.subr.bf16.mxu0 0
      %7290 = vmatpush1.bf16.msra.mxu0 0
      %7291 = vmatprep.subr.bf16.mxu0 0
      %7292 = vmatpush1.bf16.msra.mxu0 0
      %7293 = vmatprep.subr.bf16.mxu0 0
      %7294 = vmatpush1.bf16.msra.mxu0 0
      %7295 = vmatprep.subr.bf16.mxu0 0
      %7296 = vmatpush1.bf16.msra.mxu0 0
      %7297 = vmatprep.subr.bf16.mxu0 0
      %7298 = vmatpush1.bf16.msra.mxu0 0
      %7299 = vmatprep.subr.bf16.mxu0 0
      %7300 = vmatpush1.bf16.msra.mxu0 0
      %7301 = vmatprep.subr.bf16.mxu0 0
      %7302 = vmatpush1.bf16.msra.mxu0 0
      %7303 = vmatprep.subr.bf16.mxu0 0
      %7304 = vmatpush1.bf16.msra.mxu0 0
      %7305 = vmatprep.subr.bf16.mxu0 0
      %7306 = vmatpush1.bf16.msra.mxu0 0
      %7307 = vmatprep.subr.bf16.mxu0 0
      %7308 = vmatpush1.bf16.msra.mxu0 0
      %7309 = vmatprep.subr.bf16.mxu0 0
      %7310 = vmatpush1.bf16.msra.mxu0 0
      %7311 = vmatprep.subr.bf16.mxu0 0
      %7312 = vmatpush1.bf16.msra.mxu0 0
      %7313 = vmatprep.mubr.bf16.mxu0 0
      %7314 = vmatmul.mubr.bf16.gmra.mrb[0].mxu0 %v7228
      %v7315 = vpop.f32.mrb[0].mxu0
      %v7316 = vadd.f32 0.0, %v7315
      %v7317 = vpop.f32.mrb[0].mxu0
      %v7318 = vpop.f32.mrb[0].mxu0
      %v7319 = vadd.f32 0.0, %v7318
      %v7320 = vpop.f32.mrb[0].mxu0
      %7321 = vmatprep.mubr.bf16.mxu0 0
      %7322 = vmatmul.mubr.bf16.gmra.mrb[0].mxu0 %v7231
      %v7323 = vpop.f32.mrb[0].mxu0
      %v7324 = vadd.f32 0.0, %v7323
      %v7325 = vpop.f32.mrb[0].mxu0
      %v7326 = vpop.f32.mrb[0].mxu0
      %v7327 = vadd.f32 0.0, %v7326
      %v7328 = vpop.f32.mrb[0].mxu0
      %7329 = vmatprep.mubr.bf16.mxu0 0
      %7330 = vmatmul.mubr.bf16.gmra.mrb[0].mxu0 %v7234
      %v7331 = vpop.f32.mrb[0].mxu0
      %v7332 = vadd.f32 0.0, %v7331
      %v7333 = vpop.f32.mrb[0].mxu0
      %v7334 = vpop.f32.mrb[0].mxu0
      %v7335 = vadd.f32 0.0, %v7334
      %v7336 = vpop.f32.mrb[0].mxu0
      %7337 = vmatprep.mubr.bf16.mxu0 0
      %7338 = vmatmul.mubr.bf16.gmra.mrb[0].mxu0 %v7237
      %v7339 = vpop.f32.mrb[0].mxu0
      %v7340 = vadd.f32 0.0, %v7339
      %v7341 = vpop.f32.mrb[0].mxu0
      %v7342 = vpop.f32.mrb[0].mxu0
      %v7343 = vadd.f32 0.0, %v7342
      %v7344 = vpop.f32.mrb[0].mxu0
      %7345 = vmatprep.mubr.bf16.mxu0 0
      %7346 = vmatmul.mubr.bf16.gmra.mrb[0].mxu0 %v7240
      %v7347 = vpop.f32.mrb[0].mxu0
      %v7348 = vadd.f32 0.0, %v7347
      %v7349 = vpop.f32.mrb[0].mxu0
      %v7350 = vpop.f32.mrb[0].mxu0
      %v7351 = vadd.f32 0.0, %v7350
      %v7352 = vpop.f32.mrb[0].mxu0
      %7353 = vmatprep.mubr.bf16.mxu0 0
      %7354 = vmatmul.mubr.bf16.gmra.mrb[0].mxu0 %v7243
      %v7355 = vpop.f32.mrb[0].mxu0
      %v7356 = vadd.f32 0.0, %v7355
      %v7357 = vpop.f32.mrb[0].mxu0
      %v7358 = vpop.f32.mrb[0].mxu0
      %v7359 = vadd.f32 0.0, %v7358
      %v7360 = vpop.f32.mrb[0].mxu0
      %7361 = vmatprep.mubr.bf16.mxu0 0
      %7362 = vmatmul.mubr.bf16.gmra.mrb[0].mxu0 %v7246
      %v7363 = vpop.f32.mrb[0].mxu0
      %v7364 = vadd.f32 0.0, %v7363
      %v7365 = vpop.f32.mrb[0].mxu0
      %v7366 = vpop.f32.mrb[0].mxu0
      %v7367 = vadd.f32 0.0, %v7366
      %v7368 = vpop.f32.mrb[0].mxu0
      %7369 = vmatprep.mubr.bf16.mxu0 0
      %7370 = vmatmul.mubr.bf16.gmra.mrb[0].mxu0 %v7249
      %v7371 = vpop.f32.mrb[0].mxu0
      %v7372 = vadd.f32 0.0, %v7371
      %v7373 = vpop.f32.mrb[0].mxu0
      %v7374 = vpop.f32.mrb[0].mxu0
      %v7375 = vadd.f32 0.0, %v7374
      %v7376 = vpop.f32.mrb[0].mxu0
      %7377 = vmatprep.mubr.bf16.mxu0 0
      %7378 = vmatmul.mubr.bf16.gmra.mrb[0].mxu0 %v7252
      %v7379 = vpop.f32.mrb[0].mxu0
      %v7380 = vadd.f32 0.0, %v7379
      %v7381 = vpop.f32.mrb[0].mxu0
      %v7382 = vpop.f32.mrb[0].mxu0
      %v7383 = vadd.f32 0.0, %v7382
      %v7384 = vpop.f32.mrb[0].mxu0
      %7385 = vmatprep.mubr.bf16.mxu0 0
      %7386 = vmatmul.mubr.bf16.gmra.mrb[0].mxu0 %v7255
      %v7387 = vpop.f32.mrb[0].mxu0
      %v7388 = vadd.f32 0.0, %v7387
      %v7389 = vpop.f32.mrb[0].mxu0
      %v7390 = vpop.f32.mrb[0].mxu0
      %v7391 = vadd.f32 0.0, %v7390
      %v7392 = vpop.f32.mrb[0].mxu0
      %7393 = vmatprep.mubr.bf16.mxu0 0
      %7394 = vmatmul.mubr.bf16.gmra.mrb[0].mxu0 %v7258
      %v7395 = vpop.f32.mrb[0].mxu0
      %v7396 = vadd.f32 0.0, %v7395
      %v7397 = vpop.f32.mrb[0].mxu0
      %v7398 = vpop.f32.mrb[0].mxu0
      %v7399 = vadd.f32 0.0, %v7398
      %v7400 = vpop.f32.mrb[0].mxu0
      %7401 = vmatprep.mubr.bf16.mxu0 0
      %7402 = vmatmul.mubr.bf16.gmra.mrb[0].mxu0 %v7261
      %v7403 = vpop.f32.mrb[0].mxu0
      %v7404 = vadd.f32 0.0, %v7403
      %v7405 = vpop.f32.mrb[0].mxu0
      %v7406 = vpop.f32.mrb[0].mxu0
      %v7407 = vadd.f32 0.0, %v7406
      %v7408 = vpop.f32.mrb[0].mxu0
      %7409 = vmatprep.mubr.bf16.mxu0 0
      %7410 = vmatmul.mubr.bf16.gmra.mrb[0].mxu0 %v7264
      %v7411 = vpop.f32.mrb[0].mxu0
      %v7412 = vadd.f32 0.0, %v7411
      %v7413 = vpop.f32.mrb[0].mxu0
      %v7414 = vpop.f32.mrb[0].mxu0
      %v7415 = vadd.f32 0.0, %v7414
      %v7416 = vpop.f32.mrb[0].mxu0
      %7417 = vmatprep.mubr.bf16.mxu0 0
      %7418 = vmatmul.mubr.bf16.gmra.mrb[0].mxu0 %v7267
      %v7419 = vpop.f32.mrb[0].mxu0
      %v7420 = vadd.f32 0.0, %v7419
      %v7421 = vpop.f32.mrb[0].mxu0
      %v7422 = vpop.f32.mrb[0].mxu0
      %v7423 = vadd.f32 0.0, %v7422
      %v7424 = vpop.f32.mrb[0].mxu0
      %7425 = vmatprep.mubr.bf16.mxu0 0
      %7426 = vmatmul.mubr.bf16.gmra.mrb[0].mxu0 %v7270
      %v7427 = vpop.f32.mrb[0].mxu0
      %v7428 = vadd.f32 0.0, %v7427
      %v7429 = vpop.f32.mrb[0].mxu0
      %v7430 = vpop.f32.mrb[0].mxu0
      %v7431 = vadd.f32 0.0, %v7430
      %v7432 = vpop.f32.mrb[0].mxu0
      %7433 = vmatprep.mubr.bf16.mxu0 0
      %7434 = vmatmul.mubr.bf16.gmra.mrb[0].mxu0 %v7273
      %v7435 = vpop.f32.mrb[0].mxu0
      %v7436 = vadd.f32 0.0, %v7435
      %v7437 = vpop.f32.mrb[0].mxu0
      %v7438 = vpop.f32.mrb[0].mxu0
      %v7439 = vadd.f32 0.0, %v7438
      %v7440 = vpop.f32.mrb[0].mxu0
      %7441 = vmatprep.mubr.bf16.mxu0 0
      %7442 = vmatmul.mubr.bf16.gmra.mrb[0].mxu0 %v7276
      %v7443 = vpop.f32.mrb[0].mxu0
      %v7444 = vadd.f32 0.0, %v7443
      %v7445 = vpop.f32.mrb[0].mxu0
      %v7446 = vpop.f32.mrb[0].mxu0
      %v7447 = vadd.f32 0.0, %v7446
      %v7448 = vpop.f32.mrb[0].mxu0
      %7449 = vmatprep.mubr.bf16.mxu0 0
      %7450 = vmatmul.mubr.bf16.gmra.mrb[0].mxu0 %v7279
      %v7451 = vpop.f32.mrb[0].mxu0
      %v7452 = vadd.f32 0.0, %v7451
      %v7453 = vpop.f32.mrb[0].mxu0
      %v7454 = vpop.f32.mrb[0].mxu0
      %v7455 = vadd.f32 0.0, %v7454
      %v7456 = vpop.f32.mrb[0].mxu0
      %7457 = vdwg.mxu0
      %v7458 = vadd.f32 %v7093, %v7316
      %v7459 = vadd.f32 %v7094, %v7319
      %v7460 = vadd.f32 %v7095, %v7324
      %v7461 = vadd.f32 %v7096, %v7327
      %v7462 = vadd.f32 %v7097, %v7332
      %v7463 = vadd.f32 %v7098, %v7335
      %v7464 = vadd.f32 %v7099, %v7340
      %v7465 = vadd.f32 %v7100, %v7343
      %v7466 = vadd.f32 %v7101, %v7348
      %v7467 = vadd.f32 %v7102, %v7351
      %v7468 = vadd.f32 %v7103, %v7356
      %v7469 = vadd.f32 %v7104, %v7359
      %v7470 = vadd.f32 %v7105, %v7364
      %v7471 = vadd.f32 %v7106, %v7367
      %v7472 = vadd.f32 %v7107, %v7372
      %v7473 = vadd.f32 %v7108, %v7375
      %v7474 = vadd.f32 %v7109, %v7380
      %v7475 = vadd.f32 %v7110, %v7383
      %v7476 = vadd.f32 %v7111, %v7388
      %v7477 = vadd.f32 %v7112, %v7391
      %v7478 = vadd.f32 %v7113, %v7396
      %v7479 = vadd.f32 %v7114, %v7399
      %v7480 = vadd.f32 %v7115, %v7404
      %v7481 = vadd.f32 %v7116, %v7407
      %v7482 = vadd.f32 %v7117, %v7412
      %v7483 = vadd.f32 %v7118, %v7415
      %v7484 = vadd.f32 %v7119, %v7420
      %v7485 = vadd.f32 %v7120, %v7423
      %v7486 = vadd.f32 %v7121, %v7428
      %v7487 = vadd.f32 %v7122, %v7431
      %v7488 = vadd.f32 %v7123, %v7436
      %v7489 = vadd.f32 %v7124, %v7439
      %v7490 = vadd.f32 %v7125, %v7444
      %v7491 = vadd.f32 %v7126, %v7447
      %v7492 = vadd.f32 %v7127, %v7452
      %v7493 = vadd.f32 %v7128, %v7455
      %s7494 = scalar_lea.vmem %s8, 128
      %v7495 = vld [vmem:[%s7494] sm:$0xf]
      %v7496 = vld [vmem:[%s7494 + $0x4] sm:$0xf]
      %v7497 = vld [vmem:[%s7494 + $0x8] sm:$0xf]
      %v7498 = vld [vmem:[%s7494 + $0xc] sm:$0xf]
      %vm7499 = vcmask 1042432
      %v7500 = vrot.slane %v4909, 5
      %v7501 = vrot.slane %v4910, 5
      %v7502 = vsel %vm7499, %v7500, %v7501
      %v7503 = vrot.slane %v4911, 5
      %v7504 = vsel %vm7499, %v7501, %v7503
      %v7505 = vrot.slane %v4912, 5
      %v7506 = vsel %vm7499, %v7503, %v7505
      %v7507 = vrot.slane %v4913, 5
      %v7508 = vsel %vm7499, %v7505, %v7507
      %v7509 = vrot.slane %v4914, 5
      %v7510 = vsel %vm7499, %v7507, %v7509
      %v7511 = vrot.slane %v4915, 5
      %v7512 = vsel %vm7499, %v7509, %v7511
      %v7513 = vrot.slane %v4916, 5
      %v7514 = vsel %vm7499, %v7511, %v7513
      %v7515 = vrot.slane %v4917, 5
      %v7516 = vsel %vm7499, %v7513, %v7515
      %v7517 = vrot.slane %v4918, 5
      %v7518 = vsel %vm7499, %v7515, %v7517
      %v7519 = vrot.slane %v4919, 5
      %v7520 = vsel %vm7499, %v7517, %v7519
      %v7521 = vrot.slane %v4920, 5
      %v7522 = vsel %vm7499, %v7519, %v7521
      %v7523 = vrot.slane %v4921, 5
      %v7524 = vsel %vm7499, %v7521, %v7523
      %v7525 = vrot.slane %v4922, 5
      %v7526 = vsel %vm7499, %v7523, %v7525
      %v7527 = vrot.slane %v4923, 5
      %v7528 = vsel %vm7499, %v7525, %v7527
      %v7529 = vrot.slane %v4924, 5
      %v7530 = vsel %vm7499, %v7527, %v7529
      %v7531 = vrot.slane %v4925, 5
      %v7532 = vsel %vm7499, %v7529, %v7531
      %v7533 = vrot.slane %v4926, 5
      %v7534 = vsel %vm7499, %v7531, %v7533
      %v7535 = vrot.slane %v4927, 5
      %v7536 = vsel %vm7499, %v7533, %v7535
      %v7541 = vunpack.c.l.b16 %v7495
      %v7542 = vunpack.c.l.b16 %v7496
      %v7543 = vunpack.c.l.b16 %v7497
      %v7544 = vunpack.c.l.b16 %v7498
      %v7545 = vpack.c.b16 %v7542, %v7541
      %v7546 = vpack.c.b16 %v7544, %v7543
      %v7550 = vsel %vm5119, %v7502, 0
      %v7553 = vsel %vm5119, %v7504, 0
      %v7556 = vsel %vm5119, %v7506, 0
      %v7559 = vsel %vm5119, %v7508, 0
      %v7562 = vsel %vm5119, %v7510, 0
      %v7565 = vsel %vm5119, %v7512, 0
      %v7568 = vsel %vm5119, %v7514, 0
      %v7571 = vsel %vm5119, %v7516, 0
      %v7574 = vsel %vm5119, %v7518, 0
      %v7577 = vsel %vm5119, %v7520, 0
      %v7580 = vsel %vm5119, %v7522, 0
      %v7583 = vsel %vm5119, %v7524, 0
      %v7586 = vsel %vm5119, %v7526, 0
      %v7589 = vsel %vm5119, %v7528, 0
      %v7592 = vsel %vm5119, %v7530, 0
      %v7595 = vsel %vm5119, %v7532, 0
      %v7598 = vsel %vm5119, %v7534, 0
      %v7601 = vsel %vm5119, %v7536, 0
      %7603 = vmatprep.subr.bf16.mxu0 0
      %7604 = vmatpush1.bf16.msra.mxu0 %v7545
      %7605 = vmatprep.subr.bf16.mxu0 0
      %7606 = vmatpush1.bf16.msra.mxu0 %v7546
      %7607 = vmatprep.subr.bf16.mxu0 0
      %7608 = vmatpush1.bf16.msra.mxu0 0
      %7609 = vmatprep.subr.bf16.mxu0 0
      %7610 = vmatpush1.bf16.msra.mxu0 0
      %7611 = vmatprep.subr.bf16.mxu0 0
      %7612 = vmatpush1.bf16.msra.mxu0 0
      %7613 = vmatprep.subr.bf16.mxu0 0
      %7614 = vmatpush1.bf16.msra.mxu0 0
      %7615 = vmatprep.subr.bf16.mxu0 0
      %7616 = vmatpush1.bf16.msra.mxu0 0
      %7617 = vmatprep.subr.bf16.mxu0 0
      %7618 = vmatpush1.bf16.msra.mxu0 0
      %7619 = vmatprep.subr.bf16.mxu0 0
      %7620 = vmatpush1.bf16.msra.mxu0 0
      %7621 = vmatprep.subr.bf16.mxu0 0
      %7622 = vmatpush1.bf16.msra.mxu0 0
      %7623 = vmatprep.subr.bf16.mxu0 0
      %7624 = vmatpush1.bf16.msra.mxu0 0
      %7625 = vmatprep.subr.bf16.mxu0 0
      %7626 = vmatpush1.bf16.msra.mxu0 0
      %7627 = vmatprep.subr.bf16.mxu0 0
      %7628 = vmatpush1.bf16.msra.mxu0 0
      %7629 = vmatprep.subr.bf16.mxu0 0
      %7630 = vmatpush1.bf16.msra.mxu0 0
      %7631 = vmatprep.subr.bf16.mxu0 0
      %7632 = vmatpush1.bf16.msra.mxu0 0
      %7633 = vmatprep.subr.bf16.mxu0 0
      %7634 = vmatpush1.bf16.msra.mxu0 0
      %7635 = vmatprep.mubr.bf16.mxu0 0
      %7636 = vmatmul.mubr.bf16.gmra.mrb[0].mxu0 %v7550
      %v7637 = vpop.f32.mrb[0].mxu0
      %v7638 = vadd.f32 0.0, %v7637
      %v7639 = vpop.f32.mrb[0].mxu0
      %v7640 = vpop.f32.mrb[0].mxu0
      %v7641 = vadd.f32 0.0, %v7640
      %v7642 = vpop.f32.mrb[0].mxu0
      %7643 = vmatprep.mubr.bf16.mxu0 0
      %7644 = vmatmul.mubr.bf16.gmra.mrb[0].mxu0 %v7553
      %v7645 = vpop.f32.mrb[0].mxu0
      %v7646 = vadd.f32 0.0, %v7645
      %v7647 = vpop.f32.mrb[0].mxu0
      %v7648 = vpop.f32.mrb[0].mxu0
      %v7649 = vadd.f32 0.0, %v7648
      %v7650 = vpop.f32.mrb[0].mxu0
      %7651 = vmatprep.mubr.bf16.mxu0 0
      %7652 = vmatmul.mubr.bf16.gmra.mrb[0].mxu0 %v7556
      %v7653 = vpop.f32.mrb[0].mxu0
      %v7654 = vadd.f32 0.0, %v7653
      %v7655 = vpop.f32.mrb[0].mxu0
      %v7656 = vpop.f32.mrb[0].mxu0
      %v7657 = vadd.f32 0.0, %v7656
      %v7658 = vpop.f32.mrb[0].mxu0
      %7659 = vmatprep.mubr.bf16.mxu0 0
      %7660 = vmatmul.mubr.bf16.gmra.mrb[0].mxu0 %v7559
      %v7661 = vpop.f32.mrb[0].mxu0
      %v7662 = vadd.f32 0.0, %v7661
      %v7663 = vpop.f32.mrb[0].mxu0
      %v7664 = vpop.f32.mrb[0].mxu0
      %v7665 = vadd.f32 0.0, %v7664
      %v7666 = vpop.f32.mrb[0].mxu0
      %7667 = vmatprep.mubr.bf16.mxu0 0
      %7668 = vmatmul.mubr.bf16.gmra.mrb[0].mxu0 %v7562
      %v7669 = vpop.f32.mrb[0].mxu0
      %v7670 = vadd.f32 0.0, %v7669
      %v7671 = vpop.f32.mrb[0].mxu0
      %v7672 = vpop.f32.mrb[0].mxu0
      %v7673 = vadd.f32 0.0, %v7672
      %v7674 = vpop.f32.mrb[0].mxu0
      %7675 = vmatprep.mubr.bf16.mxu0 0
      %7676 = vmatmul.mubr.bf16.gmra.mrb[0].mxu0 %v7565
      %v7677 = vpop.f32.mrb[0].mxu0
      %v7678 = vadd.f32 0.0, %v7677
      %v7679 = vpop.f32.mrb[0].mxu0
      %v7680 = vpop.f32.mrb[0].mxu0
      %v7681 = vadd.f32 0.0, %v7680
      %v7682 = vpop.f32.mrb[0].mxu0
      %7683 = vmatprep.mubr.bf16.mxu0 0
      %7684 = vmatmul.mubr.bf16.gmra.mrb[0].mxu0 %v7568
      %v7685 = vpop.f32.mrb[0].mxu0
      %v7686 = vadd.f32 0.0, %v7685
      %v7687 = vpop.f32.mrb[0].mxu0
      %v7688 = vpop.f32.mrb[0].mxu0
      %v7689 = vadd.f32 0.0, %v7688
      %v7690 = vpop.f32.mrb[0].mxu0
      %7691 = vmatprep.mubr.bf16.mxu0 0
      %7692 = vmatmul.mubr.bf16.gmra.mrb[0].mxu0 %v7571
      %v7693 = vpop.f32.mrb[0].mxu0
      %v7694 = vadd.f32 0.0, %v7693
      %v7695 = vpop.f32.mrb[0].mxu0
      %v7696 = vpop.f32.mrb[0].mxu0
      %v7697 = vadd.f32 0.0, %v7696
      %v7698 = vpop.f32.mrb[0].mxu0
      %7699 = vmatprep.mubr.bf16.mxu0 0
      %7700 = vmatmul.mubr.bf16.gmra.mrb[0].mxu0 %v7574
      %v7701 = vpop.f32.mrb[0].mxu0
      %v7702 = vadd.f32 0.0, %v7701
      %v7703 = vpop.f32.mrb[0].mxu0
      %v7704 = vpop.f32.mrb[0].mxu0
      %v7705 = vadd.f32 0.0, %v7704
      %v7706 = vpop.f32.mrb[0].mxu0
      %7707 = vmatprep.mubr.bf16.mxu0 0
      %7708 = vmatmul.mubr.bf16.gmra.mrb[0].mxu0 %v7577
      %v7709 = vpop.f32.mrb[0].mxu0
      %v7710 = vadd.f32 0.0, %v7709
      %v7711 = vpop.f32.mrb[0].mxu0
      %v7712 = vpop.f32.mrb[0].mxu0
      %v7713 = vadd.f32 0.0, %v7712
      %v7714 = vpop.f32.mrb[0].mxu0
      %7715 = vmatprep.mubr.bf16.mxu0 0
      %7716 = vmatmul.mubr.bf16.gmra.mrb[0].mxu0 %v7580
      %v7717 = vpop.f32.mrb[0].mxu0
      %v7718 = vadd.f32 0.0, %v7717
      %v7719 = vpop.f32.mrb[0].mxu0
      %v7720 = vpop.f32.mrb[0].mxu0
      %v7721 = vadd.f32 0.0, %v7720
      %v7722 = vpop.f32.mrb[0].mxu0
      %7723 = vmatprep.mubr.bf16.mxu0 0
      %7724 = vmatmul.mubr.bf16.gmra.mrb[0].mxu0 %v7583
      %v7725 = vpop.f32.mrb[0].mxu0
      %v7726 = vadd.f32 0.0, %v7725
      %v7727 = vpop.f32.mrb[0].mxu0
      %v7728 = vpop.f32.mrb[0].mxu0
      %v7729 = vadd.f32 0.0, %v7728
      %v7730 = vpop.f32.mrb[0].mxu0
      %7731 = vmatprep.mubr.bf16.mxu0 0
      %7732 = vmatmul.mubr.bf16.gmra.mrb[0].mxu0 %v7586
      %v7733 = vpop.f32.mrb[0].mxu0
      %v7734 = vadd.f32 0.0, %v7733
      %v7735 = vpop.f32.mrb[0].mxu0
      %v7736 = vpop.f32.mrb[0].mxu0
      %v7737 = vadd.f32 0.0, %v7736
      %v7738 = vpop.f32.mrb[0].mxu0
      %7739 = vmatprep.mubr.bf16.mxu0 0
      %7740 = vmatmul.mubr.bf16.gmra.mrb[0].mxu0 %v7589
      %v7741 = vpop.f32.mrb[0].mxu0
      %v7742 = vadd.f32 0.0, %v7741
      %v7743 = vpop.f32.mrb[0].mxu0
      %v7744 = vpop.f32.mrb[0].mxu0
      %v7745 = vadd.f32 0.0, %v7744
      %v7746 = vpop.f32.mrb[0].mxu0
      %7747 = vmatprep.mubr.bf16.mxu0 0
      %7748 = vmatmul.mubr.bf16.gmra.mrb[0].mxu0 %v7592
      %v7749 = vpop.f32.mrb[0].mxu0
      %v7750 = vadd.f32 0.0, %v7749
      %v7751 = vpop.f32.mrb[0].mxu0
      %v7752 = vpop.f32.mrb[0].mxu0
      %v7753 = vadd.f32 0.0, %v7752
      %v7754 = vpop.f32.mrb[0].mxu0
      %7755 = vmatprep.mubr.bf16.mxu0 0
      %7756 = vmatmul.mubr.bf16.gmra.mrb[0].mxu0 %v7595
      %v7757 = vpop.f32.mrb[0].mxu0
      %v7758 = vadd.f32 0.0, %v7757
      %v7759 = vpop.f32.mrb[0].mxu0
      %v7760 = vpop.f32.mrb[0].mxu0
      %v7761 = vadd.f32 0.0, %v7760
      %v7762 = vpop.f32.mrb[0].mxu0
      %7763 = vmatprep.mubr.bf16.mxu0 0
      %7764 = vmatmul.mubr.bf16.gmra.mrb[0].mxu0 %v7598
      %v7765 = vpop.f32.mrb[0].mxu0
      %v7766 = vadd.f32 0.0, %v7765
      %v7767 = vpop.f32.mrb[0].mxu0
      %v7768 = vpop.f32.mrb[0].mxu0
      %v7769 = vadd.f32 0.0, %v7768
      %v7770 = vpop.f32.mrb[0].mxu0
      %7771 = vmatprep.mubr.bf16.mxu0 0
      %7772 = vmatmul.mubr.bf16.gmra.mrb[0].mxu0 %v7601
      %v7773 = vpop.f32.mrb[0].mxu0
      %v7774 = vadd.f32 0.0, %v7773
      %v7775 = vpop.f32.mrb[0].mxu0
      %v7776 = vpop.f32.mrb[0].mxu0
      %v7777 = vadd.f32 0.0, %v7776
      %v7778 = vpop.f32.mrb[0].mxu0
      %7779 = vdwg.mxu0
      %v7780 = vadd.f32 %v7458, %v7638
      %v7781 = vadd.f32 %v7459, %v7641
      %v7782 = vadd.f32 %v7460, %v7646
      %v7783 = vadd.f32 %v7461, %v7649
      %v7784 = vadd.f32 %v7462, %v7654
      %v7785 = vadd.f32 %v7463, %v7657
      %v7786 = vadd.f32 %v7464, %v7662
      %v7787 = vadd.f32 %v7465, %v7665
      %v7788 = vadd.f32 %v7466, %v7670
      %v7789 = vadd.f32 %v7467, %v7673
      %v7790 = vadd.f32 %v7468, %v7678
      %v7791 = vadd.f32 %v7469, %v7681
      %v7792 = vadd.f32 %v7470, %v7686
      %v7793 = vadd.f32 %v7471, %v7689
      %v7794 = vadd.f32 %v7472, %v7694
      %v7795 = vadd.f32 %v7473, %v7697
      %v7796 = vadd.f32 %v7474, %v7702
      %v7797 = vadd.f32 %v7475, %v7705
      %v7798 = vadd.f32 %v7476, %v7710
      %v7799 = vadd.f32 %v7477, %v7713
      %v7800 = vadd.f32 %v7478, %v7718
      %v7801 = vadd.f32 %v7479, %v7721
      %v7802 = vadd.f32 %v7480, %v7726
      %v7803 = vadd.f32 %v7481, %v7729
      %v7804 = vadd.f32 %v7482, %v7734
      %v7805 = vadd.f32 %v7483, %v7737
      %v7806 = vadd.f32 %v7484, %v7742
      %v7807 = vadd.f32 %v7485, %v7745
      %v7808 = vadd.f32 %v7486, %v7750
      %v7809 = vadd.f32 %v7487, %v7753
      %v7810 = vadd.f32 %v7488, %v7758
      %v7811 = vadd.f32 %v7489, %v7761
      %v7812 = vadd.f32 %v7490, %v7766
      %v7813 = vadd.f32 %v7491, %v7769
      %v7814 = vadd.f32 %v7492, %v7774
      %v7815 = vadd.f32 %v7493, %v7777
      %v7816 = vld [vmem:[%s9] sm:$0x1]
      %v7818 = vlaneseq
      %v7819 = vshrl.u32 %v7818, 7
      %v7820 = vsub.s32 0, %v7819
      %v7821 = vrot.slane %v7816, %v7820
      %v7823 = vadd.f32 %v7780, %v7821
      %v7824 = vadd.f32 %v7781, %v7821
      %v7825 = vadd.f32 %v7782, %v7821
      %v7826 = vadd.f32 %v7783, %v7821
      %v7827 = vadd.f32 %v7784, %v7821
      %v7828 = vadd.f32 %v7785, %v7821
      %v7829 = vadd.f32 %v7786, %v7821
      %v7830 = vadd.f32 %v7787, %v7821
      %v7831 = vadd.f32 %v7788, %v7821
      %v7832 = vadd.f32 %v7789, %v7821
      %v7833 = vadd.f32 %v7790, %v7821
      %v7834 = vadd.f32 %v7791, %v7821
      %v7835 = vadd.f32 %v7792, %v7821
      %v7836 = vadd.f32 %v7793, %v7821
      %v7837 = vadd.f32 %v7794, %v7821
      %v7838 = vadd.f32 %v7795, %v7821
      %v7839 = vadd.f32 %v7796, %v7821
      %v7840 = vadd.f32 %v7797, %v7821
      %v7841 = vadd.f32 %v7798, %v7821
      %v7842 = vadd.f32 %v7799, %v7821
      %v7843 = vadd.f32 %v7800, %v7821
      %v7844 = vadd.f32 %v7801, %v7821
      %v7845 = vadd.f32 %v7802, %v7821
      %v7846 = vadd.f32 %v7803, %v7821
      %v7847 = vadd.f32 %v7804, %v7821
      %v7848 = vadd.f32 %v7805, %v7821
      %v7849 = vadd.f32 %v7806, %v7821
      %v7850 = vadd.f32 %v7807, %v7821
      %v7851 = vadd.f32 %v7808, %v7821
      %v7852 = vadd.f32 %v7809, %v7821
      %v7853 = vadd.f32 %v7810, %v7821
      %v7854 = vadd.f32 %v7811, %v7821
      %v7855 = vadd.f32 %v7812, %v7821
      %v7856 = vadd.f32 %v7813, %v7821
      %v7857 = vadd.f32 %v7814, %v7821
      %v7858 = vadd.f32 %v7815, %v7821
      %v7859 = vld [vmem:[%s3] sm:$0xff]
      %v7860 = vld [vmem:[%s3 + $0x8] sm:$0xff]
      %v7861 = vld [vmem:[%s3 + $0x10] sm:$0xff]
      %v7862 = vld [vmem:[%s3 + $0x18] sm:$0xff]
      %v7863 = vld [vmem:[%s3 + $0x20] sm:$0xff]
      %v7864 = vld [vmem:[%s3 + $0x28] sm:$0xff]
      %v7865 = vld [vmem:[%s3 + $0x30] sm:$0xff]
      %v7866 = vld [vmem:[%s3 + $0x38] sm:$0xff]
      %v7867 = vld [vmem:[%s3 + $0x40] sm:$0xff]
      %v7868 = vld [vmem:[%s3 + $0x48] sm:$0xff]
      %v7869 = vld [vmem:[%s3 + $0x50] sm:$0xff]
      %v7870 = vld [vmem:[%s3 + $0x58] sm:$0xff]
      %v7871 = vld [vmem:[%s3 + $0x60] sm:$0xff]
      %v7872 = vld [vmem:[%s3 + $0x68] sm:$0xff]
      %v7873 = vld [vmem:[%s3 + $0x70] sm:$0xff]
      %v7874 = vld [vmem:[%s3 + $0x78] sm:$0xff]
      %v7875 = vld [vmem:[%s3 + $0x80] sm:$0xff]
      %v7876 = vld [vmem:[%s3 + $0x88] sm:$0xff]
      %v7877 = vld [vmem:[%s3 + $0x90] sm:$0xff]
      %v7878 = vld [vmem:[%s3 + $0x98] sm:$0xff]
      %v7879 = vld [vmem:[%s3 + $0xa0] sm:$0xff]
      %v7880 = vld [vmem:[%s3 + $0xa8] sm:$0xff]
      %v7881 = vld [vmem:[%s3 + $0xb0] sm:$0xff]
      %v7882 = vld [vmem:[%s3 + $0xb8] sm:$0xff]
      %v7883 = vld [vmem:[%s3 + $0xc0] sm:$0xff]
      %v7884 = vld [vmem:[%s3 + $0xc8] sm:$0xff]
      %v7885 = vld [vmem:[%s3 + $0xd0] sm:$0xff]
      %v7886 = vld [vmem:[%s3 + $0xd8] sm:$0xff]
      %v7887 = vld [vmem:[%s3 + $0xe0] sm:$0xff]
      %v7888 = vld [vmem:[%s3 + $0xe8] sm:$0xff]
      %v7889 = vld [vmem:[%s3 + $0xf0] sm:$0xff]
      %v7890 = vld [vmem:[%s3 + $0xf8] sm:$0xff]
      %v7891 = vld [vmem:[%s3 + $0x100] sm:$0xff]
      %v7892 = vld [vmem:[%s3 + $0x108] sm:$0xff]
      %v7893 = vld [vmem:[%s3 + $0x110] sm:$0xff]
      %v7894 = vld [vmem:[%s3 + $0x118] sm:$0xff]
      %7896 = vset.pattern.permute.xlu0 0
      %7897 = vperm.xlu0 %7896, %v7859
      %v7898 = vpop.permute.xlu0 %7897
      %7901 = vset.pattern.permute.xlu0 0
      %7902 = vperm.xlu0 %7901, %v7860
      %v7903 = vpop.permute.xlu0 %7902
      %7906 = vset.pattern.permute.xlu0 0
      %7907 = vperm.xlu0 %7906, %v7861
      %v7908 = vpop.permute.xlu0 %7907
      %7911 = vset.pattern.permute.xlu0 0
      %7912 = vperm.xlu0 %7911, %v7862
      %v7913 = vpop.permute.xlu0 %7912
      %7916 = vset.pattern.permute.xlu0 0
      %7917 = vperm.xlu0 %7916, %v7863
      %v7918 = vpop.permute.xlu0 %7917
      %7921 = vset.pattern.permute.xlu0 0
      %7922 = vperm.xlu0 %7921, %v7864
      %v7923 = vpop.permute.xlu0 %7922
      %7926 = vset.pattern.permute.xlu0 0
      %7927 = vperm.xlu0 %7926, %v7865
      %v7928 = vpop.permute.xlu0 %7927
      %7931 = vset.pattern.permute.xlu0 0
      %7932 = vperm.xlu0 %7931, %v7866
      %v7933 = vpop.permute.xlu0 %7932
      %7936 = vset.pattern.permute.xlu0 0
      %7937 = vperm.xlu0 %7936, %v7867
      %v7938 = vpop.permute.xlu0 %7937
      %7941 = vset.pattern.permute.xlu0 0
      %7942 = vperm.xlu0 %7941, %v7868
      %v7943 = vpop.permute.xlu0 %7942
      %7946 = vset.pattern.permute.xlu0 0
      %7947 = vperm.xlu0 %7946, %v7869
      %v7948 = vpop.permute.xlu0 %7947
      %7951 = vset.pattern.permute.xlu0 0
      %7952 = vperm.xlu0 %7951, %v7870
      %v7953 = vpop.permute.xlu0 %7952
      %7956 = vset.pattern.permute.xlu0 0
      %7957 = vperm.xlu0 %7956, %v7871
      %v7958 = vpop.permute.xlu0 %7957
      %7961 = vset.pattern.permute.xlu0 0
      %7962 = vperm.xlu0 %7961, %v7872
      %v7963 = vpop.permute.xlu0 %7962
      %7966 = vset.pattern.permute.xlu0 0
      %7967 = vperm.xlu0 %7966, %v7873
      %v7968 = vpop.permute.xlu0 %7967
      %7971 = vset.pattern.permute.xlu0 0
      %7972 = vperm.xlu0 %7971, %v7874
      %v7973 = vpop.permute.xlu0 %7972
      %7976 = vset.pattern.permute.xlu0 0
      %7977 = vperm.xlu0 %7976, %v7875
      %v7978 = vpop.permute.xlu0 %7977
      %7981 = vset.pattern.permute.xlu0 0
      %7982 = vperm.xlu0 %7981, %v7876
      %v7983 = vpop.permute.xlu0 %7982
      %7986 = vset.pattern.permute.xlu0 0
      %7987 = vperm.xlu0 %7986, %v7877
      %v7988 = vpop.permute.xlu0 %7987
      %7991 = vset.pattern.permute.xlu0 0
      %7992 = vperm.xlu0 %7991, %v7878
      %v7993 = vpop.permute.xlu0 %7992
      %7996 = vset.pattern.permute.xlu0 0
      %7997 = vperm.xlu0 %7996, %v7879
      %v7998 = vpop.permute.xlu0 %7997
      %8001 = vset.pattern.permute.xlu0 0
      %8002 = vperm.xlu0 %8001, %v7880
      %v8003 = vpop.permute.xlu0 %8002
      %8006 = vset.pattern.permute.xlu0 0
      %8007 = vperm.xlu0 %8006, %v7881
      %v8008 = vpop.permute.xlu0 %8007
      %8011 = vset.pattern.permute.xlu0 0
      %8012 = vperm.xlu0 %8011, %v7882
      %v8013 = vpop.permute.xlu0 %8012
      %8016 = vset.pattern.permute.xlu0 0
      %8017 = vperm.xlu0 %8016, %v7883
      %v8018 = vpop.permute.xlu0 %8017
      %8021 = vset.pattern.permute.xlu0 0
      %8022 = vperm.xlu0 %8021, %v7884
      %v8023 = vpop.permute.xlu0 %8022
      %8026 = vset.pattern.permute.xlu0 0
      %8027 = vperm.xlu0 %8026, %v7885
      %v8028 = vpop.permute.xlu0 %8027
      %8031 = vset.pattern.permute.xlu0 0
      %8032 = vperm.xlu0 %8031, %v7886
      %v8033 = vpop.permute.xlu0 %8032
      %8036 = vset.pattern.permute.xlu0 0
      %8037 = vperm.xlu0 %8036, %v7887
      %v8038 = vpop.permute.xlu0 %8037
      %8041 = vset.pattern.permute.xlu0 0
      %8042 = vperm.xlu0 %8041, %v7888
      %v8043 = vpop.permute.xlu0 %8042
      %8046 = vset.pattern.permute.xlu0 0
      %8047 = vperm.xlu0 %8046, %v7889
      %v8048 = vpop.permute.xlu0 %8047
      %8051 = vset.pattern.permute.xlu0 0
      %8052 = vperm.xlu0 %8051, %v7890
      %v8053 = vpop.permute.xlu0 %8052
      %8056 = vset.pattern.permute.xlu0 0
      %8057 = vperm.xlu0 %8056, %v7891
      %v8058 = vpop.permute.xlu0 %8057
      %8061 = vset.pattern.permute.xlu0 0
      %8062 = vperm.xlu0 %8061, %v7892
      %v8063 = vpop.permute.xlu0 %8062
      %8066 = vset.pattern.permute.xlu0 0
      %8067 = vperm.xlu0 %8066, %v7893
      %v8068 = vpop.permute.xlu0 %8067
      %8071 = vset.pattern.permute.xlu0 0
      %8072 = vperm.xlu0 %8071, %v7894
      %v8073 = vpop.permute.xlu0 %8072
      %v8075 = vmul.f32 %v7823, %v7898
      %v8076 = vmul.f32 %v7824, %v7903
      %v8077 = vmul.f32 %v7825, %v7908
      %v8078 = vmul.f32 %v7826, %v7913
      %v8079 = vmul.f32 %v7827, %v7918
      %v8080 = vmul.f32 %v7828, %v7923
      %v8081 = vmul.f32 %v7829, %v7928
      %v8082 = vmul.f32 %v7830, %v7933
      %v8083 = vmul.f32 %v7831, %v7938
      %v8084 = vmul.f32 %v7832, %v7943
      %v8085 = vmul.f32 %v7833, %v7948
      %v8086 = vmul.f32 %v7834, %v7953
      %v8087 = vmul.f32 %v7835, %v7958
      %v8088 = vmul.f32 %v7836, %v7963
      %v8089 = vmul.f32 %v7837, %v7968
      %v8090 = vmul.f32 %v7838, %v7973
      %v8091 = vmul.f32 %v7839, %v7978
      %v8092 = vmul.f32 %v7840, %v7983
      %v8093 = vmul.f32 %v7841, %v7988
      %v8094 = vmul.f32 %v7842, %v7993
      %v8095 = vmul.f32 %v7843, %v7998
      %v8096 = vmul.f32 %v7844, %v8003
      %v8097 = vmul.f32 %v7845, %v8008
      %v8098 = vmul.f32 %v7846, %v8013
      %v8099 = vmul.f32 %v7847, %v8018
      %v8100 = vmul.f32 %v7848, %v8023
      %v8101 = vmul.f32 %v7849, %v8028
      %v8102 = vmul.f32 %v7850, %v8033
      %v8103 = vmul.f32 %v7851, %v8038
      %v8104 = vmul.f32 %v7852, %v8043
      %v8105 = vmul.f32 %v7853, %v8048
      %v8106 = vmul.f32 %v7854, %v8053
      %v8107 = vmul.f32 %v7855, %v8058
      %v8108 = vmul.f32 %v7856, %v8063
      %v8109 = vmul.f32 %v7857, %v8068
      %v8110 = vmul.f32 %v7858, %v8073
      %v8111 = vsel %vm5119, %v8075, 0.0
      %v8112 = vsel %vm5119, %v8076, 0.0
      %v8113 = vadd.f32 %v8111, %v8112
      %v8114 = vsel %vm5119, %v8077, 0.0
      %v8115 = vadd.f32 %v8113, %v8114
      %v8116 = vsel %vm5119, %v8078, 0.0
      %v8117 = vadd.f32 %v8115, %v8116
      %v8118 = vsel %vm5119, %v8079, 0.0
      %v8119 = vadd.f32 %v8117, %v8118
      %v8120 = vsel %vm5119, %v8080, 0.0
      %v8121 = vadd.f32 %v8119, %v8120
      %v8122 = vsel %vm5119, %v8081, 0.0
      %v8123 = vadd.f32 %v8121, %v8122
      %v8124 = vsel %vm5119, %v8082, 0.0
      %v8125 = vadd.f32 %v8123, %v8124
      %v8126 = vsel %vm5119, %v8083, 0.0
      %v8127 = vadd.f32 %v8125, %v8126
      %v8128 = vsel %vm5119, %v8084, 0.0
      %v8129 = vadd.f32 %v8127, %v8128
      %v8130 = vsel %vm5119, %v8085, 0.0
      %v8131 = vadd.f32 %v8129, %v8130
      %v8132 = vsel %vm5119, %v8086, 0.0
      %v8133 = vadd.f32 %v8131, %v8132
      %v8134 = vsel %vm5119, %v8087, 0.0
      %v8135 = vadd.f32 %v8133, %v8134
      %v8136 = vsel %vm5119, %v8088, 0.0
      %v8137 = vadd.f32 %v8135, %v8136
      %v8138 = vsel %vm5119, %v8089, 0.0
      %v8139 = vadd.f32 %v8137, %v8138
      %v8140 = vsel %vm5119, %v8090, 0.0
      %v8141 = vadd.f32 %v8139, %v8140
      %v8142 = vsel %vm5119, %v8091, 0.0
      %v8143 = vadd.f32 %v8141, %v8142
      %v8144 = vsel %vm5119, %v8092, 0.0
      %v8145 = vadd.f32 %v8143, %v8144
      %v8146 = vsel %vm5119, %v8093, 0.0
      %v8147 = vadd.f32 %v8145, %v8146
      %v8148 = vsel %vm5119, %v8094, 0.0
      %v8149 = vadd.f32 %v8147, %v8148
      %v8150 = vsel %vm5119, %v8095, 0.0
      %v8151 = vadd.f32 %v8149, %v8150
      %v8152 = vsel %vm5119, %v8096, 0.0
      %v8153 = vadd.f32 %v8151, %v8152
      %v8154 = vsel %vm5119, %v8097, 0.0
      %v8155 = vadd.f32 %v8153, %v8154
      %v8156 = vsel %vm5119, %v8098, 0.0
      %v8157 = vadd.f32 %v8155, %v8156
      %v8158 = vsel %vm5119, %v8099, 0.0
      %v8159 = vadd.f32 %v8157, %v8158
      %v8160 = vsel %vm5119, %v8100, 0.0
      %v8161 = vadd.f32 %v8159, %v8160
      %v8162 = vsel %vm5119, %v8101, 0.0
      %v8163 = vadd.f32 %v8161, %v8162
      %v8164 = vsel %vm5119, %v8102, 0.0
      %v8165 = vadd.f32 %v8163, %v8164
      %v8166 = vsel %vm5119, %v8103, 0.0
      %v8167 = vadd.f32 %v8165, %v8166
      %v8168 = vsel %vm5119, %v8104, 0.0
      %v8169 = vadd.f32 %v8167, %v8168
      %v8170 = vsel %vm5119, %v8105, 0.0
      %v8171 = vadd.f32 %v8169, %v8170
      %v8172 = vsel %vm5119, %v8106, 0.0
      %v8173 = vadd.f32 %v8171, %v8172
      %v8174 = vsel %vm5119, %v8107, 0.0
      %v8175 = vadd.f32 %v8173, %v8174
      %v8176 = vsel %vm5119, %v8108, 0.0
      %v8177 = vadd.f32 %v8175, %v8176
      %v8178 = vsel %vm5119, %v8109, 0.0
      %v8179 = vadd.f32 %v8177, %v8178
      %v8180 = vsel %vm5119, %v8110, 0.0
      %v8181 = vadd.f32 %v8179, %v8180
      %v8182 = vrot.slane %v8181, 4
      %v8183 = vadd.f32 %v8181, %v8182
      %v8184 = vrot.slane %v8183, 2
      %v8185 = vadd.f32 %v8183, %v8184
      %v8186 = vrot.slane %v8185, 1
      %v8187 = vadd.f32 %v8185, %v8186
      %v8188 = vmul.f32 %v8187, 0.015625
      %v8189 = vld [vmem:[%s10] sm:$0xff]
      %v8190 = vld [vmem:[%s10 + $0x8] sm:$0xff]
      %v8191 = vld [vmem:[%s10 + $0x10] sm:$0xff]
      %v8192 = vld [vmem:[%s10 + $0x18] sm:$0xff]
      %v8194 = vsel %vm5119, %v8188, 0
      %8196 = vmatprep.subr.mxu0 0.0
      %8197 = vmatpush1.msra.mxu0 %v8189
      %8198 = vmatprep.subr.mxu0 0.0
      %8199 = vmatpush1.msra.mxu0 %v8190
      %8200 = vmatprep.subr.mxu0 0.0
      %8201 = vmatpush1.msra.mxu0 %v8191
      %8202 = vmatprep.subr.mxu0 0.0
      %8203 = vmatpush1.msra.mxu0 %v8192
      %8204 = vmatprep.subr.mxu0 0.0
      %8205 = vmatpush1.msra.mxu0 0.0
      %8206 = vmatprep.subr.mxu0 0.0
      %8207 = vmatpush1.msra.mxu0 0.0
      %8208 = vmatprep.subr.mxu0 0.0
      %8209 = vmatpush1.msra.mxu0 0.0
      %8210 = vmatprep.subr.mxu0 0.0
      %8211 = vmatpush1.msra.mxu0 0.0
      %8212 = vmatprep.subr.mxu0 0.0
      %8213 = vmatpush1.msra.mxu0 0.0
      %8214 = vmatprep.subr.mxu0 0.0
      %8215 = vmatpush1.msra.mxu0 0.0
      %8216 = vmatprep.subr.mxu0 0.0
      %8217 = vmatpush1.msra.mxu0 0.0
      %8218 = vmatprep.subr.mxu0 0.0
      %8219 = vmatpush1.msra.mxu0 0.0
      %8220 = vmatprep.subr.mxu0 0.0
      %8221 = vmatpush1.msra.mxu0 0.0
      %8222 = vmatprep.subr.mxu0 0.0
      %8223 = vmatpush1.msra.mxu0 0.0
      %8224 = vmatprep.subr.mxu0 0.0
      %8225 = vmatpush1.msra.mxu0 0.0
      %8226 = vmatprep.subr.mxu0 0.0
      %8227 = vmatpush1.msra.mxu0 0.0
      %8228 = vmatprep.subr.mxu0 0.0
      %8229 = vmatpush1.msra.mxu0 0.0
      %8230 = vmatprep.subr.mxu0 0.0
      %8231 = vmatpush1.msra.mxu0 0.0
      %8232 = vmatprep.subr.mxu0 0.0
      %8233 = vmatpush1.msra.mxu0 0.0
      %8234 = vmatprep.subr.mxu0 0.0
      %8235 = vmatpush1.msra.mxu0 0.0
      %8236 = vmatprep.subr.mxu0 0.0
      %8237 = vmatpush1.msra.mxu0 0.0
      %8238 = vmatprep.subr.mxu0 0.0
      %8239 = vmatpush1.msra.mxu0 0.0
      %8240 = vmatprep.subr.mxu0 0.0
      %8241 = vmatpush1.msra.mxu0 0.0
      %8242 = vmatprep.subr.mxu0 0.0
      %8243 = vmatpush1.msra.mxu0 0.0
      %8244 = vmatprep.subr.mxu0 0.0
      %8245 = vmatpush1.msra.mxu0 0.0
      %8246 = vmatprep.subr.mxu0 0.0
      %8247 = vmatpush1.msra.mxu0 0.0
      %8248 = vmatprep.subr.mxu0 0.0
      %8249 = vmatpush1.msra.mxu0 0.0
      %8250 = vmatprep.subr.mxu0 0.0
      %8251 = vmatpush1.msra.mxu0 0.0
      %8252 = vmatprep.subr.mxu0 0.0
      %8253 = vmatpush1.msra.mxu0 0.0
      %8254 = vmatprep.subr.mxu0 0.0
      %8255 = vmatpush1.msra.mxu0 0.0
      %8256 = vmatprep.subr.mxu0 0.0
      %8257 = vmatpush1.msra.mxu0 0.0
      %8258 = vmatprep.subr.mxu0 0.0
      %8259 = vmatpush1.msra.mxu0 0.0
      %8260 = vmatprep.mubr.f32.mxu0 0.0
      %8261 = vmatmul.mubr.f32.gmra.mrb[0].mxu0 %v8194
      %v8262 = vpop.f32.mrb[0].mxu0
      %v8263 = vadd.f32 0.0, %v8262
      %v8264 = vpop.f32.mrb[0].mxu0
      %8265 = vdwg.mxu0
      %v8266 = vmax.f32 %v8263, 0.0
      %v8267 = vld [vmem:[%s11] sm:$0x3]
      %vm8268 = vcmask 15360
      %v8270 = vsel %vm8268, %v8266, 0
      %vm8272 = vcmask 1041408
      %v8274 = vsel %vm8272, %v8267, 0
      %8276 = vmatprep.subr.mxu0 0.0
      %8277 = vmatpush1.msra.mxu0 %v8274
      %8278 = vmatprep.subr.mxu0 0.0
      %8279 = vmatpush1.msra.mxu0 0.0
      %8280 = vmatprep.subr.mxu0 0.0
      %8281 = vmatpush1.msra.mxu0 0.0
      %8282 = vmatprep.subr.mxu0 0.0
      %8283 = vmatpush1.msra.mxu0 0.0
      %8284 = vmatprep.subr.mxu0 0.0
      %8285 = vmatpush1.msra.mxu0 0.0
      %8286 = vmatprep.subr.mxu0 0.0
      %8287 = vmatpush1.msra.mxu0 0.0
      %8288 = vmatprep.subr.mxu0 0.0
      %8289 = vmatpush1.msra.mxu0 0.0
      %8290 = vmatprep.subr.mxu0 0.0
      %8291 = vmatpush1.msra.mxu0 0.0
      %8292 = vmatprep.subr.mxu0 0.0
      %8293 = vmatpush1.msra.mxu0 0.0
      %8294 = vmatprep.subr.mxu0 0.0
      %8295 = vmatpush1.msra.mxu0 0.0
      %8296 = vmatprep.subr.mxu0 0.0
      %8297 = vmatpush1.msra.mxu0 0.0
      %8298 = vmatprep.subr.mxu0 0.0
      %8299 = vmatpush1.msra.mxu0 0.0
      %8300 = vmatprep.subr.mxu0 0.0
      %8301 = vmatpush1.msra.mxu0 0.0
      %8302 = vmatprep.subr.mxu0 0.0
      %8303 = vmatpush1.msra.mxu0 0.0
      %8304 = vmatprep.subr.mxu0 0.0
      %8305 = vmatpush1.msra.mxu0 0.0
      %8306 = vmatprep.subr.mxu0 0.0
      %8307 = vmatpush1.msra.mxu0 0.0
      %8308 = vmatprep.subr.mxu0 0.0
      %8309 = vmatpush1.msra.mxu0 0.0
      %8310 = vmatprep.subr.mxu0 0.0
      %8311 = vmatpush1.msra.mxu0 0.0
      %8312 = vmatprep.subr.mxu0 0.0
      %8313 = vmatpush1.msra.mxu0 0.0
      %8314 = vmatprep.subr.mxu0 0.0
      %8315 = vmatpush1.msra.mxu0 0.0
      %8316 = vmatprep.subr.mxu0 0.0
      %8317 = vmatpush1.msra.mxu0 0.0
      %8318 = vmatprep.subr.mxu0 0.0
      %8319 = vmatpush1.msra.mxu0 0.0
      %8320 = vmatprep.subr.mxu0 0.0
      %8321 = vmatpush1.msra.mxu0 0.0
      %8322 = vmatprep.subr.mxu0 0.0
      %8323 = vmatpush1.msra.mxu0 0.0
      %8324 = vmatprep.subr.mxu0 0.0
      %8325 = vmatpush1.msra.mxu0 0.0
      %8326 = vmatprep.subr.mxu0 0.0
      %8327 = vmatpush1.msra.mxu0 0.0
      %8328 = vmatprep.subr.mxu0 0.0
      %8329 = vmatpush1.msra.mxu0 0.0
      %8330 = vmatprep.subr.mxu0 0.0
      %8331 = vmatpush1.msra.mxu0 0.0
      %8332 = vmatprep.subr.mxu0 0.0
      %8333 = vmatpush1.msra.mxu0 0.0
      %8334 = vmatprep.subr.mxu0 0.0
      %8335 = vmatpush1.msra.mxu0 0.0
      %8336 = vmatprep.subr.mxu0 0.0
      %8337 = vmatpush1.msra.mxu0 0.0
      %8338 = vmatprep.subr.mxu0 0.0
      %8339 = vmatpush1.msra.mxu0 0.0
      %8340 = vmatprep.mubr.f32.mxu0 0.0
      %8341 = vmatmul.mubr.f32.gmra.mrb[0].mxu0 %v8270
      %v8342 = vpop.f32.mrb[0].mxu0
      %v8343 = vadd.f32 0.0, %v8342
      %v8344 = vpop.f32.mrb[0].mxu0
      %8345 = vdwg.mxu0
      %v8346 = vxor.u32 %v8343, 2147483648
      %v8347 = vmul.f32 %v8346, 1.442695
      %v8348 = vpow.pop %v8347
      %v8349 = vadd.f32 %v8348, 1.0
      %v8350 = vrcp.pop %v8349
      %v8351 = vmul.f32 1.0, %v8350
      %v8352 = vld [vmem:[%s12] sm:$0xf]
      %v8353 = vld [vmem:[%s12 + $0x4] sm:$0xf]
      %v8354 = vld [vmem:[%s13] sm:$0x1]
      %v8356 = vlaneseq
      %v8357 = vshrl.u32 %v8356, 7
      %v8358 = vsub.s32 0, %v8357
      %v8359 = vrot.slane %v8354, %v8358
      %v8398 = vunpack.c.l.b16 %v478
      %v8399 = vunpack.c.l.b16 %v479
      %v8400 = vunpack.c.l.b16 %v480
      %v8401 = vunpack.c.l.b16 %v481
      %v8402 = vunpack.c.l.b16 %v482
      %v8403 = vunpack.c.l.b16 %v483
      %v8404 = vunpack.c.l.b16 %v484
      %v8405 = vunpack.c.l.b16 %v485
      %v8406 = vunpack.c.l.b16 %v486
      %v8407 = vunpack.c.l.b16 %v487
      %v8408 = vunpack.c.l.b16 %v488
      %v8409 = vunpack.c.l.b16 %v489
      %v8410 = vunpack.c.l.b16 %v490
      %v8411 = vunpack.c.l.b16 %v491
      %v8412 = vunpack.c.l.b16 %v492
      %v8413 = vunpack.c.l.b16 %v493
      %v8414 = vunpack.c.l.b16 %v494
      %v8415 = vunpack.c.l.b16 %v495
      %v8416 = vunpack.c.l.b16 %v496
      %v8417 = vunpack.c.l.b16 %v497
      %v8418 = vunpack.c.l.b16 %v498
      %v8419 = vunpack.c.l.b16 %v499
      %v8420 = vunpack.c.l.b16 %v500
      %v8421 = vunpack.c.l.b16 %v501
      %v8422 = vunpack.c.l.b16 %v502
      %v8423 = vunpack.c.l.b16 %v503
      %v8424 = vunpack.c.l.b16 %v504
      %v8425 = vunpack.c.l.b16 %v505
      %v8426 = vunpack.c.l.b16 %v506
      %v8427 = vunpack.c.l.b16 %v507
      %v8428 = vunpack.c.l.b16 %v508
      %v8429 = vunpack.c.l.b16 %v509
      %v8430 = vunpack.c.l.b16 %v510
      %v8431 = vunpack.c.l.b16 %v511
      %v8432 = vunpack.c.l.b16 %v512
      %v8433 = vunpack.c.l.b16 %v513
      %v8434 = vunpack.c.l.b16 %v514
      %v8435 = vpack.c.b16 %v8399, %v8398
      %v8436 = vpack.c.b16 %v8401, %v8400
      %v8437 = vpack.c.b16 %v8403, %v8402
      %v8438 = vpack.c.b16 %v8405, %v8404
      %v8439 = vpack.c.b16 %v8407, %v8406
      %v8440 = vpack.c.b16 %v8409, %v8408
      %v8441 = vpack.c.b16 %v8411, %v8410
      %v8442 = vpack.c.b16 %v8413, %v8412
      %v8443 = vpack.c.b16 %v8415, %v8414
      %v8444 = vpack.c.b16 %v8417, %v8416
      %v8445 = vpack.c.b16 %v8419, %v8418
      %v8446 = vpack.c.b16 %v8421, %v8420
      %v8447 = vpack.c.b16 %v8423, %v8422
      %v8448 = vpack.c.b16 %v8425, %v8424
      %v8449 = vpack.c.b16 %v8427, %v8426
      %v8450 = vpack.c.b16 %v8429, %v8428
      %v8451 = vpack.c.b16 %v8431, %v8430
      %v8452 = vpack.c.b16 %v8433, %v8432
      %v8453 = vpack.c.b16 %v8434, %v8434
      %v8455 = vshrl.u32 %v8435, 16
      %v8457 = vrot.slane %v8455, 1
      %v8458 = vshll.u32 %v8435, 16
      %v8460 = vrot.slane %v8458, 2
      %v8461 = vor.u32 %v8457, %v8460
      %v8463 = vshrl.u32 %v8436, 16
      %v8465 = vrot.slane %v8463, 1
      %v8466 = vshll.u32 %v8436, 16
      %v8468 = vrot.slane %v8466, 2
      %v8469 = vor.u32 %v8465, %v8468
      %v8470 = vsel %vm1680, %v8461, %v8469
      %v8472 = vshrl.u32 %v8437, 16
      %v8474 = vrot.slane %v8472, 1
      %v8475 = vshll.u32 %v8437, 16
      %v8477 = vrot.slane %v8475, 2
      %v8478 = vor.u32 %v8474, %v8477
      %v8479 = vsel %vm1680, %v8469, %v8478
      %v8481 = vshrl.u32 %v8438, 16
      %v8483 = vrot.slane %v8481, 1
      %v8484 = vshll.u32 %v8438, 16
      %v8486 = vrot.slane %v8484, 2
      %v8487 = vor.u32 %v8483, %v8486
      %v8488 = vsel %vm1680, %v8478, %v8487
      %v8490 = vshrl.u32 %v8439, 16
      %v8492 = vrot.slane %v8490, 1
      %v8493 = vshll.u32 %v8439, 16
      %v8495 = vrot.slane %v8493, 2
      %v8496 = vor.u32 %v8492, %v8495
      %v8497 = vsel %vm1680, %v8487, %v8496
      %v8499 = vshrl.u32 %v8440, 16
      %v8501 = vrot.slane %v8499, 1
      %v8502 = vshll.u32 %v8440, 16
      %v8504 = vrot.slane %v8502, 2
      %v8505 = vor.u32 %v8501, %v8504
      %v8506 = vsel %vm1680, %v8496, %v8505
      %v8508 = vshrl.u32 %v8441, 16
      %v8510 = vrot.slane %v8508, 1
      %v8511 = vshll.u32 %v8441, 16
      %v8513 = vrot.slane %v8511, 2
      %v8514 = vor.u32 %v8510, %v8513
      %v8515 = vsel %vm1680, %v8505, %v8514
      %v8517 = vshrl.u32 %v8442, 16
      %v8519 = vrot.slane %v8517, 1
      %v8520 = vshll.u32 %v8442, 16
      %v8522 = vrot.slane %v8520, 2
      %v8523 = vor.u32 %v8519, %v8522
      %v8524 = vsel %vm1680, %v8514, %v8523
      %v8526 = vshrl.u32 %v8443, 16
      %v8528 = vrot.slane %v8526, 1
      %v8529 = vshll.u32 %v8443, 16
      %v8531 = vrot.slane %v8529, 2
      %v8532 = vor.u32 %v8528, %v8531
      %v8533 = vsel %vm1680, %v8523, %v8532
      %v8535 = vshrl.u32 %v8444, 16
      %v8537 = vrot.slane %v8535, 1
      %v8538 = vshll.u32 %v8444, 16
      %v8540 = vrot.slane %v8538, 2
      %v8541 = vor.u32 %v8537, %v8540
      %v8542 = vsel %vm1680, %v8532, %v8541
      %v8544 = vshrl.u32 %v8445, 16
      %v8546 = vrot.slane %v8544, 1
      %v8547 = vshll.u32 %v8445, 16
      %v8549 = vrot.slane %v8547, 2
      %v8550 = vor.u32 %v8546, %v8549
      %v8551 = vsel %vm1680, %v8541, %v8550
      %v8553 = vshrl.u32 %v8446, 16
      %v8555 = vrot.slane %v8553, 1
      %v8556 = vshll.u32 %v8446, 16
      %v8558 = vrot.slane %v8556, 2
      %v8559 = vor.u32 %v8555, %v8558
      %v8560 = vsel %vm1680, %v8550, %v8559
      %v8562 = vshrl.u32 %v8447, 16
      %v8564 = vrot.slane %v8562, 1
      %v8565 = vshll.u32 %v8447, 16
      %v8567 = vrot.slane %v8565, 2
      %v8568 = vor.u32 %v8564, %v8567
      %v8569 = vsel %vm1680, %v8559, %v8568
      %v8571 = vshrl.u32 %v8448, 16
      %v8573 = vrot.slane %v8571, 1
      %v8574 = vshll.u32 %v8448, 16
      %v8576 = vrot.slane %v8574, 2
      %v8577 = vor.u32 %v8573, %v8576
      %v8578 = vsel %vm1680, %v8568, %v8577
      %v8580 = vshrl.u32 %v8449, 16
      %v8582 = vrot.slane %v8580, 1
      %v8583 = vshll.u32 %v8449, 16
      %v8585 = vrot.slane %v8583, 2
      %v8586 = vor.u32 %v8582, %v8585
      %v8587 = vsel %vm1680, %v8577, %v8586
      %v8589 = vshrl.u32 %v8450, 16
      %v8591 = vrot.slane %v8589, 1
      %v8592 = vshll.u32 %v8450, 16
      %v8594 = vrot.slane %v8592, 2
      %v8595 = vor.u32 %v8591, %v8594
      %v8596 = vsel %vm1680, %v8586, %v8595
      %v8598 = vshrl.u32 %v8451, 16
      %v8600 = vrot.slane %v8598, 1
      %v8601 = vshll.u32 %v8451, 16
      %v8603 = vrot.slane %v8601, 2
      %v8604 = vor.u32 %v8600, %v8603
      %v8605 = vsel %vm1680, %v8595, %v8604
      %v8607 = vshrl.u32 %v8452, 16
      %v8609 = vrot.slane %v8607, 1
      %v8610 = vshll.u32 %v8452, 16
      %v8612 = vrot.slane %v8610, 2
      %v8613 = vor.u32 %v8609, %v8612
      %v8614 = vsel %vm1680, %v8604, %v8613
      %v8616 = vshrl.u32 %v8453, 16
      %v8618 = vrot.slane %v8616, 1
      %v8619 = vshll.u32 %v8453, 16
      %v8621 = vrot.slane %v8619, 2
      %v8622 = vor.u32 %v8618, %v8621
      %v8623 = vsel %vm1680, %v8613, %v8622
      %v8626 = vunpack.c.l.b16 %v8352
      %v8627 = vunpack.c.l.b16 %v8353
      %v8628 = vpack.c.b16 %v8627, %v8626
      %v8631 = vsel %vm870, %v8470, 0
      %v8634 = vsel %vm870, %v8479, 0
      %v8637 = vsel %vm870, %v8488, 0
      %v8640 = vsel %vm870, %v8497, 0
      %v8643 = vsel %vm870, %v8506, 0
      %v8646 = vsel %vm870, %v8515, 0
      %v8649 = vsel %vm870, %v8524, 0
      %v8652 = vsel %vm870, %v8533, 0
      %v8655 = vsel %vm870, %v8542, 0
      %v8658 = vsel %vm870, %v8551, 0
      %v8661 = vsel %vm870, %v8560, 0
      %v8664 = vsel %vm870, %v8569, 0
      %v8667 = vsel %vm870, %v8578, 0
      %v8670 = vsel %vm870, %v8587, 0
      %v8673 = vsel %vm870, %v8596, 0
      %v8676 = vsel %vm870, %v8605, 0
      %v8679 = vsel %vm870, %v8614, 0
      %v8682 = vsel %vm870, %v8623, 0
      %8684 = vmatprep.subr.bf16.mxu0 0
      %8685 = vmatpush1.bf16.msra.mxu0 %v8628
      %8686 = vmatprep.subr.bf16.mxu0 0
      %8687 = vmatpush1.bf16.msra.mxu0 0
      %8688 = vmatprep.subr.bf16.mxu0 0
      %8689 = vmatpush1.bf16.msra.mxu0 0
      %8690 = vmatprep.subr.bf16.mxu0 0
      %8691 = vmatpush1.bf16.msra.mxu0 0
      %8692 = vmatprep.subr.bf16.mxu0 0
      %8693 = vmatpush1.bf16.msra.mxu0 0
      %8694 = vmatprep.subr.bf16.mxu0 0
      %8695 = vmatpush1.bf16.msra.mxu0 0
      %8696 = vmatprep.subr.bf16.mxu0 0
      %8697 = vmatpush1.bf16.msra.mxu0 0
      %8698 = vmatprep.subr.bf16.mxu0 0
      %8699 = vmatpush1.bf16.msra.mxu0 0
      %8700 = vmatprep.subr.bf16.mxu0 0
      %8701 = vmatpush1.bf16.msra.mxu0 0
      %8702 = vmatprep.subr.bf16.mxu0 0
      %8703 = vmatpush1.bf16.msra.mxu0 0
      %8704 = vmatprep.subr.bf16.mxu0 0
      %8705 = vmatpush1.bf16.msra.mxu0 0
      %8706 = vmatprep.subr.bf16.mxu0 0
      %8707 = vmatpush1.bf16.msra.mxu0 0
      %8708 = vmatprep.subr.bf16.mxu0 0
      %8709 = vmatpush1.bf16.msra.mxu0 0
      %8710 = vmatprep.subr.bf16.mxu0 0
      %8711 = vmatpush1.bf16.msra.mxu0 0
      %8712 = vmatprep.subr.bf16.mxu0 0
      %8713 = vmatpush1.bf16.msra.mxu0 0
      %8714 = vmatprep.subr.bf16.mxu0 0
      %8715 = vmatpush1.bf16.msra.mxu0 0
      %8716 = vmatprep.mubr.bf16.mxu0 0
      %8717 = vmatmul.mubr.bf16.gmra.mrb[0].mxu0 %v8631
      %v8718 = vpop.f32.mrb[0].mxu0
      %v8719 = vadd.f32 %v8359, %v8718
      %v8720 = vpop.f32.mrb[0].mxu0
      %v8721 = vpop.f32.mrb[0].mxu0
      %v8722 = vadd.f32 %v8359, %v8721
      %v8723 = vpop.f32.mrb[0].mxu0
      %8724 = vmatprep.mubr.bf16.mxu0 0
      %8725 = vmatmul.mubr.bf16.gmra.mrb[0].mxu0 %v8634
      %v8726 = vpop.f32.mrb[0].mxu0
      %v8727 = vadd.f32 %v8359, %v8726
      %v8728 = vpop.f32.mrb[0].mxu0
      %v8729 = vpop.f32.mrb[0].mxu0
      %v8730 = vadd.f32 %v8359, %v8729
      %v8731 = vpop.f32.mrb[0].mxu0
      %8732 = vmatprep.mubr.bf16.mxu0 0
      %8733 = vmatmul.mubr.bf16.gmra.mrb[0].mxu0 %v8637
      %v8734 = vpop.f32.mrb[0].mxu0
      %v8735 = vadd.f32 %v8359, %v8734
      %v8736 = vpop.f32.mrb[0].mxu0
      %v8737 = vpop.f32.mrb[0].mxu0
      %v8738 = vadd.f32 %v8359, %v8737
      %v8739 = vpop.f32.mrb[0].mxu0
      %8740 = vmatprep.mubr.bf16.mxu0 0
      %8741 = vmatmul.mubr.bf16.gmra.mrb[0].mxu0 %v8640
      %v8742 = vpop.f32.mrb[0].mxu0
      %v8743 = vadd.f32 %v8359, %v8742
      %v8744 = vpop.f32.mrb[0].mxu0
      %v8745 = vpop.f32.mrb[0].mxu0
      %v8746 = vadd.f32 %v8359, %v8745
      %v8747 = vpop.f32.mrb[0].mxu0
      %8748 = vmatprep.mubr.bf16.mxu0 0
      %8749 = vmatmul.mubr.bf16.gmra.mrb[0].mxu0 %v8643
      %v8750 = vpop.f32.mrb[0].mxu0
      %v8751 = vadd.f32 %v8359, %v8750
      %v8752 = vpop.f32.mrb[0].mxu0
      %v8753 = vpop.f32.mrb[0].mxu0
      %v8754 = vadd.f32 %v8359, %v8753
      %v8755 = vpop.f32.mrb[0].mxu0
      %8756 = vmatprep.mubr.bf16.mxu0 0
      %8757 = vmatmul.mubr.bf16.gmra.mrb[0].mxu0 %v8646
      %v8758 = vpop.f32.mrb[0].mxu0
      %v8759 = vadd.f32 %v8359, %v8758
      %v8760 = vpop.f32.mrb[0].mxu0
      %v8761 = vpop.f32.mrb[0].mxu0
      %v8762 = vadd.f32 %v8359, %v8761
      %v8763 = vpop.f32.mrb[0].mxu0
      %8764 = vmatprep.mubr.bf16.mxu0 0
      %8765 = vmatmul.mubr.bf16.gmra.mrb[0].mxu0 %v8649
      %v8766 = vpop.f32.mrb[0].mxu0
      %v8767 = vadd.f32 %v8359, %v8766
      %v8768 = vpop.f32.mrb[0].mxu0
      %v8769 = vpop.f32.mrb[0].mxu0
      %v8770 = vadd.f32 %v8359, %v8769
      %v8771 = vpop.f32.mrb[0].mxu0
      %8772 = vmatprep.mubr.bf16.mxu0 0
      %8773 = vmatmul.mubr.bf16.gmra.mrb[0].mxu0 %v8652
      %v8774 = vpop.f32.mrb[0].mxu0
      %v8775 = vadd.f32 %v8359, %v8774
      %v8776 = vpop.f32.mrb[0].mxu0
      %v8777 = vpop.f32.mrb[0].mxu0
      %v8778 = vadd.f32 %v8359, %v8777
      %v8779 = vpop.f32.mrb[0].mxu0
      %8780 = vmatprep.mubr.bf16.mxu0 0
      %8781 = vmatmul.mubr.bf16.gmra.mrb[0].mxu0 %v8655
      %v8782 = vpop.f32.mrb[0].mxu0
      %v8783 = vadd.f32 %v8359, %v8782
      %v8784 = vpop.f32.mrb[0].mxu0
      %v8785 = vpop.f32.mrb[0].mxu0
      %v8786 = vadd.f32 %v8359, %v8785
      %v8787 = vpop.f32.mrb[0].mxu0
      %8788 = vmatprep.mubr.bf16.mxu0 0
      %8789 = vmatmul.mubr.bf16.gmra.mrb[0].mxu0 %v8658
      %v8790 = vpop.f32.mrb[0].mxu0
      %v8791 = vadd.f32 %v8359, %v8790
      %v8792 = vpop.f32.mrb[0].mxu0
      %v8793 = vpop.f32.mrb[0].mxu0
      %v8794 = vadd.f32 %v8359, %v8793
      %v8795 = vpop.f32.mrb[0].mxu0
      %8796 = vmatprep.mubr.bf16.mxu0 0
      %8797 = vmatmul.mubr.bf16.gmra.mrb[0].mxu0 %v8661
      %v8798 = vpop.f32.mrb[0].mxu0
      %v8799 = vadd.f32 %v8359, %v8798
      %v8800 = vpop.f32.mrb[0].mxu0
      %v8801 = vpop.f32.mrb[0].mxu0
      %v8802 = vadd.f32 %v8359, %v8801
      %v8803 = vpop.f32.mrb[0].mxu0
      %8804 = vmatprep.mubr.bf16.mxu0 0
      %8805 = vmatmul.mubr.bf16.gmra.mrb[0].mxu0 %v8664
      %v8806 = vpop.f32.mrb[0].mxu0
      %v8807 = vadd.f32 %v8359, %v8806
      %v8808 = vpop.f32.mrb[0].mxu0
      %v8809 = vpop.f32.mrb[0].mxu0
      %v8810 = vadd.f32 %v8359, %v8809
      %v8811 = vpop.f32.mrb[0].mxu0
      %8812 = vmatprep.mubr.bf16.mxu0 0
      %8813 = vmatmul.mubr.bf16.gmra.mrb[0].mxu0 %v8667
      %v8814 = vpop.f32.mrb[0].mxu0
      %v8815 = vadd.f32 %v8359, %v8814
      %v8816 = vpop.f32.mrb[0].mxu0
      %v8817 = vpop.f32.mrb[0].mxu0
      %v8818 = vadd.f32 %v8359, %v8817
      %v8819 = vpop.f32.mrb[0].mxu0
      %8820 = vmatprep.mubr.bf16.mxu0 0
      %8821 = vmatmul.mubr.bf16.gmra.mrb[0].mxu0 %v8670
      %v8822 = vpop.f32.mrb[0].mxu0
      %v8823 = vadd.f32 %v8359, %v8822
      %v8824 = vpop.f32.mrb[0].mxu0
      %v8825 = vpop.f32.mrb[0].mxu0
      %v8826 = vadd.f32 %v8359, %v8825
      %v8827 = vpop.f32.mrb[0].mxu0
      %8828 = vmatprep.mubr.bf16.mxu0 0
      %8829 = vmatmul.mubr.bf16.gmra.mrb[0].mxu0 %v8673
      %v8830 = vpop.f32.mrb[0].mxu0
      %v8831 = vadd.f32 %v8359, %v8830
      %v8832 = vpop.f32.mrb[0].mxu0
      %v8833 = vpop.f32.mrb[0].mxu0
      %v8834 = vadd.f32 %v8359, %v8833
      %v8835 = vpop.f32.mrb[0].mxu0
      %8836 = vmatprep.mubr.bf16.mxu0 0
      %8837 = vmatmul.mubr.bf16.gmra.mrb[0].mxu0 %v8676
      %v8838 = vpop.f32.mrb[0].mxu0
      %v8839 = vadd.f32 %v8359, %v8838
      %v8840 = vpop.f32.mrb[0].mxu0
      %v8841 = vpop.f32.mrb[0].mxu0
      %v8842 = vadd.f32 %v8359, %v8841
      %v8843 = vpop.f32.mrb[0].mxu0
      %8844 = vmatprep.mubr.bf16.mxu0 0
      %8845 = vmatmul.mubr.bf16.gmra.mrb[0].mxu0 %v8679
      %v8846 = vpop.f32.mrb[0].mxu0
      %v8847 = vadd.f32 %v8359, %v8846
      %v8848 = vpop.f32.mrb[0].mxu0
      %v8849 = vpop.f32.mrb[0].mxu0
      %v8850 = vadd.f32 %v8359, %v8849
      %v8851 = vpop.f32.mrb[0].mxu0
      %8852 = vmatprep.mubr.bf16.mxu0 0
      %8853 = vmatmul.mubr.bf16.gmra.mrb[0].mxu0 %v8682
      %v8854 = vpop.f32.mrb[0].mxu0
      %v8855 = vadd.f32 %v8359, %v8854
      %v8856 = vpop.f32.mrb[0].mxu0
      %v8857 = vpop.f32.mrb[0].mxu0
      %v8858 = vadd.f32 %v8359, %v8857
      %v8859 = vpop.f32.mrb[0].mxu0
      %8860 = vdwg.mxu0
      %v8861 = vlaneseq
      %v8862 = vshrl.u32 %v8861, 7
      %v8863 = vsub.s32 0, %v8862
      %v8864 = vrot.slane %v8351, %v8863
      %v8865 = vmul.f32 %v7823, %v8864
      %v8866 = vmul.f32 %v7824, %v8864
      %v8867 = vmul.f32 %v7825, %v8864
      %v8868 = vmul.f32 %v7826, %v8864
      %v8869 = vmul.f32 %v7827, %v8864
      %v8870 = vmul.f32 %v7828, %v8864
      %v8871 = vmul.f32 %v7829, %v8864
      %v8872 = vmul.f32 %v7830, %v8864
      %v8873 = vmul.f32 %v7831, %v8864
      %v8874 = vmul.f32 %v7832, %v8864
      %v8875 = vmul.f32 %v7833, %v8864
      %v8876 = vmul.f32 %v7834, %v8864
      %v8877 = vmul.f32 %v7835, %v8864
      %v8878 = vmul.f32 %v7836, %v8864
      %v8879 = vmul.f32 %v7837, %v8864
      %v8880 = vmul.f32 %v7838, %v8864
      %v8881 = vmul.f32 %v7839, %v8864
      %v8882 = vmul.f32 %v7840, %v8864
      %v8883 = vmul.f32 %v7841, %v8864
      %v8884 = vmul.f32 %v7842, %v8864
      %v8885 = vmul.f32 %v7843, %v8864
      %v8886 = vmul.f32 %v7844, %v8864
      %v8887 = vmul.f32 %v7845, %v8864
      %v8888 = vmul.f32 %v7846, %v8864
      %v8889 = vmul.f32 %v7847, %v8864
      %v8890 = vmul.f32 %v7848, %v8864
      %v8891 = vmul.f32 %v7849, %v8864
      %v8892 = vmul.f32 %v7850, %v8864
      %v8893 = vmul.f32 %v7851, %v8864
      %v8894 = vmul.f32 %v7852, %v8864
      %v8895 = vmul.f32 %v7853, %v8864
      %v8896 = vmul.f32 %v7854, %v8864
      %v8897 = vmul.f32 %v7855, %v8864
      %v8898 = vmul.f32 %v7856, %v8864
      %v8899 = vmul.f32 %v7857, %v8864
      %v8900 = vmul.f32 %v7858, %v8864
      %v8901 = vadd.f32 %v8865, %v8719
      %v8902 = vadd.f32 %v8866, %v8722
      %v8903 = vadd.f32 %v8867, %v8727
      %v8904 = vadd.f32 %v8868, %v8730
      %v8905 = vadd.f32 %v8869, %v8735
      %v8906 = vadd.f32 %v8870, %v8738
      %v8907 = vadd.f32 %v8871, %v8743
      %v8908 = vadd.f32 %v8872, %v8746
      %v8909 = vadd.f32 %v8873, %v8751
      %v8910 = vadd.f32 %v8874, %v8754
      %v8911 = vadd.f32 %v8875, %v8759
      %v8912 = vadd.f32 %v8876, %v8762
      %v8913 = vadd.f32 %v8877, %v8767
      %v8914 = vadd.f32 %v8878, %v8770
      %v8915 = vadd.f32 %v8879, %v8775
      %v8916 = vadd.f32 %v8880, %v8778
      %v8917 = vadd.f32 %v8881, %v8783
      %v8918 = vadd.f32 %v8882, %v8786
      %v8919 = vadd.f32 %v8883, %v8791
      %v8920 = vadd.f32 %v8884, %v8794
      %v8921 = vadd.f32 %v8885, %v8799
      %v8922 = vadd.f32 %v8886, %v8802
      %v8923 = vadd.f32 %v8887, %v8807
      %v8924 = vadd.f32 %v8888, %v8810
      %v8925 = vadd.f32 %v8889, %v8815
      %v8926 = vadd.f32 %v8890, %v8818
      %v8927 = vadd.f32 %v8891, %v8823
      %v8928 = vadd.f32 %v8892, %v8826
      %v8929 = vadd.f32 %v8893, %v8831
      %v8930 = vadd.f32 %v8894, %v8834
      %v8931 = vadd.f32 %v8895, %v8839
      %v8932 = vadd.f32 %v8896, %v8842
      %v8933 = vadd.f32 %v8897, %v8847
      %v8934 = vadd.f32 %v8898, %v8850
      %v8935 = vadd.f32 %v8899, %v8855
      %v8936 = vadd.f32 %v8900, %v8858
      %8937 = vst.msk [vmem:[%s467] sm:$0xff] %vm5119, %v8901
      %8938 = vst.msk [vmem:[%s467 + $0x8] sm:$0xff] %vm5119, %v8902
      %8939 = vst.msk [vmem:[%s467 + $0x10] sm:$0xff] %vm5119, %v8903
      %8940 = vst.msk [vmem:[%s467 + $0x18] sm:$0xff] %vm5119, %v8904
      %8941 = vst.msk [vmem:[%s467 + $0x20] sm:$0xff] %vm5119, %v8905
      %8942 = vst.msk [vmem:[%s467 + $0x28] sm:$0xff] %vm5119, %v8906
      %8943 = vst.msk [vmem:[%s467 + $0x30] sm:$0xff] %vm5119, %v8907
      %8944 = vst.msk [vmem:[%s467 + $0x38] sm:$0xff] %vm5119, %v8908
      %8945 = vst.msk [vmem:[%s467 + $0x40] sm:$0xff] %vm5119, %v8909
      %8946 = vst.msk [vmem:[%s467 + $0x48] sm:$0xff] %vm5119, %v8910
      %8947 = vst.msk [vmem:[%s467 + $0x50] sm:$0xff] %vm5119, %v8911
      %8948 = vst.msk [vmem:[%s467 + $0x58] sm:$0xff] %vm5119, %v8912
      %8949 = vst.msk [vmem:[%s467 + $0x60] sm:$0xff] %vm5119, %v8913
      %8950 = vst.msk [vmem:[%s467 + $0x68] sm:$0xff] %vm5119, %v8914
      %8951 = vst.msk [vmem:[%s467 + $0x70] sm:$0xff] %vm5119, %v8915
      %8952 = vst.msk [vmem:[%s467 + $0x78] sm:$0xff] %vm5119, %v8916
      %8953 = vst.msk [vmem:[%s467 + $0x80] sm:$0xff] %vm5119, %v8917
      %8954 = vst.msk [vmem:[%s467 + $0x88] sm:$0xff] %vm5119, %v8918
      %8955 = vst.msk [vmem:[%s467 + $0x90] sm:$0xff] %vm5119, %v8919
      %8956 = vst.msk [vmem:[%s467 + $0x98] sm:$0xff] %vm5119, %v8920
      %8957 = vst.msk [vmem:[%s467 + $0xa0] sm:$0xff] %vm5119, %v8921
      %8958 = vst.msk [vmem:[%s467 + $0xa8] sm:$0xff] %vm5119, %v8922
      %8959 = vst.msk [vmem:[%s467 + $0xb0] sm:$0xff] %vm5119, %v8923
      %8960 = vst.msk [vmem:[%s467 + $0xb8] sm:$0xff] %vm5119, %v8924
      %8961 = vst.msk [vmem:[%s467 + $0xc0] sm:$0xff] %vm5119, %v8925
      %8962 = vst.msk [vmem:[%s467 + $0xc8] sm:$0xff] %vm5119, %v8926
      %8963 = vst.msk [vmem:[%s467 + $0xd0] sm:$0xff] %vm5119, %v8927
      %8964 = vst.msk [vmem:[%s467 + $0xd8] sm:$0xff] %vm5119, %v8928
      %8965 = vst.msk [vmem:[%s467 + $0xe0] sm:$0xff] %vm5119, %v8929
      %8966 = vst.msk [vmem:[%s467 + $0xe8] sm:$0xff] %vm5119, %v8930
      %8967 = vst.msk [vmem:[%s467 + $0xf0] sm:$0xff] %vm5119, %v8931
      %8968 = vst.msk [vmem:[%s467 + $0xf8] sm:$0xff] %vm5119, %v8932
      %8969 = vst.msk [vmem:[%s467 + $0x100] sm:$0xff] %vm5119, %v8933
      %8970 = vst.msk [vmem:[%s467 + $0x108] sm:$0xff] %vm5119, %v8934
      %8971 = vst.msk [vmem:[%s467 + $0x110] sm:$0xff] %vm5119, %v8935
      %8972 = vst.msk [vmem:[%s467 + $0x118] sm:$0xff] %vm5119, %v8936
      %p8973 = scmp.lt.s32.totalorder %s25, 1
      %s8974 = scalar_select %p8973, %s25, 1
      %s8975 = smul.addr %s8974, 36
      %s8976 = smul.addr %s8975, 8
      %s8977 = scalar_lea.vmem %s14, %s8976
      // Predicated region
      $region77: #{bottleneck_ir_se_forward.1} parent=75 // pred_check
        %p8978 = pneg %p342
      $region78: #{bottleneck_ir_se_forward.1} parent=75 // pred_check_branch
        %8980 = sbr.rel (%p8978) target = $region80
      $region79: #{bottleneck_ir_se_forward.1} parent=75 // pred_region
        _
      $region80: #{bottleneck_ir_se_forward.1} parent=75 // pred_fallthru
        _
    $region76: #{bottleneck_ir_se_forward.1} parent=5 // pred_fallthru
      _
    %p8981 = scmp.le.s32.totalorder 2, %s20
    // Predicated region
    $region81: #{bottleneck_ir_se_forward.1} parent=5 // pred_check
      %p8982 = pneg %p8981
    $region82: #{bottleneck_ir_se_forward.1} parent=5 // pred_check_branch
      %8984 = sbr.rel (%p8982) target = $region84
    $region83: #{bottleneck_ir_se_forward.1} parent=5 // pred_region
      %s8985 = ssub.s32 %s20, 2
      // Predicated region
      $region85: #{bottleneck_ir_se_forward.1} parent=83 // pred_check
        %p8986 = pneg %p348
      $region86: #{bottleneck_ir_se_forward.1} parent=83 // pred_check_branch
        %8988 = sbr.rel (%p8986) target = $region88
      $region87: #{bottleneck_ir_se_forward.1} parent=83 // pred_region
        %p8989 = scmp.lt.s32.totalorder %s26, 1
        %s8990 = scalar_select %p8989, %s26, 1
        %s8991 = smul.addr %s8990, 36
        %s8992 = smul.addr %s8991, 8
        %s8993 = scalar_lea.vmem %s14, %s8992
      $region88: #{bottleneck_ir_se_forward.1} parent=83 // pred_fallthru
        _
    $region84: #{bottleneck_ir_se_forward.1} parent=5 // pred_fallthru
      _
  $region6: #{bottleneck_ir_se_forward.1} parent=0 // loop_footer
    %s24 = sadd.s32 1, %s20
  $region7: #{bottleneck_ir_se_forward.1} parent=0 // loop_footer_branch
    %19 = sbr.rel target = $region3
  $region8: #{bottleneck_ir_se_forward.1} parent=0 // loop_exit
    _

</llo_original>
